<compile_context>
chip_gen: v7x
topology: tpu7x:2x2x1
jax: 0.10.0
libtpu: 0.0.40
codegen_flags: <defaults>
</compile_context>

<pallas_src>
import jax
import jax.numpy as jnp
from jax.experimental import pallas as pl
from jax.experimental.pallas import tpu as pltpu

# Keep in-kernel dots, the XLA-side reference convs and the CA MLP at full f32 precision
# so the correctness check is precision-noise free on every backend.
jax.config.update("jax_default_matmul_precision", "highest")


def _round_up(n, m):
    return ((n + m - 1) // m) * m


def dehaze_block(x, params, *, tile_hw=1024):
    """Forward pass of DehazeBlock.  x: (B, C, H, W) NCHW.  Returns (B, C, H, W)."""
    B, C, H, W = x.shape
    k = params["w_conv1"].shape[-1]
    p = (k - 1) // 2
    Hp, Wp = H + 2 * p, W + 2 * p
    HpWp = Hp * Wp
    C8 = params["w_pa1"].shape[0]
    k2 = k * k
    f32 = jnp.float32
    dtype = x.dtype

    # Lane-dense flat spatial length: multiple of 128 and of the streaming tile T.
    T = min(tile_hw, _round_up(HpWp, 128))
    L = _round_up(HpWp, T)
    nT = L // T
    E = _round_up(p * Wp + p, 128)      # halo margin, 128-aligned
    Lext = L + 2 * E
    D = E - (p * Wp + p)                # every tap-slice start D + dy*Wp + dx >= 0

    # ---------------- XLA-side layout plumbing (cheap, fuses under jit) ----------------
    x_pad = jnp.pad(x, ((0, 0), (0, 0), (p, p), (p, p)))
    x_flat = jnp.pad(x_pad.reshape(B, C, HpWp), ((0, 0), (0, 0), (0, L - HpWp)))
    x_ext = jnp.pad(x_flat, ((0, 0), (0, 0), (E, E)))

    q = jnp.arange(L)
    rr, cc = q // Wp, q % Wp
    valid = (q < HpWp) & (rr >= p) & (rr < p + H) & (cc >= p) & (cc < p + W)
    mask = valid.astype(f32)[None, :]                                   # (1, L)

    # kxk conv weights as (C_out, k*k*C_in) im2col matrices (tap-major, channel-minor),
    # matching the in-kernel im2col row order: one deep MXU dot per conv per tile.
    w1m = jnp.transpose(params["w_conv1"], (0, 2, 3, 1)).reshape(C, k2 * C).astype(f32)
    w2m = jnp.transpose(params["w_conv2"], (0, 2, 3, 1)).reshape(C, k2 * C).astype(f32)
    b1c = params["b_conv1"].astype(f32)[:, None]                        # (C, 1)
    b2c = params["b_conv2"].astype(f32)[:, None]
    wca1 = params["w_ca1"].astype(f32)
    bca1 = params["b_ca1"].astype(f32)[:, None]
    wca2 = params["w_ca2"].astype(f32)
    bca2 = params["b_ca2"].astype(f32)[:, None]
    wpa1 = params["w_pa1"].astype(f32)
    bpa1 = params["b_pa1"].astype(f32)[:, None]
    wpa2 = params["w_pa2"].astype(f32)
    bpa2 = params["b_pa2"].astype(f32).reshape(1, 1)

    inv_hw = 1.0 / float(H * W)

    def kernel(x_ref, w1_ref, b1_ref, w2_ref, b2_ref, m_ref,
               wca1_ref, bca1_ref, wca2_ref, bca2_ref,
               wpa1_ref, bpa1_ref, wpa2_ref, bpa2_ref,
               o_ref, r1e_ref, im_ref, ysum_ref):
        # Zero only the two E-wide conv2 halo strips of the r1e scratch; the interior
        # [E, E+L) is fully rewritten below.  (Un-gated: per-core scratch + megacore
        # sharding means a core may never run grid step 0.)
        if E > 0:
            zeros_halo = jnp.zeros((C, E), f32)
            r1e_ref[:, :E] = zeros_halo
            r1e_ref[:, E + L:] = zeros_halo

        # ---- conv1 + bias + ReLU (masked border) + residual x, tiled im2col ----
        for j in range(nT):
            base = j * T
            for ti in range(k2):                     # stage k2 shifted tap copies
                s = D + (ti // k) * Wp + (ti % k) + base
                im_ref[ti * C:(ti + 1) * C, :] = x_ref[0, :, s:s + T]
            a1 = jnp.dot(w1_ref[...], im_ref[...], preferred_element_type=f32)
            r1 = jnp.maximum(a1 + b1_ref[...], 0.0) * m_ref[:, base:base + T]
            r1e_ref[:, E + base:E + base + T] = r1 + x_ref[0, :, E + base:E + base + T]

        # ---- conv2 + bias, staged into the output block (still in VMEM), with the ----
        # ---- CALayer global pool reduced on the fly (mask only on the pool)       ----
        ysum_ref[...] = jnp.zeros((C, 1), f32)
        for j in range(nT):
            base = j * T
            for ti in range(k2):
                s = D + (ti // k) * Wp + (ti % k) + base
                im_ref[ti * C:(ti + 1) * C, :] = r1e_ref[:, s:s + T]
            a2 = jnp.dot(w2_ref[...], im_ref[...], preferred_element_type=f32)
            ysum_ref[...] += jnp.sum(a2 * m_ref[:, base:base + T], axis=-1, keepdims=True)
            # Unmasked border/tail pixels are cropped after the kernel.
            o_ref[0, :, base:base + T] = (a2 + b2_ref[...]).astype(o_ref.dtype)

        # ---- CALayer squeeze/excite MLP, fused in-kernel (per batch element) ----
        # ysum holds sum(mask * acc2); fold the conv2 bias analytically: + b2 * H*W.
        y = (ysum_ref[...] + b2_ref[...] * float(H * W)) * inv_hw        # (C, 1) mean pool
        y_b = jnp.broadcast_to(y, (C, 128))                              # lane-dense operand
        h = jnp.maximum(jnp.dot(wca1_ref[...], y_b, preferred_element_type=f32)
                        + bca1_ref[...], 0.0)
        ca = jax.nn.sigmoid(jnp.dot(wca2_ref[...], h, preferred_element_type=f32)
                            + bca2_ref[...])[:, 0:1]                     # (C, 1)

        # ---- CA channel scale + PALayer + final +x residual, streamed over tiles ----
        for j in range(nT):
            base = j * T
            r3 = o_ref[0, :, base:base + T].astype(f32) * ca
            u = jnp.maximum(jnp.dot(wpa1_ref[...], r3, preferred_element_type=f32)
                            + bpa1_ref[...], 0.0)
            gate = jax.nn.sigmoid(jnp.dot(wpa2_ref[...], u, preferred_element_type=f32)
                                  + bpa2_ref[...])
            o_ref[0, :, base:base + T] = (
                r3 * gate + x_ref[0, :, E + base:E + base + T]).astype(o_ref.dtype)

    # ---------------- VMEM budget: computed from actual block/scratch sizes ----------------
    itemsize = x.dtype.itemsize
    small_params_bytes = 4 * (2 * k2 * C * C + 2 * C + 2 * C * C8 + 2 * C8 + C + C8 + 1)
    vmem_need = (2 * C * Lext * 4              # x_ext block, double-buffered
                 + 2 * C * L * itemsize        # output block, double-buffered
                 + 2 * (L * 4 + small_params_bytes)
                 + C * Lext * 4                # r1e scratch
                 + k2 * C * T * 4              # im2col staging tile
                 + C * 128 * 4)                # ysum (lane-padded)
    try:
        vmem_cap = int(pltpu.get_tpu_info().vmem_capacity_bytes)
    except Exception:
        vmem_cap = 64 * 1024 * 1024
    # Generous on 128 MiB parts (v5e/v6e), ~12.5% headroom under the 64 MiB v7x budget.
    vmem_limit = int(min(max(2 * vmem_need, 32 * 1024 * 1024), vmem_cap - vmem_cap // 8))

    cost = pl.CostEstimate(
        flops=int(B * L * (4 * C * C * k2 + 2 * C8 * (C + 1) + 8 * C)),
        transcendentals=int(B * (L + 2 * C)),
        bytes_accessed=int(4 * B * C * Lext + itemsize * B * C * L
                           + B * (4 * L + small_params_bytes)),
    )

    out_flat = pl.pallas_call(
        kernel,
        out_shape=jax.ShapeDtypeStruct((B, C, L), dtype),
        grid=(B,),
        in_specs=[
            pl.BlockSpec((1, C, Lext), lambda b: (b, 0, 0)),
            pl.BlockSpec((C, k2 * C), lambda b: (0, 0)),
            pl.BlockSpec((C, 1), lambda b: (0, 0)),
            pl.BlockSpec((C, k2 * C), lambda b: (0, 0)),
            pl.BlockSpec((C, 1), lambda b: (0, 0)),
            pl.BlockSpec((1, L), lambda b: (0, 0)),
            pl.BlockSpec((C8, C), lambda b: (0, 0)),
            pl.BlockSpec((C8, 1), lambda b: (0, 0)),
            pl.BlockSpec((C, C8), lambda b: (0, 0)),
            pl.BlockSpec((C, 1), lambda b: (0, 0)),
            pl.BlockSpec((C8, C), lambda b: (0, 0)),
            pl.BlockSpec((C8, 1), lambda b: (0, 0)),
            pl.BlockSpec((1, C8), lambda b: (0, 0)),
            pl.BlockSpec((1, 1), lambda b: (0, 0)),
        ],
        out_specs=pl.BlockSpec((1, C, L), lambda b: (b, 0, 0)),
        scratch_shapes=[
            pltpu.VMEM((C, Lext), f32),        # r1 with conv2 halo
            pltpu.VMEM((k2 * C, T), f32),      # im2col staging tile
            pltpu.VMEM((C, 1), f32),           # fused global-pool accumulator
        ],
        compiler_params=pltpu.CompilerParams(
            dimension_semantics=("parallel",),
            vmem_limit_bytes=vmem_limit,
        ),
        cost_estimate=cost,
    )(x_ext, w1m, b1c, w2m, b2c, mask,
      wca1, bca1, wca2, bca2, wpa1, bpa1, wpa2, bpa2)

    # Crop the zero-padded flat layout back to (B, C, H, W).
    out = out_flat[:, :, :HpWp].reshape(B, C, Hp, Wp)[:, :, p:p + H, p:p + W]
    return out


def _reference(x, params):
    """Pure-JAX reference matching the PyTorch DehazeBlock forward."""
    p = (params["w_conv1"].shape[-1] - 1) // 2
    dn = ("NCHW", "OIHW", "NCHW")
    hp = jax.lax.Precision.HIGHEST

    def conv(v, w, b):
        o = jax.lax.conv_general_dilated(v, w, (1, 1), [(p, p), (p, p)],
                                         dimension_numbers=dn, precision=hp)
        return o + b[None, :, None, None]

    res = jax.nn.relu(conv(x, params["w_conv1"], params["b_conv1"])) + x
    res = conv(res, params["w_conv2"], params["b_conv2"])
    # CALayer
    y = jnp.mean(res, axis=(2, 3))
    h = jax.nn.relu(jnp.dot(y, params["w_ca1"].T, precision=hp) + params["b_ca1"])
    ca = jax.nn.sigmoid(jnp.dot(h, params["w_ca2"].T, precision=hp) + params["b_ca2"])
    res = res * ca[:, :, None, None]
    # PALayer
    u = jnp.einsum("oc,bchw->bohw", params["w_pa1"], res, precision=hp)
    u = jax.nn.relu(u + params["b_pa1"][None, :, None, None])
    t = jnp.einsum("oc,bchw->bohw", params["w_pa2"], u, precision=hp)
    t = jax.nn.sigmoid(t + params["b_pa2"][None, :, None, None])
    return res * t + x


if __name__ == "__main__":
    B, C, H, W, K = 2, 16, 16, 16, 3
    C8 = C // 8

    key = jax.random.PRNGKey(0)
    ks = jax.random.split(key, 13)

    def rnd(kk, shape, scale=0.1):
        return scale * jax.random.normal(kk, shape, dtype=jnp.float32)

    params = {
        "w_conv1": rnd(ks[0], (C, C, K, K)), "b_conv1": rnd(ks[1], (C,)),
        "w_conv2": rnd(ks[2], (C, C, K, K)), "b_conv2": rnd(ks[3], (C,)),
        "w_ca1": rnd(ks[4], (C8, C), 0.3), "b_ca1": rnd(ks[5], (C8,)),
        "w_ca2": rnd(ks[6], (C, C8), 0.3), "b_ca2": rnd(ks[7], (C,)),
        "w_pa1": rnd(ks[8], (C8, C), 0.3), "b_pa1": rnd(ks[9], (C8,)),
        "w_pa2": rnd(ks[10], (1, C8), 0.3), "b_pa2": rnd(ks[11], (1,)),
    }
    x = jax.random.normal(ks[12], (B, C, H, W), dtype=jnp.float32)

    out = jax.block_until_ready(jax.jit(dehaze_block)(x, params))
    ref = _reference(x, params)

    assert out.shape == x.shape
    err = float(jnp.max(jnp.abs(out - ref)))
    assert jnp.allclose(out, ref, atol=1e-3, rtol=1e-3), f"max abs err = {err}"
    print("KERNEL_OK")
</pallas_src>

<mosaic_0001>
module attributes {stable_mosaic.version = 11 : i64} {
  func.func @kernel(%arg0: i32, %arg1: memref<1x16x640xf32, #tpu.memory_space<vmem>>, %arg2: memref<16x144xf32, #tpu.memory_space<vmem>>, %arg3: memref<16x1xf32, #tpu.memory_space<vmem>>, %arg4: memref<16x144xf32, #tpu.memory_space<vmem>>, %arg5: memref<16x1xf32, #tpu.memory_space<vmem>>, %arg6: memref<1x384xf32, #tpu.memory_space<vmem>>, %arg7: memref<2x16xf32, #tpu.memory_space<vmem>>, %arg8: memref<2x1xf32, #tpu.memory_space<vmem>>, %arg9: memref<16x2xf32, #tpu.memory_space<vmem>>, %arg10: memref<16x1xf32, #tpu.memory_space<vmem>>, %arg11: memref<2x16xf32, #tpu.memory_space<vmem>>, %arg12: memref<2x1xf32, #tpu.memory_space<vmem>>, %arg13: memref<1x2xf32, #tpu.memory_space<vmem>>, %arg14: memref<1x1xf32, #tpu.memory_space<vmem>>, %arg15: memref<1x16x384xf32, #tpu.memory_space<vmem>>, %arg16: memref<16x640xf32, #tpu.memory_space<vmem>>, %arg17: memref<144x384xf32, #tpu.memory_space<vmem>>, %arg18: memref<16x1xf32, #tpu.memory_space<vmem>>) attributes {dimension_semantics = [#tpu.dimension_semantics<parallel>], iteration_bounds = array<i64: 2>, scalar_prefetch = 0 : i64, scratch_operands = 3 : i64, tpu.core_type = #tpu.core_type<tc>, window_params = [{transform_indices = @transform_0, window_bounds = array<i64: 1, 16, 640>}, {pipeline_mode = #tpu.pipeline_mode<synchronous>, transform_indices = @transform_1, window_bounds = array<i64: 16, 144>}, {pipeline_mode = #tpu.pipeline_mode<synchronous>, transform_indices = @transform_2, window_bounds = array<i64: 16, 1>}, {pipeline_mode = #tpu.pipeline_mode<synchronous>, transform_indices = @transform_3, window_bounds = array<i64: 16, 144>}, {pipeline_mode = #tpu.pipeline_mode<synchronous>, transform_indices = @transform_4, window_bounds = array<i64: 16, 1>}, {pipeline_mode = #tpu.pipeline_mode<synchronous>, transform_indices = @transform_5, window_bounds = array<i64: 1, 384>}, {pipeline_mode = #tpu.pipeline_mode<synchronous>, transform_indices = @transform_6, window_bounds = array<i64: 2, 16>}, {pipeline_mode = #tpu.pipeline_mode<synchronous>, transform_indices = @transform_7, window_bounds = array<i64: 2, 1>}, {pipeline_mode = #tpu.pipeline_mode<synchronous>, transform_indices = @transform_8, window_bounds = array<i64: 16, 2>}, {pipeline_mode = #tpu.pipeline_mode<synchronous>, transform_indices = @transform_9, window_bounds = array<i64: 16, 1>}, {pipeline_mode = #tpu.pipeline_mode<synchronous>, transform_indices = @transform_10, window_bounds = array<i64: 2, 16>}, {pipeline_mode = #tpu.pipeline_mode<synchronous>, transform_indices = @transform_11, window_bounds = array<i64: 2, 1>}, {pipeline_mode = #tpu.pipeline_mode<synchronous>, transform_indices = @transform_12, window_bounds = array<i64: 1, 2>}, {pipeline_mode = #tpu.pipeline_mode<synchronous>, transform_indices = @transform_13, window_bounds = array<i64: 1, 1>}, {transform_indices = @transform_14, window_bounds = array<i64: 1, 16, 384>}]} {
    %cst = arith.constant 0.000000e+00 : f32
    %0 = vector.broadcast %cst : f32 to vector<16x128xf32>
    %c0 = arith.constant 0 : index
    %c0_0 = arith.constant 0 : index
    %1 = vector.load %arg16[%c0, %c0_0] : memref<16x640xf32, #tpu.memory_space<vmem>>, vector<16x128xf32>
    tpu.vector_store %arg16[%c0, %c0_0], %0 {strides = array<i32>} : memref<16x640xf32, #tpu.memory_space<vmem>>, vector<16x128xf32>,
    %c0_1 = arith.constant 0 : index
    %c512 = arith.constant 512 : index
    %2 = vector.load %arg16[%c0_1, %c512] : memref<16x640xf32, #tpu.memory_space<vmem>>, vector<16x128xf32>
    tpu.vector_store %arg16[%c0_1, %c512], %0 {strides = array<i32>} : memref<16x640xf32, #tpu.memory_space<vmem>>, vector<16x128xf32>,
    %c0_2 = arith.constant 0 : index
    %c0_3 = arith.constant 0 : index
    %c109 = arith.constant 109 : index
    %3 = vector.load %arg1[%c0_2, %c0_3, %c109] : memref<1x16x640xf32, #tpu.memory_space<vmem>>, vector<1x16x384xf32>
    %4 = vector.shape_cast %3 : vector<1x16x384xf32> to vector<16x384xf32>
    %c0_4 = arith.constant 0 : index
    %c0_5 = arith.constant 0 : index
    %5 = vector.load %arg17[%c0_4, %c0_5] : memref<144x384xf32, #tpu.memory_space<vmem>>, vector<16x384xf32>
    tpu.vector_store %arg17[%c0_4, %c0_5], %4 {strides = array<i32>} : memref<144x384xf32, #tpu.memory_space<vmem>>, vector<16x384xf32>,
    %c0_6 = arith.constant 0 : index
    %c0_7 = arith.constant 0 : index
    %c110 = arith.constant 110 : index
    %6 = vector.load %arg1[%c0_6, %c0_7, %c110] : memref<1x16x640xf32, #tpu.memory_space<vmem>>, vector<1x16x384xf32>
    %7 = vector.shape_cast %6 : vector<1x16x384xf32> to vector<16x384xf32>
    %c16 = arith.constant 16 : index
    %c0_8 = arith.constant 0 : index
    %8 = vector.load %arg17[%c16, %c0_8] : memref<144x384xf32, #tpu.memory_space<vmem>>, vector<16x384xf32>
    tpu.vector_store %arg17[%c16, %c0_8], %7 {strides = array<i32>} : memref<144x384xf32, #tpu.memory_space<vmem>>, vector<16x384xf32>,
    %c0_9 = arith.constant 0 : index
    %c0_10 = arith.constant 0 : index
    %c111 = arith.constant 111 : index
    %9 = vector.load %arg1[%c0_9, %c0_10, %c111] : memref<1x16x640xf32, #tpu.memory_space<vmem>>, vector<1x16x384xf32>
    %10 = vector.shape_cast %9 : vector<1x16x384xf32> to vector<16x384xf32>
    %c32 = arith.constant 32 : index
    %c0_11 = arith.constant 0 : index
    %11 = vector.load %arg17[%c32, %c0_11] : memref<144x384xf32, #tpu.memory_space<vmem>>, vector<16x384xf32>
    tpu.vector_store %arg17[%c32, %c0_11], %10 {strides = array<i32>} : memref<144x384xf32, #tpu.memory_space<vmem>>, vector<16x384xf32>,
    %c0_12 = arith.constant 0 : index
    %c0_13 = arith.constant 0 : index
    %c127 = arith.constant 127 : index
    %12 = vector.load %arg1[%c0_12, %c0_13, %c127] : memref<1x16x640xf32, #tpu.memory_space<vmem>>, vector<1x16x384xf32>
    %13 = vector.shape_cast %12 : vector<1x16x384xf32> to vector<16x384xf32>
    %c48 = arith.constant 48 : index
    %c0_14 = arith.constant 0 : index
    %14 = vector.load %arg17[%c48, %c0_14] : memref<144x384xf32, #tpu.memory_space<vmem>>, vector<16x384xf32>
    tpu.vector_store %arg17[%c48, %c0_14], %13 {strides = array<i32>} : memref<144x384xf32, #tpu.memory_space<vmem>>, vector<16x384xf32>,
    %c0_15 = arith.constant 0 : index
    %c0_16 = arith.constant 0 : index
    %c128 = arith.constant 128 : index
    %15 = vector.load %arg1[%c0_15, %c0_16, %c128] : memref<1x16x640xf32, #tpu.memory_space<vmem>>, vector<1x16x384xf32>
    %16 = vector.shape_cast %15 : vector<1x16x384xf32> to vector<16x384xf32>
    %c64 = arith.constant 64 : index
    %c0_17 = arith.constant 0 : index
    %17 = vector.load %arg17[%c64, %c0_17] : memref<144x384xf32, #tpu.memory_space<vmem>>, vector<16x384xf32>
    tpu.vector_store %arg17[%c64, %c0_17], %16 {strides = array<i32>} : memref<144x384xf32, #tpu.memory_space<vmem>>, vector<16x384xf32>,
    %c0_18 = arith.constant 0 : index
    %c0_19 = arith.constant 0 : index
    %c129 = arith.constant 129 : index
    %18 = vector.load %arg1[%c0_18, %c0_19, %c129] : memref<1x16x640xf32, #tpu.memory_space<vmem>>, vector<1x16x384xf32>
    %19 = vector.shape_cast %18 : vector<1x16x384xf32> to vector<16x384xf32>
    %c80 = arith.constant 80 : index
    %c0_20 = arith.constant 0 : index
    %20 = vector.load %arg17[%c80, %c0_20] : memref<144x384xf32, #tpu.memory_space<vmem>>, vector<16x384xf32>
    tpu.vector_store %arg17[%c80, %c0_20], %19 {strides = array<i32>} : memref<144x384xf32, #tpu.memory_space<vmem>>, vector<16x384xf32>,
    %c0_21 = arith.constant 0 : index
    %c0_22 = arith.constant 0 : index
    %c145 = arith.constant 145 : index
    %21 = vector.load %arg1[%c0_21, %c0_22, %c145] : memref<1x16x640xf32, #tpu.memory_space<vmem>>, vector<1x16x384xf32>
    %22 = vector.shape_cast %21 : vector<1x16x384xf32> to vector<16x384xf32>
    %c96 = arith.constant 96 : index
    %c0_23 = arith.constant 0 : index
    %23 = vector.load %arg17[%c96, %c0_23] : memref<144x384xf32, #tpu.memory_space<vmem>>, vector<16x384xf32>
    tpu.vector_store %arg17[%c96, %c0_23], %22 {strides = array<i32>} : memref<144x384xf32, #tpu.memory_space<vmem>>, vector<16x384xf32>,
    %c0_24 = arith.constant 0 : index
    %c0_25 = arith.constant 0 : index
    %c146 = arith.constant 146 : index
    %24 = vector.load %arg1[%c0_24, %c0_25, %c146] : memref<1x16x640xf32, #tpu.memory_space<vmem>>, vector<1x16x384xf32>
    %25 = vector.shape_cast %24 : vector<1x16x384xf32> to vector<16x384xf32>
    %c112 = arith.constant 112 : index
    %c0_26 = arith.constant 0 : index
    %26 = vector.load %arg17[%c112, %c0_26] : memref<144x384xf32, #tpu.memory_space<vmem>>, vector<16x384xf32>
    tpu.vector_store %arg17[%c112, %c0_26], %25 {strides = array<i32>} : memref<144x384xf32, #tpu.memory_space<vmem>>, vector<16x384xf32>,
    %c0_27 = arith.constant 0 : index
    %c0_28 = arith.constant 0 : index
    %c147 = arith.constant 147 : index
    %27 = vector.load %arg1[%c0_27, %c0_28, %c147] : memref<1x16x640xf32, #tpu.memory_space<vmem>>, vector<1x16x384xf32>
    %28 = vector.shape_cast %27 : vector<1x16x384xf32> to vector<16x384xf32>
    %c128_29 = arith.constant 128 : index
    %c0_30 = arith.constant 0 : index
    %29 = vector.load %arg17[%c128_29, %c0_30] : memref<144x384xf32, #tpu.memory_space<vmem>>, vector<16x384xf32>
    tpu.vector_store %arg17[%c128_29, %c0_30], %28 {strides = array<i32>} : memref<144x384xf32, #tpu.memory_space<vmem>>, vector<16x384xf32>,
    %c0_31 = arith.constant 0 : index
    %c0_32 = arith.constant 0 : index
    %30 = vector.load %arg2[%c0_31, %c0_32] : memref<16x144xf32, #tpu.memory_space<vmem>>, vector<16x144xf32>
    %c0_33 = arith.constant 0 : index
    %c0_34 = arith.constant 0 : index
    %31 = vector.load %arg17[%c0_33, %c0_34] : memref<144x384xf32, #tpu.memory_space<vmem>>, vector<144x384xf32>
    %cst_35 = arith.constant dense<0.000000e+00> : vector<16x384xf32>
    %32 = tpu.matmul %30, %31, %cst_35 {dimension_numbers = #tpu.dot_dimension_numbers<[1], [0], [0], [1], [0, 0, 1, 1], [], []>, precision = #tpu.contract_precision<fp32>} : vector<16x144xf32>, vector<144x384xf32>, vector<16x384xf32> -> vector<16x384xf32>
    %c0_36 = arith.constant 0 : index
    %c0_37 = arith.constant 0 : index
    %33 = vector.load %arg3[%c0_36, %c0_37] : memref<16x1xf32, #tpu.memory_space<vmem>>, vector<16x1xf32>
    %34 = vector.broadcast %33 : vector<16x1xf32> to vector<16x384xf32>
    %35 = arith.addf %32, %34 : vector<16x384xf32>
    %cst_38 = arith.constant 0.000000e+00 : f32
    %36 = vector.broadcast %cst_38 : f32 to vector<16x384xf32>
    %37 = arith.maximumf %35, %36 : vector<16x384xf32>
    %c0_39 = arith.constant 0 : index
    %c0_40 = arith.constant 0 : index
    %38 = vector.load %arg6[%c0_39, %c0_40] : memref<1x384xf32, #tpu.memory_space<vmem>>, vector<1x384xf32>
    %39 = vector.broadcast %38 : vector<1x384xf32> to vector<16x384xf32>
    %40 = arith.mulf %37, %39 : vector<16x384xf32>
    %c0_41 = arith.constant 0 : index
    %c0_42 = arith.constant 0 : index
    %c128_43 = arith.constant 128 : index
    %41 = vector.load %arg1[%c0_41, %c0_42, %c128_43] : memref<1x16x640xf32, #tpu.memory_space<vmem>>, vector<1x16x384xf32>
    %42 = vector.shape_cast %41 : vector<1x16x384xf32> to vector<16x384xf32>
    %43 = arith.addf %40, %42 : vector<16x384xf32>
    %c0_44 = arith.constant 0 : index
    %c128_45 = arith.constant 128 : index
    %44 = vector.load %arg16[%c0_44, %c128_45] : memref<16x640xf32, #tpu.memory_space<vmem>>, vector<16x384xf32>
    tpu.vector_store %arg16[%c0_44, %c128_45], %43 {strides = array<i32>} : memref<16x640xf32, #tpu.memory_space<vmem>>, vector<16x384xf32>,
    %cst_46 = arith.constant 0.000000e+00 : f32
    %45 = vector.broadcast %cst_46 : f32 to vector<16x1xf32>
    %c0_47 = arith.constant 0 : index
    %c0_48 = arith.constant 0 : index
    %46 = vector.load %arg18[%c0_47, %c0_48] : memref<16x1xf32, #tpu.memory_space<vmem>>, vector<16x1xf32>
    tpu.vector_store %arg18[%c0_47, %c0_48], %45 {strides = array<i32>} : memref<16x1xf32, #tpu.memory_space<vmem>>, vector<16x1xf32>,
    %c0_49 = arith.constant 0 : index
    %c109_50 = arith.constant 109 : index
    %47 = vector.load %arg16[%c0_49, %c109_50] : memref<16x640xf32, #tpu.memory_space<vmem>>, vector<16x384xf32>
    %c0_51 = arith.constant 0 : index
    %c0_52 = arith.constant 0 : index
    %48 = vector.load %arg17[%c0_51, %c0_52] : memref<144x384xf32, #tpu.memory_space<vmem>>, vector<16x384xf32>
    tpu.vector_store %arg17[%c0_51, %c0_52], %47 {strides = array<i32>} : memref<144x384xf32, #tpu.memory_space<vmem>>, vector<16x384xf32>,
    %c0_53 = arith.constant 0 : index
    %c110_54 = arith.constant 110 : index
    %49 = vector.load %arg16[%c0_53, %c110_54] : memref<16x640xf32, #tpu.memory_space<vmem>>, vector<16x384xf32>
    %c16_55 = arith.constant 16 : index
    %c0_56 = arith.constant 0 : index
    %50 = vector.load %arg17[%c16_55, %c0_56] : memref<144x384xf32, #tpu.memory_space<vmem>>, vector<16x384xf32>
    tpu.vector_store %arg17[%c16_55, %c0_56], %49 {strides = array<i32>} : memref<144x384xf32, #tpu.memory_space<vmem>>, vector<16x384xf32>,
    %c0_57 = arith.constant 0 : index
    %c111_58 = arith.constant 111 : index
    %51 = vector.load %arg16[%c0_57, %c111_58] : memref<16x640xf32, #tpu.memory_space<vmem>>, vector<16x384xf32>
    %c32_59 = arith.constant 32 : index
    %c0_60 = arith.constant 0 : index
    %52 = vector.load %arg17[%c32_59, %c0_60] : memref<144x384xf32, #tpu.memory_space<vmem>>, vector<16x384xf32>
    tpu.vector_store %arg17[%c32_59, %c0_60], %51 {strides = array<i32>} : memref<144x384xf32, #tpu.memory_space<vmem>>, vector<16x384xf32>,
    %c0_61 = arith.constant 0 : index
    %c127_62 = arith.constant 127 : index
    %53 = vector.load %arg16[%c0_61, %c127_62] : memref<16x640xf32, #tpu.memory_space<vmem>>, vector<16x384xf32>
    %c48_63 = arith.constant 48 : index
    %c0_64 = arith.constant 0 : index
    %54 = vector.load %arg17[%c48_63, %c0_64] : memref<144x384xf32, #tpu.memory_space<vmem>>, vector<16x384xf32>
    tpu.vector_store %arg17[%c48_63, %c0_64], %53 {strides = array<i32>} : memref<144x384xf32, #tpu.memory_space<vmem>>, vector<16x384xf32>,
    %c0_65 = arith.constant 0 : index
    %c128_66 = arith.constant 128 : index
    %55 = vector.load %arg16[%c0_65, %c128_66] : memref<16x640xf32, #tpu.memory_space<vmem>>, vector<16x384xf32>
    %c64_67 = arith.constant 64 : index
    %c0_68 = arith.constant 0 : index
    %56 = vector.load %arg17[%c64_67, %c0_68] : memref<144x384xf32, #tpu.memory_space<vmem>>, vector<16x384xf32>
    tpu.vector_store %arg17[%c64_67, %c0_68], %55 {strides = array<i32>} : memref<144x384xf32, #tpu.memory_space<vmem>>, vector<16x384xf32>,
    %c0_69 = arith.constant 0 : index
    %c129_70 = arith.constant 129 : index
    %57 = vector.load %arg16[%c0_69, %c129_70] : memref<16x640xf32, #tpu.memory_space<vmem>>, vector<16x384xf32>
    %c80_71 = arith.constant 80 : index
    %c0_72 = arith.constant 0 : index
    %58 = vector.load %arg17[%c80_71, %c0_72] : memref<144x384xf32, #tpu.memory_space<vmem>>, vector<16x384xf32>
    tpu.vector_store %arg17[%c80_71, %c0_72], %57 {strides = array<i32>} : memref<144x384xf32, #tpu.memory_space<vmem>>, vector<16x384xf32>,
    %c0_73 = arith.constant 0 : index
    %c145_74 = arith.constant 145 : index
    %59 = vector.load %arg16[%c0_73, %c145_74] : memref<16x640xf32, #tpu.memory_space<vmem>>, vector<16x384xf32>
    %c96_75 = arith.constant 96 : index
    %c0_76 = arith.constant 0 : index
    %60 = vector.load %arg17[%c96_75, %c0_76] : memref<144x384xf32, #tpu.memory_space<vmem>>, vector<16x384xf32>
    tpu.vector_store %arg17[%c96_75, %c0_76], %59 {strides = array<i32>} : memref<144x384xf32, #tpu.memory_space<vmem>>, vector<16x384xf32>,
    %c0_77 = arith.constant 0 : index
    %c146_78 = arith.constant 146 : index
    %61 = vector.load %arg16[%c0_77, %c146_78] : memref<16x640xf32, #tpu.memory_space<vmem>>, vector<16x384xf32>
    %c112_79 = arith.constant 112 : index
    %c0_80 = arith.constant 0 : index
    %62 = vector.load %arg17[%c112_79, %c0_80] : memref<144x384xf32, #tpu.memory_space<vmem>>, vector<16x384xf32>
    tpu.vector_store %arg17[%c112_79, %c0_80], %61 {strides = array<i32>} : memref<144x384xf32, #tpu.memory_space<vmem>>, vector<16x384xf32>,
    %c0_81 = arith.constant 0 : index
    %c147_82 = arith.constant 147 : index
    %63 = vector.load %arg16[%c0_81, %c147_82] : memref<16x640xf32, #tpu.memory_space<vmem>>, vector<16x384xf32>
    %c128_83 = arith.constant 128 : index
    %c0_84 = arith.constant 0 : index
    %64 = vector.load %arg17[%c128_83, %c0_84] : memref<144x384xf32, #tpu.memory_space<vmem>>, vector<16x384xf32>
    tpu.vector_store %arg17[%c128_83, %c0_84], %63 {strides = array<i32>} : memref<144x384xf32, #tpu.memory_space<vmem>>, vector<16x384xf32>,
    %c0_85 = arith.constant 0 : index
    %c0_86 = arith.constant 0 : index
    %65 = vector.load %arg4[%c0_85, %c0_86] : memref<16x144xf32, #tpu.memory_space<vmem>>, vector<16x144xf32>
    %c0_87 = arith.constant 0 : index
    %c0_88 = arith.constant 0 : index
    %66 = vector.load %arg17[%c0_87, %c0_88] : memref<144x384xf32, #tpu.memory_space<vmem>>, vector<144x384xf32>
    %cst_89 = arith.constant dense<0.000000e+00> : vector<16x384xf32>
    %67 = tpu.matmul %65, %66, %cst_89 {dimension_numbers = #tpu.dot_dimension_numbers<[1], [0], [0], [1], [0, 0, 1, 1], [], []>, precision = #tpu.contract_precision<fp32>} : vector<16x144xf32>, vector<144x384xf32>, vector<16x384xf32> -> vector<16x384xf32>
    %c0_90 = arith.constant 0 : index
    %c0_91 = arith.constant 0 : index
    %68 = vector.load %arg18[%c0_90, %c0_91] : memref<16x1xf32, #tpu.memory_space<vmem>>, vector<16x1xf32>
    %c0_92 = arith.constant 0 : index
    %c0_93 = arith.constant 0 : index
    %69 = vector.load %arg6[%c0_92, %c0_93] : memref<1x384xf32, #tpu.memory_space<vmem>>, vector<1x384xf32>
    %70 = vector.broadcast %69 : vector<1x384xf32> to vector<16x384xf32>
    %71 = arith.mulf %67, %70 : vector<16x384xf32>
    %cst_94 = arith.constant dense<0.000000e+00> : vector<16xf32>
    %72 = vector.multi_reduction <add>, %71, %cst_94 [1] : vector<16x384xf32> to vector<16xf32>
    %73 = vector.shape_cast %72 : vector<16xf32> to vector<16x1xf32>
    %74 = arith.addf %68, %73 : vector<16x1xf32>
    %c0_95 = arith.constant 0 : index
    %c0_96 = arith.constant 0 : index
    %75 = vector.load %arg18[%c0_95, %c0_96] : memref<16x1xf32, #tpu.memory_space<vmem>>, vector<16x1xf32>
    tpu.vector_store %arg18[%c0_95, %c0_96], %74 {strides = array<i32>} : memref<16x1xf32, #tpu.memory_space<vmem>>, vector<16x1xf32>,
    %c0_97 = arith.constant 0 : index
    %c0_98 = arith.constant 0 : index
    %76 = vector.load %arg5[%c0_97, %c0_98] : memref<16x1xf32, #tpu.memory_space<vmem>>, vector<16x1xf32>
    %77 = vector.broadcast %76 : vector<16x1xf32> to vector<16x384xf32>
    %78 = arith.addf %67, %77 : vector<16x384xf32>
    %c0_99 = arith.constant 0 : index
    %c0_100 = arith.constant 0 : index
    %c0_101 = arith.constant 0 : index
    %79 = vector.load %arg15[%c0_99, %c0_100, %c0_101] : memref<1x16x384xf32, #tpu.memory_space<vmem>>, vector<1x16x384xf32>
    %80 = vector.shape_cast %79 : vector<1x16x384xf32> to vector<16x384xf32>
    %81 = vector.shape_cast %78 : vector<16x384xf32> to vector<1x16x384xf32>
    tpu.vector_store %arg15[%c0_99, %c0_100, %c0_101], %81 {strides = array<i32>} : memref<1x16x384xf32, #tpu.memory_space<vmem>>, vector<1x16x384xf32>,
    %c0_102 = arith.constant 0 : index
    %c0_103 = arith.constant 0 : index
    %82 = vector.load %arg18[%c0_102, %c0_103] : memref<16x1xf32, #tpu.memory_space<vmem>>, vector<16x1xf32>
    %c0_104 = arith.constant 0 : index
    %c0_105 = arith.constant 0 : index
    %83 = vector.load %arg5[%c0_104, %c0_105] : memref<16x1xf32, #tpu.memory_space<vmem>>, vector<16x1xf32>
    %cst_106 = arith.constant 2.560000e+02 : f32
    %84 = vector.broadcast %cst_106 : f32 to vector<16x1xf32>
    %85 = arith.mulf %83, %84 : vector<16x1xf32>
    %86 = arith.addf %82, %85 : vector<16x1xf32>
    %cst_107 = arith.constant 3.906250e-03 : f32
    %87 = vector.broadcast %cst_107 : f32 to vector<16x1xf32>
    %88 = arith.mulf %86, %87 : vector<16x1xf32>
    %89 = vector.shape_cast %88 : vector<16x1xf32> to vector<16x1xf32>
    %90 = vector.broadcast %89 : vector<16x1xf32> to vector<16x128xf32>
    %c0_108 = arith.constant 0 : index
    %c0_109 = arith.constant 0 : index
    %91 = vector.load %arg7[%c0_108, %c0_109] : memref<2x16xf32, #tpu.memory_space<vmem>>, vector<2x16xf32>
    %cst_110 = arith.constant dense<0.000000e+00> : vector<2x128xf32>
    %92 = tpu.matmul %91, %90, %cst_110 {dimension_numbers = #tpu.dot_dimension_numbers<[1], [0], [0], [1], [0, 0, 1, 1], [], []>, precision = #tpu.contract_precision<fp32>} : vector<2x16xf32>, vector<16x128xf32>, vector<2x128xf32> -> vector<2x128xf32>
    %c0_111 = arith.constant 0 : index
    %c0_112 = arith.constant 0 : index
    %93 = vector.load %arg8[%c0_111, %c0_112] : memref<2x1xf32, #tpu.memory_space<vmem>>, vector<2x1xf32>
    %94 = vector.broadcast %93 : vector<2x1xf32> to vector<2x128xf32>
    %95 = arith.addf %92, %94 : vector<2x128xf32>
    %cst_113 = arith.constant 0.000000e+00 : f32
    %96 = vector.broadcast %cst_113 : f32 to vector<2x128xf32>
    %97 = arith.maximumf %95, %96 : vector<2x128xf32>
    %c0_114 = arith.constant 0 : index
    %c0_115 = arith.constant 0 : index
    %98 = vector.load %arg9[%c0_114, %c0_115] : memref<16x2xf32, #tpu.memory_space<vmem>>, vector<16x2xf32>
    %cst_116 = arith.constant dense<0.000000e+00> : vector<16x128xf32>
    %99 = tpu.matmul %98, %97, %cst_116 {dimension_numbers = #tpu.dot_dimension_numbers<[1], [0], [0], [1], [0, 0, 1, 1], [], []>, precision = #tpu.contract_precision<fp32>} : vector<16x2xf32>, vector<2x128xf32>, vector<16x128xf32> -> vector<16x128xf32>
    %c0_117 = arith.constant 0 : index
    %c0_118 = arith.constant 0 : index
    %100 = vector.load %arg10[%c0_117, %c0_118] : memref<16x1xf32, #tpu.memory_space<vmem>>, vector<16x1xf32>
    %101 = vector.broadcast %100 : vector<16x1xf32> to vector<16x128xf32>
    %102 = arith.addf %99, %101 : vector<16x128xf32>
    %103 = arith.negf %102 : vector<16x128xf32>
    %104 = math.exp %103 : vector<16x128xf32>
    %cst_119 = arith.constant 1.000000e+00 : f32
    %105 = vector.broadcast %cst_119 : f32 to vector<16x128xf32>
    %106 = arith.addf %105, %104 : vector<16x128xf32>
    %107 = arith.divf %105, %106 : vector<16x128xf32>
    %108 = vector.extract_strided_slice %107 {offsets = [0, 0], sizes = [16, 1], strides = [1, 1]} : vector<16x128xf32> to vector<16x1xf32>
    %c0_120 = arith.constant 0 : index
    %c0_121 = arith.constant 0 : index
    %c0_122 = arith.constant 0 : index
    %109 = vector.load %arg15[%c0_120, %c0_121, %c0_122] : memref<1x16x384xf32, #tpu.memory_space<vmem>>, vector<1x16x384xf32>
    %110 = vector.shape_cast %109 : vector<1x16x384xf32> to vector<16x384xf32>
    %111 = vector.broadcast %108 : vector<16x1xf32> to vector<16x384xf32>
    %112 = arith.mulf %110, %111 : vector<16x384xf32>
    %c0_123 = arith.constant 0 : index
    %c0_124 = arith.constant 0 : index
    %113 = vector.load %arg11[%c0_123, %c0_124] : memref<2x16xf32, #tpu.memory_space<vmem>>, vector<2x16xf32>
    %cst_125 = arith.constant dense<0.000000e+00> : vector<2x384xf32>
    %114 = tpu.matmul %113, %112, %cst_125 {dimension_numbers = #tpu.dot_dimension_numbers<[1], [0], [0], [1], [0, 0, 1, 1], [], []>, precision = #tpu.contract_precision<fp32>} : vector<2x16xf32>, vector<16x384xf32>, vector<2x384xf32> -> vector<2x384xf32>
    %c0_126 = arith.constant 0 : index
    %c0_127 = arith.constant 0 : index
    %115 = vector.load %arg12[%c0_126, %c0_127] : memref<2x1xf32, #tpu.memory_space<vmem>>, vector<2x1xf32>
    %116 = vector.broadcast %115 : vector<2x1xf32> to vector<2x384xf32>
    %117 = arith.addf %114, %116 : vector<2x384xf32>
    %cst_128 = arith.constant 0.000000e+00 : f32
    %118 = vector.broadcast %cst_128 : f32 to vector<2x384xf32>
    %119 = arith.maximumf %117, %118 : vector<2x384xf32>
    %c0_129 = arith.constant 0 : index
    %c0_130 = arith.constant 0 : index
    %120 = vector.load %arg13[%c0_129, %c0_130] : memref<1x2xf32, #tpu.memory_space<vmem>>, vector<1x2xf32>
    %cst_131 = arith.constant dense<0.000000e+00> : vector<1x384xf32>
    %121 = tpu.matmul %120, %119, %cst_131 {dimension_numbers = #tpu.dot_dimension_numbers<[1], [0], [0], [1], [0, 0, 1, 1], [], []>, precision = #tpu.contract_precision<fp32>} : vector<1x2xf32>, vector<2x384xf32>, vector<1x384xf32> -> vector<1x384xf32>
    %c0_132 = arith.constant 0 : index
    %c0_133 = arith.constant 0 : index
    %122 = vector.load %arg14[%c0_132, %c0_133] : memref<1x1xf32, #tpu.memory_space<vmem>>, vector<1x1xf32>
    %123 = vector.broadcast %122 : vector<1x1xf32> to vector<1x384xf32>
    %124 = arith.addf %121, %123 : vector<1x384xf32>
    %125 = arith.negf %124 : vector<1x384xf32>
    %126 = math.exp %125 : vector<1x384xf32>
    %cst_134 = arith.constant 1.000000e+00 : f32
    %127 = vector.broadcast %cst_134 : f32 to vector<1x384xf32>
    %128 = arith.addf %127, %126 : vector<1x384xf32>
    %129 = arith.divf %127, %128 : vector<1x384xf32>
    %130 = vector.broadcast %129 : vector<1x384xf32> to vector<16x384xf32>
    %131 = arith.mulf %112, %130 : vector<16x384xf32>
    %c0_135 = arith.constant 0 : index
    %c0_136 = arith.constant 0 : index
    %c128_137 = arith.constant 128 : index
    %132 = vector.load %arg1[%c0_135, %c0_136, %c128_137] : memref<1x16x640xf32, #tpu.memory_space<vmem>>, vector<1x16x384xf32>
    %133 = vector.shape_cast %132 : vector<1x16x384xf32> to vector<16x384xf32>
    %134 = arith.addf %131, %133 : vector<16x384xf32>
    %c0_138 = arith.constant 0 : index
    %c0_139 = arith.constant 0 : index
    %c0_140 = arith.constant 0 : index
    %135 = vector.load %arg15[%c0_138, %c0_139, %c0_140] : memref<1x16x384xf32, #tpu.memory_space<vmem>>, vector<1x16x384xf32>
    %136 = vector.shape_cast %135 : vector<1x16x384xf32> to vector<16x384xf32>
    %137 = vector.shape_cast %134 : vector<16x384xf32> to vector<1x16x384xf32>
    tpu.vector_store %arg15[%c0_138, %c0_139, %c0_140], %137 {strides = array<i32>} : memref<1x16x384xf32, #tpu.memory_space<vmem>>, vector<1x16x384xf32>,
    return
  }
  func.func @transform_0(%arg0: i32) -> (i32, i32, i32) {
    %c0_i32 = arith.constant 0 : i32
    %c0_i32_0 = arith.constant 0 : i32
    %c0_i32_1 = arith.constant 0 : i32
    return %arg0, %c0_i32, %c0_i32_0 : i32, i32, i32
  }
  func.func @transform_1(%arg0: i32) -> (i32, i32) {
    %c0_i32 = arith.constant 0 : i32
    %c0_i32_0 = arith.constant 0 : i32
    %c0_i32_1 = arith.constant 0 : i32
    return %c0_i32, %c0_i32_0 : i32, i32
  }
  func.func @transform_2(%arg0: i32) -> (i32, i32) {
    %c0_i32 = arith.constant 0 : i32
    %c0_i32_0 = arith.constant 0 : i32
    %c0_i32_1 = arith.constant 0 : i32
    return %c0_i32, %c0_i32_0 : i32, i32
  }
  func.func @transform_3(%arg0: i32) -> (i32, i32) {
    %c0_i32 = arith.constant 0 : i32
    %c0_i32_0 = arith.constant 0 : i32
    %c0_i32_1 = arith.constant 0 : i32
    return %c0_i32, %c0_i32_0 : i32, i32
  }
  func.func @transform_4(%arg0: i32) -> (i32, i32) {
    %c0_i32 = arith.constant 0 : i32
    %c0_i32_0 = arith.constant 0 : i32
    %c0_i32_1 = arith.constant 0 : i32
    return %c0_i32, %c0_i32_0 : i32, i32
  }
  func.func @transform_5(%arg0: i32) -> (i32, i32) {
    %c0_i32 = arith.constant 0 : i32
    %c0_i32_0 = arith.constant 0 : i32
    %c0_i32_1 = arith.constant 0 : i32
    return %c0_i32, %c0_i32_0 : i32, i32
  }
  func.func @transform_6(%arg0: i32) -> (i32, i32) {
    %c0_i32 = arith.constant 0 : i32
    %c0_i32_0 = arith.constant 0 : i32
    %c0_i32_1 = arith.constant 0 : i32
    return %c0_i32, %c0_i32_0 : i32, i32
  }
  func.func @transform_7(%arg0: i32) -> (i32, i32) {
    %c0_i32 = arith.constant 0 : i32
    %c0_i32_0 = arith.constant 0 : i32
    %c0_i32_1 = arith.constant 0 : i32
    return %c0_i32, %c0_i32_0 : i32, i32
  }
  func.func @transform_8(%arg0: i32) -> (i32, i32) {
    %c0_i32 = arith.constant 0 : i32
    %c0_i32_0 = arith.constant 0 : i32
    %c0_i32_1 = arith.constant 0 : i32
    return %c0_i32, %c0_i32_0 : i32, i32
  }
  func.func @transform_9(%arg0: i32) -> (i32, i32) {
    %c0_i32 = arith.constant 0 : i32
    %c0_i32_0 = arith.constant 0 : i32
    %c0_i32_1 = arith.constant 0 : i32
    return %c0_i32, %c0_i32_0 : i32, i32
  }
  func.func @transform_10(%arg0: i32) -> (i32, i32) {
    %c0_i32 = arith.constant 0 : i32
    %c0_i32_0 = arith.constant 0 : i32
    %c0_i32_1 = arith.constant 0 : i32
    return %c0_i32, %c0_i32_0 : i32, i32
  }
  func.func @transform_11(%arg0: i32) -> (i32, i32) {
    %c0_i32 = arith.constant 0 : i32
    %c0_i32_0 = arith.constant 0 : i32
    %c0_i32_1 = arith.constant 0 : i32
    return %c0_i32, %c0_i32_0 : i32, i32
  }
  func.func @transform_12(%arg0: i32) -> (i32, i32) {
    %c0_i32 = arith.constant 0 : i32
    %c0_i32_0 = arith.constant 0 : i32
    %c0_i32_1 = arith.constant 0 : i32
    return %c0_i32, %c0_i32_0 : i32, i32
  }
  func.func @transform_13(%arg0: i32) -> (i32, i32) {
    %c0_i32 = arith.constant 0 : i32
    %c0_i32_0 = arith.constant 0 : i32
    %c0_i32_1 = arith.constant 0 : i32
    return %c0_i32, %c0_i32_0 : i32, i32
  }
  func.func @transform_14(%arg0: i32) -> (i32, i32, i32) {
    %c0_i32 = arith.constant 0 : i32
    %c0_i32_0 = arith.constant 0 : i32
    %c0_i32_1 = arith.constant 0 : i32
    return %arg0, %c0_i32, %c0_i32_0 : i32, i32, i32
  }
}

</mosaic_0001>

<llo_original>
// kernel: dehaze_block.1
$region0: #{dehaze_block.1}
  #allocation0 [shape = 'u32[]', space=smem, size = 0x4, offset = 0x4, fixed_abs, tag = 'smem constant byte address 0x4 - core index']
  #allocation1 [shape = 'u32[144,128]{1,0:T(1,128)}', space=vmem, size = 0x12000, scoped, tag = 'internal scratch']
  #allocation2 [shape = 'f32[16,640]{1,0:T(8,128)}', space=vmem, size = 0xa000, scoped, tag = 'scratch operand']
  #allocation3 [shape = 'f32[144,384]{1,0:T(8,128)}', space=vmem, size = 0x36000, scoped, tag = 'scratch operand']
  #allocation4 [shape = 'f32[16,1]{1,0:T(8,128)}', space=vmem, size = 0x2000, scoped, tag = 'scratch operand']
  #allocation5 [shape = 'f32[1,1]{1,0:T(1,128)S(1)}', space=vmem, size = 0x200, scoped, tag = 'scoped memory for dehaze_block.1']
  %s0 = inlined_call_operand.vmem [shape: f32[2,16,640], index: 0, kind: input, shape index: {}]
  %s1 = inlined_call_operand.vmem [shape: f32[16,144], index: 1, kind: input, shape index: {}]
  %s2 = inlined_call_operand.vmem [shape: f32[16,1], index: 2, kind: input, shape index: {}]
  %s3 = inlined_call_operand.vmem [shape: f32[16,144], index: 3, kind: input, shape index: {}]
  %s4 = inlined_call_operand.vmem [shape: f32[16,1], index: 4, kind: input, shape index: {}]
  %s5 = inlined_call_operand.vmem [shape: f32[1,384], index: 5, kind: input, shape index: {}]
  %s6 = inlined_call_operand.vmem [shape: f32[2,16], index: 6, kind: input, shape index: {}]
  %s7 = inlined_call_operand.vmem [shape: f32[2,1], index: 7, kind: input, shape index: {}]
  %s8 = inlined_call_operand.vmem [shape: f32[16,2], index: 8, kind: input, shape index: {}]
  %s9 = inlined_call_operand.vmem [shape: f32[16,1], index: 9, kind: input, shape index: {}]
  %s10 = inlined_call_operand.vmem [shape: f32[2,16], index: 10, kind: input, shape index: {}]
  %s11 = inlined_call_operand.vmem [shape: f32[2,1], index: 11, kind: input, shape index: {}]
  %s12 = inlined_call_operand.vmem [shape: f32[1,2], index: 12, kind: input, shape index: {}]
  %s13 = inlined_call_operand.<no memory space> [shape: f32[1,1], index: 13, kind: input, shape index: {}]
  %s14 = inlined_call_operand.vmem [shape: f32[2,16,384], index: 14, kind: output, shape index: {}]
  %s15 = sld [smem:[#allocation0]]
  $region89: #{dehaze_block.1} parent=0
    _
  %s17 = ssub.s32 1, %s15
  %s18 = scalar_select 0, %s17, %s15
  %v19 = vstv %s13
  %20 = vst [vmem:[#allocation5] sm:$0x1] %v19
  loop: start=0, step=1, limit=4
  $region2: #{dehaze_block.1} parent=0 // loop_pre_header
    _
  $region3: #{dehaze_block.1} parent=0 // loop_header
    %s22 = sphi 0, %s26
    %p23 = scmp.ge.s32.totalorder %s22, 4
    %s32 = sphi 0, %s34
    %s35 = sphi 0, %s32
    %s36 = sphi 0, %s35
    %s52 = sphi 0, %s36
    %s56 = sphi 0, %s56
    %s58 = sphi 0, %s56
    %s59 = sphi 0, %s58
    %s73 = sphi 0, %s59
    %s77 = sphi 0, %s77
    %s79 = sphi 0, %s77
    %s80 = sphi 0, %s79
    %s94 = sphi 0, %s80
    %s98 = sphi 0, %s98
    %s100 = sphi 0, %s98
    %s101 = sphi 0, %s100
    %s115 = sphi 0, %s101
    %s119 = sphi 0, %s119
    %s121 = sphi 0, %s119
    %s122 = sphi 0, %s121
    %s136 = sphi 0, %s122
    %s140 = sphi 0, %s140
    %s142 = sphi 0, %s140
    %s143 = sphi 0, %s142
    %s157 = sphi 0, %s143
    %s161 = sphi 0, %s161
    %s163 = sphi 0, %s161
    %s164 = sphi 0, %s163
    %s178 = sphi 0, %s164
    %s182 = sphi 0, %s182
    %s184 = sphi 0, %s182
    %s185 = sphi 0, %s184
    %s199 = sphi 0, %s185
    %s203 = sphi 0, %s203
    %s205 = sphi 0, %s203
    %s206 = sphi 0, %s205
    %s220 = sphi 0, %s206
    %s224 = sphi 0, %s224
    %s226 = sphi 0, %s224
    %s227 = sphi 0, %s226
    %s241 = sphi 0, %s227
    %s245 = sphi 0, %s245
    %s247 = sphi 0, %s245
    %s248 = sphi 0, %s247
    %s262 = sphi 0, %s248
    %s266 = sphi 0, %s266
    %s268 = sphi 0, %s266
    %s269 = sphi 0, %s268
    %s283 = sphi 0, %s269
    %s287 = sphi 0, %s287
    %s289 = sphi 0, %s287
    %s290 = sphi 0, %s289
    %s304 = sphi 0, %s290
    %s308 = sphi 0, %s308
    %s310 = sphi 0, %s308
    %s311 = sphi 0, %s310
    %s325 = sphi 0, %s311
    %s331 = sphi 0, %s333
    %s334 = sphi 0, %s331
    %s335 = sphi 0, %s334
    %s351 = sphi 0, %s335
  $region4: #{dehaze_block.1} parent=0 // loop_header_branch
    %25 = sbr.rel (%p23) target = $region8
  $region5: #{dehaze_block.1} parent=0 // loop_body
    %s27 = ssub.s32 %s22, 1
    %s28 = ssub.s32 %s22, 2
    %s29 = sadd.s32 %s22, 1
    %s30 = ssub.s32 %s22, %s29
    %p31 = scmp.eq.s32.totalorder %s30, 0
    %s33 = sadd.s32 %s32, 1
    %s34 = scalar_select %p31, %s32, %s33
    %p37 = pneg %p31
    %p38 = scmp.eq.s32.totalorder %s22, 1
    %p39 = por %p37, %p38
    %p40 = scmp.ne.s32.totalorder %s32, %s35
    %p41 = scmp.eq.s32.totalorder %s22, 0
    %p42 = por %p40, %p41
    %p43 = scmp.ne.s32.totalorder %s32, %s35
    %p44 = scmp.eq.s32.totalorder %s27, 1
    %p45 = por %p43, %p44
    %p46 = scmp.ne.s32.totalorder %s35, %s36
    %p47 = scmp.eq.s32.totalorder %s27, 0
    %p48 = por %p46, %p47
    %p49 = scmp.ne.s32.totalorder %s35, %s36
    %p50 = scmp.eq.s32.totalorder %s28, 1
    %p51 = por %p49, %p50
    %p53 = scmp.ne.s32.totalorder %s36, %s52
    %p54 = scmp.eq.s32.totalorder %s28, 0
    %p55 = por %p53, %p54
    %s57 = sadd.s32 %s56, 1
    %p60 = scmp.eq.s32.totalorder %s22, 1
    %p61 = scmp.ne.s32.totalorder %s56, %s58
    %p62 = scmp.eq.s32.totalorder %s22, 0
    %p63 = por %p61, %p62
    %p64 = scmp.ne.s32.totalorder %s56, %s58
    %p65 = scmp.eq.s32.totalorder %s27, 1
    %p66 = por %p64, %p65
    %p67 = scmp.ne.s32.totalorder %s58, %s59
    %p68 = scmp.eq.s32.totalorder %s27, 0
    %p69 = por %p67, %p68
    %p70 = scmp.ne.s32.totalorder %s58, %s59
    %p71 = scmp.eq.s32.totalorder %s28, 1
    %p72 = por %p70, %p71
    %p74 = scmp.ne.s32.totalorder %s59, %s73
    %p75 = scmp.eq.s32.totalorder %s28, 0
    %p76 = por %p74, %p75
    %s78 = sadd.s32 %s77, 1
    %p81 = scmp.eq.s32.totalorder %s22, 1
    %p82 = scmp.ne.s32.totalorder %s77, %s79
    %p83 = scmp.eq.s32.totalorder %s22, 0
    %p84 = por %p82, %p83
    %p85 = scmp.ne.s32.totalorder %s77, %s79
    %p86 = scmp.eq.s32.totalorder %s27, 1
    %p87 = por %p85, %p86
    %p88 = scmp.ne.s32.totalorder %s79, %s80
    %p89 = scmp.eq.s32.totalorder %s27, 0
    %p90 = por %p88, %p89
    %p91 = scmp.ne.s32.totalorder %s79, %s80
    %p92 = scmp.eq.s32.totalorder %s28, 1
    %p93 = por %p91, %p92
    %p95 = scmp.ne.s32.totalorder %s80, %s94
    %p96 = scmp.eq.s32.totalorder %s28, 0
    %p97 = por %p95, %p96
    %s99 = sadd.s32 %s98, 1
    %p102 = scmp.eq.s32.totalorder %s22, 1
    %p103 = scmp.ne.s32.totalorder %s98, %s100
    %p104 = scmp.eq.s32.totalorder %s22, 0
    %p105 = por %p103, %p104
    %p106 = scmp.ne.s32.totalorder %s98, %s100
    %p107 = scmp.eq.s32.totalorder %s27, 1
    %p108 = por %p106, %p107
    %p109 = scmp.ne.s32.totalorder %s100, %s101
    %p110 = scmp.eq.s32.totalorder %s27, 0
    %p111 = por %p109, %p110
    %p112 = scmp.ne.s32.totalorder %s100, %s101
    %p113 = scmp.eq.s32.totalorder %s28, 1
    %p114 = por %p112, %p113
    %p116 = scmp.ne.s32.totalorder %s101, %s115
    %p117 = scmp.eq.s32.totalorder %s28, 0
    %p118 = por %p116, %p117
    %s120 = sadd.s32 %s119, 1
    %p123 = scmp.eq.s32.totalorder %s22, 1
    %p124 = scmp.ne.s32.totalorder %s119, %s121
    %p125 = scmp.eq.s32.totalorder %s22, 0
    %p126 = por %p124, %p125
    %p127 = scmp.ne.s32.totalorder %s119, %s121
    %p128 = scmp.eq.s32.totalorder %s27, 1
    %p129 = por %p127, %p128
    %p130 = scmp.ne.s32.totalorder %s121, %s122
    %p131 = scmp.eq.s32.totalorder %s27, 0
    %p132 = por %p130, %p131
    %p133 = scmp.ne.s32.totalorder %s121, %s122
    %p134 = scmp.eq.s32.totalorder %s28, 1
    %p135 = por %p133, %p134
    %p137 = scmp.ne.s32.totalorder %s122, %s136
    %p138 = scmp.eq.s32.totalorder %s28, 0
    %p139 = por %p137, %p138
    %s141 = sadd.s32 %s140, 1
    %p144 = scmp.eq.s32.totalorder %s22, 1
    %p145 = scmp.ne.s32.totalorder %s140, %s142
    %p146 = scmp.eq.s32.totalorder %s22, 0
    %p147 = por %p145, %p146
    %p148 = scmp.ne.s32.totalorder %s140, %s142
    %p149 = scmp.eq.s32.totalorder %s27, 1
    %p150 = por %p148, %p149
    %p151 = scmp.ne.s32.totalorder %s142, %s143
    %p152 = scmp.eq.s32.totalorder %s27, 0
    %p153 = por %p151, %p152
    %p154 = scmp.ne.s32.totalorder %s142, %s143
    %p155 = scmp.eq.s32.totalorder %s28, 1
    %p156 = por %p154, %p155
    %p158 = scmp.ne.s32.totalorder %s143, %s157
    %p159 = scmp.eq.s32.totalorder %s28, 0
    %p160 = por %p158, %p159
    %s162 = sadd.s32 %s161, 1
    %p165 = scmp.eq.s32.totalorder %s22, 1
    %p166 = scmp.ne.s32.totalorder %s161, %s163
    %p167 = scmp.eq.s32.totalorder %s22, 0
    %p168 = por %p166, %p167
    %p169 = scmp.ne.s32.totalorder %s161, %s163
    %p170 = scmp.eq.s32.totalorder %s27, 1
    %p171 = por %p169, %p170
    %p172 = scmp.ne.s32.totalorder %s163, %s164
    %p173 = scmp.eq.s32.totalorder %s27, 0
    %p174 = por %p172, %p173
    %p175 = scmp.ne.s32.totalorder %s163, %s164
    %p176 = scmp.eq.s32.totalorder %s28, 1
    %p177 = por %p175, %p176
    %p179 = scmp.ne.s32.totalorder %s164, %s178
    %p180 = scmp.eq.s32.totalorder %s28, 0
    %p181 = por %p179, %p180
    %s183 = sadd.s32 %s182, 1
    %p186 = scmp.eq.s32.totalorder %s22, 1
    %p187 = scmp.ne.s32.totalorder %s182, %s184
    %p188 = scmp.eq.s32.totalorder %s22, 0
    %p189 = por %p187, %p188
    %p190 = scmp.ne.s32.totalorder %s182, %s184
    %p191 = scmp.eq.s32.totalorder %s27, 1
    %p192 = por %p190, %p191
    %p193 = scmp.ne.s32.totalorder %s184, %s185
    %p194 = scmp.eq.s32.totalorder %s27, 0
    %p195 = por %p193, %p194
    %p196 = scmp.ne.s32.totalorder %s184, %s185
    %p197 = scmp.eq.s32.totalorder %s28, 1
    %p198 = por %p196, %p197
    %p200 = scmp.ne.s32.totalorder %s185, %s199
    %p201 = scmp.eq.s32.totalorder %s28, 0
    %p202 = por %p200, %p201
    %s204 = sadd.s32 %s203, 1
    %p207 = scmp.eq.s32.totalorder %s22, 1
    %p208 = scmp.ne.s32.totalorder %s203, %s205
    %p209 = scmp.eq.s32.totalorder %s22, 0
    %p210 = por %p208, %p209
    %p211 = scmp.ne.s32.totalorder %s203, %s205
    %p212 = scmp.eq.s32.totalorder %s27, 1
    %p213 = por %p211, %p212
    %p214 = scmp.ne.s32.totalorder %s205, %s206
    %p215 = scmp.eq.s32.totalorder %s27, 0
    %p216 = por %p214, %p215
    %p217 = scmp.ne.s32.totalorder %s205, %s206
    %p218 = scmp.eq.s32.totalorder %s28, 1
    %p219 = por %p217, %p218
    %p221 = scmp.ne.s32.totalorder %s206, %s220
    %p222 = scmp.eq.s32.totalorder %s28, 0
    %p223 = por %p221, %p222
    %s225 = sadd.s32 %s224, 1
    %p228 = scmp.eq.s32.totalorder %s22, 1
    %p229 = scmp.ne.s32.totalorder %s224, %s226
    %p230 = scmp.eq.s32.totalorder %s22, 0
    %p231 = por %p229, %p230
    %p232 = scmp.ne.s32.totalorder %s224, %s226
    %p233 = scmp.eq.s32.totalorder %s27, 1
    %p234 = por %p232, %p233
    %p235 = scmp.ne.s32.totalorder %s226, %s227
    %p236 = scmp.eq.s32.totalorder %s27, 0
    %p237 = por %p235, %p236
    %p238 = scmp.ne.s32.totalorder %s226, %s227
    %p239 = scmp.eq.s32.totalorder %s28, 1
    %p240 = por %p238, %p239
    %p242 = scmp.ne.s32.totalorder %s227, %s241
    %p243 = scmp.eq.s32.totalorder %s28, 0
    %p244 = por %p242, %p243
    %s246 = sadd.s32 %s245, 1
    %p249 = scmp.eq.s32.totalorder %s22, 1
    %p250 = scmp.ne.s32.totalorder %s245, %s247
    %p251 = scmp.eq.s32.totalorder %s22, 0
    %p252 = por %p250, %p251
    %p253 = scmp.ne.s32.totalorder %s245, %s247
    %p254 = scmp.eq.s32.totalorder %s27, 1
    %p255 = por %p253, %p254
    %p256 = scmp.ne.s32.totalorder %s247, %s248
    %p257 = scmp.eq.s32.totalorder %s27, 0
    %p258 = por %p256, %p257
    %p259 = scmp.ne.s32.totalorder %s247, %s248
    %p260 = scmp.eq.s32.totalorder %s28, 1
    %p261 = por %p259, %p260
    %p263 = scmp.ne.s32.totalorder %s248, %s262
    %p264 = scmp.eq.s32.totalorder %s28, 0
    %p265 = por %p263, %p264
    %s267 = sadd.s32 %s266, 1
    %p270 = scmp.eq.s32.totalorder %s22, 1
    %p271 = scmp.ne.s32.totalorder %s266, %s268
    %p272 = scmp.eq.s32.totalorder %s22, 0
    %p273 = por %p271, %p272
    %p274 = scmp.ne.s32.totalorder %s266, %s268
    %p275 = scmp.eq.s32.totalorder %s27, 1
    %p276 = por %p274, %p275
    %p277 = scmp.ne.s32.totalorder %s268, %s269
    %p278 = scmp.eq.s32.totalorder %s27, 0
    %p279 = por %p277, %p278
    %p280 = scmp.ne.s32.totalorder %s268, %s269
    %p281 = scmp.eq.s32.totalorder %s28, 1
    %p282 = por %p280, %p281
    %p284 = scmp.ne.s32.totalorder %s269, %s283
    %p285 = scmp.eq.s32.totalorder %s28, 0
    %p286 = por %p284, %p285
    %s288 = sadd.s32 %s287, 1
    %p291 = scmp.eq.s32.totalorder %s22, 1
    %p292 = scmp.ne.s32.totalorder %s287, %s289
    %p293 = scmp.eq.s32.totalorder %s22, 0
    %p294 = por %p292, %p293
    %p295 = scmp.ne.s32.totalorder %s287, %s289
    %p296 = scmp.eq.s32.totalorder %s27, 1
    %p297 = por %p295, %p296
    %p298 = scmp.ne.s32.totalorder %s289, %s290
    %p299 = scmp.eq.s32.totalorder %s27, 0
    %p300 = por %p298, %p299
    %p301 = scmp.ne.s32.totalorder %s289, %s290
    %p302 = scmp.eq.s32.totalorder %s28, 1
    %p303 = por %p301, %p302
    %p305 = scmp.ne.s32.totalorder %s290, %s304
    %p306 = scmp.eq.s32.totalorder %s28, 0
    %p307 = por %p305, %p306
    %s309 = sadd.s32 %s308, 1
    %p312 = scmp.eq.s32.totalorder %s22, 1
    %p313 = scmp.ne.s32.totalorder %s308, %s310
    %p314 = scmp.eq.s32.totalorder %s22, 0
    %p315 = por %p313, %p314
    %p316 = scmp.ne.s32.totalorder %s308, %s310
    %p317 = scmp.eq.s32.totalorder %s27, 1
    %p318 = por %p316, %p317
    %p319 = scmp.ne.s32.totalorder %s310, %s311
    %p320 = scmp.eq.s32.totalorder %s27, 0
    %p321 = por %p319, %p320
    %p322 = scmp.ne.s32.totalorder %s310, %s311
    %p323 = scmp.eq.s32.totalorder %s28, 1
    %p324 = por %p322, %p323
    %p326 = scmp.ne.s32.totalorder %s311, %s325
    %p327 = scmp.eq.s32.totalorder %s28, 0
    %p328 = por %p326, %p327
    %s329 = ssub.s32 %s22, %s29
    %p330 = scmp.eq.s32.totalorder %s329, 0
    %s332 = sadd.s32 %s331, 1
    %s333 = scalar_select %p330, %s331, %s332
    %p336 = pneg %p330
    %p337 = scmp.eq.s32.totalorder %s22, 1
    %p338 = por %p336, %p337
    %p339 = scmp.ne.s32.totalorder %s331, %s334
    %p340 = scmp.eq.s32.totalorder %s22, 0
    %p341 = por %p339, %p340
    %p342 = scmp.ne.s32.totalorder %s331, %s334
    %p343 = scmp.eq.s32.totalorder %s27, 1
    %p344 = por %p342, %p343
    %p345 = scmp.ne.s32.totalorder %s334, %s335
    %p346 = scmp.eq.s32.totalorder %s27, 0
    %p347 = por %p345, %p346
    %p348 = scmp.ne.s32.totalorder %s334, %s335
    %p349 = scmp.eq.s32.totalorder %s28, 1
    %p350 = por %p348, %p349
    %p352 = scmp.ne.s32.totalorder %s335, %s351
    %p353 = scmp.eq.s32.totalorder %s28, 0
    %p354 = por %p352, %p353
    %p355 = scmp.le.s32.totalorder 1, %s22
    %p356 = scmp.lt.s32.totalorder %s22, 3
    %p357 = pnand %p355, %p356
    %p358 = pneg %p357
    // Predicated region
    $region9: #{dehaze_block.1} parent=5 // pred_check
      _
    $region10: #{dehaze_block.1} parent=5 // pred_check_branch
      %360 = sbr.rel (%p357) target = $region12
    $region11: #{dehaze_block.1} parent=5 // pred_region
      %s361 = ssub.s32 %s22, 1
      // Predicated region
      $region13: #{dehaze_block.1} parent=11 // pred_check
        %p362 = pneg %p69
      $region14: #{dehaze_block.1} parent=11 // pred_check_branch
        %364 = sbr.rel (%p362) target = $region16
      $region15: #{dehaze_block.1} parent=11 // pred_region
        _
      $region16: #{dehaze_block.1} parent=11 // pred_fallthru
        _
      // Predicated region
      $region17: #{dehaze_block.1} parent=11 // pred_check
        %p365 = pneg %p90
      $region18: #{dehaze_block.1} parent=11 // pred_check_branch
        %367 = sbr.rel (%p365) target = $region20
      $region19: #{dehaze_block.1} parent=11 // pred_region
        _
      $region20: #{dehaze_block.1} parent=11 // pred_fallthru
        _
      // Predicated region
      $region21: #{dehaze_block.1} parent=11 // pred_check
        %p368 = pneg %p111
      $region22: #{dehaze_block.1} parent=11 // pred_check_branch
        %370 = sbr.rel (%p368) target = $region24
      $region23: #{dehaze_block.1} parent=11 // pred_region
        _
      $region24: #{dehaze_block.1} parent=11 // pred_fallthru
        _
      // Predicated region
      $region25: #{dehaze_block.1} parent=11 // pred_check
        %p371 = pneg %p132
      $region26: #{dehaze_block.1} parent=11 // pred_check_branch
        %373 = sbr.rel (%p371) target = $region28
      $region27: #{dehaze_block.1} parent=11 // pred_region
        _
      $region28: #{dehaze_block.1} parent=11 // pred_fallthru
        _
      // Predicated region
      $region29: #{dehaze_block.1} parent=11 // pred_check
        %p374 = pneg %p153
      $region30: #{dehaze_block.1} parent=11 // pred_check_branch
        %376 = sbr.rel (%p374) target = $region32
      $region31: #{dehaze_block.1} parent=11 // pred_region
        _
      $region32: #{dehaze_block.1} parent=11 // pred_fallthru
        _
      // Predicated region
      $region33: #{dehaze_block.1} parent=11 // pred_check
        %p377 = pneg %p174
      $region34: #{dehaze_block.1} parent=11 // pred_check_branch
        %379 = sbr.rel (%p377) target = $region36
      $region35: #{dehaze_block.1} parent=11 // pred_region
        _
      $region36: #{dehaze_block.1} parent=11 // pred_fallthru
        _
      // Predicated region
      $region37: #{dehaze_block.1} parent=11 // pred_check
        %p380 = pneg %p195
      $region38: #{dehaze_block.1} parent=11 // pred_check_branch
        %382 = sbr.rel (%p380) target = $region40
      $region39: #{dehaze_block.1} parent=11 // pred_region
        _
      $region40: #{dehaze_block.1} parent=11 // pred_fallthru
        _
      // Predicated region
      $region41: #{dehaze_block.1} parent=11 // pred_check
        %p383 = pneg %p216
      $region42: #{dehaze_block.1} parent=11 // pred_check_branch
        %385 = sbr.rel (%p383) target = $region44
      $region43: #{dehaze_block.1} parent=11 // pred_region
        _
      $region44: #{dehaze_block.1} parent=11 // pred_fallthru
        _
      // Predicated region
      $region45: #{dehaze_block.1} parent=11 // pred_check
        %p386 = pneg %p237
      $region46: #{dehaze_block.1} parent=11 // pred_check_branch
        %388 = sbr.rel (%p386) target = $region48
      $region47: #{dehaze_block.1} parent=11 // pred_region
        _
      $region48: #{dehaze_block.1} parent=11 // pred_fallthru
        _
      // Predicated region
      $region49: #{dehaze_block.1} parent=11 // pred_check
        %p389 = pneg %p258
      $region50: #{dehaze_block.1} parent=11 // pred_check_branch
        %391 = sbr.rel (%p389) target = $region52
      $region51: #{dehaze_block.1} parent=11 // pred_region
        _
      $region52: #{dehaze_block.1} parent=11 // pred_fallthru
        _
      // Predicated region
      $region53: #{dehaze_block.1} parent=11 // pred_check
        %p392 = pneg %p279
      $region54: #{dehaze_block.1} parent=11 // pred_check_branch
        %394 = sbr.rel (%p392) target = $region56
      $region55: #{dehaze_block.1} parent=11 // pred_region
        _
      $region56: #{dehaze_block.1} parent=11 // pred_fallthru
        _
      // Predicated region
      $region57: #{dehaze_block.1} parent=11 // pred_check
        %p395 = pneg %p300
      $region58: #{dehaze_block.1} parent=11 // pred_check_branch
        %397 = sbr.rel (%p395) target = $region60
      $region59: #{dehaze_block.1} parent=11 // pred_region
        _
      $region60: #{dehaze_block.1} parent=11 // pred_fallthru
        _
      // Predicated region
      $region61: #{dehaze_block.1} parent=11 // pred_check
        %p398 = pneg %p321
      $region62: #{dehaze_block.1} parent=11 // pred_check_branch
        %400 = sbr.rel (%p398) target = $region64
      $region63: #{dehaze_block.1} parent=11 // pred_region
        _
      $region64: #{dehaze_block.1} parent=11 // pred_fallthru
        _
    $region12: #{dehaze_block.1} parent=5 // pred_fallthru
      _
    %p401 = scmp.lt.s32.totalorder %s22, 2
    // Predicated region
    $region65: #{dehaze_block.1} parent=5 // pred_check
      %p402 = pneg %p401
    $region66: #{dehaze_block.1} parent=5 // pred_check_branch
      %404 = sbr.rel (%p402) target = $region68
    $region67: #{dehaze_block.1} parent=5 // pred_region
      // Predicated region
      $region69: #{dehaze_block.1} parent=67 // pred_check
        %p405 = pneg %p42
      $region70: #{dehaze_block.1} parent=67 // pred_check_branch
        %407 = sbr.rel (%p405) target = $region72
      $region71: #{dehaze_block.1} parent=67 // pred_region
        %p408 = scmp.lt.s32.totalorder %s22, 1
        %s409 = scalar_select %p408, %s22, 1
        %s410 = smul.addr %s409, 10
        %s411 = smul.addr %s410, 8
        %s412 = scalar_lea.vmem %s0, %s411
      $region72: #{dehaze_block.1} parent=67 // pred_fallthru
        _
    $region68: #{dehaze_block.1} parent=5 // pred_fallthru
      _
    %p413 = scmp.le.s32.totalorder 1, %s22
    %p414 = scmp.lt.s32.totalorder %s22, 3
    %p415 = pnand %p413, %p414
    %p416 = pneg %p415
    // Predicated region
    $region73: #{dehaze_block.1} parent=5 // pred_check
      _
    $region74: #{dehaze_block.1} parent=5 // pred_check_branch
      %418 = sbr.rel (%p415) target = $region76
    $region75: #{dehaze_block.1} parent=5 // pred_region
      %s419 = ssub.s32 %s22, 1
      %p420 = scmp.lt.s32.totalorder %s27, 1
      %s421 = scalar_select %p420, %s27, 1
      %s422 = smul.addr %s421, 10
      %s423 = smul.addr %s422, 8
      %s424 = scalar_lea.vmem %s0, %s423
      %p425 = pneg %p48
      %p426 = pneg %p45
      %p427 = pneg %p69
      %p428 = pneg %p66
      %p429 = pneg %p90
      %p430 = pneg %p87
      %p431 = pneg %p111
      %p432 = pneg %p108
      %p433 = pneg %p132
      %p434 = pneg %p129
      %p435 = pneg %p153
      %p436 = pneg %p150
      %p437 = pneg %p174
      %p438 = pneg %p171
      %p439 = pneg %p195
      %p440 = pneg %p192
      %p441 = pneg %p216
      %p442 = pneg %p213
      %p443 = pneg %p237
      %p444 = pneg %p234
      %p445 = pneg %p258
      %p446 = pneg %p255
      %p447 = pneg %p279
      %p448 = pneg %p276
      %p449 = pneg %p300
      %p450 = pneg %p297
      %p451 = pneg %p321
      %p452 = pneg %p318
      %p453 = pneg %p347
      %p454 = pneg %p344
      %p455 = scmp.lt.s32.totalorder %s27, 1
      %s456 = scalar_select %p455, %s27, 1
      %s457 = smul.addr %s456, 6
      %s458 = smul.addr %s457, 8
      %s459 = scalar_lea.vmem %s14, %s458
      %p460 = scmp.lt.s32.totalorder %s27, 1
      %s461 = scalar_select %p460, %s27, 1
      %s462 = smul.addr %s461, 10
      %s463 = smul.addr %s462, 8
      %s464 = scalar_lea.vmem %s0, %s463
      %p465 = scmp.lt.s32.totalorder %s27, 1
      %s466 = scalar_select %p465, %s27, 1
      %s467 = smul.addr %s466, 6
      %s468 = smul.addr %s467, 8
      %s469 = scalar_lea.vmem %s14, %s468
      %470 = vst [vmem:[#allocation2] sm:$0xff] 0.0
      %471 = vst [vmem:[#allocation2 + $0x28] sm:$0xff] 0.0
      %472 = vst [vmem:[#allocation2 + $0x20] sm:$0xff] 0.0
      %473 = vst [vmem:[#allocation2 + $0x48] sm:$0xff] 0.0
      %v474 = vld [vmem:[%s464] sm:$0xff]
      %v475 = vld [vmem:[%s464 + $0x8] sm:$0xff]
      %v476 = vld [vmem:[%s464 + $0x10] sm:$0xff]
      %v477 = vld [vmem:[%s464 + $0x18] sm:$0xff]
      %v478 = vld [vmem:[%s464 + $0x28] sm:$0xff]
      %v479 = vld [vmem:[%s464 + $0x30] sm:$0xff]
      %v480 = vld [vmem:[%s464 + $0x38] sm:$0xff]
      %v481 = vld [vmem:[%s464 + $0x40] sm:$0xff]
      %490 = vrot.lane.b32.xlu0 %v474, 19
      %v491 = vpop.permute.xlu0 %490
      %492 = vrot.lane.b32.xlu0 %v475, 19
      %v493 = vpop.permute.xlu0 %492
      %494 = vrot.lane.b32.xlu0 %v476, 19
      %v495 = vpop.permute.xlu0 %494
      %496 = vrot.lane.b32.xlu0 %v477, 19
      %v497 = vpop.permute.xlu0 %496
      %498 = vrot.lane.b32.xlu0 %v478, 19
      %v499 = vpop.permute.xlu0 %498
      %500 = vrot.lane.b32.xlu0 %v479, 19
      %v501 = vpop.permute.xlu0 %500
      %502 = vrot.lane.b32.xlu0 %v480, 19
      %v503 = vpop.permute.xlu0 %502
      %504 = vrot.lane.b32.xlu0 %v481, 19
      %v505 = vpop.permute.xlu0 %504
      %vm506 = vcmask 154624
      %v507 = vsel %vm506, %v491, %v493
      %v508 = vsel %vm506, %v493, %v495
      %v509 = vsel %vm506, %v495, %v497
      %v510 = vsel %vm506, %v499, %v501
      %v511 = vsel %vm506, %v501, %v503
      %v512 = vsel %vm506, %v503, %v505
      %519 = vst [vmem:[#allocation3] sm:$0xff] %v507
      %520 = vst [vmem:[#allocation3 + $0x8] sm:$0xff] %v508
      %521 = vst [vmem:[#allocation3 + $0x10] sm:$0xff] %v509
      %522 = vst [vmem:[#allocation3 + $0x18] sm:$0xff] %v510
      %523 = vst [vmem:[#allocation3 + $0x20] sm:$0xff] %v511
      %524 = vst [vmem:[#allocation3 + $0x28] sm:$0xff] %v512
      %v525 = vld [vmem:[%s464] sm:$0xff]
      %v526 = vld [vmem:[%s464 + $0x8] sm:$0xff]
      %v527 = vld [vmem:[%s464 + $0x10] sm:$0xff]
      %v528 = vld [vmem:[%s464 + $0x18] sm:$0xff]
      %v529 = vld [vmem:[%s464 + $0x28] sm:$0xff]
      %v530 = vld [vmem:[%s464 + $0x30] sm:$0xff]
      %v531 = vld [vmem:[%s464 + $0x38] sm:$0xff]
      %v532 = vld [vmem:[%s464 + $0x40] sm:$0xff]
      %541 = vrot.lane.b32.xlu0 %v525, 18
      %v542 = vpop.permute.xlu0 %541
      %543 = vrot.lane.b32.xlu0 %v526, 18
      %v544 = vpop.permute.xlu0 %543
      %545 = vrot.lane.b32.xlu0 %v527, 18
      %v546 = vpop.permute.xlu0 %545
      %547 = vrot.lane.b32.xlu0 %v528, 18
      %v548 = vpop.permute.xlu0 %547
      %549 = vrot.lane.b32.xlu0 %v529, 18
      %v550 = vpop.permute.xlu0 %549
      %551 = vrot.lane.b32.xlu0 %v530, 18
      %v552 = vpop.permute.xlu0 %551
      %553 = vrot.lane.b32.xlu0 %v531, 18
      %v554 = vpop.permute.xlu0 %553
      %555 = vrot.lane.b32.xlu0 %v532, 18
      %v556 = vpop.permute.xlu0 %555
      %vm557 = vcmask 146432
      %v558 = vsel %vm557, %v542, %v544
      %v559 = vsel %vm557, %v544, %v546
      %v560 = vsel %vm557, %v546, %v548
      %v561 = vsel %vm557, %v550, %v552
      %v562 = vsel %vm557, %v552, %v554
      %v563 = vsel %vm557, %v554, %v556
      %570 = vst [vmem:[#allocation3 + $0x30] sm:$0xff] %v558
      %571 = vst [vmem:[#allocation3 + $0x38] sm:$0xff] %v559
      %572 = vst [vmem:[#allocation3 + $0x40] sm:$0xff] %v560
      %573 = vst [vmem:[#allocation3 + $0x48] sm:$0xff] %v561
      %574 = vst [vmem:[#allocation3 + $0x50] sm:$0xff] %v562
      %575 = vst [vmem:[#allocation3 + $0x58] sm:$0xff] %v563
      %v576 = vld [vmem:[%s464] sm:$0xff]
      %v577 = vld [vmem:[%s464 + $0x8] sm:$0xff]
      %v578 = vld [vmem:[%s464 + $0x10] sm:$0xff]
      %v579 = vld [vmem:[%s464 + $0x18] sm:$0xff]
      %v580 = vld [vmem:[%s464 + $0x28] sm:$0xff]
      %v581 = vld [vmem:[%s464 + $0x30] sm:$0xff]
      %v582 = vld [vmem:[%s464 + $0x38] sm:$0xff]
      %v583 = vld [vmem:[%s464 + $0x40] sm:$0xff]
      %592 = vrot.lane.b32.xlu0 %v576, 17
      %v593 = vpop.permute.xlu0 %592
      %594 = vrot.lane.b32.xlu0 %v577, 17
      %v595 = vpop.permute.xlu0 %594
      %596 = vrot.lane.b32.xlu0 %v578, 17
      %v597 = vpop.permute.xlu0 %596
      %598 = vrot.lane.b32.xlu0 %v579, 17
      %v599 = vpop.permute.xlu0 %598
      %600 = vrot.lane.b32.xlu0 %v580, 17
      %v601 = vpop.permute.xlu0 %600
      %602 = vrot.lane.b32.xlu0 %v581, 17
      %v603 = vpop.permute.xlu0 %602
      %604 = vrot.lane.b32.xlu0 %v582, 17
      %v605 = vpop.permute.xlu0 %604
      %606 = vrot.lane.b32.xlu0 %v583, 17
      %v607 = vpop.permute.xlu0 %606
      %vm608 = vcmask 138240
      %v609 = vsel %vm608, %v593, %v595
      %v610 = vsel %vm608, %v595, %v597
      %v611 = vsel %vm608, %v597, %v599
      %v612 = vsel %vm608, %v601, %v603
      %v613 = vsel %vm608, %v603, %v605
      %v614 = vsel %vm608, %v605, %v607
      %621 = vst [vmem:[#allocation3 + $0x60] sm:$0xff] %v609
      %622 = vst [vmem:[#allocation3 + $0x68] sm:$0xff] %v610
      %623 = vst [vmem:[#allocation3 + $0x70] sm:$0xff] %v611
      %624 = vst [vmem:[#allocation3 + $0x78] sm:$0xff] %v612
      %625 = vst [vmem:[#allocation3 + $0x80] sm:$0xff] %v613
      %626 = vst [vmem:[#allocation3 + $0x88] sm:$0xff] %v614
      %v627 = vld [vmem:[%s464] sm:$0xff]
      %v628 = vld [vmem:[%s464 + $0x8] sm:$0xff]
      %v629 = vld [vmem:[%s464 + $0x10] sm:$0xff]
      %v630 = vld [vmem:[%s464 + $0x18] sm:$0xff]
      %v631 = vld [vmem:[%s464 + $0x28] sm:$0xff]
      %v632 = vld [vmem:[%s464 + $0x30] sm:$0xff]
      %v633 = vld [vmem:[%s464 + $0x38] sm:$0xff]
      %v634 = vld [vmem:[%s464 + $0x40] sm:$0xff]
      %643 = vrot.lane.b32.xlu0 %v627, 1
      %v644 = vpop.permute.xlu0 %643
      %645 = vrot.lane.b32.xlu0 %v628, 1
      %v646 = vpop.permute.xlu0 %645
      %647 = vrot.lane.b32.xlu0 %v629, 1
      %v648 = vpop.permute.xlu0 %647
      %649 = vrot.lane.b32.xlu0 %v630, 1
      %v650 = vpop.permute.xlu0 %649
      %651 = vrot.lane.b32.xlu0 %v631, 1
      %v652 = vpop.permute.xlu0 %651
      %653 = vrot.lane.b32.xlu0 %v632, 1
      %v654 = vpop.permute.xlu0 %653
      %655 = vrot.lane.b32.xlu0 %v633, 1
      %v656 = vpop.permute.xlu0 %655
      %657 = vrot.lane.b32.xlu0 %v634, 1
      %v658 = vpop.permute.xlu0 %657
      %vm659 = vcmask 7168
      %v660 = vsel %vm659, %v644, %v646
      %v661 = vsel %vm659, %v646, %v648
      %v662 = vsel %vm659, %v648, %v650
      %v663 = vsel %vm659, %v652, %v654
      %v664 = vsel %vm659, %v654, %v656
      %v665 = vsel %vm659, %v656, %v658
      %672 = vst [vmem:[#allocation3 + $0x90] sm:$0xff] %v660
      %673 = vst [vmem:[#allocation3 + $0x98] sm:$0xff] %v661
      %674 = vst [vmem:[#allocation3 + $0xa0] sm:$0xff] %v662
      %675 = vst [vmem:[#allocation3 + $0xa8] sm:$0xff] %v663
      %676 = vst [vmem:[#allocation3 + $0xb0] sm:$0xff] %v664
      %677 = vst [vmem:[#allocation3 + $0xb8] sm:$0xff] %v665
      %v678 = vld [vmem:[%s464 + $0x8] sm:$0xff]
      %v679 = vld [vmem:[%s464 + $0x10] sm:$0xff]
      %v680 = vld [vmem:[%s464 + $0x18] sm:$0xff]
      %v681 = vld [vmem:[%s464 + $0x30] sm:$0xff]
      %v682 = vld [vmem:[%s464 + $0x38] sm:$0xff]
      %v683 = vld [vmem:[%s464 + $0x40] sm:$0xff]
      %684 = vst [vmem:[#allocation3 + $0xc0] sm:$0xff] %v678
      %685 = vst [vmem:[#allocation3 + $0xc8] sm:$0xff] %v679
      %686 = vst [vmem:[#allocation3 + $0xd0] sm:$0xff] %v680
      %687 = vst [vmem:[#allocation3 + $0xd8] sm:$0xff] %v681
      %688 = vst [vmem:[#allocation3 + $0xe0] sm:$0xff] %v682
      %689 = vst [vmem:[#allocation3 + $0xe8] sm:$0xff] %v683
      %v690 = vld [vmem:[%s464 + $0x8] sm:$0xff]
      %v691 = vld [vmem:[%s464 + $0x10] sm:$0xff]
      %v692 = vld [vmem:[%s464 + $0x18] sm:$0xff]
      %v693 = vld [vmem:[%s464 + $0x20] sm:$0xff]
      %v694 = vld [vmem:[%s464 + $0x30] sm:$0xff]
      %v695 = vld [vmem:[%s464 + $0x38] sm:$0xff]
      %v696 = vld [vmem:[%s464 + $0x40] sm:$0xff]
      %v697 = vld [vmem:[%s464 + $0x48] sm:$0xff]
      %706 = vrot.lane.b32.xlu0 %v690, 127
      %v707 = vpop.permute.xlu0 %706
      %708 = vrot.lane.b32.xlu0 %v691, 127
      %v709 = vpop.permute.xlu0 %708
      %710 = vrot.lane.b32.xlu0 %v692, 127
      %v711 = vpop.permute.xlu0 %710
      %712 = vrot.lane.b32.xlu0 %v693, 127
      %v713 = vpop.permute.xlu0 %712
      %714 = vrot.lane.b32.xlu0 %v694, 127
      %v715 = vpop.permute.xlu0 %714
      %716 = vrot.lane.b32.xlu0 %v695, 127
      %v717 = vpop.permute.xlu0 %716
      %718 = vrot.lane.b32.xlu0 %v696, 127
      %v719 = vpop.permute.xlu0 %718
      %720 = vrot.lane.b32.xlu0 %v697, 127
      %v721 = vpop.permute.xlu0 %720
      %vm722 = vcmask 1039360
      %v723 = vsel %vm722, %v707, %v709
      %v724 = vsel %vm722, %v709, %v711
      %v725 = vsel %vm722, %v711, %v713
      %v726 = vsel %vm722, %v715, %v717
      %v727 = vsel %vm722, %v717, %v719
      %v728 = vsel %vm722, %v719, %v721
      %735 = vst [vmem:[#allocation3 + $0xf0] sm:$0xff] %v723
      %736 = vst [vmem:[#allocation3 + $0xf8] sm:$0xff] %v724
      %737 = vst [vmem:[#allocation3 + $0x100] sm:$0xff] %v725
      %738 = vst [vmem:[#allocation3 + $0x108] sm:$0xff] %v726
      %739 = vst [vmem:[#allocation3 + $0x110] sm:$0xff] %v727
      %740 = vst [vmem:[#allocation3 + $0x118] sm:$0xff] %v728
      %v741 = vld [vmem:[%s464 + $0x8] sm:$0xff]
      %v742 = vld [vmem:[%s464 + $0x10] sm:$0xff]
      %v743 = vld [vmem:[%s464 + $0x18] sm:$0xff]
      %v744 = vld [vmem:[%s464 + $0x20] sm:$0xff]
      %v745 = vld [vmem:[%s464 + $0x30] sm:$0xff]
      %v746 = vld [vmem:[%s464 + $0x38] sm:$0xff]
      %v747 = vld [vmem:[%s464 + $0x40] sm:$0xff]
      %v748 = vld [vmem:[%s464 + $0x48] sm:$0xff]
      %757 = vrot.lane.b32.xlu0 %v741, 111
      %v758 = vpop.permute.xlu0 %757
      %759 = vrot.lane.b32.xlu0 %v742, 111
      %v760 = vpop.permute.xlu0 %759
      %761 = vrot.lane.b32.xlu0 %v743, 111
      %v762 = vpop.permute.xlu0 %761
      %763 = vrot.lane.b32.xlu0 %v744, 111
      %v764 = vpop.permute.xlu0 %763
      %765 = vrot.lane.b32.xlu0 %v745, 111
      %v766 = vpop.permute.xlu0 %765
      %767 = vrot.lane.b32.xlu0 %v746, 111
      %v768 = vpop.permute.xlu0 %767
      %769 = vrot.lane.b32.xlu0 %v747, 111
      %v770 = vpop.permute.xlu0 %769
      %771 = vrot.lane.b32.xlu0 %v748, 111
      %v772 = vpop.permute.xlu0 %771
      %vm773 = vcmask 908288
      %v774 = vsel %vm773, %v758, %v760
      %v775 = vsel %vm773, %v760, %v762
      %v776 = vsel %vm773, %v762, %v764
      %v777 = vsel %vm773, %v766, %v768
      %v778 = vsel %vm773, %v768, %v770
      %v779 = vsel %vm773, %v770, %v772
      %786 = vst [vmem:[#allocation3 + $0x120] sm:$0xff] %v774
      %787 = vst [vmem:[#allocation3 + $0x128] sm:$0xff] %v775
      %788 = vst [vmem:[#allocation3 + $0x130] sm:$0xff] %v776
      %789 = vst [vmem:[#allocation3 + $0x138] sm:$0xff] %v777
      %790 = vst [vmem:[#allocation3 + $0x140] sm:$0xff] %v778
      %791 = vst [vmem:[#allocation3 + $0x148] sm:$0xff] %v779
      %v792 = vld [vmem:[%s464 + $0x8] sm:$0xff]
      %v793 = vld [vmem:[%s464 + $0x10] sm:$0xff]
      %v794 = vld [vmem:[%s464 + $0x18] sm:$0xff]
      %v795 = vld [vmem:[%s464 + $0x20] sm:$0xff]
      %v796 = vld [vmem:[%s464 + $0x30] sm:$0xff]
      %v797 = vld [vmem:[%s464 + $0x38] sm:$0xff]
      %v798 = vld [vmem:[%s464 + $0x40] sm:$0xff]
      %v799 = vld [vmem:[%s464 + $0x48] sm:$0xff]
      %808 = vrot.lane.b32.xlu0 %v792, 110
      %v809 = vpop.permute.xlu0 %808
      %810 = vrot.lane.b32.xlu0 %v793, 110
      %v811 = vpop.permute.xlu0 %810
      %812 = vrot.lane.b32.xlu0 %v794, 110
      %v813 = vpop.permute.xlu0 %812
      %814 = vrot.lane.b32.xlu0 %v795, 110
      %v815 = vpop.permute.xlu0 %814
      %816 = vrot.lane.b32.xlu0 %v796, 110
      %v817 = vpop.permute.xlu0 %816
      %818 = vrot.lane.b32.xlu0 %v797, 110
      %v819 = vpop.permute.xlu0 %818
      %820 = vrot.lane.b32.xlu0 %v798, 110
      %v821 = vpop.permute.xlu0 %820
      %822 = vrot.lane.b32.xlu0 %v799, 110
      %v823 = vpop.permute.xlu0 %822
      %vm824 = vcmask 900096
      %v825 = vsel %vm824, %v809, %v811
      %v826 = vsel %vm824, %v811, %v813
      %v827 = vsel %vm824, %v813, %v815
      %v828 = vsel %vm824, %v817, %v819
      %v829 = vsel %vm824, %v819, %v821
      %v830 = vsel %vm824, %v821, %v823
      %837 = vst [vmem:[#allocation3 + $0x150] sm:$0xff] %v825
      %838 = vst [vmem:[#allocation3 + $0x158] sm:$0xff] %v826
      %839 = vst [vmem:[#allocation3 + $0x160] sm:$0xff] %v827
      %840 = vst [vmem:[#allocation3 + $0x168] sm:$0xff] %v828
      %841 = vst [vmem:[#allocation3 + $0x170] sm:$0xff] %v829
      %842 = vst [vmem:[#allocation3 + $0x178] sm:$0xff] %v830
      %v843 = vld [vmem:[%s464 + $0x8] sm:$0xff]
      %v844 = vld [vmem:[%s464 + $0x10] sm:$0xff]
      %v845 = vld [vmem:[%s464 + $0x18] sm:$0xff]
      %v846 = vld [vmem:[%s464 + $0x20] sm:$0xff]
      %v847 = vld [vmem:[%s464 + $0x30] sm:$0xff]
      %v848 = vld [vmem:[%s464 + $0x38] sm:$0xff]
      %v849 = vld [vmem:[%s464 + $0x40] sm:$0xff]
      %v850 = vld [vmem:[%s464 + $0x48] sm:$0xff]
      %859 = vrot.lane.b32.xlu0 %v843, 109
      %v860 = vpop.permute.xlu0 %859
      %861 = vrot.lane.b32.xlu0 %v844, 109
      %v862 = vpop.permute.xlu0 %861
      %863 = vrot.lane.b32.xlu0 %v845, 109
      %v864 = vpop.permute.xlu0 %863
      %865 = vrot.lane.b32.xlu0 %v846, 109
      %v866 = vpop.permute.xlu0 %865
      %867 = vrot.lane.b32.xlu0 %v847, 109
      %v868 = vpop.permute.xlu0 %867
      %869 = vrot.lane.b32.xlu0 %v848, 109
      %v870 = vpop.permute.xlu0 %869
      %871 = vrot.lane.b32.xlu0 %v849, 109
      %v872 = vpop.permute.xlu0 %871
      %873 = vrot.lane.b32.xlu0 %v850, 109
      %v874 = vpop.permute.xlu0 %873
      %vm875 = vcmask 891904
      %v876 = vsel %vm875, %v860, %v862
      %v877 = vsel %vm875, %v862, %v864
      %v878 = vsel %vm875, %v864, %v866
      %v879 = vsel %vm875, %v868, %v870
      %v880 = vsel %vm875, %v870, %v872
      %v881 = vsel %vm875, %v872, %v874
      %888 = vst [vmem:[#allocation3 + $0x180] sm:$0xff] %v876
      %889 = vst [vmem:[#allocation3 + $0x188] sm:$0xff] %v877
      %890 = vst [vmem:[#allocation3 + $0x190] sm:$0xff] %v878
      %891 = vst [vmem:[#allocation3 + $0x198] sm:$0xff] %v879
      %892 = vst [vmem:[#allocation3 + $0x1a0] sm:$0xff] %v880
      %893 = vst [vmem:[#allocation3 + $0x1a8] sm:$0xff] %v881
      %v894 = vld [vmem:[%s1] sm:$0xff]
      %v895 = vld [vmem:[%s1 + $0x8] sm:$0xff]
      %v896 = vld [vmem:[%s1 + $0x10] sm:$0xff]
      %v897 = vld [vmem:[%s1 + $0x18] sm:$0xff]
      %v898 = vld [vmem:[#allocation3] sm:$0xff]
      %v899 = vld [vmem:[#allocation3 + $0x8] sm:$0xff]
      %v900 = vld [vmem:[#allocation3 + $0x10] sm:$0xff]
      %v901 = vld [vmem:[#allocation3 + $0x18] sm:$0xff]
      %v902 = vld [vmem:[#allocation3 + $0x20] sm:$0xff]
      %v903 = vld [vmem:[#allocation3 + $0x28] sm:$0xff]
      %v904 = vld [vmem:[#allocation3 + $0x30] sm:$0xff]
      %v905 = vld [vmem:[#allocation3 + $0x38] sm:$0xff]
      %v906 = vld [vmem:[#allocation3 + $0x40] sm:$0xff]
      %v907 = vld [vmem:[#allocation3 + $0x48] sm:$0xff]
      %v908 = vld [vmem:[#allocation3 + $0x50] sm:$0xff]
      %v909 = vld [vmem:[#allocation3 + $0x58] sm:$0xff]
      %v910 = vld [vmem:[#allocation3 + $0x60] sm:$0xff]
      %v911 = vld [vmem:[#allocation3 + $0x68] sm:$0xff]
      %v912 = vld [vmem:[#allocation3 + $0x70] sm:$0xff]
      %v913 = vld [vmem:[#allocation3 + $0x78] sm:$0xff]
      %v914 = vld [vmem:[#allocation3 + $0x80] sm:$0xff]
      %v915 = vld [vmem:[#allocation3 + $0x88] sm:$0xff]
      %v916 = vld [vmem:[#allocation3 + $0x90] sm:$0xff]
      %v917 = vld [vmem:[#allocation3 + $0x98] sm:$0xff]
      %v918 = vld [vmem:[#allocation3 + $0xa0] sm:$0xff]
      %v919 = vld [vmem:[#allocation3 + $0xa8] sm:$0xff]
      %v920 = vld [vmem:[#allocation3 + $0xb0] sm:$0xff]
      %v921 = vld [vmem:[#allocation3 + $0xb8] sm:$0xff]
      %v922 = vld [vmem:[#allocation3 + $0xc0] sm:$0xff]
      %v923 = vld [vmem:[#allocation3 + $0xc8] sm:$0xff]
      %v924 = vld [vmem:[#allocation3 + $0xd0] sm:$0xff]
      %v925 = vld [vmem:[#allocation3 + $0xd8] sm:$0xff]
      %v926 = vld [vmem:[#allocation3 + $0xe0] sm:$0xff]
      %v927 = vld [vmem:[#allocation3 + $0xe8] sm:$0xff]
      %v928 = vld [vmem:[#allocation3 + $0xf0] sm:$0xff]
      %v929 = vld [vmem:[#allocation3 + $0xf8] sm:$0xff]
      %v930 = vld [vmem:[#allocation3 + $0x100] sm:$0xff]
      %v931 = vld [vmem:[#allocation3 + $0x108] sm:$0xff]
      %v932 = vld [vmem:[#allocation3 + $0x110] sm:$0xff]
      %v933 = vld [vmem:[#allocation3 + $0x118] sm:$0xff]
      %v934 = vld [vmem:[#allocation3 + $0x120] sm:$0xff]
      %v935 = vld [vmem:[#allocation3 + $0x128] sm:$0xff]
      %v936 = vld [vmem:[#allocation3 + $0x130] sm:$0xff]
      %v937 = vld [vmem:[#allocation3 + $0x138] sm:$0xff]
      %v938 = vld [vmem:[#allocation3 + $0x140] sm:$0xff]
      %v939 = vld [vmem:[#allocation3 + $0x148] sm:$0xff]
      %v940 = vld [vmem:[#allocation3 + $0x150] sm:$0xff]
      %v941 = vld [vmem:[#allocation3 + $0x158] sm:$0xff]
      %v942 = vld [vmem:[#allocation3 + $0x160] sm:$0xff]
      %v943 = vld [vmem:[#allocation3 + $0x168] sm:$0xff]
      %v944 = vld [vmem:[#allocation3 + $0x170] sm:$0xff]
      %v945 = vld [vmem:[#allocation3 + $0x178] sm:$0xff]
      %v946 = vld [vmem:[#allocation3 + $0x180] sm:$0xff]
      %v947 = vld [vmem:[#allocation3 + $0x188] sm:$0xff]
      %v948 = vld [vmem:[#allocation3 + $0x190] sm:$0xff]
      %v949 = vld [vmem:[#allocation3 + $0x198] sm:$0xff]
      %v950 = vld [vmem:[#allocation3 + $0x1a0] sm:$0xff]
      %v951 = vld [vmem:[#allocation3 + $0x1a8] sm:$0xff]
      %v952 = vld [vmem:[%s2] sm:$0xff]
      %v953 = vld [vmem:[%s2 + $0x8] sm:$0xff]
      %955 = vset.pattern.permute.xlu0 0
      %956 = vperm.xlu0 %955, %v952
      %v957 = vpop.permute.xlu0 %956
      %960 = vset.pattern.permute.xlu0 0
      %961 = vperm.xlu0 %960, %v953
      %v962 = vpop.permute.xlu0 %961
      %vm964 = vcmask 130048
      %v966 = vsel %vm964, %v895, 0
      %v969 = vsel %vm964, %v897, 0
      %v971 = vand.u32 %v899, 4294901760
      %972 = vmatprep.subr.mxu0 %v971
      %v973 = vand.u32 %v898, 4294901760
      %974 = vmatpush1.msra.mxu0 %v973
      %v975 = vand.u32 %v902, 4294901760
      %976 = vmatprep.subr.mxu0 %v975
      %v977 = vand.u32 %v901, 4294901760
      %978 = vmatpush1.msra.mxu0 %v977
      %v979 = vand.u32 %v905, 4294901760
      %980 = vmatprep.subr.mxu0 %v979
      %v981 = vand.u32 %v904, 4294901760
      %982 = vmatpush1.msra.mxu0 %v981
      %v983 = vand.u32 %v908, 4294901760
      %984 = vmatprep.subr.mxu0 %v983
      %v985 = vand.u32 %v907, 4294901760
      %986 = vmatpush1.msra.mxu0 %v985
      %v987 = vand.u32 %v911, 4294901760
      %988 = vmatprep.subr.mxu0 %v987
      %v989 = vand.u32 %v910, 4294901760
      %990 = vmatpush1.msra.mxu0 %v989
      %v991 = vand.u32 %v914, 4294901760
      %992 = vmatprep.subr.mxu0 %v991
      %v993 = vand.u32 %v913, 4294901760
      %994 = vmatpush1.msra.mxu0 %v993
      %v995 = vand.u32 %v917, 4294901760
      %996 = vmatprep.subr.mxu0 %v995
      %v997 = vand.u32 %v916, 4294901760
      %998 = vmatpush1.msra.mxu0 %v997
      %v999 = vand.u32 %v920, 4294901760
      %1000 = vmatprep.subr.mxu0 %v999
      %v1001 = vand.u32 %v919, 4294901760
      %1002 = vmatpush1.msra.mxu0 %v1001
      %v1003 = vand.u32 %v923, 4294901760
      %1004 = vmatprep.subr.mxu0 %v1003
      %v1005 = vand.u32 %v922, 4294901760
      %1006 = vmatpush1.msra.mxu0 %v1005
      %v1007 = vand.u32 %v926, 4294901760
      %1008 = vmatprep.subr.mxu0 %v1007
      %v1009 = vand.u32 %v925, 4294901760
      %1010 = vmatpush1.msra.mxu0 %v1009
      %v1011 = vand.u32 %v929, 4294901760
      %1012 = vmatprep.subr.mxu0 %v1011
      %v1013 = vand.u32 %v928, 4294901760
      %1014 = vmatpush1.msra.mxu0 %v1013
      %v1015 = vand.u32 %v932, 4294901760
      %1016 = vmatprep.subr.mxu0 %v1015
      %v1017 = vand.u32 %v931, 4294901760
      %1018 = vmatpush1.msra.mxu0 %v1017
      %v1019 = vand.u32 %v935, 4294901760
      %1020 = vmatprep.subr.mxu0 %v1019
      %v1021 = vand.u32 %v934, 4294901760
      %1022 = vmatpush1.msra.mxu0 %v1021
      %v1023 = vand.u32 %v938, 4294901760
      %1024 = vmatprep.subr.mxu0 %v1023
      %v1025 = vand.u32 %v937, 4294901760
      %1026 = vmatpush1.msra.mxu0 %v1025
      %v1027 = vand.u32 %v941, 4294901760
      %1028 = vmatprep.subr.mxu0 %v1027
      %v1029 = vand.u32 %v940, 4294901760
      %1030 = vmatpush1.msra.mxu0 %v1029
      %v1031 = vand.u32 %v944, 4294901760
      %1032 = vmatprep.subr.mxu0 %v1031
      %v1033 = vand.u32 %v943, 4294901760
      %1034 = vmatpush1.msra.mxu0 %v1033
      %v1035 = vand.u32 %v947, 4294901760
      %1036 = vmatprep.subr.mxu0 %v1035
      %v1037 = vand.u32 %v946, 4294901760
      %1038 = vmatpush1.msra.mxu0 %v1037
      %v1039 = vand.u32 %v950, 4294901760
      %1040 = vmatprep.subr.mxu0 %v1039
      %v1041 = vand.u32 %v949, 4294901760
      %1042 = vmatpush1.msra.mxu0 %v1041
      %1043 = vmatprep.subr.mxu0 0.0
      %1044 = vmatpush1.msra.mxu0 0.0
      %1045 = vmatprep.subr.mxu0 0.0
      %1046 = vmatpush1.msra.mxu0 0.0
      %1047 = vmatprep.subr.mxu0 0.0
      %1048 = vmatpush1.msra.mxu0 0.0
      %1049 = vmatprep.subr.mxu0 0.0
      %1050 = vmatpush1.msra.mxu0 0.0
      %1051 = vmatprep.subr.mxu0 0.0
      %1052 = vmatpush1.msra.mxu0 0.0
      %1053 = vmatprep.subr.mxu0 0.0
      %1054 = vmatpush1.msra.mxu0 0.0
      %1055 = vmatprep.subr.mxu0 0.0
      %1056 = vmatpush1.msra.mxu0 0.0
      %1057 = vmatprep.subr.mxu0 0.0
      %1058 = vmatpush1.msra.mxu0 0.0
      %1059 = vmatprep.subr.mxu0 0.0
      %1060 = vmatpush1.msra.mxu0 0.0
      %1061 = vmatprep.subr.mxu0 0.0
      %1062 = vmatpush1.msra.mxu0 0.0
      %1063 = vmatprep.subr.mxu0 0.0
      %1064 = vmatpush1.msra.mxu0 0.0
      %1065 = vmatprep.subr.mxu0 0.0
      %1066 = vmatpush1.msra.mxu0 0.0
      %1067 = vmatprep.subr.mxu0 0.0
      %1068 = vmatpush1.msra.mxu0 0.0
      %1069 = vmatprep.subr.mxu0 0.0
      %1070 = vmatpush1.msra.mxu0 0.0
      %v1071 = vand.u32 %v966, 4294901760
      %v1072 = vsub.f32 %v966, %v1071
      %v1073 = vand.u32 %v1072, 4294901760
      %v1074 = vsub.f32 %v1072, %v1073
      %v1075 = vand.u32 %v1074, 4294901760
      %1076 = vmatprep.mubr.f32.mxu0 %v1075
      %v1077 = vand.u32 %v894, 4294901760
      %v1078 = vsub.f32 %v894, %v1077
      %v1079 = vand.u32 %v1078, 4294901760
      %v1080 = vsub.f32 %v1078, %v1079
      %v1081 = vand.u32 %v1080, 4294901760
      %1082 = vmatmul.mubr.f32.gmra.mrb[0].mxu0 %v1081
      %v1083 = vpop.f32.mrb[0].mxu0
      %v1084 = vadd.f32 %v957, %v1083
      %v1085 = vpop.f32.mrb[0].mxu0
      %v1086 = vadd.f32 %v957, %v1085
      %v1087 = vand.u32 %v969, 4294901760
      %v1088 = vsub.f32 %v969, %v1087
      %v1089 = vand.u32 %v1088, 4294901760
      %v1090 = vsub.f32 %v1088, %v1089
      %v1091 = vand.u32 %v1090, 4294901760
      %1092 = vmatprep.mubr.f32.mxu0 %v1091
      %v1093 = vand.u32 %v896, 4294901760
      %v1094 = vsub.f32 %v896, %v1093
      %v1095 = vand.u32 %v1094, 4294901760
      %v1096 = vsub.f32 %v1094, %v1095
      %v1097 = vand.u32 %v1096, 4294901760
      %1098 = vmatmul.mubr.f32.gmra.mrb[0].mxu0 %v1097
      %v1099 = vpop.f32.mrb[0].mxu0
      %v1100 = vadd.f32 %v962, %v1099
      %v1101 = vpop.f32.mrb[0].mxu0
      %v1102 = vadd.f32 %v962, %v1101
      %1103 = vdwg.mxu0
      %v1104 = vand.u32 %v899, 4294901760
      %v1105 = vsub.f32 %v899, %v1104
      %v1106 = vand.u32 %v1105, 4294901760
      %v1107 = vsub.f32 %v1105, %v1106
      %v1108 = vand.u32 %v1107, 4294901760
      %1109 = vmatprep.subr.mxu0 %v1108
      %v1110 = vand.u32 %v898, 4294901760
      %v1111 = vsub.f32 %v898, %v1110
      %v1112 = vand.u32 %v1111, 4294901760
      %v1113 = vsub.f32 %v1111, %v1112
      %v1114 = vand.u32 %v1113, 4294901760
      %1115 = vmatpush1.msra.mxu0 %v1114
      %v1116 = vand.u32 %v902, 4294901760
      %v1117 = vsub.f32 %v902, %v1116
      %v1118 = vand.u32 %v1117, 4294901760
      %v1119 = vsub.f32 %v1117, %v1118
      %v1120 = vand.u32 %v1119, 4294901760
      %1121 = vmatprep.subr.mxu0 %v1120
      %v1122 = vand.u32 %v901, 4294901760
      %v1123 = vsub.f32 %v901, %v1122
      %v1124 = vand.u32 %v1123, 4294901760
      %v1125 = vsub.f32 %v1123, %v1124
      %v1126 = vand.u32 %v1125, 4294901760
      %1127 = vmatpush1.msra.mxu0 %v1126
      %v1128 = vand.u32 %v905, 4294901760
      %v1129 = vsub.f32 %v905, %v1128
      %v1130 = vand.u32 %v1129, 4294901760
      %v1131 = vsub.f32 %v1129, %v1130
      %v1132 = vand.u32 %v1131, 4294901760
      %1133 = vmatprep.subr.mxu0 %v1132
      %v1134 = vand.u32 %v904, 4294901760
      %v1135 = vsub.f32 %v904, %v1134
      %v1136 = vand.u32 %v1135, 4294901760
      %v1137 = vsub.f32 %v1135, %v1136
      %v1138 = vand.u32 %v1137, 4294901760
      %1139 = vmatpush1.msra.mxu0 %v1138
      %v1140 = vand.u32 %v908, 4294901760
      %v1141 = vsub.f32 %v908, %v1140
      %v1142 = vand.u32 %v1141, 4294901760
      %v1143 = vsub.f32 %v1141, %v1142
      %v1144 = vand.u32 %v1143, 4294901760
      %1145 = vmatprep.subr.mxu0 %v1144
      %v1146 = vand.u32 %v907, 4294901760
      %v1147 = vsub.f32 %v907, %v1146
      %v1148 = vand.u32 %v1147, 4294901760
      %v1149 = vsub.f32 %v1147, %v1148
      %v1150 = vand.u32 %v1149, 4294901760
      %1151 = vmatpush1.msra.mxu0 %v1150
      %v1152 = vand.u32 %v911, 4294901760
      %v1153 = vsub.f32 %v911, %v1152
      %v1154 = vand.u32 %v1153, 4294901760
      %v1155 = vsub.f32 %v1153, %v1154
      %v1156 = vand.u32 %v1155, 4294901760
      %1157 = vmatprep.subr.mxu0 %v1156
      %v1158 = vand.u32 %v910, 4294901760
      %v1159 = vsub.f32 %v910, %v1158
      %v1160 = vand.u32 %v1159, 4294901760
      %v1161 = vsub.f32 %v1159, %v1160
      %v1162 = vand.u32 %v1161, 4294901760
      %1163 = vmatpush1.msra.mxu0 %v1162
      %v1164 = vand.u32 %v914, 4294901760
      %v1165 = vsub.f32 %v914, %v1164
      %v1166 = vand.u32 %v1165, 4294901760
      %v1167 = vsub.f32 %v1165, %v1166
      %v1168 = vand.u32 %v1167, 4294901760
      %1169 = vmatprep.subr.mxu0 %v1168
      %v1170 = vand.u32 %v913, 4294901760
      %v1171 = vsub.f32 %v913, %v1170
      %v1172 = vand.u32 %v1171, 4294901760
      %v1173 = vsub.f32 %v1171, %v1172
      %v1174 = vand.u32 %v1173, 4294901760
      %1175 = vmatpush1.msra.mxu0 %v1174
      %v1176 = vand.u32 %v917, 4294901760
      %v1177 = vsub.f32 %v917, %v1176
      %v1178 = vand.u32 %v1177, 4294901760
      %v1179 = vsub.f32 %v1177, %v1178
      %v1180 = vand.u32 %v1179, 4294901760
      %1181 = vmatprep.subr.mxu0 %v1180
      %v1182 = vand.u32 %v916, 4294901760
      %v1183 = vsub.f32 %v916, %v1182
      %v1184 = vand.u32 %v1183, 4294901760
      %v1185 = vsub.f32 %v1183, %v1184
      %v1186 = vand.u32 %v1185, 4294901760
      %1187 = vmatpush1.msra.mxu0 %v1186
      %v1188 = vand.u32 %v920, 4294901760
      %v1189 = vsub.f32 %v920, %v1188
      %v1190 = vand.u32 %v1189, 4294901760
      %v1191 = vsub.f32 %v1189, %v1190
      %v1192 = vand.u32 %v1191, 4294901760
      %1193 = vmatprep.subr.mxu0 %v1192
      %v1194 = vand.u32 %v919, 4294901760
      %v1195 = vsub.f32 %v919, %v1194
      %v1196 = vand.u32 %v1195, 4294901760
      %v1197 = vsub.f32 %v1195, %v1196
      %v1198 = vand.u32 %v1197, 4294901760
      %1199 = vmatpush1.msra.mxu0 %v1198
      %v1200 = vand.u32 %v923, 4294901760
      %v1201 = vsub.f32 %v923, %v1200
      %v1202 = vand.u32 %v1201, 4294901760
      %v1203 = vsub.f32 %v1201, %v1202
      %v1204 = vand.u32 %v1203, 4294901760
      %1205 = vmatprep.subr.mxu0 %v1204
      %v1206 = vand.u32 %v922, 4294901760
      %v1207 = vsub.f32 %v922, %v1206
      %v1208 = vand.u32 %v1207, 4294901760
      %v1209 = vsub.f32 %v1207, %v1208
      %v1210 = vand.u32 %v1209, 4294901760
      %1211 = vmatpush1.msra.mxu0 %v1210
      %v1212 = vand.u32 %v926, 4294901760
      %v1213 = vsub.f32 %v926, %v1212
      %v1214 = vand.u32 %v1213, 4294901760
      %v1215 = vsub.f32 %v1213, %v1214
      %v1216 = vand.u32 %v1215, 4294901760
      %1217 = vmatprep.subr.mxu0 %v1216
      %v1218 = vand.u32 %v925, 4294901760
      %v1219 = vsub.f32 %v925, %v1218
      %v1220 = vand.u32 %v1219, 4294901760
      %v1221 = vsub.f32 %v1219, %v1220
      %v1222 = vand.u32 %v1221, 4294901760
      %1223 = vmatpush1.msra.mxu0 %v1222
      %v1224 = vand.u32 %v929, 4294901760
      %v1225 = vsub.f32 %v929, %v1224
      %v1226 = vand.u32 %v1225, 4294901760
      %v1227 = vsub.f32 %v1225, %v1226
      %v1228 = vand.u32 %v1227, 4294901760
      %1229 = vmatprep.subr.mxu0 %v1228
      %v1230 = vand.u32 %v928, 4294901760
      %v1231 = vsub.f32 %v928, %v1230
      %v1232 = vand.u32 %v1231, 4294901760
      %v1233 = vsub.f32 %v1231, %v1232
      %v1234 = vand.u32 %v1233, 4294901760
      %1235 = vmatpush1.msra.mxu0 %v1234
      %v1236 = vand.u32 %v932, 4294901760
      %v1237 = vsub.f32 %v932, %v1236
      %v1238 = vand.u32 %v1237, 4294901760
      %v1239 = vsub.f32 %v1237, %v1238
      %v1240 = vand.u32 %v1239, 4294901760
      %1241 = vmatprep.subr.mxu0 %v1240
      %v1242 = vand.u32 %v931, 4294901760
      %v1243 = vsub.f32 %v931, %v1242
      %v1244 = vand.u32 %v1243, 4294901760
      %v1245 = vsub.f32 %v1243, %v1244
      %v1246 = vand.u32 %v1245, 4294901760
      %1247 = vmatpush1.msra.mxu0 %v1246
      %v1248 = vand.u32 %v935, 4294901760
      %v1249 = vsub.f32 %v935, %v1248
      %v1250 = vand.u32 %v1249, 4294901760
      %v1251 = vsub.f32 %v1249, %v1250
      %v1252 = vand.u32 %v1251, 4294901760
      %1253 = vmatprep.subr.mxu0 %v1252
      %v1254 = vand.u32 %v934, 4294901760
      %v1255 = vsub.f32 %v934, %v1254
      %v1256 = vand.u32 %v1255, 4294901760
      %v1257 = vsub.f32 %v1255, %v1256
      %v1258 = vand.u32 %v1257, 4294901760
      %1259 = vmatpush1.msra.mxu0 %v1258
      %v1260 = vand.u32 %v938, 4294901760
      %v1261 = vsub.f32 %v938, %v1260
      %v1262 = vand.u32 %v1261, 4294901760
      %v1263 = vsub.f32 %v1261, %v1262
      %v1264 = vand.u32 %v1263, 4294901760
      %1265 = vmatprep.subr.mxu0 %v1264
      %v1266 = vand.u32 %v937, 4294901760
      %v1267 = vsub.f32 %v937, %v1266
      %v1268 = vand.u32 %v1267, 4294901760
      %v1269 = vsub.f32 %v1267, %v1268
      %v1270 = vand.u32 %v1269, 4294901760
      %1271 = vmatpush1.msra.mxu0 %v1270
      %v1272 = vand.u32 %v941, 4294901760
      %v1273 = vsub.f32 %v941, %v1272
      %v1274 = vand.u32 %v1273, 4294901760
      %v1275 = vsub.f32 %v1273, %v1274
      %v1276 = vand.u32 %v1275, 4294901760
      %1277 = vmatprep.subr.mxu0 %v1276
      %v1278 = vand.u32 %v940, 4294901760
      %v1279 = vsub.f32 %v940, %v1278
      %v1280 = vand.u32 %v1279, 4294901760
      %v1281 = vsub.f32 %v1279, %v1280
      %v1282 = vand.u32 %v1281, 4294901760
      %1283 = vmatpush1.msra.mxu0 %v1282
      %v1284 = vand.u32 %v944, 4294901760
      %v1285 = vsub.f32 %v944, %v1284
      %v1286 = vand.u32 %v1285, 4294901760
      %v1287 = vsub.f32 %v1285, %v1286
      %v1288 = vand.u32 %v1287, 4294901760
      %1289 = vmatprep.subr.mxu0 %v1288
      %v1290 = vand.u32 %v943, 4294901760
      %v1291 = vsub.f32 %v943, %v1290
      %v1292 = vand.u32 %v1291, 4294901760
      %v1293 = vsub.f32 %v1291, %v1292
      %v1294 = vand.u32 %v1293, 4294901760
      %1295 = vmatpush1.msra.mxu0 %v1294
      %v1296 = vand.u32 %v947, 4294901760
      %v1297 = vsub.f32 %v947, %v1296
      %v1298 = vand.u32 %v1297, 4294901760
      %v1299 = vsub.f32 %v1297, %v1298
      %v1300 = vand.u32 %v1299, 4294901760
      %1301 = vmatprep.subr.mxu0 %v1300
      %v1302 = vand.u32 %v946, 4294901760
      %v1303 = vsub.f32 %v946, %v1302
      %v1304 = vand.u32 %v1303, 4294901760
      %v1305 = vsub.f32 %v1303, %v1304
      %v1306 = vand.u32 %v1305, 4294901760
      %1307 = vmatpush1.msra.mxu0 %v1306
      %v1308 = vand.u32 %v950, 4294901760
      %v1309 = vsub.f32 %v950, %v1308
      %v1310 = vand.u32 %v1309, 4294901760
      %v1311 = vsub.f32 %v1309, %v1310
      %v1312 = vand.u32 %v1311, 4294901760
      %1313 = vmatprep.subr.mxu0 %v1312
      %v1314 = vand.u32 %v949, 4294901760
      %v1315 = vsub.f32 %v949, %v1314
      %v1316 = vand.u32 %v1315, 4294901760
      %v1317 = vsub.f32 %v1315, %v1316
      %v1318 = vand.u32 %v1317, 4294901760
      %1319 = vmatpush1.msra.mxu0 %v1318
      %1320 = vmatprep.subr.mxu0 0.0
      %1321 = vmatpush1.msra.mxu0 0.0
      %1322 = vmatprep.subr.mxu0 0.0
      %1323 = vmatpush1.msra.mxu0 0.0
      %1324 = vmatprep.subr.mxu0 0.0
      %1325 = vmatpush1.msra.mxu0 0.0
      %1326 = vmatprep.subr.mxu0 0.0
      %1327 = vmatpush1.msra.mxu0 0.0
      %1328 = vmatprep.subr.mxu0 0.0
      %1329 = vmatpush1.msra.mxu0 0.0
      %1330 = vmatprep.subr.mxu0 0.0
      %1331 = vmatpush1.msra.mxu0 0.0
      %1332 = vmatprep.subr.mxu0 0.0
      %1333 = vmatpush1.msra.mxu0 0.0
      %1334 = vmatprep.subr.mxu0 0.0
      %1335 = vmatpush1.msra.mxu0 0.0
      %1336 = vmatprep.subr.mxu0 0.0
      %1337 = vmatpush1.msra.mxu0 0.0
      %1338 = vmatprep.subr.mxu0 0.0
      %1339 = vmatpush1.msra.mxu0 0.0
      %1340 = vmatprep.subr.mxu0 0.0
      %1341 = vmatpush1.msra.mxu0 0.0
      %1342 = vmatprep.subr.mxu0 0.0
      %1343 = vmatpush1.msra.mxu0 0.0
      %1344 = vmatprep.subr.mxu0 0.0
      %1345 = vmatpush1.msra.mxu0 0.0
      %1346 = vmatprep.subr.mxu0 0.0
      %1347 = vmatpush1.msra.mxu0 0.0
      %v1348 = vand.u32 %v966, 4294901760
      %1349 = vmatprep.mubr.f32.mxu0 %v1348
      %v1350 = vand.u32 %v894, 4294901760
      %1351 = vmatmul.mubr.f32.gmra.mrb[0].mxu0 %v1350
      %v1352 = vpop.f32.mrb[0].mxu0
      %v1353 = vadd.f32 %v1084, %v1352
      %v1354 = vpop.f32.mrb[0].mxu0
      %v1355 = vadd.f32 %v1086, %v1354
      %v1356 = vand.u32 %v969, 4294901760
      %1357 = vmatprep.mubr.f32.mxu0 %v1356
      %v1358 = vand.u32 %v896, 4294901760
      %1359 = vmatmul.mubr.f32.gmra.mrb[0].mxu0 %v1358
      %v1360 = vpop.f32.mrb[0].mxu0
      %v1361 = vadd.f32 %v1100, %v1360
      %v1362 = vpop.f32.mrb[0].mxu0
      %v1363 = vadd.f32 %v1102, %v1362
      %1364 = vdwg.mxu0
      %v1365 = vand.u32 %v899, 4294901760
      %v1366 = vsub.f32 %v899, %v1365
      %1367 = vmatprep.subr.mxu0 %v1366
      %v1368 = vand.u32 %v898, 4294901760
      %v1369 = vsub.f32 %v898, %v1368
      %1370 = vmatpush1.msra.mxu0 %v1369
      %v1371 = vand.u32 %v902, 4294901760
      %v1372 = vsub.f32 %v902, %v1371
      %1373 = vmatprep.subr.mxu0 %v1372
      %v1374 = vand.u32 %v901, 4294901760
      %v1375 = vsub.f32 %v901, %v1374
      %1376 = vmatpush1.msra.mxu0 %v1375
      %v1377 = vand.u32 %v905, 4294901760
      %v1378 = vsub.f32 %v905, %v1377
      %1379 = vmatprep.subr.mxu0 %v1378
      %v1380 = vand.u32 %v904, 4294901760
      %v1381 = vsub.f32 %v904, %v1380
      %1382 = vmatpush1.msra.mxu0 %v1381
      %v1383 = vand.u32 %v908, 4294901760
      %v1384 = vsub.f32 %v908, %v1383
      %1385 = vmatprep.subr.mxu0 %v1384
      %v1386 = vand.u32 %v907, 4294901760
      %v1387 = vsub.f32 %v907, %v1386
      %1388 = vmatpush1.msra.mxu0 %v1387
      %v1389 = vand.u32 %v911, 4294901760
      %v1390 = vsub.f32 %v911, %v1389
      %1391 = vmatprep.subr.mxu0 %v1390
      %v1392 = vand.u32 %v910, 4294901760
      %v1393 = vsub.f32 %v910, %v1392
      %1394 = vmatpush1.msra.mxu0 %v1393
      %v1395 = vand.u32 %v914, 4294901760
      %v1396 = vsub.f32 %v914, %v1395
      %1397 = vmatprep.subr.mxu0 %v1396
      %v1398 = vand.u32 %v913, 4294901760
      %v1399 = vsub.f32 %v913, %v1398
      %1400 = vmatpush1.msra.mxu0 %v1399
      %v1401 = vand.u32 %v917, 4294901760
      %v1402 = vsub.f32 %v917, %v1401
      %1403 = vmatprep.subr.mxu0 %v1402
      %v1404 = vand.u32 %v916, 4294901760
      %v1405 = vsub.f32 %v916, %v1404
      %1406 = vmatpush1.msra.mxu0 %v1405
      %v1407 = vand.u32 %v920, 4294901760
      %v1408 = vsub.f32 %v920, %v1407
      %1409 = vmatprep.subr.mxu0 %v1408
      %v1410 = vand.u32 %v919, 4294901760
      %v1411 = vsub.f32 %v919, %v1410
      %1412 = vmatpush1.msra.mxu0 %v1411
      %v1413 = vand.u32 %v923, 4294901760
      %v1414 = vsub.f32 %v923, %v1413
      %1415 = vmatprep.subr.mxu0 %v1414
      %v1416 = vand.u32 %v922, 4294901760
      %v1417 = vsub.f32 %v922, %v1416
      %1418 = vmatpush1.msra.mxu0 %v1417
      %v1419 = vand.u32 %v926, 4294901760
      %v1420 = vsub.f32 %v926, %v1419
      %1421 = vmatprep.subr.mxu0 %v1420
      %v1422 = vand.u32 %v925, 4294901760
      %v1423 = vsub.f32 %v925, %v1422
      %1424 = vmatpush1.msra.mxu0 %v1423
      %v1425 = vand.u32 %v929, 4294901760
      %v1426 = vsub.f32 %v929, %v1425
      %1427 = vmatprep.subr.mxu0 %v1426
      %v1428 = vand.u32 %v928, 4294901760
      %v1429 = vsub.f32 %v928, %v1428
      %1430 = vmatpush1.msra.mxu0 %v1429
      %v1431 = vand.u32 %v932, 4294901760
      %v1432 = vsub.f32 %v932, %v1431
      %1433 = vmatprep.subr.mxu0 %v1432
      %v1434 = vand.u32 %v931, 4294901760
      %v1435 = vsub.f32 %v931, %v1434
      %1436 = vmatpush1.msra.mxu0 %v1435
      %v1437 = vand.u32 %v935, 4294901760
      %v1438 = vsub.f32 %v935, %v1437
      %1439 = vmatprep.subr.mxu0 %v1438
      %v1440 = vand.u32 %v934, 4294901760
      %v1441 = vsub.f32 %v934, %v1440
      %1442 = vmatpush1.msra.mxu0 %v1441
      %v1443 = vand.u32 %v938, 4294901760
      %v1444 = vsub.f32 %v938, %v1443
      %1445 = vmatprep.subr.mxu0 %v1444
      %v1446 = vand.u32 %v937, 4294901760
      %v1447 = vsub.f32 %v937, %v1446
      %1448 = vmatpush1.msra.mxu0 %v1447
      %v1449 = vand.u32 %v941, 4294901760
      %v1450 = vsub.f32 %v941, %v1449
      %1451 = vmatprep.subr.mxu0 %v1450
      %v1452 = vand.u32 %v940, 4294901760
      %v1453 = vsub.f32 %v940, %v1452
      %1454 = vmatpush1.msra.mxu0 %v1453
      %v1455 = vand.u32 %v944, 4294901760
      %v1456 = vsub.f32 %v944, %v1455
      %1457 = vmatprep.subr.mxu0 %v1456
      %v1458 = vand.u32 %v943, 4294901760
      %v1459 = vsub.f32 %v943, %v1458
      %1460 = vmatpush1.msra.mxu0 %v1459
      %v1461 = vand.u32 %v947, 4294901760
      %v1462 = vsub.f32 %v947, %v1461
      %1463 = vmatprep.subr.mxu0 %v1462
      %v1464 = vand.u32 %v946, 4294901760
      %v1465 = vsub.f32 %v946, %v1464
      %1466 = vmatpush1.msra.mxu0 %v1465
      %v1467 = vand.u32 %v950, 4294901760
      %v1468 = vsub.f32 %v950, %v1467
      %1469 = vmatprep.subr.mxu0 %v1468
      %v1470 = vand.u32 %v949, 4294901760
      %v1471 = vsub.f32 %v949, %v1470
      %1472 = vmatpush1.msra.mxu0 %v1471
      %1473 = vmatprep.subr.mxu0 0.0
      %1474 = vmatpush1.msra.mxu0 0.0
      %1475 = vmatprep.subr.mxu0 0.0
      %1476 = vmatpush1.msra.mxu0 0.0
      %1477 = vmatprep.subr.mxu0 0.0
      %1478 = vmatpush1.msra.mxu0 0.0
      %1479 = vmatprep.subr.mxu0 0.0
      %1480 = vmatpush1.msra.mxu0 0.0
      %1481 = vmatprep.subr.mxu0 0.0
      %1482 = vmatpush1.msra.mxu0 0.0
      %1483 = vmatprep.subr.mxu0 0.0
      %1484 = vmatpush1.msra.mxu0 0.0
      %1485 = vmatprep.subr.mxu0 0.0
      %1486 = vmatpush1.msra.mxu0 0.0
      %1487 = vmatprep.subr.mxu0 0.0
      %1488 = vmatpush1.msra.mxu0 0.0
      %1489 = vmatprep.subr.mxu0 0.0
      %1490 = vmatpush1.msra.mxu0 0.0
      %1491 = vmatprep.subr.mxu0 0.0
      %1492 = vmatpush1.msra.mxu0 0.0
      %1493 = vmatprep.subr.mxu0 0.0
      %1494 = vmatpush1.msra.mxu0 0.0
      %1495 = vmatprep.subr.mxu0 0.0
      %1496 = vmatpush1.msra.mxu0 0.0
      %1497 = vmatprep.subr.mxu0 0.0
      %1498 = vmatpush1.msra.mxu0 0.0
      %1499 = vmatprep.subr.mxu0 0.0
      %1500 = vmatpush1.msra.mxu0 0.0
      %v1501 = vand.u32 %v966, 4294901760
      %v1502 = vsub.f32 %v966, %v1501
      %1503 = vmatprep.mubr.f32.mxu0 %v1502
      %v1504 = vand.u32 %v894, 4294901760
      %v1505 = vsub.f32 %v894, %v1504
      %1506 = vmatmul.mubr.f32.gmra.mrb[0].mxu0 %v1505
      %v1507 = vpop.f32.mrb[0].mxu0
      %v1508 = vadd.f32 %v1353, %v1507
      %v1509 = vpop.f32.mrb[0].mxu0
      %v1510 = vadd.f32 %v1355, %v1509
      %v1511 = vand.u32 %v969, 4294901760
      %v1512 = vsub.f32 %v969, %v1511
      %1513 = vmatprep.mubr.f32.mxu0 %v1512
      %v1514 = vand.u32 %v896, 4294901760
      %v1515 = vsub.f32 %v896, %v1514
      %1516 = vmatmul.mubr.f32.gmra.mrb[0].mxu0 %v1515
      %v1517 = vpop.f32.mrb[0].mxu0
      %v1518 = vadd.f32 %v1361, %v1517
      %v1519 = vpop.f32.mrb[0].mxu0
      %v1520 = vadd.f32 %v1363, %v1519
      %1521 = vdwg.mxu0
      %v1522 = vand.u32 %v899, 4294901760
      %1523 = vmatprep.subr.mxu0 %v1522
      %v1524 = vand.u32 %v898, 4294901760
      %1525 = vmatpush1.msra.mxu0 %v1524
      %v1526 = vand.u32 %v902, 4294901760
      %1527 = vmatprep.subr.mxu0 %v1526
      %v1528 = vand.u32 %v901, 4294901760
      %1529 = vmatpush1.msra.mxu0 %v1528
      %v1530 = vand.u32 %v905, 4294901760
      %1531 = vmatprep.subr.mxu0 %v1530
      %v1532 = vand.u32 %v904, 4294901760
      %1533 = vmatpush1.msra.mxu0 %v1532
      %v1534 = vand.u32 %v908, 4294901760
      %1535 = vmatprep.subr.mxu0 %v1534
      %v1536 = vand.u32 %v907, 4294901760
      %1537 = vmatpush1.msra.mxu0 %v1536
      %v1538 = vand.u32 %v911, 4294901760
      %1539 = vmatprep.subr.mxu0 %v1538
      %v1540 = vand.u32 %v910, 4294901760
      %1541 = vmatpush1.msra.mxu0 %v1540
      %v1542 = vand.u32 %v914, 4294901760
      %1543 = vmatprep.subr.mxu0 %v1542
      %v1544 = vand.u32 %v913, 4294901760
      %1545 = vmatpush1.msra.mxu0 %v1544
      %v1546 = vand.u32 %v917, 4294901760
      %1547 = vmatprep.subr.mxu0 %v1546
      %v1548 = vand.u32 %v916, 4294901760
      %1549 = vmatpush1.msra.mxu0 %v1548
      %v1550 = vand.u32 %v920, 4294901760
      %1551 = vmatprep.subr.mxu0 %v1550
      %v1552 = vand.u32 %v919, 4294901760
      %1553 = vmatpush1.msra.mxu0 %v1552
      %v1554 = vand.u32 %v923, 4294901760
      %1555 = vmatprep.subr.mxu0 %v1554
      %v1556 = vand.u32 %v922, 4294901760
      %1557 = vmatpush1.msra.mxu0 %v1556
      %v1558 = vand.u32 %v926, 4294901760
      %1559 = vmatprep.subr.mxu0 %v1558
      %v1560 = vand.u32 %v925, 4294901760
      %1561 = vmatpush1.msra.mxu0 %v1560
      %v1562 = vand.u32 %v929, 4294901760
      %1563 = vmatprep.subr.mxu0 %v1562
      %v1564 = vand.u32 %v928, 4294901760
      %1565 = vmatpush1.msra.mxu0 %v1564
      %v1566 = vand.u32 %v932, 4294901760
      %1567 = vmatprep.subr.mxu0 %v1566
      %v1568 = vand.u32 %v931, 4294901760
      %1569 = vmatpush1.msra.mxu0 %v1568
      %v1570 = vand.u32 %v935, 4294901760
      %1571 = vmatprep.subr.mxu0 %v1570
      %v1572 = vand.u32 %v934, 4294901760
      %1573 = vmatpush1.msra.mxu0 %v1572
      %v1574 = vand.u32 %v938, 4294901760
      %1575 = vmatprep.subr.mxu0 %v1574
      %v1576 = vand.u32 %v937, 4294901760
      %1577 = vmatpush1.msra.mxu0 %v1576
      %v1578 = vand.u32 %v941, 4294901760
      %1579 = vmatprep.subr.mxu0 %v1578
      %v1580 = vand.u32 %v940, 4294901760
      %1581 = vmatpush1.msra.mxu0 %v1580
      %v1582 = vand.u32 %v944, 4294901760
      %1583 = vmatprep.subr.mxu0 %v1582
      %v1584 = vand.u32 %v943, 4294901760
      %1585 = vmatpush1.msra.mxu0 %v1584
      %v1586 = vand.u32 %v947, 4294901760
      %1587 = vmatprep.subr.mxu0 %v1586
      %v1588 = vand.u32 %v946, 4294901760
      %1589 = vmatpush1.msra.mxu0 %v1588
      %v1590 = vand.u32 %v950, 4294901760
      %1591 = vmatprep.subr.mxu0 %v1590
      %v1592 = vand.u32 %v949, 4294901760
      %1593 = vmatpush1.msra.mxu0 %v1592
      %1594 = vmatprep.subr.mxu0 0.0
      %1595 = vmatpush1.msra.mxu0 0.0
      %1596 = vmatprep.subr.mxu0 0.0
      %1597 = vmatpush1.msra.mxu0 0.0
      %1598 = vmatprep.subr.mxu0 0.0
      %1599 = vmatpush1.msra.mxu0 0.0
      %1600 = vmatprep.subr.mxu0 0.0
      %1601 = vmatpush1.msra.mxu0 0.0
      %1602 = vmatprep.subr.mxu0 0.0
      %1603 = vmatpush1.msra.mxu0 0.0
      %1604 = vmatprep.subr.mxu0 0.0
      %1605 = vmatpush1.msra.mxu0 0.0
      %1606 = vmatprep.subr.mxu0 0.0
      %1607 = vmatpush1.msra.mxu0 0.0
      %1608 = vmatprep.subr.mxu0 0.0
      %1609 = vmatpush1.msra.mxu0 0.0
      %1610 = vmatprep.subr.mxu0 0.0
      %1611 = vmatpush1.msra.mxu0 0.0
      %1612 = vmatprep.subr.mxu0 0.0
      %1613 = vmatpush1.msra.mxu0 0.0
      %1614 = vmatprep.subr.mxu0 0.0
      %1615 = vmatpush1.msra.mxu0 0.0
      %1616 = vmatprep.subr.mxu0 0.0
      %1617 = vmatpush1.msra.mxu0 0.0
      %1618 = vmatprep.subr.mxu0 0.0
      %1619 = vmatpush1.msra.mxu0 0.0
      %1620 = vmatprep.subr.mxu0 0.0
      %1621 = vmatpush1.msra.mxu0 0.0
      %v1622 = vand.u32 %v966, 4294901760
      %v1623 = vsub.f32 %v966, %v1622
      %v1624 = vand.u32 %v1623, 4294901760
      %1625 = vmatprep.mubr.f32.mxu0 %v1624
      %v1626 = vand.u32 %v894, 4294901760
      %v1627 = vsub.f32 %v894, %v1626
      %v1628 = vand.u32 %v1627, 4294901760
      %1629 = vmatmul.mubr.f32.gmra.mrb[0].mxu0 %v1628
      %v1630 = vpop.f32.mrb[0].mxu0
      %v1631 = vadd.f32 %v1508, %v1630
      %v1632 = vpop.f32.mrb[0].mxu0
      %v1633 = vadd.f32 %v1510, %v1632
      %v1634 = vand.u32 %v969, 4294901760
      %v1635 = vsub.f32 %v969, %v1634
      %v1636 = vand.u32 %v1635, 4294901760
      %1637 = vmatprep.mubr.f32.mxu0 %v1636
      %v1638 = vand.u32 %v896, 4294901760
      %v1639 = vsub.f32 %v896, %v1638
      %v1640 = vand.u32 %v1639, 4294901760
      %1641 = vmatmul.mubr.f32.gmra.mrb[0].mxu0 %v1640
      %v1642 = vpop.f32.mrb[0].mxu0
      %v1643 = vadd.f32 %v1518, %v1642
      %v1644 = vpop.f32.mrb[0].mxu0
      %v1645 = vadd.f32 %v1520, %v1644
      %1646 = vdwg.mxu0
      %v1647 = vand.u32 %v899, 4294901760
      %v1648 = vsub.f32 %v899, %v1647
      %v1649 = vand.u32 %v1648, 4294901760
      %1650 = vmatprep.subr.mxu0 %v1649
      %v1651 = vand.u32 %v898, 4294901760
      %v1652 = vsub.f32 %v898, %v1651
      %v1653 = vand.u32 %v1652, 4294901760
      %1654 = vmatpush1.msra.mxu0 %v1653
      %v1655 = vand.u32 %v902, 4294901760
      %v1656 = vsub.f32 %v902, %v1655
      %v1657 = vand.u32 %v1656, 4294901760
      %1658 = vmatprep.subr.mxu0 %v1657
      %v1659 = vand.u32 %v901, 4294901760
      %v1660 = vsub.f32 %v901, %v1659
      %v1661 = vand.u32 %v1660, 4294901760
      %1662 = vmatpush1.msra.mxu0 %v1661
      %v1663 = vand.u32 %v905, 4294901760
      %v1664 = vsub.f32 %v905, %v1663
      %v1665 = vand.u32 %v1664, 4294901760
      %1666 = vmatprep.subr.mxu0 %v1665
      %v1667 = vand.u32 %v904, 4294901760
      %v1668 = vsub.f32 %v904, %v1667
      %v1669 = vand.u32 %v1668, 4294901760
      %1670 = vmatpush1.msra.mxu0 %v1669
      %v1671 = vand.u32 %v908, 4294901760
      %v1672 = vsub.f32 %v908, %v1671
      %v1673 = vand.u32 %v1672, 4294901760
      %1674 = vmatprep.subr.mxu0 %v1673
      %v1675 = vand.u32 %v907, 4294901760
      %v1676 = vsub.f32 %v907, %v1675
      %v1677 = vand.u32 %v1676, 4294901760
      %1678 = vmatpush1.msra.mxu0 %v1677
      %v1679 = vand.u32 %v911, 4294901760
      %v1680 = vsub.f32 %v911, %v1679
      %v1681 = vand.u32 %v1680, 4294901760
      %1682 = vmatprep.subr.mxu0 %v1681
      %v1683 = vand.u32 %v910, 4294901760
      %v1684 = vsub.f32 %v910, %v1683
      %v1685 = vand.u32 %v1684, 4294901760
      %1686 = vmatpush1.msra.mxu0 %v1685
      %v1687 = vand.u32 %v914, 4294901760
      %v1688 = vsub.f32 %v914, %v1687
      %v1689 = vand.u32 %v1688, 4294901760
      %1690 = vmatprep.subr.mxu0 %v1689
      %v1691 = vand.u32 %v913, 4294901760
      %v1692 = vsub.f32 %v913, %v1691
      %v1693 = vand.u32 %v1692, 4294901760
      %1694 = vmatpush1.msra.mxu0 %v1693
      %v1695 = vand.u32 %v917, 4294901760
      %v1696 = vsub.f32 %v917, %v1695
      %v1697 = vand.u32 %v1696, 4294901760
      %1698 = vmatprep.subr.mxu0 %v1697
      %v1699 = vand.u32 %v916, 4294901760
      %v1700 = vsub.f32 %v916, %v1699
      %v1701 = vand.u32 %v1700, 4294901760
      %1702 = vmatpush1.msra.mxu0 %v1701
      %v1703 = vand.u32 %v920, 4294901760
      %v1704 = vsub.f32 %v920, %v1703
      %v1705 = vand.u32 %v1704, 4294901760
      %1706 = vmatprep.subr.mxu0 %v1705
      %v1707 = vand.u32 %v919, 4294901760
      %v1708 = vsub.f32 %v919, %v1707
      %v1709 = vand.u32 %v1708, 4294901760
      %1710 = vmatpush1.msra.mxu0 %v1709
      %v1711 = vand.u32 %v923, 4294901760
      %v1712 = vsub.f32 %v923, %v1711
      %v1713 = vand.u32 %v1712, 4294901760
      %1714 = vmatprep.subr.mxu0 %v1713
      %v1715 = vand.u32 %v922, 4294901760
      %v1716 = vsub.f32 %v922, %v1715
      %v1717 = vand.u32 %v1716, 4294901760
      %1718 = vmatpush1.msra.mxu0 %v1717
      %v1719 = vand.u32 %v926, 4294901760
      %v1720 = vsub.f32 %v926, %v1719
      %v1721 = vand.u32 %v1720, 4294901760
      %1722 = vmatprep.subr.mxu0 %v1721
      %v1723 = vand.u32 %v925, 4294901760
      %v1724 = vsub.f32 %v925, %v1723
      %v1725 = vand.u32 %v1724, 4294901760
      %1726 = vmatpush1.msra.mxu0 %v1725
      %v1727 = vand.u32 %v929, 4294901760
      %v1728 = vsub.f32 %v929, %v1727
      %v1729 = vand.u32 %v1728, 4294901760
      %1730 = vmatprep.subr.mxu0 %v1729
      %v1731 = vand.u32 %v928, 4294901760
      %v1732 = vsub.f32 %v928, %v1731
      %v1733 = vand.u32 %v1732, 4294901760
      %1734 = vmatpush1.msra.mxu0 %v1733
      %v1735 = vand.u32 %v932, 4294901760
      %v1736 = vsub.f32 %v932, %v1735
      %v1737 = vand.u32 %v1736, 4294901760
      %1738 = vmatprep.subr.mxu0 %v1737
      %v1739 = vand.u32 %v931, 4294901760
      %v1740 = vsub.f32 %v931, %v1739
      %v1741 = vand.u32 %v1740, 4294901760
      %1742 = vmatpush1.msra.mxu0 %v1741
      %v1743 = vand.u32 %v935, 4294901760
      %v1744 = vsub.f32 %v935, %v1743
      %v1745 = vand.u32 %v1744, 4294901760
      %1746 = vmatprep.subr.mxu0 %v1745
      %v1747 = vand.u32 %v934, 4294901760
      %v1748 = vsub.f32 %v934, %v1747
      %v1749 = vand.u32 %v1748, 4294901760
      %1750 = vmatpush1.msra.mxu0 %v1749
      %v1751 = vand.u32 %v938, 4294901760
      %v1752 = vsub.f32 %v938, %v1751
      %v1753 = vand.u32 %v1752, 4294901760
      %1754 = vmatprep.subr.mxu0 %v1753
      %v1755 = vand.u32 %v937, 4294901760
      %v1756 = vsub.f32 %v937, %v1755
      %v1757 = vand.u32 %v1756, 4294901760
      %1758 = vmatpush1.msra.mxu0 %v1757
      %v1759 = vand.u32 %v941, 4294901760
      %v1760 = vsub.f32 %v941, %v1759
      %v1761 = vand.u32 %v1760, 4294901760
      %1762 = vmatprep.subr.mxu0 %v1761
      %v1763 = vand.u32 %v940, 4294901760
      %v1764 = vsub.f32 %v940, %v1763
      %v1765 = vand.u32 %v1764, 4294901760
      %1766 = vmatpush1.msra.mxu0 %v1765
      %v1767 = vand.u32 %v944, 4294901760
      %v1768 = vsub.f32 %v944, %v1767
      %v1769 = vand.u32 %v1768, 4294901760
      %1770 = vmatprep.subr.mxu0 %v1769
      %v1771 = vand.u32 %v943, 4294901760
      %v1772 = vsub.f32 %v943, %v1771
      %v1773 = vand.u32 %v1772, 4294901760
      %1774 = vmatpush1.msra.mxu0 %v1773
      %v1775 = vand.u32 %v947, 4294901760
      %v1776 = vsub.f32 %v947, %v1775
      %v1777 = vand.u32 %v1776, 4294901760
      %1778 = vmatprep.subr.mxu0 %v1777
      %v1779 = vand.u32 %v946, 4294901760
      %v1780 = vsub.f32 %v946, %v1779
      %v1781 = vand.u32 %v1780, 4294901760
      %1782 = vmatpush1.msra.mxu0 %v1781
      %v1783 = vand.u32 %v950, 4294901760
      %v1784 = vsub.f32 %v950, %v1783
      %v1785 = vand.u32 %v1784, 4294901760
      %1786 = vmatprep.subr.mxu0 %v1785
      %v1787 = vand.u32 %v949, 4294901760
      %v1788 = vsub.f32 %v949, %v1787
      %v1789 = vand.u32 %v1788, 4294901760
      %1790 = vmatpush1.msra.mxu0 %v1789
      %1791 = vmatprep.subr.mxu0 0.0
      %1792 = vmatpush1.msra.mxu0 0.0
      %1793 = vmatprep.subr.mxu0 0.0
      %1794 = vmatpush1.msra.mxu0 0.0
      %1795 = vmatprep.subr.mxu0 0.0
      %1796 = vmatpush1.msra.mxu0 0.0
      %1797 = vmatprep.subr.mxu0 0.0
      %1798 = vmatpush1.msra.mxu0 0.0
      %1799 = vmatprep.subr.mxu0 0.0
      %1800 = vmatpush1.msra.mxu0 0.0
      %1801 = vmatprep.subr.mxu0 0.0
      %1802 = vmatpush1.msra.mxu0 0.0
      %1803 = vmatprep.subr.mxu0 0.0
      %1804 = vmatpush1.msra.mxu0 0.0
      %1805 = vmatprep.subr.mxu0 0.0
      %1806 = vmatpush1.msra.mxu0 0.0
      %1807 = vmatprep.subr.mxu0 0.0
      %1808 = vmatpush1.msra.mxu0 0.0
      %1809 = vmatprep.subr.mxu0 0.0
      %1810 = vmatpush1.msra.mxu0 0.0
      %1811 = vmatprep.subr.mxu0 0.0
      %1812 = vmatpush1.msra.mxu0 0.0
      %1813 = vmatprep.subr.mxu0 0.0
      %1814 = vmatpush1.msra.mxu0 0.0
      %1815 = vmatprep.subr.mxu0 0.0
      %1816 = vmatpush1.msra.mxu0 0.0
      %1817 = vmatprep.subr.mxu0 0.0
      %1818 = vmatpush1.msra.mxu0 0.0
      %v1819 = vand.u32 %v966, 4294901760
      %1820 = vmatprep.mubr.f32.mxu0 %v1819
      %v1821 = vand.u32 %v894, 4294901760
      %1822 = vmatmul.mubr.f32.gmra.mrb[0].mxu0 %v1821
      %v1823 = vpop.f32.mrb[0].mxu0
      %v1824 = vadd.f32 %v1631, %v1823
      %v1825 = vpop.f32.mrb[0].mxu0
      %v1826 = vadd.f32 %v1633, %v1825
      %v1827 = vand.u32 %v969, 4294901760
      %1828 = vmatprep.mubr.f32.mxu0 %v1827
      %v1829 = vand.u32 %v896, 4294901760
      %1830 = vmatmul.mubr.f32.gmra.mrb[0].mxu0 %v1829
      %v1831 = vpop.f32.mrb[0].mxu0
      %v1832 = vadd.f32 %v1643, %v1831
      %v1833 = vpop.f32.mrb[0].mxu0
      %v1834 = vadd.f32 %v1645, %v1833
      %1835 = vdwg.mxu0
      %v1836 = vand.u32 %v899, 4294901760
      %1837 = vmatprep.subr.mxu0 %v1836
      %v1838 = vand.u32 %v898, 4294901760
      %1839 = vmatpush1.msra.mxu0 %v1838
      %v1840 = vand.u32 %v902, 4294901760
      %1841 = vmatprep.subr.mxu0 %v1840
      %v1842 = vand.u32 %v901, 4294901760
      %1843 = vmatpush1.msra.mxu0 %v1842
      %v1844 = vand.u32 %v905, 4294901760
      %1845 = vmatprep.subr.mxu0 %v1844
      %v1846 = vand.u32 %v904, 4294901760
      %1847 = vmatpush1.msra.mxu0 %v1846
      %v1848 = vand.u32 %v908, 4294901760
      %1849 = vmatprep.subr.mxu0 %v1848
      %v1850 = vand.u32 %v907, 4294901760
      %1851 = vmatpush1.msra.mxu0 %v1850
      %v1852 = vand.u32 %v911, 4294901760
      %1853 = vmatprep.subr.mxu0 %v1852
      %v1854 = vand.u32 %v910, 4294901760
      %1855 = vmatpush1.msra.mxu0 %v1854
      %v1856 = vand.u32 %v914, 4294901760
      %1857 = vmatprep.subr.mxu0 %v1856
      %v1858 = vand.u32 %v913, 4294901760
      %1859 = vmatpush1.msra.mxu0 %v1858
      %v1860 = vand.u32 %v917, 4294901760
      %1861 = vmatprep.subr.mxu0 %v1860
      %v1862 = vand.u32 %v916, 4294901760
      %1863 = vmatpush1.msra.mxu0 %v1862
      %v1864 = vand.u32 %v920, 4294901760
      %1865 = vmatprep.subr.mxu0 %v1864
      %v1866 = vand.u32 %v919, 4294901760
      %1867 = vmatpush1.msra.mxu0 %v1866
      %v1868 = vand.u32 %v923, 4294901760
      %1869 = vmatprep.subr.mxu0 %v1868
      %v1870 = vand.u32 %v922, 4294901760
      %1871 = vmatpush1.msra.mxu0 %v1870
      %v1872 = vand.u32 %v926, 4294901760
      %1873 = vmatprep.subr.mxu0 %v1872
      %v1874 = vand.u32 %v925, 4294901760
      %1875 = vmatpush1.msra.mxu0 %v1874
      %v1876 = vand.u32 %v929, 4294901760
      %1877 = vmatprep.subr.mxu0 %v1876
      %v1878 = vand.u32 %v928, 4294901760
      %1879 = vmatpush1.msra.mxu0 %v1878
      %v1880 = vand.u32 %v932, 4294901760
      %1881 = vmatprep.subr.mxu0 %v1880
      %v1882 = vand.u32 %v931, 4294901760
      %1883 = vmatpush1.msra.mxu0 %v1882
      %v1884 = vand.u32 %v935, 4294901760
      %1885 = vmatprep.subr.mxu0 %v1884
      %v1886 = vand.u32 %v934, 4294901760
      %1887 = vmatpush1.msra.mxu0 %v1886
      %v1888 = vand.u32 %v938, 4294901760
      %1889 = vmatprep.subr.mxu0 %v1888
      %v1890 = vand.u32 %v937, 4294901760
      %1891 = vmatpush1.msra.mxu0 %v1890
      %v1892 = vand.u32 %v941, 4294901760
      %1893 = vmatprep.subr.mxu0 %v1892
      %v1894 = vand.u32 %v940, 4294901760
      %1895 = vmatpush1.msra.mxu0 %v1894
      %v1896 = vand.u32 %v944, 4294901760
      %1897 = vmatprep.subr.mxu0 %v1896
      %v1898 = vand.u32 %v943, 4294901760
      %1899 = vmatpush1.msra.mxu0 %v1898
      %v1900 = vand.u32 %v947, 4294901760
      %1901 = vmatprep.subr.mxu0 %v1900
      %v1902 = vand.u32 %v946, 4294901760
      %1903 = vmatpush1.msra.mxu0 %v1902
      %v1904 = vand.u32 %v950, 4294901760
      %1905 = vmatprep.subr.mxu0 %v1904
      %v1906 = vand.u32 %v949, 4294901760
      %1907 = vmatpush1.msra.mxu0 %v1906
      %1908 = vmatprep.subr.mxu0 0.0
      %1909 = vmatpush1.msra.mxu0 0.0
      %1910 = vmatprep.subr.mxu0 0.0
      %1911 = vmatpush1.msra.mxu0 0.0
      %1912 = vmatprep.subr.mxu0 0.0
      %1913 = vmatpush1.msra.mxu0 0.0
      %1914 = vmatprep.subr.mxu0 0.0
      %1915 = vmatpush1.msra.mxu0 0.0
      %1916 = vmatprep.subr.mxu0 0.0
      %1917 = vmatpush1.msra.mxu0 0.0
      %1918 = vmatprep.subr.mxu0 0.0
      %1919 = vmatpush1.msra.mxu0 0.0
      %1920 = vmatprep.subr.mxu0 0.0
      %1921 = vmatpush1.msra.mxu0 0.0
      %1922 = vmatprep.subr.mxu0 0.0
      %1923 = vmatpush1.msra.mxu0 0.0
      %1924 = vmatprep.subr.mxu0 0.0
      %1925 = vmatpush1.msra.mxu0 0.0
      %1926 = vmatprep.subr.mxu0 0.0
      %1927 = vmatpush1.msra.mxu0 0.0
      %1928 = vmatprep.subr.mxu0 0.0
      %1929 = vmatpush1.msra.mxu0 0.0
      %1930 = vmatprep.subr.mxu0 0.0
      %1931 = vmatpush1.msra.mxu0 0.0
      %1932 = vmatprep.subr.mxu0 0.0
      %1933 = vmatpush1.msra.mxu0 0.0
      %1934 = vmatprep.subr.mxu0 0.0
      %1935 = vmatpush1.msra.mxu0 0.0
      %v1936 = vand.u32 %v966, 4294901760
      %1937 = vmatprep.mubr.f32.mxu0 %v1936
      %v1938 = vand.u32 %v894, 4294901760
      %1939 = vmatmul.mubr.f32.gmra.mrb[0].mxu0 %v1938
      %v1940 = vpop.f32.mrb[0].mxu0
      %v1941 = vadd.f32 %v1824, %v1940
      %v1942 = vpop.f32.mrb[0].mxu0
      %v1943 = vadd.f32 %v1826, %v1942
      %v1944 = vand.u32 %v969, 4294901760
      %1945 = vmatprep.mubr.f32.mxu0 %v1944
      %v1946 = vand.u32 %v896, 4294901760
      %1947 = vmatmul.mubr.f32.gmra.mrb[0].mxu0 %v1946
      %v1948 = vpop.f32.mrb[0].mxu0
      %v1949 = vadd.f32 %v1832, %v1948
      %v1950 = vpop.f32.mrb[0].mxu0
      %v1951 = vadd.f32 %v1834, %v1950
      %1952 = vdwg.mxu0
      %1953 = vmatprep.subr.mxu0 0.0
      %v1954 = vand.u32 %v900, 4294901760
      %1955 = vmatpush1.msra.mxu0 %v1954
      %1956 = vmatprep.subr.mxu0 0.0
      %v1957 = vand.u32 %v903, 4294901760
      %1958 = vmatpush1.msra.mxu0 %v1957
      %1959 = vmatprep.subr.mxu0 0.0
      %v1960 = vand.u32 %v906, 4294901760
      %1961 = vmatpush1.msra.mxu0 %v1960
      %1962 = vmatprep.subr.mxu0 0.0
      %v1963 = vand.u32 %v909, 4294901760
      %1964 = vmatpush1.msra.mxu0 %v1963
      %1965 = vmatprep.subr.mxu0 0.0
      %v1966 = vand.u32 %v912, 4294901760
      %1967 = vmatpush1.msra.mxu0 %v1966
      %1968 = vmatprep.subr.mxu0 0.0
      %v1969 = vand.u32 %v915, 4294901760
      %1970 = vmatpush1.msra.mxu0 %v1969
      %1971 = vmatprep.subr.mxu0 0.0
      %v1972 = vand.u32 %v918, 4294901760
      %1973 = vmatpush1.msra.mxu0 %v1972
      %1974 = vmatprep.subr.mxu0 0.0
      %v1975 = vand.u32 %v921, 4294901760
      %1976 = vmatpush1.msra.mxu0 %v1975
      %1977 = vmatprep.subr.mxu0 0.0
      %v1978 = vand.u32 %v924, 4294901760
      %1979 = vmatpush1.msra.mxu0 %v1978
      %1980 = vmatprep.subr.mxu0 0.0
      %v1981 = vand.u32 %v927, 4294901760
      %1982 = vmatpush1.msra.mxu0 %v1981
      %1983 = vmatprep.subr.mxu0 0.0
      %v1984 = vand.u32 %v930, 4294901760
      %1985 = vmatpush1.msra.mxu0 %v1984
      %1986 = vmatprep.subr.mxu0 0.0
      %v1987 = vand.u32 %v933, 4294901760
      %1988 = vmatpush1.msra.mxu0 %v1987
      %1989 = vmatprep.subr.mxu0 0.0
      %v1990 = vand.u32 %v936, 4294901760
      %1991 = vmatpush1.msra.mxu0 %v1990
      %1992 = vmatprep.subr.mxu0 0.0
      %v1993 = vand.u32 %v939, 4294901760
      %1994 = vmatpush1.msra.mxu0 %v1993
      %1995 = vmatprep.subr.mxu0 0.0
      %v1996 = vand.u32 %v942, 4294901760
      %1997 = vmatpush1.msra.mxu0 %v1996
      %1998 = vmatprep.subr.mxu0 0.0
      %v1999 = vand.u32 %v945, 4294901760
      %2000 = vmatpush1.msra.mxu0 %v1999
      %2001 = vmatprep.subr.mxu0 0.0
      %v2002 = vand.u32 %v948, 4294901760
      %2003 = vmatpush1.msra.mxu0 %v2002
      %2004 = vmatprep.subr.mxu0 0.0
      %v2005 = vand.u32 %v951, 4294901760
      %2006 = vmatpush1.msra.mxu0 %v2005
      %2007 = vmatprep.subr.mxu0 0.0
      %2008 = vmatpush1.msra.mxu0 0.0
      %2009 = vmatprep.subr.mxu0 0.0
      %2010 = vmatpush1.msra.mxu0 0.0
      %2011 = vmatprep.subr.mxu0 0.0
      %2012 = vmatpush1.msra.mxu0 0.0
      %2013 = vmatprep.subr.mxu0 0.0
      %2014 = vmatpush1.msra.mxu0 0.0
      %2015 = vmatprep.subr.mxu0 0.0
      %2016 = vmatpush1.msra.mxu0 0.0
      %2017 = vmatprep.subr.mxu0 0.0
      %2018 = vmatpush1.msra.mxu0 0.0
      %2019 = vmatprep.subr.mxu0 0.0
      %2020 = vmatpush1.msra.mxu0 0.0
      %2021 = vmatprep.subr.mxu0 0.0
      %2022 = vmatpush1.msra.mxu0 0.0
      %2023 = vmatprep.subr.mxu0 0.0
      %2024 = vmatpush1.msra.mxu0 0.0
      %2025 = vmatprep.subr.mxu0 0.0
      %2026 = vmatpush1.msra.mxu0 0.0
      %2027 = vmatprep.subr.mxu0 0.0
      %2028 = vmatpush1.msra.mxu0 0.0
      %2029 = vmatprep.subr.mxu0 0.0
      %2030 = vmatpush1.msra.mxu0 0.0
      %2031 = vmatprep.subr.mxu0 0.0
      %2032 = vmatpush1.msra.mxu0 0.0
      %2033 = vmatprep.subr.mxu0 0.0
      %2034 = vmatpush1.msra.mxu0 0.0
      %v2035 = vand.u32 %v966, 4294901760
      %v2036 = vsub.f32 %v966, %v2035
      %v2037 = vand.u32 %v2036, 4294901760
      %v2038 = vsub.f32 %v2036, %v2037
      %v2039 = vand.u32 %v2038, 4294901760
      %2040 = vmatprep.mubr.f32.mxu0 %v2039
      %v2041 = vand.u32 %v894, 4294901760
      %v2042 = vsub.f32 %v894, %v2041
      %v2043 = vand.u32 %v2042, 4294901760
      %v2044 = vsub.f32 %v2042, %v2043
      %v2045 = vand.u32 %v2044, 4294901760
      %2046 = vmatmul.mubr.f32.gmra.mrb[0].mxu0 %v2045
      %v2047 = vpop.f32.mrb[0].mxu0
      %v2048 = vadd.f32 %v957, %v2047
      %v2049 = vpop.f32.mrb[0].mxu0
      %v2050 = vand.u32 %v969, 4294901760
      %v2051 = vsub.f32 %v969, %v2050
      %v2052 = vand.u32 %v2051, 4294901760
      %v2053 = vsub.f32 %v2051, %v2052
      %v2054 = vand.u32 %v2053, 4294901760
      %2055 = vmatprep.mubr.f32.mxu0 %v2054
      %v2056 = vand.u32 %v896, 4294901760
      %v2057 = vsub.f32 %v896, %v2056
      %v2058 = vand.u32 %v2057, 4294901760
      %v2059 = vsub.f32 %v2057, %v2058
      %v2060 = vand.u32 %v2059, 4294901760
      %2061 = vmatmul.mubr.f32.gmra.mrb[0].mxu0 %v2060
      %v2062 = vpop.f32.mrb[0].mxu0
      %v2063 = vadd.f32 %v962, %v2062
      %v2064 = vpop.f32.mrb[0].mxu0
      %2065 = vdwg.mxu0
      %2066 = vmatprep.subr.mxu0 0.0
      %v2067 = vand.u32 %v900, 4294901760
      %v2068 = vsub.f32 %v900, %v2067
      %v2069 = vand.u32 %v2068, 4294901760
      %v2070 = vsub.f32 %v2068, %v2069
      %v2071 = vand.u32 %v2070, 4294901760
      %2072 = vmatpush1.msra.mxu0 %v2071
      %2073 = vmatprep.subr.mxu0 0.0
      %v2074 = vand.u32 %v903, 4294901760
      %v2075 = vsub.f32 %v903, %v2074
      %v2076 = vand.u32 %v2075, 4294901760
      %v2077 = vsub.f32 %v2075, %v2076
      %v2078 = vand.u32 %v2077, 4294901760
      %2079 = vmatpush1.msra.mxu0 %v2078
      %2080 = vmatprep.subr.mxu0 0.0
      %v2081 = vand.u32 %v906, 4294901760
      %v2082 = vsub.f32 %v906, %v2081
      %v2083 = vand.u32 %v2082, 4294901760
      %v2084 = vsub.f32 %v2082, %v2083
      %v2085 = vand.u32 %v2084, 4294901760
      %2086 = vmatpush1.msra.mxu0 %v2085
      %2087 = vmatprep.subr.mxu0 0.0
      %v2088 = vand.u32 %v909, 4294901760
      %v2089 = vsub.f32 %v909, %v2088
      %v2090 = vand.u32 %v2089, 4294901760
      %v2091 = vsub.f32 %v2089, %v2090
      %v2092 = vand.u32 %v2091, 4294901760
      %2093 = vmatpush1.msra.mxu0 %v2092
      %2094 = vmatprep.subr.mxu0 0.0
      %v2095 = vand.u32 %v912, 4294901760
      %v2096 = vsub.f32 %v912, %v2095
      %v2097 = vand.u32 %v2096, 4294901760
      %v2098 = vsub.f32 %v2096, %v2097
      %v2099 = vand.u32 %v2098, 4294901760
      %2100 = vmatpush1.msra.mxu0 %v2099
      %2101 = vmatprep.subr.mxu0 0.0
      %v2102 = vand.u32 %v915, 4294901760
      %v2103 = vsub.f32 %v915, %v2102
      %v2104 = vand.u32 %v2103, 4294901760
      %v2105 = vsub.f32 %v2103, %v2104
      %v2106 = vand.u32 %v2105, 4294901760
      %2107 = vmatpush1.msra.mxu0 %v2106
      %2108 = vmatprep.subr.mxu0 0.0
      %v2109 = vand.u32 %v918, 4294901760
      %v2110 = vsub.f32 %v918, %v2109
      %v2111 = vand.u32 %v2110, 4294901760
      %v2112 = vsub.f32 %v2110, %v2111
      %v2113 = vand.u32 %v2112, 4294901760
      %2114 = vmatpush1.msra.mxu0 %v2113
      %2115 = vmatprep.subr.mxu0 0.0
      %v2116 = vand.u32 %v921, 4294901760
      %v2117 = vsub.f32 %v921, %v2116
      %v2118 = vand.u32 %v2117, 4294901760
      %v2119 = vsub.f32 %v2117, %v2118
      %v2120 = vand.u32 %v2119, 4294901760
      %2121 = vmatpush1.msra.mxu0 %v2120
      %2122 = vmatprep.subr.mxu0 0.0
      %v2123 = vand.u32 %v924, 4294901760
      %v2124 = vsub.f32 %v924, %v2123
      %v2125 = vand.u32 %v2124, 4294901760
      %v2126 = vsub.f32 %v2124, %v2125
      %v2127 = vand.u32 %v2126, 4294901760
      %2128 = vmatpush1.msra.mxu0 %v2127
      %2129 = vmatprep.subr.mxu0 0.0
      %v2130 = vand.u32 %v927, 4294901760
      %v2131 = vsub.f32 %v927, %v2130
      %v2132 = vand.u32 %v2131, 4294901760
      %v2133 = vsub.f32 %v2131, %v2132
      %v2134 = vand.u32 %v2133, 4294901760
      %2135 = vmatpush1.msra.mxu0 %v2134
      %2136 = vmatprep.subr.mxu0 0.0
      %v2137 = vand.u32 %v930, 4294901760
      %v2138 = vsub.f32 %v930, %v2137
      %v2139 = vand.u32 %v2138, 4294901760
      %v2140 = vsub.f32 %v2138, %v2139
      %v2141 = vand.u32 %v2140, 4294901760
      %2142 = vmatpush1.msra.mxu0 %v2141
      %2143 = vmatprep.subr.mxu0 0.0
      %v2144 = vand.u32 %v933, 4294901760
      %v2145 = vsub.f32 %v933, %v2144
      %v2146 = vand.u32 %v2145, 4294901760
      %v2147 = vsub.f32 %v2145, %v2146
      %v2148 = vand.u32 %v2147, 4294901760
      %2149 = vmatpush1.msra.mxu0 %v2148
      %2150 = vmatprep.subr.mxu0 0.0
      %v2151 = vand.u32 %v936, 4294901760
      %v2152 = vsub.f32 %v936, %v2151
      %v2153 = vand.u32 %v2152, 4294901760
      %v2154 = vsub.f32 %v2152, %v2153
      %v2155 = vand.u32 %v2154, 4294901760
      %2156 = vmatpush1.msra.mxu0 %v2155
      %2157 = vmatprep.subr.mxu0 0.0
      %v2158 = vand.u32 %v939, 4294901760
      %v2159 = vsub.f32 %v939, %v2158
      %v2160 = vand.u32 %v2159, 4294901760
      %v2161 = vsub.f32 %v2159, %v2160
      %v2162 = vand.u32 %v2161, 4294901760
      %2163 = vmatpush1.msra.mxu0 %v2162
      %2164 = vmatprep.subr.mxu0 0.0
      %v2165 = vand.u32 %v942, 4294901760
      %v2166 = vsub.f32 %v942, %v2165
      %v2167 = vand.u32 %v2166, 4294901760
      %v2168 = vsub.f32 %v2166, %v2167
      %v2169 = vand.u32 %v2168, 4294901760
      %2170 = vmatpush1.msra.mxu0 %v2169
      %2171 = vmatprep.subr.mxu0 0.0
      %v2172 = vand.u32 %v945, 4294901760
      %v2173 = vsub.f32 %v945, %v2172
      %v2174 = vand.u32 %v2173, 4294901760
      %v2175 = vsub.f32 %v2173, %v2174
      %v2176 = vand.u32 %v2175, 4294901760
      %2177 = vmatpush1.msra.mxu0 %v2176
      %2178 = vmatprep.subr.mxu0 0.0
      %v2179 = vand.u32 %v948, 4294901760
      %v2180 = vsub.f32 %v948, %v2179
      %v2181 = vand.u32 %v2180, 4294901760
      %v2182 = vsub.f32 %v2180, %v2181
      %v2183 = vand.u32 %v2182, 4294901760
      %2184 = vmatpush1.msra.mxu0 %v2183
      %2185 = vmatprep.subr.mxu0 0.0
      %v2186 = vand.u32 %v951, 4294901760
      %v2187 = vsub.f32 %v951, %v2186
      %v2188 = vand.u32 %v2187, 4294901760
      %v2189 = vsub.f32 %v2187, %v2188
      %v2190 = vand.u32 %v2189, 4294901760
      %2191 = vmatpush1.msra.mxu0 %v2190
      %2192 = vmatprep.subr.mxu0 0.0
      %2193 = vmatpush1.msra.mxu0 0.0
      %2194 = vmatprep.subr.mxu0 0.0
      %2195 = vmatpush1.msra.mxu0 0.0
      %2196 = vmatprep.subr.mxu0 0.0
      %2197 = vmatpush1.msra.mxu0 0.0
      %2198 = vmatprep.subr.mxu0 0.0
      %2199 = vmatpush1.msra.mxu0 0.0
      %2200 = vmatprep.subr.mxu0 0.0
      %2201 = vmatpush1.msra.mxu0 0.0
      %2202 = vmatprep.subr.mxu0 0.0
      %2203 = vmatpush1.msra.mxu0 0.0
      %2204 = vmatprep.subr.mxu0 0.0
      %2205 = vmatpush1.msra.mxu0 0.0
      %2206 = vmatprep.subr.mxu0 0.0
      %2207 = vmatpush1.msra.mxu0 0.0
      %2208 = vmatprep.subr.mxu0 0.0
      %2209 = vmatpush1.msra.mxu0 0.0
      %2210 = vmatprep.subr.mxu0 0.0
      %2211 = vmatpush1.msra.mxu0 0.0
      %2212 = vmatprep.subr.mxu0 0.0
      %2213 = vmatpush1.msra.mxu0 0.0
      %2214 = vmatprep.subr.mxu0 0.0
      %2215 = vmatpush1.msra.mxu0 0.0
      %2216 = vmatprep.subr.mxu0 0.0
      %2217 = vmatpush1.msra.mxu0 0.0
      %2218 = vmatprep.subr.mxu0 0.0
      %2219 = vmatpush1.msra.mxu0 0.0
      %v2220 = vand.u32 %v966, 4294901760
      %2221 = vmatprep.mubr.f32.mxu0 %v2220
      %v2222 = vand.u32 %v894, 4294901760
      %2223 = vmatmul.mubr.f32.gmra.mrb[0].mxu0 %v2222
      %v2224 = vpop.f32.mrb[0].mxu0
      %v2225 = vadd.f32 %v2048, %v2224
      %v2226 = vpop.f32.mrb[0].mxu0
      %v2227 = vand.u32 %v969, 4294901760
      %2228 = vmatprep.mubr.f32.mxu0 %v2227
      %v2229 = vand.u32 %v896, 4294901760
      %2230 = vmatmul.mubr.f32.gmra.mrb[0].mxu0 %v2229
      %v2231 = vpop.f32.mrb[0].mxu0
      %v2232 = vadd.f32 %v2063, %v2231
      %v2233 = vpop.f32.mrb[0].mxu0
      %2234 = vdwg.mxu0
      %2235 = vmatprep.subr.mxu0 0.0
      %v2236 = vand.u32 %v900, 4294901760
      %v2237 = vsub.f32 %v900, %v2236
      %2238 = vmatpush1.msra.mxu0 %v2237
      %2239 = vmatprep.subr.mxu0 0.0
      %v2240 = vand.u32 %v903, 4294901760
      %v2241 = vsub.f32 %v903, %v2240
      %2242 = vmatpush1.msra.mxu0 %v2241
      %2243 = vmatprep.subr.mxu0 0.0
      %v2244 = vand.u32 %v906, 4294901760
      %v2245 = vsub.f32 %v906, %v2244
      %2246 = vmatpush1.msra.mxu0 %v2245
      %2247 = vmatprep.subr.mxu0 0.0
      %v2248 = vand.u32 %v909, 4294901760
      %v2249 = vsub.f32 %v909, %v2248
      %2250 = vmatpush1.msra.mxu0 %v2249
      %2251 = vmatprep.subr.mxu0 0.0
      %v2252 = vand.u32 %v912, 4294901760
      %v2253 = vsub.f32 %v912, %v2252
      %2254 = vmatpush1.msra.mxu0 %v2253
      %2255 = vmatprep.subr.mxu0 0.0
      %v2256 = vand.u32 %v915, 4294901760
      %v2257 = vsub.f32 %v915, %v2256
      %2258 = vmatpush1.msra.mxu0 %v2257
      %2259 = vmatprep.subr.mxu0 0.0
      %v2260 = vand.u32 %v918, 4294901760
      %v2261 = vsub.f32 %v918, %v2260
      %2262 = vmatpush1.msra.mxu0 %v2261
      %2263 = vmatprep.subr.mxu0 0.0
      %v2264 = vand.u32 %v921, 4294901760
      %v2265 = vsub.f32 %v921, %v2264
      %2266 = vmatpush1.msra.mxu0 %v2265
      %2267 = vmatprep.subr.mxu0 0.0
      %v2268 = vand.u32 %v924, 4294901760
      %v2269 = vsub.f32 %v924, %v2268
      %2270 = vmatpush1.msra.mxu0 %v2269
      %2271 = vmatprep.subr.mxu0 0.0
      %v2272 = vand.u32 %v927, 4294901760
      %v2273 = vsub.f32 %v927, %v2272
      %2274 = vmatpush1.msra.mxu0 %v2273
      %2275 = vmatprep.subr.mxu0 0.0
      %v2276 = vand.u32 %v930, 4294901760
      %v2277 = vsub.f32 %v930, %v2276
      %2278 = vmatpush1.msra.mxu0 %v2277
      %2279 = vmatprep.subr.mxu0 0.0
      %v2280 = vand.u32 %v933, 4294901760
      %v2281 = vsub.f32 %v933, %v2280
      %2282 = vmatpush1.msra.mxu0 %v2281
      %2283 = vmatprep.subr.mxu0 0.0
      %v2284 = vand.u32 %v936, 4294901760
      %v2285 = vsub.f32 %v936, %v2284
      %2286 = vmatpush1.msra.mxu0 %v2285
      %2287 = vmatprep.subr.mxu0 0.0
      %v2288 = vand.u32 %v939, 4294901760
      %v2289 = vsub.f32 %v939, %v2288
      %2290 = vmatpush1.msra.mxu0 %v2289
      %2291 = vmatprep.subr.mxu0 0.0
      %v2292 = vand.u32 %v942, 4294901760
      %v2293 = vsub.f32 %v942, %v2292
      %2294 = vmatpush1.msra.mxu0 %v2293
      %2295 = vmatprep.subr.mxu0 0.0
      %v2296 = vand.u32 %v945, 4294901760
      %v2297 = vsub.f32 %v945, %v2296
      %2298 = vmatpush1.msra.mxu0 %v2297
      %2299 = vmatprep.subr.mxu0 0.0
      %v2300 = vand.u32 %v948, 4294901760
      %v2301 = vsub.f32 %v948, %v2300
      %2302 = vmatpush1.msra.mxu0 %v2301
      %2303 = vmatprep.subr.mxu0 0.0
      %v2304 = vand.u32 %v951, 4294901760
      %v2305 = vsub.f32 %v951, %v2304
      %2306 = vmatpush1.msra.mxu0 %v2305
      %2307 = vmatprep.subr.mxu0 0.0
      %2308 = vmatpush1.msra.mxu0 0.0
      %2309 = vmatprep.subr.mxu0 0.0
      %2310 = vmatpush1.msra.mxu0 0.0
      %2311 = vmatprep.subr.mxu0 0.0
      %2312 = vmatpush1.msra.mxu0 0.0
      %2313 = vmatprep.subr.mxu0 0.0
      %2314 = vmatpush1.msra.mxu0 0.0
      %2315 = vmatprep.subr.mxu0 0.0
      %2316 = vmatpush1.msra.mxu0 0.0
      %2317 = vmatprep.subr.mxu0 0.0
      %2318 = vmatpush1.msra.mxu0 0.0
      %2319 = vmatprep.subr.mxu0 0.0
      %2320 = vmatpush1.msra.mxu0 0.0
      %2321 = vmatprep.subr.mxu0 0.0
      %2322 = vmatpush1.msra.mxu0 0.0
      %2323 = vmatprep.subr.mxu0 0.0
      %2324 = vmatpush1.msra.mxu0 0.0
      %2325 = vmatprep.subr.mxu0 0.0
      %2326 = vmatpush1.msra.mxu0 0.0
      %2327 = vmatprep.subr.mxu0 0.0
      %2328 = vmatpush1.msra.mxu0 0.0
      %2329 = vmatprep.subr.mxu0 0.0
      %2330 = vmatpush1.msra.mxu0 0.0
      %2331 = vmatprep.subr.mxu0 0.0
      %2332 = vmatpush1.msra.mxu0 0.0
      %2333 = vmatprep.subr.mxu0 0.0
      %2334 = vmatpush1.msra.mxu0 0.0
      %v2335 = vand.u32 %v966, 4294901760
      %v2336 = vsub.f32 %v966, %v2335
      %2337 = vmatprep.mubr.f32.mxu0 %v2336
      %v2338 = vand.u32 %v894, 4294901760
      %v2339 = vsub.f32 %v894, %v2338
      %2340 = vmatmul.mubr.f32.gmra.mrb[0].mxu0 %v2339
      %v2341 = vpop.f32.mrb[0].mxu0
      %v2342 = vadd.f32 %v2225, %v2341
      %v2343 = vpop.f32.mrb[0].mxu0
      %v2344 = vand.u32 %v969, 4294901760
      %v2345 = vsub.f32 %v969, %v2344
      %2346 = vmatprep.mubr.f32.mxu0 %v2345
      %v2347 = vand.u32 %v896, 4294901760
      %v2348 = vsub.f32 %v896, %v2347
      %2349 = vmatmul.mubr.f32.gmra.mrb[0].mxu0 %v2348
      %v2350 = vpop.f32.mrb[0].mxu0
      %v2351 = vadd.f32 %v2232, %v2350
      %v2352 = vpop.f32.mrb[0].mxu0
      %2353 = vdwg.mxu0
      %2354 = vmatprep.subr.mxu0 0.0
      %v2355 = vand.u32 %v900, 4294901760
      %2356 = vmatpush1.msra.mxu0 %v2355
      %2357 = vmatprep.subr.mxu0 0.0
      %v2358 = vand.u32 %v903, 4294901760
      %2359 = vmatpush1.msra.mxu0 %v2358
      %2360 = vmatprep.subr.mxu0 0.0
      %v2361 = vand.u32 %v906, 4294901760
      %2362 = vmatpush1.msra.mxu0 %v2361
      %2363 = vmatprep.subr.mxu0 0.0
      %v2364 = vand.u32 %v909, 4294901760
      %2365 = vmatpush1.msra.mxu0 %v2364
      %2366 = vmatprep.subr.mxu0 0.0
      %v2367 = vand.u32 %v912, 4294901760
      %2368 = vmatpush1.msra.mxu0 %v2367
      %2369 = vmatprep.subr.mxu0 0.0
      %v2370 = vand.u32 %v915, 4294901760
      %2371 = vmatpush1.msra.mxu0 %v2370
      %2372 = vmatprep.subr.mxu0 0.0
      %v2373 = vand.u32 %v918, 4294901760
      %2374 = vmatpush1.msra.mxu0 %v2373
      %2375 = vmatprep.subr.mxu0 0.0
      %v2376 = vand.u32 %v921, 4294901760
      %2377 = vmatpush1.msra.mxu0 %v2376
      %2378 = vmatprep.subr.mxu0 0.0
      %v2379 = vand.u32 %v924, 4294901760
      %2380 = vmatpush1.msra.mxu0 %v2379
      %2381 = vmatprep.subr.mxu0 0.0
      %v2382 = vand.u32 %v927, 4294901760
      %2383 = vmatpush1.msra.mxu0 %v2382
      %2384 = vmatprep.subr.mxu0 0.0
      %v2385 = vand.u32 %v930, 4294901760
      %2386 = vmatpush1.msra.mxu0 %v2385
      %2387 = vmatprep.subr.mxu0 0.0
      %v2388 = vand.u32 %v933, 4294901760
      %2389 = vmatpush1.msra.mxu0 %v2388
      %2390 = vmatprep.subr.mxu0 0.0
      %v2391 = vand.u32 %v936, 4294901760
      %2392 = vmatpush1.msra.mxu0 %v2391
      %2393 = vmatprep.subr.mxu0 0.0
      %v2394 = vand.u32 %v939, 4294901760
      %2395 = vmatpush1.msra.mxu0 %v2394
      %2396 = vmatprep.subr.mxu0 0.0
      %v2397 = vand.u32 %v942, 4294901760
      %2398 = vmatpush1.msra.mxu0 %v2397
      %2399 = vmatprep.subr.mxu0 0.0
      %v2400 = vand.u32 %v945, 4294901760
      %2401 = vmatpush1.msra.mxu0 %v2400
      %2402 = vmatprep.subr.mxu0 0.0
      %v2403 = vand.u32 %v948, 4294901760
      %2404 = vmatpush1.msra.mxu0 %v2403
      %2405 = vmatprep.subr.mxu0 0.0
      %v2406 = vand.u32 %v951, 4294901760
      %2407 = vmatpush1.msra.mxu0 %v2406
      %2408 = vmatprep.subr.mxu0 0.0
      %2409 = vmatpush1.msra.mxu0 0.0
      %2410 = vmatprep.subr.mxu0 0.0
      %2411 = vmatpush1.msra.mxu0 0.0
      %2412 = vmatprep.subr.mxu0 0.0
      %2413 = vmatpush1.msra.mxu0 0.0
      %2414 = vmatprep.subr.mxu0 0.0
      %2415 = vmatpush1.msra.mxu0 0.0
      %2416 = vmatprep.subr.mxu0 0.0
      %2417 = vmatpush1.msra.mxu0 0.0
      %2418 = vmatprep.subr.mxu0 0.0
      %2419 = vmatpush1.msra.mxu0 0.0
      %2420 = vmatprep.subr.mxu0 0.0
      %2421 = vmatpush1.msra.mxu0 0.0
      %2422 = vmatprep.subr.mxu0 0.0
      %2423 = vmatpush1.msra.mxu0 0.0
      %2424 = vmatprep.subr.mxu0 0.0
      %2425 = vmatpush1.msra.mxu0 0.0
      %2426 = vmatprep.subr.mxu0 0.0
      %2427 = vmatpush1.msra.mxu0 0.0
      %2428 = vmatprep.subr.mxu0 0.0
      %2429 = vmatpush1.msra.mxu0 0.0
      %2430 = vmatprep.subr.mxu0 0.0
      %2431 = vmatpush1.msra.mxu0 0.0
      %2432 = vmatprep.subr.mxu0 0.0
      %2433 = vmatpush1.msra.mxu0 0.0
      %2434 = vmatprep.subr.mxu0 0.0
      %2435 = vmatpush1.msra.mxu0 0.0
      %v2436 = vand.u32 %v966, 4294901760
      %v2437 = vsub.f32 %v966, %v2436
      %v2438 = vand.u32 %v2437, 4294901760
      %2439 = vmatprep.mubr.f32.mxu0 %v2438
      %v2440 = vand.u32 %v894, 4294901760
      %v2441 = vsub.f32 %v894, %v2440
      %v2442 = vand.u32 %v2441, 4294901760
      %2443 = vmatmul.mubr.f32.gmra.mrb[0].mxu0 %v2442
      %v2444 = vpop.f32.mrb[0].mxu0
      %v2445 = vadd.f32 %v2342, %v2444
      %v2446 = vpop.f32.mrb[0].mxu0
      %v2447 = vand.u32 %v969, 4294901760
      %v2448 = vsub.f32 %v969, %v2447
      %v2449 = vand.u32 %v2448, 4294901760
      %2450 = vmatprep.mubr.f32.mxu0 %v2449
      %v2451 = vand.u32 %v896, 4294901760
      %v2452 = vsub.f32 %v896, %v2451
      %v2453 = vand.u32 %v2452, 4294901760
      %2454 = vmatmul.mubr.f32.gmra.mrb[0].mxu0 %v2453
      %v2455 = vpop.f32.mrb[0].mxu0
      %v2456 = vadd.f32 %v2351, %v2455
      %v2457 = vpop.f32.mrb[0].mxu0
      %2458 = vdwg.mxu0
      %2459 = vmatprep.subr.mxu0 0.0
      %v2460 = vand.u32 %v900, 4294901760
      %v2461 = vsub.f32 %v900, %v2460
      %v2462 = vand.u32 %v2461, 4294901760
      %2463 = vmatpush1.msra.mxu0 %v2462
      %2464 = vmatprep.subr.mxu0 0.0
      %v2465 = vand.u32 %v903, 4294901760
      %v2466 = vsub.f32 %v903, %v2465
      %v2467 = vand.u32 %v2466, 4294901760
      %2468 = vmatpush1.msra.mxu0 %v2467
      %2469 = vmatprep.subr.mxu0 0.0
      %v2470 = vand.u32 %v906, 4294901760
      %v2471 = vsub.f32 %v906, %v2470
      %v2472 = vand.u32 %v2471, 4294901760
      %2473 = vmatpush1.msra.mxu0 %v2472
      %2474 = vmatprep.subr.mxu0 0.0
      %v2475 = vand.u32 %v909, 4294901760
      %v2476 = vsub.f32 %v909, %v2475
      %v2477 = vand.u32 %v2476, 4294901760
      %2478 = vmatpush1.msra.mxu0 %v2477
      %2479 = vmatprep.subr.mxu0 0.0
      %v2480 = vand.u32 %v912, 4294901760
      %v2481 = vsub.f32 %v912, %v2480
      %v2482 = vand.u32 %v2481, 4294901760
      %2483 = vmatpush1.msra.mxu0 %v2482
      %2484 = vmatprep.subr.mxu0 0.0
      %v2485 = vand.u32 %v915, 4294901760
      %v2486 = vsub.f32 %v915, %v2485
      %v2487 = vand.u32 %v2486, 4294901760
      %2488 = vmatpush1.msra.mxu0 %v2487
      %2489 = vmatprep.subr.mxu0 0.0
      %v2490 = vand.u32 %v918, 4294901760
      %v2491 = vsub.f32 %v918, %v2490
      %v2492 = vand.u32 %v2491, 4294901760
      %2493 = vmatpush1.msra.mxu0 %v2492
      %2494 = vmatprep.subr.mxu0 0.0
      %v2495 = vand.u32 %v921, 4294901760
      %v2496 = vsub.f32 %v921, %v2495
      %v2497 = vand.u32 %v2496, 4294901760
      %2498 = vmatpush1.msra.mxu0 %v2497
      %2499 = vmatprep.subr.mxu0 0.0
      %v2500 = vand.u32 %v924, 4294901760
      %v2501 = vsub.f32 %v924, %v2500
      %v2502 = vand.u32 %v2501, 4294901760
      %2503 = vmatpush1.msra.mxu0 %v2502
      %2504 = vmatprep.subr.mxu0 0.0
      %v2505 = vand.u32 %v927, 4294901760
      %v2506 = vsub.f32 %v927, %v2505
      %v2507 = vand.u32 %v2506, 4294901760
      %2508 = vmatpush1.msra.mxu0 %v2507
      %2509 = vmatprep.subr.mxu0 0.0
      %v2510 = vand.u32 %v930, 4294901760
      %v2511 = vsub.f32 %v930, %v2510
      %v2512 = vand.u32 %v2511, 4294901760
      %2513 = vmatpush1.msra.mxu0 %v2512
      %2514 = vmatprep.subr.mxu0 0.0
      %v2515 = vand.u32 %v933, 4294901760
      %v2516 = vsub.f32 %v933, %v2515
      %v2517 = vand.u32 %v2516, 4294901760
      %2518 = vmatpush1.msra.mxu0 %v2517
      %2519 = vmatprep.subr.mxu0 0.0
      %v2520 = vand.u32 %v936, 4294901760
      %v2521 = vsub.f32 %v936, %v2520
      %v2522 = vand.u32 %v2521, 4294901760
      %2523 = vmatpush1.msra.mxu0 %v2522
      %2524 = vmatprep.subr.mxu0 0.0
      %v2525 = vand.u32 %v939, 4294901760
      %v2526 = vsub.f32 %v939, %v2525
      %v2527 = vand.u32 %v2526, 4294901760
      %2528 = vmatpush1.msra.mxu0 %v2527
      %2529 = vmatprep.subr.mxu0 0.0
      %v2530 = vand.u32 %v942, 4294901760
      %v2531 = vsub.f32 %v942, %v2530
      %v2532 = vand.u32 %v2531, 4294901760
      %2533 = vmatpush1.msra.mxu0 %v2532
      %2534 = vmatprep.subr.mxu0 0.0
      %v2535 = vand.u32 %v945, 4294901760
      %v2536 = vsub.f32 %v945, %v2535
      %v2537 = vand.u32 %v2536, 4294901760
      %2538 = vmatpush1.msra.mxu0 %v2537
      %2539 = vmatprep.subr.mxu0 0.0
      %v2540 = vand.u32 %v948, 4294901760
      %v2541 = vsub.f32 %v948, %v2540
      %v2542 = vand.u32 %v2541, 4294901760
      %2543 = vmatpush1.msra.mxu0 %v2542
      %2544 = vmatprep.subr.mxu0 0.0
      %v2545 = vand.u32 %v951, 4294901760
      %v2546 = vsub.f32 %v951, %v2545
      %v2547 = vand.u32 %v2546, 4294901760
      %2548 = vmatpush1.msra.mxu0 %v2547
      %2549 = vmatprep.subr.mxu0 0.0
      %2550 = vmatpush1.msra.mxu0 0.0
      %2551 = vmatprep.subr.mxu0 0.0
      %2552 = vmatpush1.msra.mxu0 0.0
      %2553 = vmatprep.subr.mxu0 0.0
      %2554 = vmatpush1.msra.mxu0 0.0
      %2555 = vmatprep.subr.mxu0 0.0
      %2556 = vmatpush1.msra.mxu0 0.0
      %2557 = vmatprep.subr.mxu0 0.0
      %2558 = vmatpush1.msra.mxu0 0.0
      %2559 = vmatprep.subr.mxu0 0.0
      %2560 = vmatpush1.msra.mxu0 0.0
      %2561 = vmatprep.subr.mxu0 0.0
      %2562 = vmatpush1.msra.mxu0 0.0
      %2563 = vmatprep.subr.mxu0 0.0
      %2564 = vmatpush1.msra.mxu0 0.0
      %2565 = vmatprep.subr.mxu0 0.0
      %2566 = vmatpush1.msra.mxu0 0.0
      %2567 = vmatprep.subr.mxu0 0.0
      %2568 = vmatpush1.msra.mxu0 0.0
      %2569 = vmatprep.subr.mxu0 0.0
      %2570 = vmatpush1.msra.mxu0 0.0
      %2571 = vmatprep.subr.mxu0 0.0
      %2572 = vmatpush1.msra.mxu0 0.0
      %2573 = vmatprep.subr.mxu0 0.0
      %2574 = vmatpush1.msra.mxu0 0.0
      %2575 = vmatprep.subr.mxu0 0.0
      %2576 = vmatpush1.msra.mxu0 0.0
      %v2577 = vand.u32 %v966, 4294901760
      %2578 = vmatprep.mubr.f32.mxu0 %v2577
      %v2579 = vand.u32 %v894, 4294901760
      %2580 = vmatmul.mubr.f32.gmra.mrb[0].mxu0 %v2579
      %v2581 = vpop.f32.mrb[0].mxu0
      %v2582 = vadd.f32 %v2445, %v2581
      %v2583 = vpop.f32.mrb[0].mxu0
      %v2584 = vand.u32 %v969, 4294901760
      %2585 = vmatprep.mubr.f32.mxu0 %v2584
      %v2586 = vand.u32 %v896, 4294901760
      %2587 = vmatmul.mubr.f32.gmra.mrb[0].mxu0 %v2586
      %v2588 = vpop.f32.mrb[0].mxu0
      %v2589 = vadd.f32 %v2456, %v2588
      %v2590 = vpop.f32.mrb[0].mxu0
      %2591 = vdwg.mxu0
      %2592 = vmatprep.subr.mxu0 0.0
      %v2593 = vand.u32 %v900, 4294901760
      %2594 = vmatpush1.msra.mxu0 %v2593
      %2595 = vmatprep.subr.mxu0 0.0
      %v2596 = vand.u32 %v903, 4294901760
      %2597 = vmatpush1.msra.mxu0 %v2596
      %2598 = vmatprep.subr.mxu0 0.0
      %v2599 = vand.u32 %v906, 4294901760
      %2600 = vmatpush1.msra.mxu0 %v2599
      %2601 = vmatprep.subr.mxu0 0.0
      %v2602 = vand.u32 %v909, 4294901760
      %2603 = vmatpush1.msra.mxu0 %v2602
      %2604 = vmatprep.subr.mxu0 0.0
      %v2605 = vand.u32 %v912, 4294901760
      %2606 = vmatpush1.msra.mxu0 %v2605
      %2607 = vmatprep.subr.mxu0 0.0
      %v2608 = vand.u32 %v915, 4294901760
      %2609 = vmatpush1.msra.mxu0 %v2608
      %2610 = vmatprep.subr.mxu0 0.0
      %v2611 = vand.u32 %v918, 4294901760
      %2612 = vmatpush1.msra.mxu0 %v2611
      %2613 = vmatprep.subr.mxu0 0.0
      %v2614 = vand.u32 %v921, 4294901760
      %2615 = vmatpush1.msra.mxu0 %v2614
      %2616 = vmatprep.subr.mxu0 0.0
      %v2617 = vand.u32 %v924, 4294901760
      %2618 = vmatpush1.msra.mxu0 %v2617
      %2619 = vmatprep.subr.mxu0 0.0
      %v2620 = vand.u32 %v927, 4294901760
      %2621 = vmatpush1.msra.mxu0 %v2620
      %2622 = vmatprep.subr.mxu0 0.0
      %v2623 = vand.u32 %v930, 4294901760
      %2624 = vmatpush1.msra.mxu0 %v2623
      %2625 = vmatprep.subr.mxu0 0.0
      %v2626 = vand.u32 %v933, 4294901760
      %2627 = vmatpush1.msra.mxu0 %v2626
      %2628 = vmatprep.subr.mxu0 0.0
      %v2629 = vand.u32 %v936, 4294901760
      %2630 = vmatpush1.msra.mxu0 %v2629
      %2631 = vmatprep.subr.mxu0 0.0
      %v2632 = vand.u32 %v939, 4294901760
      %2633 = vmatpush1.msra.mxu0 %v2632
      %2634 = vmatprep.subr.mxu0 0.0
      %v2635 = vand.u32 %v942, 4294901760
      %2636 = vmatpush1.msra.mxu0 %v2635
      %2637 = vmatprep.subr.mxu0 0.0
      %v2638 = vand.u32 %v945, 4294901760
      %2639 = vmatpush1.msra.mxu0 %v2638
      %2640 = vmatprep.subr.mxu0 0.0
      %v2641 = vand.u32 %v948, 4294901760
      %2642 = vmatpush1.msra.mxu0 %v2641
      %2643 = vmatprep.subr.mxu0 0.0
      %v2644 = vand.u32 %v951, 4294901760
      %2645 = vmatpush1.msra.mxu0 %v2644
      %2646 = vmatprep.subr.mxu0 0.0
      %2647 = vmatpush1.msra.mxu0 0.0
      %2648 = vmatprep.subr.mxu0 0.0
      %2649 = vmatpush1.msra.mxu0 0.0
      %2650 = vmatprep.subr.mxu0 0.0
      %2651 = vmatpush1.msra.mxu0 0.0
      %2652 = vmatprep.subr.mxu0 0.0
      %2653 = vmatpush1.msra.mxu0 0.0
      %2654 = vmatprep.subr.mxu0 0.0
      %2655 = vmatpush1.msra.mxu0 0.0
      %2656 = vmatprep.subr.mxu0 0.0
      %2657 = vmatpush1.msra.mxu0 0.0
      %2658 = vmatprep.subr.mxu0 0.0
      %2659 = vmatpush1.msra.mxu0 0.0
      %2660 = vmatprep.subr.mxu0 0.0
      %2661 = vmatpush1.msra.mxu0 0.0
      %2662 = vmatprep.subr.mxu0 0.0
      %2663 = vmatpush1.msra.mxu0 0.0
      %2664 = vmatprep.subr.mxu0 0.0
      %2665 = vmatpush1.msra.mxu0 0.0
      %2666 = vmatprep.subr.mxu0 0.0
      %2667 = vmatpush1.msra.mxu0 0.0
      %2668 = vmatprep.subr.mxu0 0.0
      %2669 = vmatpush1.msra.mxu0 0.0
      %2670 = vmatprep.subr.mxu0 0.0
      %2671 = vmatpush1.msra.mxu0 0.0
      %2672 = vmatprep.subr.mxu0 0.0
      %2673 = vmatpush1.msra.mxu0 0.0
      %v2674 = vand.u32 %v966, 4294901760
      %2675 = vmatprep.mubr.f32.mxu0 %v2674
      %v2676 = vand.u32 %v894, 4294901760
      %2677 = vmatmul.mubr.f32.gmra.mrb[0].mxu0 %v2676
      %v2678 = vpop.f32.mrb[0].mxu0
      %v2679 = vadd.f32 %v2582, %v2678
      %v2680 = vpop.f32.mrb[0].mxu0
      %v2681 = vand.u32 %v969, 4294901760
      %2682 = vmatprep.mubr.f32.mxu0 %v2681
      %v2683 = vand.u32 %v896, 4294901760
      %2684 = vmatmul.mubr.f32.gmra.mrb[0].mxu0 %v2683
      %v2685 = vpop.f32.mrb[0].mxu0
      %v2686 = vadd.f32 %v2589, %v2685
      %v2687 = vpop.f32.mrb[0].mxu0
      %2688 = vdwg.mxu0
      %v2689 = vmax.f32 %v1941, 0.0
      %v2690 = vmax.f32 %v1943, 0.0
      %v2691 = vmax.f32 %v2679, 0.0
      %v2692 = vmax.f32 %v1949, 0.0
      %v2693 = vmax.f32 %v1951, 0.0
      %v2694 = vmax.f32 %v2686, 0.0
      %v2695 = vld [vmem:[%s5] sm:$0x7]
      %v2697 = vlaneseq
      %v2698 = vshrl.u32 %v2697, 7
      %v2699 = vsub.s32 0, %v2698
      %v2700 = vrot.slane %v2695, %v2699
      %v2701 = vlaneseq
      %v2702 = vshrl.u32 %v2701, 7
      %v2703 = vsub.s32 1, %v2702
      %v2704 = vrot.slane %v2695, %v2703
      %v2705 = vlaneseq
      %v2706 = vshrl.u32 %v2705, 7
      %v2707 = vsub.s32 2, %v2706
      %v2708 = vrot.slane %v2695, %v2707
      %v2712 = vmul.f32 %v2689, %v2700
      %v2713 = vmul.f32 %v2690, %v2704
      %v2714 = vmul.f32 %v2691, %v2708
      %v2715 = vmul.f32 %v2692, %v2700
      %v2716 = vmul.f32 %v2693, %v2704
      %v2717 = vmul.f32 %v2694, %v2708
      %v2718 = vld [vmem:[%s464 + $0x8] sm:$0xff]
      %v2719 = vld [vmem:[%s464 + $0x10] sm:$0xff]
      %v2720 = vld [vmem:[%s464 + $0x18] sm:$0xff]
      %v2721 = vld [vmem:[%s464 + $0x30] sm:$0xff]
      %v2722 = vld [vmem:[%s464 + $0x38] sm:$0xff]
      %v2723 = vld [vmem:[%s464 + $0x40] sm:$0xff]
      %v2724 = vadd.f32 %v2712, %v2718
      %v2725 = vadd.f32 %v2713, %v2719
      %v2726 = vadd.f32 %v2714, %v2720
      %v2727 = vadd.f32 %v2715, %v2721
      %v2728 = vadd.f32 %v2716, %v2722
      %v2729 = vadd.f32 %v2717, %v2723
      %2730 = vst [vmem:[#allocation2 + $0x8] sm:$0xff] %v2724
      %2731 = vst [vmem:[#allocation2 + $0x10] sm:$0xff] %v2725
      %2732 = vst [vmem:[#allocation2 + $0x18] sm:$0xff] %v2726
      %2733 = vst [vmem:[#allocation2 + $0x30] sm:$0xff] %v2727
      %2734 = vst [vmem:[#allocation2 + $0x38] sm:$0xff] %v2728
      %2735 = vst [vmem:[#allocation2 + $0x40] sm:$0xff] %v2729
      %2736 = vst.msk [vmem:[#allocation4] sm:$0xff] %vm659, 0.0
      %2737 = vst.msk [vmem:[#allocation4 + $0x8] sm:$0xff] %vm659, 0.0
      %v2738 = vld [vmem:[#allocation2] sm:$0xff]
      %v2739 = vld [vmem:[#allocation2 + $0x8] sm:$0xff]
      %v2740 = vld [vmem:[#allocation2 + $0x10] sm:$0xff]
      %v2741 = vld [vmem:[#allocation2 + $0x18] sm:$0xff]
      %v2742 = vld [vmem:[#allocation2 + $0x28] sm:$0xff]
      %v2743 = vld [vmem:[#allocation2 + $0x30] sm:$0xff]
      %v2744 = vld [vmem:[#allocation2 + $0x38] sm:$0xff]
      %v2745 = vld [vmem:[#allocation2 + $0x40] sm:$0xff]
      %2754 = vrot.lane.b32.xlu0 %v2738, 19
      %v2755 = vpop.permute.xlu0 %2754
      %2756 = vrot.lane.b32.xlu0 %v2739, 19
      %v2757 = vpop.permute.xlu0 %2756
      %2758 = vrot.lane.b32.xlu0 %v2740, 19
      %v2759 = vpop.permute.xlu0 %2758
      %2760 = vrot.lane.b32.xlu0 %v2741, 19
      %v2761 = vpop.permute.xlu0 %2760
      %2762 = vrot.lane.b32.xlu0 %v2742, 19
      %v2763 = vpop.permute.xlu0 %2762
      %2764 = vrot.lane.b32.xlu0 %v2743, 19
      %v2765 = vpop.permute.xlu0 %2764
      %2766 = vrot.lane.b32.xlu0 %v2744, 19
      %v2767 = vpop.permute.xlu0 %2766
      %2768 = vrot.lane.b32.xlu0 %v2745, 19
      %v2769 = vpop.permute.xlu0 %2768
      %v2770 = vsel %vm506, %v2755, %v2757
      %v2771 = vsel %vm506, %v2757, %v2759
      %v2772 = vsel %vm506, %v2759, %v2761
      %v2773 = vsel %vm506, %v2763, %v2765
      %v2774 = vsel %vm506, %v2765, %v2767
      %v2775 = vsel %vm506, %v2767, %v2769
      %2782 = vst [vmem:[#allocation3] sm:$0xff] %v2770
      %2783 = vst [vmem:[#allocation3 + $0x8] sm:$0xff] %v2771
      %2784 = vst [vmem:[#allocation3 + $0x10] sm:$0xff] %v2772
      %2785 = vst [vmem:[#allocation3 + $0x18] sm:$0xff] %v2773
      %2786 = vst [vmem:[#allocation3 + $0x20] sm:$0xff] %v2774
      %2787 = vst [vmem:[#allocation3 + $0x28] sm:$0xff] %v2775
      %v2788 = vld [vmem:[#allocation2] sm:$0xff]
      %v2789 = vld [vmem:[#allocation2 + $0x8] sm:$0xff]
      %v2790 = vld [vmem:[#allocation2 + $0x10] sm:$0xff]
      %v2791 = vld [vmem:[#allocation2 + $0x18] sm:$0xff]
      %v2792 = vld [vmem:[#allocation2 + $0x28] sm:$0xff]
      %v2793 = vld [vmem:[#allocation2 + $0x30] sm:$0xff]
      %v2794 = vld [vmem:[#allocation2 + $0x38] sm:$0xff]
      %v2795 = vld [vmem:[#allocation2 + $0x40] sm:$0xff]
      %2804 = vrot.lane.b32.xlu0 %v2788, 18
      %v2805 = vpop.permute.xlu0 %2804
      %2806 = vrot.lane.b32.xlu0 %v2789, 18
      %v2807 = vpop.permute.xlu0 %2806
      %2808 = vrot.lane.b32.xlu0 %v2790, 18
      %v2809 = vpop.permute.xlu0 %2808
      %2810 = vrot.lane.b32.xlu0 %v2791, 18
      %v2811 = vpop.permute.xlu0 %2810
      %2812 = vrot.lane.b32.xlu0 %v2792, 18
      %v2813 = vpop.permute.xlu0 %2812
      %2814 = vrot.lane.b32.xlu0 %v2793, 18
      %v2815 = vpop.permute.xlu0 %2814
      %2816 = vrot.lane.b32.xlu0 %v2794, 18
      %v2817 = vpop.permute.xlu0 %2816
      %2818 = vrot.lane.b32.xlu0 %v2795, 18
      %v2819 = vpop.permute.xlu0 %2818
      %v2820 = vsel %vm557, %v2805, %v2807
      %v2821 = vsel %vm557, %v2807, %v2809
      %v2822 = vsel %vm557, %v2809, %v2811
      %v2823 = vsel %vm557, %v2813, %v2815
      %v2824 = vsel %vm557, %v2815, %v2817
      %v2825 = vsel %vm557, %v2817, %v2819
      %2832 = vst [vmem:[#allocation3 + $0x30] sm:$0xff] %v2820
      %2833 = vst [vmem:[#allocation3 + $0x38] sm:$0xff] %v2821
      %2834 = vst [vmem:[#allocation3 + $0x40] sm:$0xff] %v2822
      %2835 = vst [vmem:[#allocation3 + $0x48] sm:$0xff] %v2823
      %2836 = vst [vmem:[#allocation3 + $0x50] sm:$0xff] %v2824
      %2837 = vst [vmem:[#allocation3 + $0x58] sm:$0xff] %v2825
      %v2838 = vld [vmem:[#allocation2] sm:$0xff]
      %v2839 = vld [vmem:[#allocation2 + $0x8] sm:$0xff]
      %v2840 = vld [vmem:[#allocation2 + $0x10] sm:$0xff]
      %v2841 = vld [vmem:[#allocation2 + $0x18] sm:$0xff]
      %v2842 = vld [vmem:[#allocation2 + $0x28] sm:$0xff]
      %v2843 = vld [vmem:[#allocation2 + $0x30] sm:$0xff]
      %v2844 = vld [vmem:[#allocation2 + $0x38] sm:$0xff]
      %v2845 = vld [vmem:[#allocation2 + $0x40] sm:$0xff]
      %2854 = vrot.lane.b32.xlu0 %v2838, 17
      %v2855 = vpop.permute.xlu0 %2854
      %2856 = vrot.lane.b32.xlu0 %v2839, 17
      %v2857 = vpop.permute.xlu0 %2856
      %2858 = vrot.lane.b32.xlu0 %v2840, 17
      %v2859 = vpop.permute.xlu0 %2858
      %2860 = vrot.lane.b32.xlu0 %v2841, 17
      %v2861 = vpop.permute.xlu0 %2860
      %2862 = vrot.lane.b32.xlu0 %v2842, 17
      %v2863 = vpop.permute.xlu0 %2862
      %2864 = vrot.lane.b32.xlu0 %v2843, 17
      %v2865 = vpop.permute.xlu0 %2864
      %2866 = vrot.lane.b32.xlu0 %v2844, 17
      %v2867 = vpop.permute.xlu0 %2866
      %2868 = vrot.lane.b32.xlu0 %v2845, 17
      %v2869 = vpop.permute.xlu0 %2868
      %v2870 = vsel %vm608, %v2855, %v2857
      %v2871 = vsel %vm608, %v2857, %v2859
      %v2872 = vsel %vm608, %v2859, %v2861
      %v2873 = vsel %vm608, %v2863, %v2865
      %v2874 = vsel %vm608, %v2865, %v2867
      %v2875 = vsel %vm608, %v2867, %v2869
      %2882 = vst [vmem:[#allocation3 + $0x60] sm:$0xff] %v2870
      %2883 = vst [vmem:[#allocation3 + $0x68] sm:$0xff] %v2871
      %2884 = vst [vmem:[#allocation3 + $0x70] sm:$0xff] %v2872
      %2885 = vst [vmem:[#allocation3 + $0x78] sm:$0xff] %v2873
      %2886 = vst [vmem:[#allocation3 + $0x80] sm:$0xff] %v2874
      %2887 = vst [vmem:[#allocation3 + $0x88] sm:$0xff] %v2875
      %v2888 = vld [vmem:[#allocation2] sm:$0xff]
      %v2889 = vld [vmem:[#allocation2 + $0x8] sm:$0xff]
      %v2890 = vld [vmem:[#allocation2 + $0x10] sm:$0xff]
      %v2891 = vld [vmem:[#allocation2 + $0x18] sm:$0xff]
      %v2892 = vld [vmem:[#allocation2 + $0x28] sm:$0xff]
      %v2893 = vld [vmem:[#allocation2 + $0x30] sm:$0xff]
      %v2894 = vld [vmem:[#allocation2 + $0x38] sm:$0xff]
      %v2895 = vld [vmem:[#allocation2 + $0x40] sm:$0xff]
      %2904 = vrot.lane.b32.xlu0 %v2888, 1
      %v2905 = vpop.permute.xlu0 %2904
      %2906 = vrot.lane.b32.xlu0 %v2889, 1
      %v2907 = vpop.permute.xlu0 %2906
      %2908 = vrot.lane.b32.xlu0 %v2890, 1
      %v2909 = vpop.permute.xlu0 %2908
      %2910 = vrot.lane.b32.xlu0 %v2891, 1
      %v2911 = vpop.permute.xlu0 %2910
      %2912 = vrot.lane.b32.xlu0 %v2892, 1
      %v2913 = vpop.permute.xlu0 %2912
      %2914 = vrot.lane.b32.xlu0 %v2893, 1
      %v2915 = vpop.permute.xlu0 %2914
      %2916 = vrot.lane.b32.xlu0 %v2894, 1
      %v2917 = vpop.permute.xlu0 %2916
      %2918 = vrot.lane.b32.xlu0 %v2895, 1
      %v2919 = vpop.permute.xlu0 %2918
      %v2920 = vsel %vm659, %v2905, %v2907
      %v2921 = vsel %vm659, %v2907, %v2909
      %v2922 = vsel %vm659, %v2909, %v2911
      %v2923 = vsel %vm659, %v2913, %v2915
      %v2924 = vsel %vm659, %v2915, %v2917
      %v2925 = vsel %vm659, %v2917, %v2919
      %2932 = vst [vmem:[#allocation3 + $0x90] sm:$0xff] %v2920
      %2933 = vst [vmem:[#allocation3 + $0x98] sm:$0xff] %v2921
      %2934 = vst [vmem:[#allocation3 + $0xa0] sm:$0xff] %v2922
      %2935 = vst [vmem:[#allocation3 + $0xa8] sm:$0xff] %v2923
      %2936 = vst [vmem:[#allocation3 + $0xb0] sm:$0xff] %v2924
      %2937 = vst [vmem:[#allocation3 + $0xb8] sm:$0xff] %v2925
      %v2938 = vld [vmem:[#allocation2 + $0x8] sm:$0xff]
      %v2939 = vld [vmem:[#allocation2 + $0x10] sm:$0xff]
      %v2940 = vld [vmem:[#allocation2 + $0x18] sm:$0xff]
      %v2941 = vld [vmem:[#allocation2 + $0x30] sm:$0xff]
      %v2942 = vld [vmem:[#allocation2 + $0x38] sm:$0xff]
      %v2943 = vld [vmem:[#allocation2 + $0x40] sm:$0xff]
      %2944 = vst [vmem:[#allocation3 + $0xc0] sm:$0xff] %v2938
      %2945 = vst [vmem:[#allocation3 + $0xc8] sm:$0xff] %v2939
      %2946 = vst [vmem:[#allocation3 + $0xd0] sm:$0xff] %v2940
      %2947 = vst [vmem:[#allocation3 + $0xd8] sm:$0xff] %v2941
      %2948 = vst [vmem:[#allocation3 + $0xe0] sm:$0xff] %v2942
      %2949 = vst [vmem:[#allocation3 + $0xe8] sm:$0xff] %v2943
      %v2950 = vld [vmem:[#allocation2 + $0x8] sm:$0xff]
      %v2951 = vld [vmem:[#allocation2 + $0x10] sm:$0xff]
      %v2952 = vld [vmem:[#allocation2 + $0x18] sm:$0xff]
      %v2953 = vld [vmem:[#allocation2 + $0x20] sm:$0xff]
      %v2954 = vld [vmem:[#allocation2 + $0x30] sm:$0xff]
      %v2955 = vld [vmem:[#allocation2 + $0x38] sm:$0xff]
      %v2956 = vld [vmem:[#allocation2 + $0x40] sm:$0xff]
      %v2957 = vld [vmem:[#allocation2 + $0x48] sm:$0xff]
      %2966 = vrot.lane.b32.xlu0 %v2950, 127
      %v2967 = vpop.permute.xlu0 %2966
      %2968 = vrot.lane.b32.xlu0 %v2951, 127
      %v2969 = vpop.permute.xlu0 %2968
      %2970 = vrot.lane.b32.xlu0 %v2952, 127
      %v2971 = vpop.permute.xlu0 %2970
      %2972 = vrot.lane.b32.xlu0 %v2953, 127
      %v2973 = vpop.permute.xlu0 %2972
      %2974 = vrot.lane.b32.xlu0 %v2954, 127
      %v2975 = vpop.permute.xlu0 %2974
      %2976 = vrot.lane.b32.xlu0 %v2955, 127
      %v2977 = vpop.permute.xlu0 %2976
      %2978 = vrot.lane.b32.xlu0 %v2956, 127
      %v2979 = vpop.permute.xlu0 %2978
      %2980 = vrot.lane.b32.xlu0 %v2957, 127
      %v2981 = vpop.permute.xlu0 %2980
      %v2982 = vsel %vm722, %v2967, %v2969
      %v2983 = vsel %vm722, %v2969, %v2971
      %v2984 = vsel %vm722, %v2971, %v2973
      %v2985 = vsel %vm722, %v2975, %v2977
      %v2986 = vsel %vm722, %v2977, %v2979
      %v2987 = vsel %vm722, %v2979, %v2981
      %2994 = vst [vmem:[#allocation3 + $0xf0] sm:$0xff] %v2982
      %2995 = vst [vmem:[#allocation3 + $0xf8] sm:$0xff] %v2983
      %2996 = vst [vmem:[#allocation3 + $0x100] sm:$0xff] %v2984
      %2997 = vst [vmem:[#allocation3 + $0x108] sm:$0xff] %v2985
      %2998 = vst [vmem:[#allocation3 + $0x110] sm:$0xff] %v2986
      %2999 = vst [vmem:[#allocation3 + $0x118] sm:$0xff] %v2987
      %v3000 = vld [vmem:[#allocation2 + $0x8] sm:$0xff]
      %v3001 = vld [vmem:[#allocation2 + $0x10] sm:$0xff]
      %v3002 = vld [vmem:[#allocation2 + $0x18] sm:$0xff]
      %v3003 = vld [vmem:[#allocation2 + $0x20] sm:$0xff]
      %v3004 = vld [vmem:[#allocation2 + $0x30] sm:$0xff]
      %v3005 = vld [vmem:[#allocation2 + $0x38] sm:$0xff]
      %v3006 = vld [vmem:[#allocation2 + $0x40] sm:$0xff]
      %v3007 = vld [vmem:[#allocation2 + $0x48] sm:$0xff]
      %3016 = vrot.lane.b32.xlu0 %v3000, 111
      %v3017 = vpop.permute.xlu0 %3016
      %3018 = vrot.lane.b32.xlu0 %v3001, 111
      %v3019 = vpop.permute.xlu0 %3018
      %3020 = vrot.lane.b32.xlu0 %v3002, 111
      %v3021 = vpop.permute.xlu0 %3020
      %3022 = vrot.lane.b32.xlu0 %v3003, 111
      %v3023 = vpop.permute.xlu0 %3022
      %3024 = vrot.lane.b32.xlu0 %v3004, 111
      %v3025 = vpop.permute.xlu0 %3024
      %3026 = vrot.lane.b32.xlu0 %v3005, 111
      %v3027 = vpop.permute.xlu0 %3026
      %3028 = vrot.lane.b32.xlu0 %v3006, 111
      %v3029 = vpop.permute.xlu0 %3028
      %3030 = vrot.lane.b32.xlu0 %v3007, 111
      %v3031 = vpop.permute.xlu0 %3030
      %v3032 = vsel %vm773, %v3017, %v3019
      %v3033 = vsel %vm773, %v3019, %v3021
      %v3034 = vsel %vm773, %v3021, %v3023
      %v3035 = vsel %vm773, %v3025, %v3027
      %v3036 = vsel %vm773, %v3027, %v3029
      %v3037 = vsel %vm773, %v3029, %v3031
      %3044 = vst [vmem:[#allocation3 + $0x120] sm:$0xff] %v3032
      %3045 = vst [vmem:[#allocation3 + $0x128] sm:$0xff] %v3033
      %3046 = vst [vmem:[#allocation3 + $0x130] sm:$0xff] %v3034
      %3047 = vst [vmem:[#allocation3 + $0x138] sm:$0xff] %v3035
      %3048 = vst [vmem:[#allocation3 + $0x140] sm:$0xff] %v3036
      %3049 = vst [vmem:[#allocation3 + $0x148] sm:$0xff] %v3037
      %v3050 = vld [vmem:[#allocation2 + $0x8] sm:$0xff]
      %v3051 = vld [vmem:[#allocation2 + $0x10] sm:$0xff]
      %v3052 = vld [vmem:[#allocation2 + $0x18] sm:$0xff]
      %v3053 = vld [vmem:[#allocation2 + $0x20] sm:$0xff]
      %v3054 = vld [vmem:[#allocation2 + $0x30] sm:$0xff]
      %v3055 = vld [vmem:[#allocation2 + $0x38] sm:$0xff]
      %v3056 = vld [vmem:[#allocation2 + $0x40] sm:$0xff]
      %v3057 = vld [vmem:[#allocation2 + $0x48] sm:$0xff]
      %3066 = vrot.lane.b32.xlu0 %v3050, 110
      %v3067 = vpop.permute.xlu0 %3066
      %3068 = vrot.lane.b32.xlu0 %v3051, 110
      %v3069 = vpop.permute.xlu0 %3068
      %3070 = vrot.lane.b32.xlu0 %v3052, 110
      %v3071 = vpop.permute.xlu0 %3070
      %3072 = vrot.lane.b32.xlu0 %v3053, 110
      %v3073 = vpop.permute.xlu0 %3072
      %3074 = vrot.lane.b32.xlu0 %v3054, 110
      %v3075 = vpop.permute.xlu0 %3074
      %3076 = vrot.lane.b32.xlu0 %v3055, 110
      %v3077 = vpop.permute.xlu0 %3076
      %3078 = vrot.lane.b32.xlu0 %v3056, 110
      %v3079 = vpop.permute.xlu0 %3078
      %3080 = vrot.lane.b32.xlu0 %v3057, 110
      %v3081 = vpop.permute.xlu0 %3080
      %v3082 = vsel %vm824, %v3067, %v3069
      %v3083 = vsel %vm824, %v3069, %v3071
      %v3084 = vsel %vm824, %v3071, %v3073
      %v3085 = vsel %vm824, %v3075, %v3077
      %v3086 = vsel %vm824, %v3077, %v3079
      %v3087 = vsel %vm824, %v3079, %v3081
      %3094 = vst [vmem:[#allocation3 + $0x150] sm:$0xff] %v3082
      %3095 = vst [vmem:[#allocation3 + $0x158] sm:$0xff] %v3083
      %3096 = vst [vmem:[#allocation3 + $0x160] sm:$0xff] %v3084
      %3097 = vst [vmem:[#allocation3 + $0x168] sm:$0xff] %v3085
      %3098 = vst [vmem:[#allocation3 + $0x170] sm:$0xff] %v3086
      %3099 = vst [vmem:[#allocation3 + $0x178] sm:$0xff] %v3087
      %v3100 = vld [vmem:[#allocation2 + $0x8] sm:$0xff]
      %v3101 = vld [vmem:[#allocation2 + $0x10] sm:$0xff]
      %v3102 = vld [vmem:[#allocation2 + $0x18] sm:$0xff]
      %v3103 = vld [vmem:[#allocation2 + $0x20] sm:$0xff]
      %v3104 = vld [vmem:[#allocation2 + $0x30] sm:$0xff]
      %v3105 = vld [vmem:[#allocation2 + $0x38] sm:$0xff]
      %v3106 = vld [vmem:[#allocation2 + $0x40] sm:$0xff]
      %v3107 = vld [vmem:[#allocation2 + $0x48] sm:$0xff]
      %3116 = vrot.lane.b32.xlu0 %v3100, 109
      %v3117 = vpop.permute.xlu0 %3116
      %3118 = vrot.lane.b32.xlu0 %v3101, 109
      %v3119 = vpop.permute.xlu0 %3118
      %3120 = vrot.lane.b32.xlu0 %v3102, 109
      %v3121 = vpop.permute.xlu0 %3120
      %3122 = vrot.lane.b32.xlu0 %v3103, 109
      %v3123 = vpop.permute.xlu0 %3122
      %3124 = vrot.lane.b32.xlu0 %v3104, 109
      %v3125 = vpop.permute.xlu0 %3124
      %3126 = vrot.lane.b32.xlu0 %v3105, 109
      %v3127 = vpop.permute.xlu0 %3126
      %3128 = vrot.lane.b32.xlu0 %v3106, 109
      %v3129 = vpop.permute.xlu0 %3128
      %3130 = vrot.lane.b32.xlu0 %v3107, 109
      %v3131 = vpop.permute.xlu0 %3130
      %v3132 = vsel %vm875, %v3117, %v3119
      %v3133 = vsel %vm875, %v3119, %v3121
      %v3134 = vsel %vm875, %v3121, %v3123
      %v3135 = vsel %vm875, %v3125, %v3127
      %v3136 = vsel %vm875, %v3127, %v3129
      %v3137 = vsel %vm875, %v3129, %v3131
      %3144 = vst [vmem:[#allocation3 + $0x180] sm:$0xff] %v3132
      %3145 = vst [vmem:[#allocation3 + $0x188] sm:$0xff] %v3133
      %3146 = vst [vmem:[#allocation3 + $0x190] sm:$0xff] %v3134
      %3147 = vst [vmem:[#allocation3 + $0x198] sm:$0xff] %v3135
      %3148 = vst [vmem:[#allocation3 + $0x1a0] sm:$0xff] %v3136
      %3149 = vst [vmem:[#allocation3 + $0x1a8] sm:$0xff] %v3137
      %v3150 = vld [vmem:[%s3] sm:$0xff]
      %v3151 = vld [vmem:[%s3 + $0x8] sm:$0xff]
      %v3152 = vld [vmem:[%s3 + $0x10] sm:$0xff]
      %v3153 = vld [vmem:[%s3 + $0x18] sm:$0xff]
      %v3154 = vld [vmem:[#allocation3] sm:$0xff]
      %v3155 = vld [vmem:[#allocation3 + $0x8] sm:$0xff]
      %v3156 = vld [vmem:[#allocation3 + $0x10] sm:$0xff]
      %v3157 = vld [vmem:[#allocation3 + $0x18] sm:$0xff]
      %v3158 = vld [vmem:[#allocation3 + $0x20] sm:$0xff]
      %v3159 = vld [vmem:[#allocation3 + $0x28] sm:$0xff]
      %v3160 = vld [vmem:[#allocation3 + $0x30] sm:$0xff]
      %v3161 = vld [vmem:[#allocation3 + $0x38] sm:$0xff]
      %v3162 = vld [vmem:[#allocation3 + $0x40] sm:$0xff]
      %v3163 = vld [vmem:[#allocation3 + $0x48] sm:$0xff]
      %v3164 = vld [vmem:[#allocation3 + $0x50] sm:$0xff]
      %v3165 = vld [vmem:[#allocation3 + $0x58] sm:$0xff]
      %v3166 = vld [vmem:[#allocation3 + $0x60] sm:$0xff]
      %v3167 = vld [vmem:[#allocation3 + $0x68] sm:$0xff]
      %v3168 = vld [vmem:[#allocation3 + $0x70] sm:$0xff]
      %v3169 = vld [vmem:[#allocation3 + $0x78] sm:$0xff]
      %v3170 = vld [vmem:[#allocation3 + $0x80] sm:$0xff]
      %v3171 = vld [vmem:[#allocation3 + $0x88] sm:$0xff]
      %v3172 = vld [vmem:[#allocation3 + $0x90] sm:$0xff]
      %v3173 = vld [vmem:[#allocation3 + $0x98] sm:$0xff]
      %v3174 = vld [vmem:[#allocation3 + $0xa0] sm:$0xff]
      %v3175 = vld [vmem:[#allocation3 + $0xa8] sm:$0xff]
      %v3176 = vld [vmem:[#allocation3 + $0xb0] sm:$0xff]
      %v3177 = vld [vmem:[#allocation3 + $0xb8] sm:$0xff]
      %v3178 = vld [vmem:[#allocation3 + $0xc0] sm:$0xff]
      %v3179 = vld [vmem:[#allocation3 + $0xc8] sm:$0xff]
      %v3180 = vld [vmem:[#allocation3 + $0xd0] sm:$0xff]
      %v3181 = vld [vmem:[#allocation3 + $0xd8] sm:$0xff]
      %v3182 = vld [vmem:[#allocation3 + $0xe0] sm:$0xff]
      %v3183 = vld [vmem:[#allocation3 + $0xe8] sm:$0xff]
      %v3184 = vld [vmem:[#allocation3 + $0xf0] sm:$0xff]
      %v3185 = vld [vmem:[#allocation3 + $0xf8] sm:$0xff]
      %v3186 = vld [vmem:[#allocation3 + $0x100] sm:$0xff]
      %v3187 = vld [vmem:[#allocation3 + $0x108] sm:$0xff]
      %v3188 = vld [vmem:[#allocation3 + $0x110] sm:$0xff]
      %v3189 = vld [vmem:[#allocation3 + $0x118] sm:$0xff]
      %v3190 = vld [vmem:[#allocation3 + $0x120] sm:$0xff]
      %v3191 = vld [vmem:[#allocation3 + $0x128] sm:$0xff]
      %v3192 = vld [vmem:[#allocation3 + $0x130] sm:$0xff]
      %v3193 = vld [vmem:[#allocation3 + $0x138] sm:$0xff]
      %v3194 = vld [vmem:[#allocation3 + $0x140] sm:$0xff]
      %v3195 = vld [vmem:[#allocation3 + $0x148] sm:$0xff]
      %v3196 = vld [vmem:[#allocation3 + $0x150] sm:$0xff]
      %v3197 = vld [vmem:[#allocation3 + $0x158] sm:$0xff]
      %v3198 = vld [vmem:[#allocation3 + $0x160] sm:$0xff]
      %v3199 = vld [vmem:[#allocation3 + $0x168] sm:$0xff]
      %v3200 = vld [vmem:[#allocation3 + $0x170] sm:$0xff]
      %v3201 = vld [vmem:[#allocation3 + $0x178] sm:$0xff]
      %v3202 = vld [vmem:[#allocation3 + $0x180] sm:$0xff]
      %v3203 = vld [vmem:[#allocation3 + $0x188] sm:$0xff]
      %v3204 = vld [vmem:[#allocation3 + $0x190] sm:$0xff]
      %v3205 = vld [vmem:[#allocation3 + $0x198] sm:$0xff]
      %v3206 = vld [vmem:[#allocation3 + $0x1a0] sm:$0xff]
      %v3207 = vld [vmem:[#allocation3 + $0x1a8] sm:$0xff]
      %v3209 = vsel %vm964, %v3151, 0
      %v3212 = vsel %vm964, %v3153, 0
      %v3214 = vand.u32 %v3155, 4294901760
      %3215 = vmatprep.subr.mxu0 %v3214
      %v3216 = vand.u32 %v3154, 4294901760
      %3217 = vmatpush1.msra.mxu0 %v3216
      %v3218 = vand.u32 %v3158, 4294901760
      %3219 = vmatprep.subr.mxu0 %v3218
      %v3220 = vand.u32 %v3157, 4294901760
      %3221 = vmatpush1.msra.mxu0 %v3220
      %v3222 = vand.u32 %v3161, 4294901760
      %3223 = vmatprep.subr.mxu0 %v3222
      %v3224 = vand.u32 %v3160, 4294901760
      %3225 = vmatpush1.msra.mxu0 %v3224
      %v3226 = vand.u32 %v3164, 4294901760
      %3227 = vmatprep.subr.mxu0 %v3226
      %v3228 = vand.u32 %v3163, 4294901760
      %3229 = vmatpush1.msra.mxu0 %v3228
      %v3230 = vand.u32 %v3167, 4294901760
      %3231 = vmatprep.subr.mxu0 %v3230
      %v3232 = vand.u32 %v3166, 4294901760
      %3233 = vmatpush1.msra.mxu0 %v3232
      %v3234 = vand.u32 %v3170, 4294901760
      %3235 = vmatprep.subr.mxu0 %v3234
      %v3236 = vand.u32 %v3169, 4294901760
      %3237 = vmatpush1.msra.mxu0 %v3236
      %v3238 = vand.u32 %v3173, 4294901760
      %3239 = vmatprep.subr.mxu0 %v3238
      %v3240 = vand.u32 %v3172, 4294901760
      %3241 = vmatpush1.msra.mxu0 %v3240
      %v3242 = vand.u32 %v3176, 4294901760
      %3243 = vmatprep.subr.mxu0 %v3242
      %v3244 = vand.u32 %v3175, 4294901760
      %3245 = vmatpush1.msra.mxu0 %v3244
      %v3246 = vand.u32 %v3179, 4294901760
      %3247 = vmatprep.subr.mxu0 %v3246
      %v3248 = vand.u32 %v3178, 4294901760
      %3249 = vmatpush1.msra.mxu0 %v3248
      %v3250 = vand.u32 %v3182, 4294901760
      %3251 = vmatprep.subr.mxu0 %v3250
      %v3252 = vand.u32 %v3181, 4294901760
      %3253 = vmatpush1.msra.mxu0 %v3252
      %v3254 = vand.u32 %v3185, 4294901760
      %3255 = vmatprep.subr.mxu0 %v3254
      %v3256 = vand.u32 %v3184, 4294901760
      %3257 = vmatpush1.msra.mxu0 %v3256
      %v3258 = vand.u32 %v3188, 4294901760
      %3259 = vmatprep.subr.mxu0 %v3258
      %v3260 = vand.u32 %v3187, 4294901760
      %3261 = vmatpush1.msra.mxu0 %v3260
      %v3262 = vand.u32 %v3191, 4294901760
      %3263 = vmatprep.subr.mxu0 %v3262
      %v3264 = vand.u32 %v3190, 4294901760
      %3265 = vmatpush1.msra.mxu0 %v3264
      %v3266 = vand.u32 %v3194, 4294901760
      %3267 = vmatprep.subr.mxu0 %v3266
      %v3268 = vand.u32 %v3193, 4294901760
      %3269 = vmatpush1.msra.mxu0 %v3268
      %v3270 = vand.u32 %v3197, 4294901760
      %3271 = vmatprep.subr.mxu0 %v3270
      %v3272 = vand.u32 %v3196, 4294901760
      %3273 = vmatpush1.msra.mxu0 %v3272
      %v3274 = vand.u32 %v3200, 4294901760
      %3275 = vmatprep.subr.mxu0 %v3274
      %v3276 = vand.u32 %v3199, 4294901760
      %3277 = vmatpush1.msra.mxu0 %v3276
      %v3278 = vand.u32 %v3203, 4294901760
      %3279 = vmatprep.subr.mxu0 %v3278
      %v3280 = vand.u32 %v3202, 4294901760
      %3281 = vmatpush1.msra.mxu0 %v3280
      %v3282 = vand.u32 %v3206, 4294901760
      %3283 = vmatprep.subr.mxu0 %v3282
      %v3284 = vand.u32 %v3205, 4294901760
      %3285 = vmatpush1.msra.mxu0 %v3284
      %3286 = vmatprep.subr.mxu0 0.0
      %3287 = vmatpush1.msra.mxu0 0.0
      %3288 = vmatprep.subr.mxu0 0.0
      %3289 = vmatpush1.msra.mxu0 0.0
      %3290 = vmatprep.subr.mxu0 0.0
      %3291 = vmatpush1.msra.mxu0 0.0
      %3292 = vmatprep.subr.mxu0 0.0
      %3293 = vmatpush1.msra.mxu0 0.0
      %3294 = vmatprep.subr.mxu0 0.0
      %3295 = vmatpush1.msra.mxu0 0.0
      %3296 = vmatprep.subr.mxu0 0.0
      %3297 = vmatpush1.msra.mxu0 0.0
      %3298 = vmatprep.subr.mxu0 0.0
      %3299 = vmatpush1.msra.mxu0 0.0
      %3300 = vmatprep.subr.mxu0 0.0
      %3301 = vmatpush1.msra.mxu0 0.0
      %3302 = vmatprep.subr.mxu0 0.0
      %3303 = vmatpush1.msra.mxu0 0.0
      %3304 = vmatprep.subr.mxu0 0.0
      %3305 = vmatpush1.msra.mxu0 0.0
      %3306 = vmatprep.subr.mxu0 0.0
      %3307 = vmatpush1.msra.mxu0 0.0
      %3308 = vmatprep.subr.mxu0 0.0
      %3309 = vmatpush1.msra.mxu0 0.0
      %3310 = vmatprep.subr.mxu0 0.0
      %3311 = vmatpush1.msra.mxu0 0.0
      %3312 = vmatprep.subr.mxu0 0.0
      %3313 = vmatpush1.msra.mxu0 0.0
      %v3314 = vand.u32 %v3209, 4294901760
      %v3315 = vsub.f32 %v3209, %v3314
      %v3316 = vand.u32 %v3315, 4294901760
      %v3317 = vsub.f32 %v3315, %v3316
      %v3318 = vand.u32 %v3317, 4294901760
      %3319 = vmatprep.mubr.f32.mxu0 %v3318
      %v3320 = vand.u32 %v3150, 4294901760
      %v3321 = vsub.f32 %v3150, %v3320
      %v3322 = vand.u32 %v3321, 4294901760
      %v3323 = vsub.f32 %v3321, %v3322
      %v3324 = vand.u32 %v3323, 4294901760
      %3325 = vmatmul.mubr.f32.gmra.mrb[0].mxu0 %v3324
      %v3326 = vpop.f32.mrb[0].mxu0
      %v3327 = vadd.f32 0.0, %v3326
      %v3328 = vpop.f32.mrb[0].mxu0
      %v3329 = vadd.f32 0.0, %v3328
      %v3330 = vand.u32 %v3212, 4294901760
      %v3331 = vsub.f32 %v3212, %v3330
      %v3332 = vand.u32 %v3331, 4294901760
      %v3333 = vsub.f32 %v3331, %v3332
      %v3334 = vand.u32 %v3333, 4294901760
      %3335 = vmatprep.mubr.f32.mxu0 %v3334
      %v3336 = vand.u32 %v3152, 4294901760
      %v3337 = vsub.f32 %v3152, %v3336
      %v3338 = vand.u32 %v3337, 4294901760
      %v3339 = vsub.f32 %v3337, %v3338
      %v3340 = vand.u32 %v3339, 4294901760
      %3341 = vmatmul.mubr.f32.gmra.mrb[0].mxu0 %v3340
      %v3342 = vpop.f32.mrb[0].mxu0
      %v3343 = vadd.f32 0.0, %v3342
      %v3344 = vpop.f32.mrb[0].mxu0
      %v3345 = vadd.f32 0.0, %v3344
      %3346 = vdwg.mxu0
      %v3347 = vand.u32 %v3155, 4294901760
      %v3348 = vsub.f32 %v3155, %v3347
      %v3349 = vand.u32 %v3348, 4294901760
      %v3350 = vsub.f32 %v3348, %v3349
      %v3351 = vand.u32 %v3350, 4294901760
      %3352 = vmatprep.subr.mxu0 %v3351
      %v3353 = vand.u32 %v3154, 4294901760
      %v3354 = vsub.f32 %v3154, %v3353
      %v3355 = vand.u32 %v3354, 4294901760
      %v3356 = vsub.f32 %v3354, %v3355
      %v3357 = vand.u32 %v3356, 4294901760
      %3358 = vmatpush1.msra.mxu0 %v3357
      %v3359 = vand.u32 %v3158, 4294901760
      %v3360 = vsub.f32 %v3158, %v3359
      %v3361 = vand.u32 %v3360, 4294901760
      %v3362 = vsub.f32 %v3360, %v3361
      %v3363 = vand.u32 %v3362, 4294901760
      %3364 = vmatprep.subr.mxu0 %v3363
      %v3365 = vand.u32 %v3157, 4294901760
      %v3366 = vsub.f32 %v3157, %v3365
      %v3367 = vand.u32 %v3366, 4294901760
      %v3368 = vsub.f32 %v3366, %v3367
      %v3369 = vand.u32 %v3368, 4294901760
      %3370 = vmatpush1.msra.mxu0 %v3369
      %v3371 = vand.u32 %v3161, 4294901760
      %v3372 = vsub.f32 %v3161, %v3371
      %v3373 = vand.u32 %v3372, 4294901760
      %v3374 = vsub.f32 %v3372, %v3373
      %v3375 = vand.u32 %v3374, 4294901760
      %3376 = vmatprep.subr.mxu0 %v3375
      %v3377 = vand.u32 %v3160, 4294901760
      %v3378 = vsub.f32 %v3160, %v3377
      %v3379 = vand.u32 %v3378, 4294901760
      %v3380 = vsub.f32 %v3378, %v3379
      %v3381 = vand.u32 %v3380, 4294901760
      %3382 = vmatpush1.msra.mxu0 %v3381
      %v3383 = vand.u32 %v3164, 4294901760
      %v3384 = vsub.f32 %v3164, %v3383
      %v3385 = vand.u32 %v3384, 4294901760
      %v3386 = vsub.f32 %v3384, %v3385
      %v3387 = vand.u32 %v3386, 4294901760
      %3388 = vmatprep.subr.mxu0 %v3387
      %v3389 = vand.u32 %v3163, 4294901760
      %v3390 = vsub.f32 %v3163, %v3389
      %v3391 = vand.u32 %v3390, 4294901760
      %v3392 = vsub.f32 %v3390, %v3391
      %v3393 = vand.u32 %v3392, 4294901760
      %3394 = vmatpush1.msra.mxu0 %v3393
      %v3395 = vand.u32 %v3167, 4294901760
      %v3396 = vsub.f32 %v3167, %v3395
      %v3397 = vand.u32 %v3396, 4294901760
      %v3398 = vsub.f32 %v3396, %v3397
      %v3399 = vand.u32 %v3398, 4294901760
      %3400 = vmatprep.subr.mxu0 %v3399
      %v3401 = vand.u32 %v3166, 4294901760
      %v3402 = vsub.f32 %v3166, %v3401
      %v3403 = vand.u32 %v3402, 4294901760
      %v3404 = vsub.f32 %v3402, %v3403
      %v3405 = vand.u32 %v3404, 4294901760
      %3406 = vmatpush1.msra.mxu0 %v3405
      %v3407 = vand.u32 %v3170, 4294901760
      %v3408 = vsub.f32 %v3170, %v3407
      %v3409 = vand.u32 %v3408, 4294901760
      %v3410 = vsub.f32 %v3408, %v3409
      %v3411 = vand.u32 %v3410, 4294901760
      %3412 = vmatprep.subr.mxu0 %v3411
      %v3413 = vand.u32 %v3169, 4294901760
      %v3414 = vsub.f32 %v3169, %v3413
      %v3415 = vand.u32 %v3414, 4294901760
      %v3416 = vsub.f32 %v3414, %v3415
      %v3417 = vand.u32 %v3416, 4294901760
      %3418 = vmatpush1.msra.mxu0 %v3417
      %v3419 = vand.u32 %v3173, 4294901760
      %v3420 = vsub.f32 %v3173, %v3419
      %v3421 = vand.u32 %v3420, 4294901760
      %v3422 = vsub.f32 %v3420, %v3421
      %v3423 = vand.u32 %v3422, 4294901760
      %3424 = vmatprep.subr.mxu0 %v3423
      %v3425 = vand.u32 %v3172, 4294901760
      %v3426 = vsub.f32 %v3172, %v3425
      %v3427 = vand.u32 %v3426, 4294901760
      %v3428 = vsub.f32 %v3426, %v3427
      %v3429 = vand.u32 %v3428, 4294901760
      %3430 = vmatpush1.msra.mxu0 %v3429
      %v3431 = vand.u32 %v3176, 4294901760
      %v3432 = vsub.f32 %v3176, %v3431
      %v3433 = vand.u32 %v3432, 4294901760
      %v3434 = vsub.f32 %v3432, %v3433
      %v3435 = vand.u32 %v3434, 4294901760
      %3436 = vmatprep.subr.mxu0 %v3435
      %v3437 = vand.u32 %v3175, 4294901760
      %v3438 = vsub.f32 %v3175, %v3437
      %v3439 = vand.u32 %v3438, 4294901760
      %v3440 = vsub.f32 %v3438, %v3439
      %v3441 = vand.u32 %v3440, 4294901760
      %3442 = vmatpush1.msra.mxu0 %v3441
      %v3443 = vand.u32 %v3179, 4294901760
      %v3444 = vsub.f32 %v3179, %v3443
      %v3445 = vand.u32 %v3444, 4294901760
      %v3446 = vsub.f32 %v3444, %v3445
      %v3447 = vand.u32 %v3446, 4294901760
      %3448 = vmatprep.subr.mxu0 %v3447
      %v3449 = vand.u32 %v3178, 4294901760
      %v3450 = vsub.f32 %v3178, %v3449
      %v3451 = vand.u32 %v3450, 4294901760
      %v3452 = vsub.f32 %v3450, %v3451
      %v3453 = vand.u32 %v3452, 4294901760
      %3454 = vmatpush1.msra.mxu0 %v3453
      %v3455 = vand.u32 %v3182, 4294901760
      %v3456 = vsub.f32 %v3182, %v3455
      %v3457 = vand.u32 %v3456, 4294901760
      %v3458 = vsub.f32 %v3456, %v3457
      %v3459 = vand.u32 %v3458, 4294901760
      %3460 = vmatprep.subr.mxu0 %v3459
      %v3461 = vand.u32 %v3181, 4294901760
      %v3462 = vsub.f32 %v3181, %v3461
      %v3463 = vand.u32 %v3462, 4294901760
      %v3464 = vsub.f32 %v3462, %v3463
      %v3465 = vand.u32 %v3464, 4294901760
      %3466 = vmatpush1.msra.mxu0 %v3465
      %v3467 = vand.u32 %v3185, 4294901760
      %v3468 = vsub.f32 %v3185, %v3467
      %v3469 = vand.u32 %v3468, 4294901760
      %v3470 = vsub.f32 %v3468, %v3469
      %v3471 = vand.u32 %v3470, 4294901760
      %3472 = vmatprep.subr.mxu0 %v3471
      %v3473 = vand.u32 %v3184, 4294901760
      %v3474 = vsub.f32 %v3184, %v3473
      %v3475 = vand.u32 %v3474, 4294901760
      %v3476 = vsub.f32 %v3474, %v3475
      %v3477 = vand.u32 %v3476, 4294901760
      %3478 = vmatpush1.msra.mxu0 %v3477
      %v3479 = vand.u32 %v3188, 4294901760
      %v3480 = vsub.f32 %v3188, %v3479
      %v3481 = vand.u32 %v3480, 4294901760
      %v3482 = vsub.f32 %v3480, %v3481
      %v3483 = vand.u32 %v3482, 4294901760
      %3484 = vmatprep.subr.mxu0 %v3483
      %v3485 = vand.u32 %v3187, 4294901760
      %v3486 = vsub.f32 %v3187, %v3485
      %v3487 = vand.u32 %v3486, 4294901760
      %v3488 = vsub.f32 %v3486, %v3487
      %v3489 = vand.u32 %v3488, 4294901760
      %3490 = vmatpush1.msra.mxu0 %v3489
      %v3491 = vand.u32 %v3191, 4294901760
      %v3492 = vsub.f32 %v3191, %v3491
      %v3493 = vand.u32 %v3492, 4294901760
      %v3494 = vsub.f32 %v3492, %v3493
      %v3495 = vand.u32 %v3494, 4294901760
      %3496 = vmatprep.subr.mxu0 %v3495
      %v3497 = vand.u32 %v3190, 4294901760
      %v3498 = vsub.f32 %v3190, %v3497
      %v3499 = vand.u32 %v3498, 4294901760
      %v3500 = vsub.f32 %v3498, %v3499
      %v3501 = vand.u32 %v3500, 4294901760
      %3502 = vmatpush1.msra.mxu0 %v3501
      %v3503 = vand.u32 %v3194, 4294901760
      %v3504 = vsub.f32 %v3194, %v3503
      %v3505 = vand.u32 %v3504, 4294901760
      %v3506 = vsub.f32 %v3504, %v3505
      %v3507 = vand.u32 %v3506, 4294901760
      %3508 = vmatprep.subr.mxu0 %v3507
      %v3509 = vand.u32 %v3193, 4294901760
      %v3510 = vsub.f32 %v3193, %v3509
      %v3511 = vand.u32 %v3510, 4294901760
      %v3512 = vsub.f32 %v3510, %v3511
      %v3513 = vand.u32 %v3512, 4294901760
      %3514 = vmatpush1.msra.mxu0 %v3513
      %v3515 = vand.u32 %v3197, 4294901760
      %v3516 = vsub.f32 %v3197, %v3515
      %v3517 = vand.u32 %v3516, 4294901760
      %v3518 = vsub.f32 %v3516, %v3517
      %v3519 = vand.u32 %v3518, 4294901760
      %3520 = vmatprep.subr.mxu0 %v3519
      %v3521 = vand.u32 %v3196, 4294901760
      %v3522 = vsub.f32 %v3196, %v3521
      %v3523 = vand.u32 %v3522, 4294901760
      %v3524 = vsub.f32 %v3522, %v3523
      %v3525 = vand.u32 %v3524, 4294901760
      %3526 = vmatpush1.msra.mxu0 %v3525
      %v3527 = vand.u32 %v3200, 4294901760
      %v3528 = vsub.f32 %v3200, %v3527
      %v3529 = vand.u32 %v3528, 4294901760
      %v3530 = vsub.f32 %v3528, %v3529
      %v3531 = vand.u32 %v3530, 4294901760
      %3532 = vmatprep.subr.mxu0 %v3531
      %v3533 = vand.u32 %v3199, 4294901760
      %v3534 = vsub.f32 %v3199, %v3533
      %v3535 = vand.u32 %v3534, 4294901760
      %v3536 = vsub.f32 %v3534, %v3535
      %v3537 = vand.u32 %v3536, 4294901760
      %3538 = vmatpush1.msra.mxu0 %v3537
      %v3539 = vand.u32 %v3203, 4294901760
      %v3540 = vsub.f32 %v3203, %v3539
      %v3541 = vand.u32 %v3540, 4294901760
      %v3542 = vsub.f32 %v3540, %v3541
      %v3543 = vand.u32 %v3542, 4294901760
      %3544 = vmatprep.subr.mxu0 %v3543
      %v3545 = vand.u32 %v3202, 4294901760
      %v3546 = vsub.f32 %v3202, %v3545
      %v3547 = vand.u32 %v3546, 4294901760
      %v3548 = vsub.f32 %v3546, %v3547
      %v3549 = vand.u32 %v3548, 4294901760
      %3550 = vmatpush1.msra.mxu0 %v3549
      %v3551 = vand.u32 %v3206, 4294901760
      %v3552 = vsub.f32 %v3206, %v3551
      %v3553 = vand.u32 %v3552, 4294901760
      %v3554 = vsub.f32 %v3552, %v3553
      %v3555 = vand.u32 %v3554, 4294901760
      %3556 = vmatprep.subr.mxu0 %v3555
      %v3557 = vand.u32 %v3205, 4294901760
      %v3558 = vsub.f32 %v3205, %v3557
      %v3559 = vand.u32 %v3558, 4294901760
      %v3560 = vsub.f32 %v3558, %v3559
      %v3561 = vand.u32 %v3560, 4294901760
      %3562 = vmatpush1.msra.mxu0 %v3561
      %3563 = vmatprep.subr.mxu0 0.0
      %3564 = vmatpush1.msra.mxu0 0.0
      %3565 = vmatprep.subr.mxu0 0.0
      %3566 = vmatpush1.msra.mxu0 0.0
      %3567 = vmatprep.subr.mxu0 0.0
      %3568 = vmatpush1.msra.mxu0 0.0
      %3569 = vmatprep.subr.mxu0 0.0
      %3570 = vmatpush1.msra.mxu0 0.0
      %3571 = vmatprep.subr.mxu0 0.0
      %3572 = vmatpush1.msra.mxu0 0.0
      %3573 = vmatprep.subr.mxu0 0.0
      %3574 = vmatpush1.msra.mxu0 0.0
      %3575 = vmatprep.subr.mxu0 0.0
      %3576 = vmatpush1.msra.mxu0 0.0
      %3577 = vmatprep.subr.mxu0 0.0
      %3578 = vmatpush1.msra.mxu0 0.0
      %3579 = vmatprep.subr.mxu0 0.0
      %3580 = vmatpush1.msra.mxu0 0.0
      %3581 = vmatprep.subr.mxu0 0.0
      %3582 = vmatpush1.msra.mxu0 0.0
      %3583 = vmatprep.subr.mxu0 0.0
      %3584 = vmatpush1.msra.mxu0 0.0
      %3585 = vmatprep.subr.mxu0 0.0
      %3586 = vmatpush1.msra.mxu0 0.0
      %3587 = vmatprep.subr.mxu0 0.0
      %3588 = vmatpush1.msra.mxu0 0.0
      %3589 = vmatprep.subr.mxu0 0.0
      %3590 = vmatpush1.msra.mxu0 0.0
      %v3591 = vand.u32 %v3209, 4294901760
      %3592 = vmatprep.mubr.f32.mxu0 %v3591
      %v3593 = vand.u32 %v3150, 4294901760
      %3594 = vmatmul.mubr.f32.gmra.mrb[0].mxu0 %v3593
      %v3595 = vpop.f32.mrb[0].mxu0
      %v3596 = vadd.f32 %v3327, %v3595
      %v3597 = vpop.f32.mrb[0].mxu0
      %v3598 = vadd.f32 %v3329, %v3597
      %v3599 = vand.u32 %v3212, 4294901760
      %3600 = vmatprep.mubr.f32.mxu0 %v3599
      %v3601 = vand.u32 %v3152, 4294901760
      %3602 = vmatmul.mubr.f32.gmra.mrb[0].mxu0 %v3601
      %v3603 = vpop.f32.mrb[0].mxu0
      %v3604 = vadd.f32 %v3343, %v3603
      %v3605 = vpop.f32.mrb[0].mxu0
      %v3606 = vadd.f32 %v3345, %v3605
      %3607 = vdwg.mxu0
      %v3608 = vand.u32 %v3155, 4294901760
      %v3609 = vsub.f32 %v3155, %v3608
      %3610 = vmatprep.subr.mxu0 %v3609
      %v3611 = vand.u32 %v3154, 4294901760
      %v3612 = vsub.f32 %v3154, %v3611
      %3613 = vmatpush1.msra.mxu0 %v3612
      %v3614 = vand.u32 %v3158, 4294901760
      %v3615 = vsub.f32 %v3158, %v3614
      %3616 = vmatprep.subr.mxu0 %v3615
      %v3617 = vand.u32 %v3157, 4294901760
      %v3618 = vsub.f32 %v3157, %v3617
      %3619 = vmatpush1.msra.mxu0 %v3618
      %v3620 = vand.u32 %v3161, 4294901760
      %v3621 = vsub.f32 %v3161, %v3620
      %3622 = vmatprep.subr.mxu0 %v3621
      %v3623 = vand.u32 %v3160, 4294901760
      %v3624 = vsub.f32 %v3160, %v3623
      %3625 = vmatpush1.msra.mxu0 %v3624
      %v3626 = vand.u32 %v3164, 4294901760
      %v3627 = vsub.f32 %v3164, %v3626
      %3628 = vmatprep.subr.mxu0 %v3627
      %v3629 = vand.u32 %v3163, 4294901760
      %v3630 = vsub.f32 %v3163, %v3629
      %3631 = vmatpush1.msra.mxu0 %v3630
      %v3632 = vand.u32 %v3167, 4294901760
      %v3633 = vsub.f32 %v3167, %v3632
      %3634 = vmatprep.subr.mxu0 %v3633
      %v3635 = vand.u32 %v3166, 4294901760
      %v3636 = vsub.f32 %v3166, %v3635
      %3637 = vmatpush1.msra.mxu0 %v3636
      %v3638 = vand.u32 %v3170, 4294901760
      %v3639 = vsub.f32 %v3170, %v3638
      %3640 = vmatprep.subr.mxu0 %v3639
      %v3641 = vand.u32 %v3169, 4294901760
      %v3642 = vsub.f32 %v3169, %v3641
      %3643 = vmatpush1.msra.mxu0 %v3642
      %v3644 = vand.u32 %v3173, 4294901760
      %v3645 = vsub.f32 %v3173, %v3644
      %3646 = vmatprep.subr.mxu0 %v3645
      %v3647 = vand.u32 %v3172, 4294901760
      %v3648 = vsub.f32 %v3172, %v3647
      %3649 = vmatpush1.msra.mxu0 %v3648
      %v3650 = vand.u32 %v3176, 4294901760
      %v3651 = vsub.f32 %v3176, %v3650
      %3652 = vmatprep.subr.mxu0 %v3651
      %v3653 = vand.u32 %v3175, 4294901760
      %v3654 = vsub.f32 %v3175, %v3653
      %3655 = vmatpush1.msra.mxu0 %v3654
      %v3656 = vand.u32 %v3179, 4294901760
      %v3657 = vsub.f32 %v3179, %v3656
      %3658 = vmatprep.subr.mxu0 %v3657
      %v3659 = vand.u32 %v3178, 4294901760
      %v3660 = vsub.f32 %v3178, %v3659
      %3661 = vmatpush1.msra.mxu0 %v3660
      %v3662 = vand.u32 %v3182, 4294901760
      %v3663 = vsub.f32 %v3182, %v3662
      %3664 = vmatprep.subr.mxu0 %v3663
      %v3665 = vand.u32 %v3181, 4294901760
      %v3666 = vsub.f32 %v3181, %v3665
      %3667 = vmatpush1.msra.mxu0 %v3666
      %v3668 = vand.u32 %v3185, 4294901760
      %v3669 = vsub.f32 %v3185, %v3668
      %3670 = vmatprep.subr.mxu0 %v3669
      %v3671 = vand.u32 %v3184, 4294901760
      %v3672 = vsub.f32 %v3184, %v3671
      %3673 = vmatpush1.msra.mxu0 %v3672
      %v3674 = vand.u32 %v3188, 4294901760
      %v3675 = vsub.f32 %v3188, %v3674
      %3676 = vmatprep.subr.mxu0 %v3675
      %v3677 = vand.u32 %v3187, 4294901760
      %v3678 = vsub.f32 %v3187, %v3677
      %3679 = vmatpush1.msra.mxu0 %v3678
      %v3680 = vand.u32 %v3191, 4294901760
      %v3681 = vsub.f32 %v3191, %v3680
      %3682 = vmatprep.subr.mxu0 %v3681
      %v3683 = vand.u32 %v3190, 4294901760
      %v3684 = vsub.f32 %v3190, %v3683
      %3685 = vmatpush1.msra.mxu0 %v3684
      %v3686 = vand.u32 %v3194, 4294901760
      %v3687 = vsub.f32 %v3194, %v3686
      %3688 = vmatprep.subr.mxu0 %v3687
      %v3689 = vand.u32 %v3193, 4294901760
      %v3690 = vsub.f32 %v3193, %v3689
      %3691 = vmatpush1.msra.mxu0 %v3690
      %v3692 = vand.u32 %v3197, 4294901760
      %v3693 = vsub.f32 %v3197, %v3692
      %3694 = vmatprep.subr.mxu0 %v3693
      %v3695 = vand.u32 %v3196, 4294901760
      %v3696 = vsub.f32 %v3196, %v3695
      %3697 = vmatpush1.msra.mxu0 %v3696
      %v3698 = vand.u32 %v3200, 4294901760
      %v3699 = vsub.f32 %v3200, %v3698
      %3700 = vmatprep.subr.mxu0 %v3699
      %v3701 = vand.u32 %v3199, 4294901760
      %v3702 = vsub.f32 %v3199, %v3701
      %3703 = vmatpush1.msra.mxu0 %v3702
      %v3704 = vand.u32 %v3203, 4294901760
      %v3705 = vsub.f32 %v3203, %v3704
      %3706 = vmatprep.subr.mxu0 %v3705
      %v3707 = vand.u32 %v3202, 4294901760
      %v3708 = vsub.f32 %v3202, %v3707
      %3709 = vmatpush1.msra.mxu0 %v3708
      %v3710 = vand.u32 %v3206, 4294901760
      %v3711 = vsub.f32 %v3206, %v3710
      %3712 = vmatprep.subr.mxu0 %v3711
      %v3713 = vand.u32 %v3205, 4294901760
      %v3714 = vsub.f32 %v3205, %v3713
      %3715 = vmatpush1.msra.mxu0 %v3714
      %3716 = vmatprep.subr.mxu0 0.0
      %3717 = vmatpush1.msra.mxu0 0.0
      %3718 = vmatprep.subr.mxu0 0.0
      %3719 = vmatpush1.msra.mxu0 0.0
      %3720 = vmatprep.subr.mxu0 0.0
      %3721 = vmatpush1.msra.mxu0 0.0
      %3722 = vmatprep.subr.mxu0 0.0
      %3723 = vmatpush1.msra.mxu0 0.0
      %3724 = vmatprep.subr.mxu0 0.0
      %3725 = vmatpush1.msra.mxu0 0.0
      %3726 = vmatprep.subr.mxu0 0.0
      %3727 = vmatpush1.msra.mxu0 0.0
      %3728 = vmatprep.subr.mxu0 0.0
      %3729 = vmatpush1.msra.mxu0 0.0
      %3730 = vmatprep.subr.mxu0 0.0
      %3731 = vmatpush1.msra.mxu0 0.0
      %3732 = vmatprep.subr.mxu0 0.0
      %3733 = vmatpush1.msra.mxu0 0.0
      %3734 = vmatprep.subr.mxu0 0.0
      %3735 = vmatpush1.msra.mxu0 0.0
      %3736 = vmatprep.subr.mxu0 0.0
      %3737 = vmatpush1.msra.mxu0 0.0
      %3738 = vmatprep.subr.mxu0 0.0
      %3739 = vmatpush1.msra.mxu0 0.0
      %3740 = vmatprep.subr.mxu0 0.0
      %3741 = vmatpush1.msra.mxu0 0.0
      %3742 = vmatprep.subr.mxu0 0.0
      %3743 = vmatpush1.msra.mxu0 0.0
      %v3744 = vand.u32 %v3209, 4294901760
      %v3745 = vsub.f32 %v3209, %v3744
      %3746 = vmatprep.mubr.f32.mxu0 %v3745
      %v3747 = vand.u32 %v3150, 4294901760
      %v3748 = vsub.f32 %v3150, %v3747
      %3749 = vmatmul.mubr.f32.gmra.mrb[0].mxu0 %v3748
      %v3750 = vpop.f32.mrb[0].mxu0
      %v3751 = vadd.f32 %v3596, %v3750
      %v3752 = vpop.f32.mrb[0].mxu0
      %v3753 = vadd.f32 %v3598, %v3752
      %v3754 = vand.u32 %v3212, 4294901760
      %v3755 = vsub.f32 %v3212, %v3754
      %3756 = vmatprep.mubr.f32.mxu0 %v3755
      %v3757 = vand.u32 %v3152, 4294901760
      %v3758 = vsub.f32 %v3152, %v3757
      %3759 = vmatmul.mubr.f32.gmra.mrb[0].mxu0 %v3758
      %v3760 = vpop.f32.mrb[0].mxu0
      %v3761 = vadd.f32 %v3604, %v3760
      %v3762 = vpop.f32.mrb[0].mxu0
      %v3763 = vadd.f32 %v3606, %v3762
      %3764 = vdwg.mxu0
      %v3765 = vand.u32 %v3155, 4294901760
      %3766 = vmatprep.subr.mxu0 %v3765
      %v3767 = vand.u32 %v3154, 4294901760
      %3768 = vmatpush1.msra.mxu0 %v3767
      %v3769 = vand.u32 %v3158, 4294901760
      %3770 = vmatprep.subr.mxu0 %v3769
      %v3771 = vand.u32 %v3157, 4294901760
      %3772 = vmatpush1.msra.mxu0 %v3771
      %v3773 = vand.u32 %v3161, 4294901760
      %3774 = vmatprep.subr.mxu0 %v3773
      %v3775 = vand.u32 %v3160, 4294901760
      %3776 = vmatpush1.msra.mxu0 %v3775
      %v3777 = vand.u32 %v3164, 4294901760
      %3778 = vmatprep.subr.mxu0 %v3777
      %v3779 = vand.u32 %v3163, 4294901760
      %3780 = vmatpush1.msra.mxu0 %v3779
      %v3781 = vand.u32 %v3167, 4294901760
      %3782 = vmatprep.subr.mxu0 %v3781
      %v3783 = vand.u32 %v3166, 4294901760
      %3784 = vmatpush1.msra.mxu0 %v3783
      %v3785 = vand.u32 %v3170, 4294901760
      %3786 = vmatprep.subr.mxu0 %v3785
      %v3787 = vand.u32 %v3169, 4294901760
      %3788 = vmatpush1.msra.mxu0 %v3787
      %v3789 = vand.u32 %v3173, 4294901760
      %3790 = vmatprep.subr.mxu0 %v3789
      %v3791 = vand.u32 %v3172, 4294901760
      %3792 = vmatpush1.msra.mxu0 %v3791
      %v3793 = vand.u32 %v3176, 4294901760
      %3794 = vmatprep.subr.mxu0 %v3793
      %v3795 = vand.u32 %v3175, 4294901760
      %3796 = vmatpush1.msra.mxu0 %v3795
      %v3797 = vand.u32 %v3179, 4294901760
      %3798 = vmatprep.subr.mxu0 %v3797
      %v3799 = vand.u32 %v3178, 4294901760
      %3800 = vmatpush1.msra.mxu0 %v3799
      %v3801 = vand.u32 %v3182, 4294901760
      %3802 = vmatprep.subr.mxu0 %v3801
      %v3803 = vand.u32 %v3181, 4294901760
      %3804 = vmatpush1.msra.mxu0 %v3803
      %v3805 = vand.u32 %v3185, 4294901760
      %3806 = vmatprep.subr.mxu0 %v3805
      %v3807 = vand.u32 %v3184, 4294901760
      %3808 = vmatpush1.msra.mxu0 %v3807
      %v3809 = vand.u32 %v3188, 4294901760
      %3810 = vmatprep.subr.mxu0 %v3809
      %v3811 = vand.u32 %v3187, 4294901760
      %3812 = vmatpush1.msra.mxu0 %v3811
      %v3813 = vand.u32 %v3191, 4294901760
      %3814 = vmatprep.subr.mxu0 %v3813
      %v3815 = vand.u32 %v3190, 4294901760
      %3816 = vmatpush1.msra.mxu0 %v3815
      %v3817 = vand.u32 %v3194, 4294901760
      %3818 = vmatprep.subr.mxu0 %v3817
      %v3819 = vand.u32 %v3193, 4294901760
      %3820 = vmatpush1.msra.mxu0 %v3819
      %v3821 = vand.u32 %v3197, 4294901760
      %3822 = vmatprep.subr.mxu0 %v3821
      %v3823 = vand.u32 %v3196, 4294901760
      %3824 = vmatpush1.msra.mxu0 %v3823
      %v3825 = vand.u32 %v3200, 4294901760
      %3826 = vmatprep.subr.mxu0 %v3825
      %v3827 = vand.u32 %v3199, 4294901760
      %3828 = vmatpush1.msra.mxu0 %v3827
      %v3829 = vand.u32 %v3203, 4294901760
      %3830 = vmatprep.subr.mxu0 %v3829
      %v3831 = vand.u32 %v3202, 4294901760
      %3832 = vmatpush1.msra.mxu0 %v3831
      %v3833 = vand.u32 %v3206, 4294901760
      %3834 = vmatprep.subr.mxu0 %v3833
      %v3835 = vand.u32 %v3205, 4294901760
      %3836 = vmatpush1.msra.mxu0 %v3835
      %3837 = vmatprep.subr.mxu0 0.0
      %3838 = vmatpush1.msra.mxu0 0.0
      %3839 = vmatprep.subr.mxu0 0.0
      %3840 = vmatpush1.msra.mxu0 0.0
      %3841 = vmatprep.subr.mxu0 0.0
      %3842 = vmatpush1.msra.mxu0 0.0
      %3843 = vmatprep.subr.mxu0 0.0
      %3844 = vmatpush1.msra.mxu0 0.0
      %3845 = vmatprep.subr.mxu0 0.0
      %3846 = vmatpush1.msra.mxu0 0.0
      %3847 = vmatprep.subr.mxu0 0.0
      %3848 = vmatpush1.msra.mxu0 0.0
      %3849 = vmatprep.subr.mxu0 0.0
      %3850 = vmatpush1.msra.mxu0 0.0
      %3851 = vmatprep.subr.mxu0 0.0
      %3852 = vmatpush1.msra.mxu0 0.0
      %3853 = vmatprep.subr.mxu0 0.0
      %3854 = vmatpush1.msra.mxu0 0.0
      %3855 = vmatprep.subr.mxu0 0.0
      %3856 = vmatpush1.msra.mxu0 0.0
      %3857 = vmatprep.subr.mxu0 0.0
      %3858 = vmatpush1.msra.mxu0 0.0
      %3859 = vmatprep.subr.mxu0 0.0
      %3860 = vmatpush1.msra.mxu0 0.0
      %3861 = vmatprep.subr.mxu0 0.0
      %3862 = vmatpush1.msra.mxu0 0.0
      %3863 = vmatprep.subr.mxu0 0.0
      %3864 = vmatpush1.msra.mxu0 0.0
      %v3865 = vand.u32 %v3209, 4294901760
      %v3866 = vsub.f32 %v3209, %v3865
      %v3867 = vand.u32 %v3866, 4294901760
      %3868 = vmatprep.mubr.f32.mxu0 %v3867
      %v3869 = vand.u32 %v3150, 4294901760
      %v3870 = vsub.f32 %v3150, %v3869
      %v3871 = vand.u32 %v3870, 4294901760
      %3872 = vmatmul.mubr.f32.gmra.mrb[0].mxu0 %v3871
      %v3873 = vpop.f32.mrb[0].mxu0
      %v3874 = vadd.f32 %v3751, %v3873
      %v3875 = vpop.f32.mrb[0].mxu0
      %v3876 = vadd.f32 %v3753, %v3875
      %v3877 = vand.u32 %v3212, 4294901760
      %v3878 = vsub.f32 %v3212, %v3877
      %v3879 = vand.u32 %v3878, 4294901760
      %3880 = vmatprep.mubr.f32.mxu0 %v3879
      %v3881 = vand.u32 %v3152, 4294901760
      %v3882 = vsub.f32 %v3152, %v3881
      %v3883 = vand.u32 %v3882, 4294901760
      %3884 = vmatmul.mubr.f32.gmra.mrb[0].mxu0 %v3883
      %v3885 = vpop.f32.mrb[0].mxu0
      %v3886 = vadd.f32 %v3761, %v3885
      %v3887 = vpop.f32.mrb[0].mxu0
      %v3888 = vadd.f32 %v3763, %v3887
      %3889 = vdwg.mxu0
      %v3890 = vand.u32 %v3155, 4294901760
      %v3891 = vsub.f32 %v3155, %v3890
      %v3892 = vand.u32 %v3891, 4294901760
      %3893 = vmatprep.subr.mxu0 %v3892
      %v3894 = vand.u32 %v3154, 4294901760
      %v3895 = vsub.f32 %v3154, %v3894
      %v3896 = vand.u32 %v3895, 4294901760
      %3897 = vmatpush1.msra.mxu0 %v3896
      %v3898 = vand.u32 %v3158, 4294901760
      %v3899 = vsub.f32 %v3158, %v3898
      %v3900 = vand.u32 %v3899, 4294901760
      %3901 = vmatprep.subr.mxu0 %v3900
      %v3902 = vand.u32 %v3157, 4294901760
      %v3903 = vsub.f32 %v3157, %v3902
      %v3904 = vand.u32 %v3903, 4294901760
      %3905 = vmatpush1.msra.mxu0 %v3904
      %v3906 = vand.u32 %v3161, 4294901760
      %v3907 = vsub.f32 %v3161, %v3906
      %v3908 = vand.u32 %v3907, 4294901760
      %3909 = vmatprep.subr.mxu0 %v3908
      %v3910 = vand.u32 %v3160, 4294901760
      %v3911 = vsub.f32 %v3160, %v3910
      %v3912 = vand.u32 %v3911, 4294901760
      %3913 = vmatpush1.msra.mxu0 %v3912
      %v3914 = vand.u32 %v3164, 4294901760
      %v3915 = vsub.f32 %v3164, %v3914
      %v3916 = vand.u32 %v3915, 4294901760
      %3917 = vmatprep.subr.mxu0 %v3916
      %v3918 = vand.u32 %v3163, 4294901760
      %v3919 = vsub.f32 %v3163, %v3918
      %v3920 = vand.u32 %v3919, 4294901760
      %3921 = vmatpush1.msra.mxu0 %v3920
      %v3922 = vand.u32 %v3167, 4294901760
      %v3923 = vsub.f32 %v3167, %v3922
      %v3924 = vand.u32 %v3923, 4294901760
      %3925 = vmatprep.subr.mxu0 %v3924
      %v3926 = vand.u32 %v3166, 4294901760
      %v3927 = vsub.f32 %v3166, %v3926
      %v3928 = vand.u32 %v3927, 4294901760
      %3929 = vmatpush1.msra.mxu0 %v3928
      %v3930 = vand.u32 %v3170, 4294901760
      %v3931 = vsub.f32 %v3170, %v3930
      %v3932 = vand.u32 %v3931, 4294901760
      %3933 = vmatprep.subr.mxu0 %v3932
      %v3934 = vand.u32 %v3169, 4294901760
      %v3935 = vsub.f32 %v3169, %v3934
      %v3936 = vand.u32 %v3935, 4294901760
      %3937 = vmatpush1.msra.mxu0 %v3936
      %v3938 = vand.u32 %v3173, 4294901760
      %v3939 = vsub.f32 %v3173, %v3938
      %v3940 = vand.u32 %v3939, 4294901760
      %3941 = vmatprep.subr.mxu0 %v3940
      %v3942 = vand.u32 %v3172, 4294901760
      %v3943 = vsub.f32 %v3172, %v3942
      %v3944 = vand.u32 %v3943, 4294901760
      %3945 = vmatpush1.msra.mxu0 %v3944
      %v3946 = vand.u32 %v3176, 4294901760
      %v3947 = vsub.f32 %v3176, %v3946
      %v3948 = vand.u32 %v3947, 4294901760
      %3949 = vmatprep.subr.mxu0 %v3948
      %v3950 = vand.u32 %v3175, 4294901760
      %v3951 = vsub.f32 %v3175, %v3950
      %v3952 = vand.u32 %v3951, 4294901760
      %3953 = vmatpush1.msra.mxu0 %v3952
      %v3954 = vand.u32 %v3179, 4294901760
      %v3955 = vsub.f32 %v3179, %v3954
      %v3956 = vand.u32 %v3955, 4294901760
      %3957 = vmatprep.subr.mxu0 %v3956
      %v3958 = vand.u32 %v3178, 4294901760
      %v3959 = vsub.f32 %v3178, %v3958
      %v3960 = vand.u32 %v3959, 4294901760
      %3961 = vmatpush1.msra.mxu0 %v3960
      %v3962 = vand.u32 %v3182, 4294901760
      %v3963 = vsub.f32 %v3182, %v3962
      %v3964 = vand.u32 %v3963, 4294901760
      %3965 = vmatprep.subr.mxu0 %v3964
      %v3966 = vand.u32 %v3181, 4294901760
      %v3967 = vsub.f32 %v3181, %v3966
      %v3968 = vand.u32 %v3967, 4294901760
      %3969 = vmatpush1.msra.mxu0 %v3968
      %v3970 = vand.u32 %v3185, 4294901760
      %v3971 = vsub.f32 %v3185, %v3970
      %v3972 = vand.u32 %v3971, 4294901760
      %3973 = vmatprep.subr.mxu0 %v3972
      %v3974 = vand.u32 %v3184, 4294901760
      %v3975 = vsub.f32 %v3184, %v3974
      %v3976 = vand.u32 %v3975, 4294901760
      %3977 = vmatpush1.msra.mxu0 %v3976
      %v3978 = vand.u32 %v3188, 4294901760
      %v3979 = vsub.f32 %v3188, %v3978
      %v3980 = vand.u32 %v3979, 4294901760
      %3981 = vmatprep.subr.mxu0 %v3980
      %v3982 = vand.u32 %v3187, 4294901760
      %v3983 = vsub.f32 %v3187, %v3982
      %v3984 = vand.u32 %v3983, 4294901760
      %3985 = vmatpush1.msra.mxu0 %v3984
      %v3986 = vand.u32 %v3191, 4294901760
      %v3987 = vsub.f32 %v3191, %v3986
      %v3988 = vand.u32 %v3987, 4294901760
      %3989 = vmatprep.subr.mxu0 %v3988
      %v3990 = vand.u32 %v3190, 4294901760
      %v3991 = vsub.f32 %v3190, %v3990
      %v3992 = vand.u32 %v3991, 4294901760
      %3993 = vmatpush1.msra.mxu0 %v3992
      %v3994 = vand.u32 %v3194, 4294901760
      %v3995 = vsub.f32 %v3194, %v3994
      %v3996 = vand.u32 %v3995, 4294901760
      %3997 = vmatprep.subr.mxu0 %v3996
      %v3998 = vand.u32 %v3193, 4294901760
      %v3999 = vsub.f32 %v3193, %v3998
      %v4000 = vand.u32 %v3999, 4294901760
      %4001 = vmatpush1.msra.mxu0 %v4000
      %v4002 = vand.u32 %v3197, 4294901760
      %v4003 = vsub.f32 %v3197, %v4002
      %v4004 = vand.u32 %v4003, 4294901760
      %4005 = vmatprep.subr.mxu0 %v4004
      %v4006 = vand.u32 %v3196, 4294901760
      %v4007 = vsub.f32 %v3196, %v4006
      %v4008 = vand.u32 %v4007, 4294901760
      %4009 = vmatpush1.msra.mxu0 %v4008
      %v4010 = vand.u32 %v3200, 4294901760
      %v4011 = vsub.f32 %v3200, %v4010
      %v4012 = vand.u32 %v4011, 4294901760
      %4013 = vmatprep.subr.mxu0 %v4012
      %v4014 = vand.u32 %v3199, 4294901760
      %v4015 = vsub.f32 %v3199, %v4014
      %v4016 = vand.u32 %v4015, 4294901760
      %4017 = vmatpush1.msra.mxu0 %v4016
      %v4018 = vand.u32 %v3203, 4294901760
      %v4019 = vsub.f32 %v3203, %v4018
      %v4020 = vand.u32 %v4019, 4294901760
      %4021 = vmatprep.subr.mxu0 %v4020
      %v4022 = vand.u32 %v3202, 4294901760
      %v4023 = vsub.f32 %v3202, %v4022
      %v4024 = vand.u32 %v4023, 4294901760
      %4025 = vmatpush1.msra.mxu0 %v4024
      %v4026 = vand.u32 %v3206, 4294901760
      %v4027 = vsub.f32 %v3206, %v4026
      %v4028 = vand.u32 %v4027, 4294901760
      %4029 = vmatprep.subr.mxu0 %v4028
      %v4030 = vand.u32 %v3205, 4294901760
      %v4031 = vsub.f32 %v3205, %v4030
      %v4032 = vand.u32 %v4031, 4294901760
      %4033 = vmatpush1.msra.mxu0 %v4032
      %4034 = vmatprep.subr.mxu0 0.0
      %4035 = vmatpush1.msra.mxu0 0.0
      %4036 = vmatprep.subr.mxu0 0.0
      %4037 = vmatpush1.msra.mxu0 0.0
      %4038 = vmatprep.subr.mxu0 0.0
      %4039 = vmatpush1.msra.mxu0 0.0
      %4040 = vmatprep.subr.mxu0 0.0
      %4041 = vmatpush1.msra.mxu0 0.0
      %4042 = vmatprep.subr.mxu0 0.0
      %4043 = vmatpush1.msra.mxu0 0.0
      %4044 = vmatprep.subr.mxu0 0.0
      %4045 = vmatpush1.msra.mxu0 0.0
      %4046 = vmatprep.subr.mxu0 0.0
      %4047 = vmatpush1.msra.mxu0 0.0
      %4048 = vmatprep.subr.mxu0 0.0
      %4049 = vmatpush1.msra.mxu0 0.0
      %4050 = vmatprep.subr.mxu0 0.0
      %4051 = vmatpush1.msra.mxu0 0.0
      %4052 = vmatprep.subr.mxu0 0.0
      %4053 = vmatpush1.msra.mxu0 0.0
      %4054 = vmatprep.subr.mxu0 0.0
      %4055 = vmatpush1.msra.mxu0 0.0
      %4056 = vmatprep.subr.mxu0 0.0
      %4057 = vmatpush1.msra.mxu0 0.0
      %4058 = vmatprep.subr.mxu0 0.0
      %4059 = vmatpush1.msra.mxu0 0.0
      %4060 = vmatprep.subr.mxu0 0.0
      %4061 = vmatpush1.msra.mxu0 0.0
      %v4062 = vand.u32 %v3209, 4294901760
      %4063 = vmatprep.mubr.f32.mxu0 %v4062
      %v4064 = vand.u32 %v3150, 4294901760
      %4065 = vmatmul.mubr.f32.gmra.mrb[0].mxu0 %v4064
      %v4066 = vpop.f32.mrb[0].mxu0
      %v4067 = vadd.f32 %v3874, %v4066
      %v4068 = vpop.f32.mrb[0].mxu0
      %v4069 = vadd.f32 %v3876, %v4068
      %v4070 = vand.u32 %v3212, 4294901760
      %4071 = vmatprep.mubr.f32.mxu0 %v4070
      %v4072 = vand.u32 %v3152, 4294901760
      %4073 = vmatmul.mubr.f32.gmra.mrb[0].mxu0 %v4072
      %v4074 = vpop.f32.mrb[0].mxu0
      %v4075 = vadd.f32 %v3886, %v4074
      %v4076 = vpop.f32.mrb[0].mxu0
      %v4077 = vadd.f32 %v3888, %v4076
      %4078 = vdwg.mxu0
      %v4079 = vand.u32 %v3155, 4294901760
      %4080 = vmatprep.subr.mxu0 %v4079
      %v4081 = vand.u32 %v3154, 4294901760
      %4082 = vmatpush1.msra.mxu0 %v4081
      %v4083 = vand.u32 %v3158, 4294901760
      %4084 = vmatprep.subr.mxu0 %v4083
      %v4085 = vand.u32 %v3157, 4294901760
      %4086 = vmatpush1.msra.mxu0 %v4085
      %v4087 = vand.u32 %v3161, 4294901760
      %4088 = vmatprep.subr.mxu0 %v4087
      %v4089 = vand.u32 %v3160, 4294901760
      %4090 = vmatpush1.msra.mxu0 %v4089
      %v4091 = vand.u32 %v3164, 4294901760
      %4092 = vmatprep.subr.mxu0 %v4091
      %v4093 = vand.u32 %v3163, 4294901760
      %4094 = vmatpush1.msra.mxu0 %v4093
      %v4095 = vand.u32 %v3167, 4294901760
      %4096 = vmatprep.subr.mxu0 %v4095
      %v4097 = vand.u32 %v3166, 4294901760
      %4098 = vmatpush1.msra.mxu0 %v4097
      %v4099 = vand.u32 %v3170, 4294901760
      %4100 = vmatprep.subr.mxu0 %v4099
      %v4101 = vand.u32 %v3169, 4294901760
      %4102 = vmatpush1.msra.mxu0 %v4101
      %v4103 = vand.u32 %v3173, 4294901760
      %4104 = vmatprep.subr.mxu0 %v4103
      %v4105 = vand.u32 %v3172, 4294901760
      %4106 = vmatpush1.msra.mxu0 %v4105
      %v4107 = vand.u32 %v3176, 4294901760
      %4108 = vmatprep.subr.mxu0 %v4107
      %v4109 = vand.u32 %v3175, 4294901760
      %4110 = vmatpush1.msra.mxu0 %v4109
      %v4111 = vand.u32 %v3179, 4294901760
      %4112 = vmatprep.subr.mxu0 %v4111
      %v4113 = vand.u32 %v3178, 4294901760
      %4114 = vmatpush1.msra.mxu0 %v4113
      %v4115 = vand.u32 %v3182, 4294901760
      %4116 = vmatprep.subr.mxu0 %v4115
      %v4117 = vand.u32 %v3181, 4294901760
      %4118 = vmatpush1.msra.mxu0 %v4117
      %v4119 = vand.u32 %v3185, 4294901760
      %4120 = vmatprep.subr.mxu0 %v4119
      %v4121 = vand.u32 %v3184, 4294901760
      %4122 = vmatpush1.msra.mxu0 %v4121
      %v4123 = vand.u32 %v3188, 4294901760
      %4124 = vmatprep.subr.mxu0 %v4123
      %v4125 = vand.u32 %v3187, 4294901760
      %4126 = vmatpush1.msra.mxu0 %v4125
      %v4127 = vand.u32 %v3191, 4294901760
      %4128 = vmatprep.subr.mxu0 %v4127
      %v4129 = vand.u32 %v3190, 4294901760
      %4130 = vmatpush1.msra.mxu0 %v4129
      %v4131 = vand.u32 %v3194, 4294901760
      %4132 = vmatprep.subr.mxu0 %v4131
      %v4133 = vand.u32 %v3193, 4294901760
      %4134 = vmatpush1.msra.mxu0 %v4133
      %v4135 = vand.u32 %v3197, 4294901760
      %4136 = vmatprep.subr.mxu0 %v4135
      %v4137 = vand.u32 %v3196, 4294901760
      %4138 = vmatpush1.msra.mxu0 %v4137
      %v4139 = vand.u32 %v3200, 4294901760
      %4140 = vmatprep.subr.mxu0 %v4139
      %v4141 = vand.u32 %v3199, 4294901760
      %4142 = vmatpush1.msra.mxu0 %v4141
      %v4143 = vand.u32 %v3203, 4294901760
      %4144 = vmatprep.subr.mxu0 %v4143
      %v4145 = vand.u32 %v3202, 4294901760
      %4146 = vmatpush1.msra.mxu0 %v4145
      %v4147 = vand.u32 %v3206, 4294901760
      %4148 = vmatprep.subr.mxu0 %v4147
      %v4149 = vand.u32 %v3205, 4294901760
      %4150 = vmatpush1.msra.mxu0 %v4149
      %4151 = vmatprep.subr.mxu0 0.0
      %4152 = vmatpush1.msra.mxu0 0.0
      %4153 = vmatprep.subr.mxu0 0.0
      %4154 = vmatpush1.msra.mxu0 0.0
      %4155 = vmatprep.subr.mxu0 0.0
      %4156 = vmatpush1.msra.mxu0 0.0
      %4157 = vmatprep.subr.mxu0 0.0
      %4158 = vmatpush1.msra.mxu0 0.0
      %4159 = vmatprep.subr.mxu0 0.0
      %4160 = vmatpush1.msra.mxu0 0.0
      %4161 = vmatprep.subr.mxu0 0.0
      %4162 = vmatpush1.msra.mxu0 0.0
      %4163 = vmatprep.subr.mxu0 0.0
      %4164 = vmatpush1.msra.mxu0 0.0
      %4165 = vmatprep.subr.mxu0 0.0
      %4166 = vmatpush1.msra.mxu0 0.0
      %4167 = vmatprep.subr.mxu0 0.0
      %4168 = vmatpush1.msra.mxu0 0.0
      %4169 = vmatprep.subr.mxu0 0.0
      %4170 = vmatpush1.msra.mxu0 0.0
      %4171 = vmatprep.subr.mxu0 0.0
      %4172 = vmatpush1.msra.mxu0 0.0
      %4173 = vmatprep.subr.mxu0 0.0
      %4174 = vmatpush1.msra.mxu0 0.0
      %4175 = vmatprep.subr.mxu0 0.0
      %4176 = vmatpush1.msra.mxu0 0.0
      %4177 = vmatprep.subr.mxu0 0.0
      %4178 = vmatpush1.msra.mxu0 0.0
      %v4179 = vand.u32 %v3209, 4294901760
      %4180 = vmatprep.mubr.f32.mxu0 %v4179
      %v4181 = vand.u32 %v3150, 4294901760
      %4182 = vmatmul.mubr.f32.gmra.mrb[0].mxu0 %v4181
      %v4183 = vpop.f32.mrb[0].mxu0
      %v4184 = vadd.f32 %v4067, %v4183
      %v4185 = vpop.f32.mrb[0].mxu0
      %v4186 = vadd.f32 %v4069, %v4185
      %v4187 = vand.u32 %v3212, 4294901760
      %4188 = vmatprep.mubr.f32.mxu0 %v4187
      %v4189 = vand.u32 %v3152, 4294901760
      %4190 = vmatmul.mubr.f32.gmra.mrb[0].mxu0 %v4189
      %v4191 = vpop.f32.mrb[0].mxu0
      %v4192 = vadd.f32 %v4075, %v4191
      %v4193 = vpop.f32.mrb[0].mxu0
      %v4194 = vadd.f32 %v4077, %v4193
      %4195 = vdwg.mxu0
      %4196 = vmatprep.subr.mxu0 0.0
      %v4197 = vand.u32 %v3156, 4294901760
      %4198 = vmatpush1.msra.mxu0 %v4197
      %4199 = vmatprep.subr.mxu0 0.0
      %v4200 = vand.u32 %v3159, 4294901760
      %4201 = vmatpush1.msra.mxu0 %v4200
      %4202 = vmatprep.subr.mxu0 0.0
      %v4203 = vand.u32 %v3162, 4294901760
      %4204 = vmatpush1.msra.mxu0 %v4203
      %4205 = vmatprep.subr.mxu0 0.0
      %v4206 = vand.u32 %v3165, 4294901760
      %4207 = vmatpush1.msra.mxu0 %v4206
      %4208 = vmatprep.subr.mxu0 0.0
      %v4209 = vand.u32 %v3168, 4294901760
      %4210 = vmatpush1.msra.mxu0 %v4209
      %4211 = vmatprep.subr.mxu0 0.0
      %v4212 = vand.u32 %v3171, 4294901760
      %4213 = vmatpush1.msra.mxu0 %v4212
      %4214 = vmatprep.subr.mxu0 0.0
      %v4215 = vand.u32 %v3174, 4294901760
      %4216 = vmatpush1.msra.mxu0 %v4215
      %4217 = vmatprep.subr.mxu0 0.0
      %v4218 = vand.u32 %v3177, 4294901760
      %4219 = vmatpush1.msra.mxu0 %v4218
      %4220 = vmatprep.subr.mxu0 0.0
      %v4221 = vand.u32 %v3180, 4294901760
      %4222 = vmatpush1.msra.mxu0 %v4221
      %4223 = vmatprep.subr.mxu0 0.0
      %v4224 = vand.u32 %v3183, 4294901760
      %4225 = vmatpush1.msra.mxu0 %v4224
      %4226 = vmatprep.subr.mxu0 0.0
      %v4227 = vand.u32 %v3186, 4294901760
      %4228 = vmatpush1.msra.mxu0 %v4227
      %4229 = vmatprep.subr.mxu0 0.0
      %v4230 = vand.u32 %v3189, 4294901760
      %4231 = vmatpush1.msra.mxu0 %v4230
      %4232 = vmatprep.subr.mxu0 0.0
      %v4233 = vand.u32 %v3192, 4294901760
      %4234 = vmatpush1.msra.mxu0 %v4233
      %4235 = vmatprep.subr.mxu0 0.0
      %v4236 = vand.u32 %v3195, 4294901760
      %4237 = vmatpush1.msra.mxu0 %v4236
      %4238 = vmatprep.subr.mxu0 0.0
      %v4239 = vand.u32 %v3198, 4294901760
      %4240 = vmatpush1.msra.mxu0 %v4239
      %4241 = vmatprep.subr.mxu0 0.0
      %v4242 = vand.u32 %v3201, 4294901760
      %4243 = vmatpush1.msra.mxu0 %v4242
      %4244 = vmatprep.subr.mxu0 0.0
      %v4245 = vand.u32 %v3204, 4294901760
      %4246 = vmatpush1.msra.mxu0 %v4245
      %4247 = vmatprep.subr.mxu0 0.0
      %v4248 = vand.u32 %v3207, 4294901760
      %4249 = vmatpush1.msra.mxu0 %v4248
      %4250 = vmatprep.subr.mxu0 0.0
      %4251 = vmatpush1.msra.mxu0 0.0
      %4252 = vmatprep.subr.mxu0 0.0
      %4253 = vmatpush1.msra.mxu0 0.0
      %4254 = vmatprep.subr.mxu0 0.0
      %4255 = vmatpush1.msra.mxu0 0.0
      %4256 = vmatprep.subr.mxu0 0.0
      %4257 = vmatpush1.msra.mxu0 0.0
      %4258 = vmatprep.subr.mxu0 0.0
      %4259 = vmatpush1.msra.mxu0 0.0
      %4260 = vmatprep.subr.mxu0 0.0
      %4261 = vmatpush1.msra.mxu0 0.0
      %4262 = vmatprep.subr.mxu0 0.0
      %4263 = vmatpush1.msra.mxu0 0.0
      %4264 = vmatprep.subr.mxu0 0.0
      %4265 = vmatpush1.msra.mxu0 0.0
      %4266 = vmatprep.subr.mxu0 0.0
      %4267 = vmatpush1.msra.mxu0 0.0
      %4268 = vmatprep.subr.mxu0 0.0
      %4269 = vmatpush1.msra.mxu0 0.0
      %4270 = vmatprep.subr.mxu0 0.0
      %4271 = vmatpush1.msra.mxu0 0.0
      %4272 = vmatprep.subr.mxu0 0.0
      %4273 = vmatpush1.msra.mxu0 0.0
      %4274 = vmatprep.subr.mxu0 0.0
      %4275 = vmatpush1.msra.mxu0 0.0
      %4276 = vmatprep.subr.mxu0 0.0
      %4277 = vmatpush1.msra.mxu0 0.0
      %v4278 = vand.u32 %v3209, 4294901760
      %v4279 = vsub.f32 %v3209, %v4278
      %v4280 = vand.u32 %v4279, 4294901760
      %v4281 = vsub.f32 %v4279, %v4280
      %v4282 = vand.u32 %v4281, 4294901760
      %4283 = vmatprep.mubr.f32.mxu0 %v4282
      %v4284 = vand.u32 %v3150, 4294901760
      %v4285 = vsub.f32 %v3150, %v4284
      %v4286 = vand.u32 %v4285, 4294901760
      %v4287 = vsub.f32 %v4285, %v4286
      %v4288 = vand.u32 %v4287, 4294901760
      %4289 = vmatmul.mubr.f32.gmra.mrb[0].mxu0 %v4288
      %v4290 = vpop.f32.mrb[0].mxu0
      %v4291 = vadd.f32 0.0, %v4290
      %v4292 = vpop.f32.mrb[0].mxu0
      %v4293 = vand.u32 %v3212, 4294901760
      %v4294 = vsub.f32 %v3212, %v4293
      %v4295 = vand.u32 %v4294, 4294901760
      %v4296 = vsub.f32 %v4294, %v4295
      %v4297 = vand.u32 %v4296, 4294901760
      %4298 = vmatprep.mubr.f32.mxu0 %v4297
      %v4299 = vand.u32 %v3152, 4294901760
      %v4300 = vsub.f32 %v3152, %v4299
      %v4301 = vand.u32 %v4300, 4294901760
      %v4302 = vsub.f32 %v4300, %v4301
      %v4303 = vand.u32 %v4302, 4294901760
      %4304 = vmatmul.mubr.f32.gmra.mrb[0].mxu0 %v4303
      %v4305 = vpop.f32.mrb[0].mxu0
      %v4306 = vadd.f32 0.0, %v4305
      %v4307 = vpop.f32.mrb[0].mxu0
      %4308 = vdwg.mxu0
      %4309 = vmatprep.subr.mxu0 0.0
      %v4310 = vand.u32 %v3156, 4294901760
      %v4311 = vsub.f32 %v3156, %v4310
      %v4312 = vand.u32 %v4311, 4294901760
      %v4313 = vsub.f32 %v4311, %v4312
      %v4314 = vand.u32 %v4313, 4294901760
      %4315 = vmatpush1.msra.mxu0 %v4314
      %4316 = vmatprep.subr.mxu0 0.0
      %v4317 = vand.u32 %v3159, 4294901760
      %v4318 = vsub.f32 %v3159, %v4317
      %v4319 = vand.u32 %v4318, 4294901760
      %v4320 = vsub.f32 %v4318, %v4319
      %v4321 = vand.u32 %v4320, 4294901760
      %4322 = vmatpush1.msra.mxu0 %v4321
      %4323 = vmatprep.subr.mxu0 0.0
      %v4324 = vand.u32 %v3162, 4294901760
      %v4325 = vsub.f32 %v3162, %v4324
      %v4326 = vand.u32 %v4325, 4294901760
      %v4327 = vsub.f32 %v4325, %v4326
      %v4328 = vand.u32 %v4327, 4294901760
      %4329 = vmatpush1.msra.mxu0 %v4328
      %4330 = vmatprep.subr.mxu0 0.0
      %v4331 = vand.u32 %v3165, 4294901760
      %v4332 = vsub.f32 %v3165, %v4331
      %v4333 = vand.u32 %v4332, 4294901760
      %v4334 = vsub.f32 %v4332, %v4333
      %v4335 = vand.u32 %v4334, 4294901760
      %4336 = vmatpush1.msra.mxu0 %v4335
      %4337 = vmatprep.subr.mxu0 0.0
      %v4338 = vand.u32 %v3168, 4294901760
      %v4339 = vsub.f32 %v3168, %v4338
      %v4340 = vand.u32 %v4339, 4294901760
      %v4341 = vsub.f32 %v4339, %v4340
      %v4342 = vand.u32 %v4341, 4294901760
      %4343 = vmatpush1.msra.mxu0 %v4342
      %4344 = vmatprep.subr.mxu0 0.0
      %v4345 = vand.u32 %v3171, 4294901760
      %v4346 = vsub.f32 %v3171, %v4345
      %v4347 = vand.u32 %v4346, 4294901760
      %v4348 = vsub.f32 %v4346, %v4347
      %v4349 = vand.u32 %v4348, 4294901760
      %4350 = vmatpush1.msra.mxu0 %v4349
      %4351 = vmatprep.subr.mxu0 0.0
      %v4352 = vand.u32 %v3174, 4294901760
      %v4353 = vsub.f32 %v3174, %v4352
      %v4354 = vand.u32 %v4353, 4294901760
      %v4355 = vsub.f32 %v4353, %v4354
      %v4356 = vand.u32 %v4355, 4294901760
      %4357 = vmatpush1.msra.mxu0 %v4356
      %4358 = vmatprep.subr.mxu0 0.0
      %v4359 = vand.u32 %v3177, 4294901760
      %v4360 = vsub.f32 %v3177, %v4359
      %v4361 = vand.u32 %v4360, 4294901760
      %v4362 = vsub.f32 %v4360, %v4361
      %v4363 = vand.u32 %v4362, 4294901760
      %4364 = vmatpush1.msra.mxu0 %v4363
      %4365 = vmatprep.subr.mxu0 0.0
      %v4366 = vand.u32 %v3180, 4294901760
      %v4367 = vsub.f32 %v3180, %v4366
      %v4368 = vand.u32 %v4367, 4294901760
      %v4369 = vsub.f32 %v4367, %v4368
      %v4370 = vand.u32 %v4369, 4294901760
      %4371 = vmatpush1.msra.mxu0 %v4370
      %4372 = vmatprep.subr.mxu0 0.0
      %v4373 = vand.u32 %v3183, 4294901760
      %v4374 = vsub.f32 %v3183, %v4373
      %v4375 = vand.u32 %v4374, 4294901760
      %v4376 = vsub.f32 %v4374, %v4375
      %v4377 = vand.u32 %v4376, 4294901760
      %4378 = vmatpush1.msra.mxu0 %v4377
      %4379 = vmatprep.subr.mxu0 0.0
      %v4380 = vand.u32 %v3186, 4294901760
      %v4381 = vsub.f32 %v3186, %v4380
      %v4382 = vand.u32 %v4381, 4294901760
      %v4383 = vsub.f32 %v4381, %v4382
      %v4384 = vand.u32 %v4383, 4294901760
      %4385 = vmatpush1.msra.mxu0 %v4384
      %4386 = vmatprep.subr.mxu0 0.0
      %v4387 = vand.u32 %v3189, 4294901760
      %v4388 = vsub.f32 %v3189, %v4387
      %v4389 = vand.u32 %v4388, 4294901760
      %v4390 = vsub.f32 %v4388, %v4389
      %v4391 = vand.u32 %v4390, 4294901760
      %4392 = vmatpush1.msra.mxu0 %v4391
      %4393 = vmatprep.subr.mxu0 0.0
      %v4394 = vand.u32 %v3192, 4294901760
      %v4395 = vsub.f32 %v3192, %v4394
      %v4396 = vand.u32 %v4395, 4294901760
      %v4397 = vsub.f32 %v4395, %v4396
      %v4398 = vand.u32 %v4397, 4294901760
      %4399 = vmatpush1.msra.mxu0 %v4398
      %4400 = vmatprep.subr.mxu0 0.0
      %v4401 = vand.u32 %v3195, 4294901760
      %v4402 = vsub.f32 %v3195, %v4401
      %v4403 = vand.u32 %v4402, 4294901760
      %v4404 = vsub.f32 %v4402, %v4403
      %v4405 = vand.u32 %v4404, 4294901760
      %4406 = vmatpush1.msra.mxu0 %v4405
      %4407 = vmatprep.subr.mxu0 0.0
      %v4408 = vand.u32 %v3198, 4294901760
      %v4409 = vsub.f32 %v3198, %v4408
      %v4410 = vand.u32 %v4409, 4294901760
      %v4411 = vsub.f32 %v4409, %v4410
      %v4412 = vand.u32 %v4411, 4294901760
      %4413 = vmatpush1.msra.mxu0 %v4412
      %4414 = vmatprep.subr.mxu0 0.0
      %v4415 = vand.u32 %v3201, 4294901760
      %v4416 = vsub.f32 %v3201, %v4415
      %v4417 = vand.u32 %v4416, 4294901760
      %v4418 = vsub.f32 %v4416, %v4417
      %v4419 = vand.u32 %v4418, 4294901760
      %4420 = vmatpush1.msra.mxu0 %v4419
      %4421 = vmatprep.subr.mxu0 0.0
      %v4422 = vand.u32 %v3204, 4294901760
      %v4423 = vsub.f32 %v3204, %v4422
      %v4424 = vand.u32 %v4423, 4294901760
      %v4425 = vsub.f32 %v4423, %v4424
      %v4426 = vand.u32 %v4425, 4294901760
      %4427 = vmatpush1.msra.mxu0 %v4426
      %4428 = vmatprep.subr.mxu0 0.0
      %v4429 = vand.u32 %v3207, 4294901760
      %v4430 = vsub.f32 %v3207, %v4429
      %v4431 = vand.u32 %v4430, 4294901760
      %v4432 = vsub.f32 %v4430, %v4431
      %v4433 = vand.u32 %v4432, 4294901760
      %4434 = vmatpush1.msra.mxu0 %v4433
      %4435 = vmatprep.subr.mxu0 0.0
      %4436 = vmatpush1.msra.mxu0 0.0
      %4437 = vmatprep.subr.mxu0 0.0
      %4438 = vmatpush1.msra.mxu0 0.0
      %4439 = vmatprep.subr.mxu0 0.0
      %4440 = vmatpush1.msra.mxu0 0.0
      %4441 = vmatprep.subr.mxu0 0.0
      %4442 = vmatpush1.msra.mxu0 0.0
      %4443 = vmatprep.subr.mxu0 0.0
      %4444 = vmatpush1.msra.mxu0 0.0
      %4445 = vmatprep.subr.mxu0 0.0
      %4446 = vmatpush1.msra.mxu0 0.0
      %4447 = vmatprep.subr.mxu0 0.0
      %4448 = vmatpush1.msra.mxu0 0.0
      %4449 = vmatprep.subr.mxu0 0.0
      %4450 = vmatpush1.msra.mxu0 0.0
      %4451 = vmatprep.subr.mxu0 0.0
      %4452 = vmatpush1.msra.mxu0 0.0
      %4453 = vmatprep.subr.mxu0 0.0
      %4454 = vmatpush1.msra.mxu0 0.0
      %4455 = vmatprep.subr.mxu0 0.0
      %4456 = vmatpush1.msra.mxu0 0.0
      %4457 = vmatprep.subr.mxu0 0.0
      %4458 = vmatpush1.msra.mxu0 0.0
      %4459 = vmatprep.subr.mxu0 0.0
      %4460 = vmatpush1.msra.mxu0 0.0
      %4461 = vmatprep.subr.mxu0 0.0
      %4462 = vmatpush1.msra.mxu0 0.0
      %v4463 = vand.u32 %v3209, 4294901760
      %4464 = vmatprep.mubr.f32.mxu0 %v4463
      %v4465 = vand.u32 %v3150, 4294901760
      %4466 = vmatmul.mubr.f32.gmra.mrb[0].mxu0 %v4465
      %v4467 = vpop.f32.mrb[0].mxu0
      %v4468 = vadd.f32 %v4291, %v4467
      %v4469 = vpop.f32.mrb[0].mxu0
      %v4470 = vand.u32 %v3212, 4294901760
      %4471 = vmatprep.mubr.f32.mxu0 %v4470
      %v4472 = vand.u32 %v3152, 4294901760
      %4473 = vmatmul.mubr.f32.gmra.mrb[0].mxu0 %v4472
      %v4474 = vpop.f32.mrb[0].mxu0
      %v4475 = vadd.f32 %v4306, %v4474
      %v4476 = vpop.f32.mrb[0].mxu0
      %4477 = vdwg.mxu0
      %4478 = vmatprep.subr.mxu0 0.0
      %v4479 = vand.u32 %v3156, 4294901760
      %v4480 = vsub.f32 %v3156, %v4479
      %4481 = vmatpush1.msra.mxu0 %v4480
      %4482 = vmatprep.subr.mxu0 0.0
      %v4483 = vand.u32 %v3159, 4294901760
      %v4484 = vsub.f32 %v3159, %v4483
      %4485 = vmatpush1.msra.mxu0 %v4484
      %4486 = vmatprep.subr.mxu0 0.0
      %v4487 = vand.u32 %v3162, 4294901760
      %v4488 = vsub.f32 %v3162, %v4487
      %4489 = vmatpush1.msra.mxu0 %v4488
      %4490 = vmatprep.subr.mxu0 0.0
      %v4491 = vand.u32 %v3165, 4294901760
      %v4492 = vsub.f32 %v3165, %v4491
      %4493 = vmatpush1.msra.mxu0 %v4492
      %4494 = vmatprep.subr.mxu0 0.0
      %v4495 = vand.u32 %v3168, 4294901760
      %v4496 = vsub.f32 %v3168, %v4495
      %4497 = vmatpush1.msra.mxu0 %v4496
      %4498 = vmatprep.subr.mxu0 0.0
      %v4499 = vand.u32 %v3171, 4294901760
      %v4500 = vsub.f32 %v3171, %v4499
      %4501 = vmatpush1.msra.mxu0 %v4500
      %4502 = vmatprep.subr.mxu0 0.0
      %v4503 = vand.u32 %v3174, 4294901760
      %v4504 = vsub.f32 %v3174, %v4503
      %4505 = vmatpush1.msra.mxu0 %v4504
      %4506 = vmatprep.subr.mxu0 0.0
      %v4507 = vand.u32 %v3177, 4294901760
      %v4508 = vsub.f32 %v3177, %v4507
      %4509 = vmatpush1.msra.mxu0 %v4508
      %4510 = vmatprep.subr.mxu0 0.0
      %v4511 = vand.u32 %v3180, 4294901760
      %v4512 = vsub.f32 %v3180, %v4511
      %4513 = vmatpush1.msra.mxu0 %v4512
      %4514 = vmatprep.subr.mxu0 0.0
      %v4515 = vand.u32 %v3183, 4294901760
      %v4516 = vsub.f32 %v3183, %v4515
      %4517 = vmatpush1.msra.mxu0 %v4516
      %4518 = vmatprep.subr.mxu0 0.0
      %v4519 = vand.u32 %v3186, 4294901760
      %v4520 = vsub.f32 %v3186, %v4519
      %4521 = vmatpush1.msra.mxu0 %v4520
      %4522 = vmatprep.subr.mxu0 0.0
      %v4523 = vand.u32 %v3189, 4294901760
      %v4524 = vsub.f32 %v3189, %v4523
      %4525 = vmatpush1.msra.mxu0 %v4524
      %4526 = vmatprep.subr.mxu0 0.0
      %v4527 = vand.u32 %v3192, 4294901760
      %v4528 = vsub.f32 %v3192, %v4527
      %4529 = vmatpush1.msra.mxu0 %v4528
      %4530 = vmatprep.subr.mxu0 0.0
      %v4531 = vand.u32 %v3195, 4294901760
      %v4532 = vsub.f32 %v3195, %v4531
      %4533 = vmatpush1.msra.mxu0 %v4532
      %4534 = vmatprep.subr.mxu0 0.0
      %v4535 = vand.u32 %v3198, 4294901760
      %v4536 = vsub.f32 %v3198, %v4535
      %4537 = vmatpush1.msra.mxu0 %v4536
      %4538 = vmatprep.subr.mxu0 0.0
      %v4539 = vand.u32 %v3201, 4294901760
      %v4540 = vsub.f32 %v3201, %v4539
      %4541 = vmatpush1.msra.mxu0 %v4540
      %4542 = vmatprep.subr.mxu0 0.0
      %v4543 = vand.u32 %v3204, 4294901760
      %v4544 = vsub.f32 %v3204, %v4543
      %4545 = vmatpush1.msra.mxu0 %v4544
      %4546 = vmatprep.subr.mxu0 0.0
      %v4547 = vand.u32 %v3207, 4294901760
      %v4548 = vsub.f32 %v3207, %v4547
      %4549 = vmatpush1.msra.mxu0 %v4548
      %4550 = vmatprep.subr.mxu0 0.0
      %4551 = vmatpush1.msra.mxu0 0.0
      %4552 = vmatprep.subr.mxu0 0.0
      %4553 = vmatpush1.msra.mxu0 0.0
      %4554 = vmatprep.subr.mxu0 0.0
      %4555 = vmatpush1.msra.mxu0 0.0
      %4556 = vmatprep.subr.mxu0 0.0
      %4557 = vmatpush1.msra.mxu0 0.0
      %4558 = vmatprep.subr.mxu0 0.0
      %4559 = vmatpush1.msra.mxu0 0.0
      %4560 = vmatprep.subr.mxu0 0.0
      %4561 = vmatpush1.msra.mxu0 0.0
      %4562 = vmatprep.subr.mxu0 0.0
      %4563 = vmatpush1.msra.mxu0 0.0
      %4564 = vmatprep.subr.mxu0 0.0
      %4565 = vmatpush1.msra.mxu0 0.0
      %4566 = vmatprep.subr.mxu0 0.0
      %4567 = vmatpush1.msra.mxu0 0.0
      %4568 = vmatprep.subr.mxu0 0.0
      %4569 = vmatpush1.msra.mxu0 0.0
      %4570 = vmatprep.subr.mxu0 0.0
      %4571 = vmatpush1.msra.mxu0 0.0
      %4572 = vmatprep.subr.mxu0 0.0
      %4573 = vmatpush1.msra.mxu0 0.0
      %4574 = vmatprep.subr.mxu0 0.0
      %4575 = vmatpush1.msra.mxu0 0.0
      %4576 = vmatprep.subr.mxu0 0.0
      %4577 = vmatpush1.msra.mxu0 0.0
      %v4578 = vand.u32 %v3209, 4294901760
      %v4579 = vsub.f32 %v3209, %v4578
      %4580 = vmatprep.mubr.f32.mxu0 %v4579
      %v4581 = vand.u32 %v3150, 4294901760
      %v4582 = vsub.f32 %v3150, %v4581
      %4583 = vmatmul.mubr.f32.gmra.mrb[0].mxu0 %v4582
      %v4584 = vpop.f32.mrb[0].mxu0
      %v4585 = vadd.f32 %v4468, %v4584
      %v4586 = vpop.f32.mrb[0].mxu0
      %v4587 = vand.u32 %v3212, 4294901760
      %v4588 = vsub.f32 %v3212, %v4587
      %4589 = vmatprep.mubr.f32.mxu0 %v4588
      %v4590 = vand.u32 %v3152, 4294901760
      %v4591 = vsub.f32 %v3152, %v4590
      %4592 = vmatmul.mubr.f32.gmra.mrb[0].mxu0 %v4591
      %v4593 = vpop.f32.mrb[0].mxu0
      %v4594 = vadd.f32 %v4475, %v4593
      %v4595 = vpop.f32.mrb[0].mxu0
      %4596 = vdwg.mxu0
      %4597 = vmatprep.subr.mxu0 0.0
      %v4598 = vand.u32 %v3156, 4294901760
      %4599 = vmatpush1.msra.mxu0 %v4598
      %4600 = vmatprep.subr.mxu0 0.0
      %v4601 = vand.u32 %v3159, 4294901760
      %4602 = vmatpush1.msra.mxu0 %v4601
      %4603 = vmatprep.subr.mxu0 0.0
      %v4604 = vand.u32 %v3162, 4294901760
      %4605 = vmatpush1.msra.mxu0 %v4604
      %4606 = vmatprep.subr.mxu0 0.0
      %v4607 = vand.u32 %v3165, 4294901760
      %4608 = vmatpush1.msra.mxu0 %v4607
      %4609 = vmatprep.subr.mxu0 0.0
      %v4610 = vand.u32 %v3168, 4294901760
      %4611 = vmatpush1.msra.mxu0 %v4610
      %4612 = vmatprep.subr.mxu0 0.0
      %v4613 = vand.u32 %v3171, 4294901760
      %4614 = vmatpush1.msra.mxu0 %v4613
      %4615 = vmatprep.subr.mxu0 0.0
      %v4616 = vand.u32 %v3174, 4294901760
      %4617 = vmatpush1.msra.mxu0 %v4616
      %4618 = vmatprep.subr.mxu0 0.0
      %v4619 = vand.u32 %v3177, 4294901760
      %4620 = vmatpush1.msra.mxu0 %v4619
      %4621 = vmatprep.subr.mxu0 0.0
      %v4622 = vand.u32 %v3180, 4294901760
      %4623 = vmatpush1.msra.mxu0 %v4622
      %4624 = vmatprep.subr.mxu0 0.0
      %v4625 = vand.u32 %v3183, 4294901760
      %4626 = vmatpush1.msra.mxu0 %v4625
      %4627 = vmatprep.subr.mxu0 0.0
      %v4628 = vand.u32 %v3186, 4294901760
      %4629 = vmatpush1.msra.mxu0 %v4628
      %4630 = vmatprep.subr.mxu0 0.0
      %v4631 = vand.u32 %v3189, 4294901760
      %4632 = vmatpush1.msra.mxu0 %v4631
      %4633 = vmatprep.subr.mxu0 0.0
      %v4634 = vand.u32 %v3192, 4294901760
      %4635 = vmatpush1.msra.mxu0 %v4634
      %4636 = vmatprep.subr.mxu0 0.0
      %v4637 = vand.u32 %v3195, 4294901760
      %4638 = vmatpush1.msra.mxu0 %v4637
      %4639 = vmatprep.subr.mxu0 0.0
      %v4640 = vand.u32 %v3198, 4294901760
      %4641 = vmatpush1.msra.mxu0 %v4640
      %4642 = vmatprep.subr.mxu0 0.0
      %v4643 = vand.u32 %v3201, 4294901760
      %4644 = vmatpush1.msra.mxu0 %v4643
      %4645 = vmatprep.subr.mxu0 0.0
      %v4646 = vand.u32 %v3204, 4294901760
      %4647 = vmatpush1.msra.mxu0 %v4646
      %4648 = vmatprep.subr.mxu0 0.0
      %v4649 = vand.u32 %v3207, 4294901760
      %4650 = vmatpush1.msra.mxu0 %v4649
      %4651 = vmatprep.subr.mxu0 0.0
      %4652 = vmatpush1.msra.mxu0 0.0
      %4653 = vmatprep.subr.mxu0 0.0
      %4654 = vmatpush1.msra.mxu0 0.0
      %4655 = vmatprep.subr.mxu0 0.0
      %4656 = vmatpush1.msra.mxu0 0.0
      %4657 = vmatprep.subr.mxu0 0.0
      %4658 = vmatpush1.msra.mxu0 0.0
      %4659 = vmatprep.subr.mxu0 0.0
      %4660 = vmatpush1.msra.mxu0 0.0
      %4661 = vmatprep.subr.mxu0 0.0
      %4662 = vmatpush1.msra.mxu0 0.0
      %4663 = vmatprep.subr.mxu0 0.0
      %4664 = vmatpush1.msra.mxu0 0.0
      %4665 = vmatprep.subr.mxu0 0.0
      %4666 = vmatpush1.msra.mxu0 0.0
      %4667 = vmatprep.subr.mxu0 0.0
      %4668 = vmatpush1.msra.mxu0 0.0
      %4669 = vmatprep.subr.mxu0 0.0
      %4670 = vmatpush1.msra.mxu0 0.0
      %4671 = vmatprep.subr.mxu0 0.0
      %4672 = vmatpush1.msra.mxu0 0.0
      %4673 = vmatprep.subr.mxu0 0.0
      %4674 = vmatpush1.msra.mxu0 0.0
      %4675 = vmatprep.subr.mxu0 0.0
      %4676 = vmatpush1.msra.mxu0 0.0
      %4677 = vmatprep.subr.mxu0 0.0
      %4678 = vmatpush1.msra.mxu0 0.0
      %v4679 = vand.u32 %v3209, 4294901760
      %v4680 = vsub.f32 %v3209, %v4679
      %v4681 = vand.u32 %v4680, 4294901760
      %4682 = vmatprep.mubr.f32.mxu0 %v4681
      %v4683 = vand.u32 %v3150, 4294901760
      %v4684 = vsub.f32 %v3150, %v4683
      %v4685 = vand.u32 %v4684, 4294901760
      %4686 = vmatmul.mubr.f32.gmra.mrb[0].mxu0 %v4685
      %v4687 = vpop.f32.mrb[0].mxu0
      %v4688 = vadd.f32 %v4585, %v4687
      %v4689 = vpop.f32.mrb[0].mxu0
      %v4690 = vand.u32 %v3212, 4294901760
      %v4691 = vsub.f32 %v3212, %v4690
      %v4692 = vand.u32 %v4691, 4294901760
      %4693 = vmatprep.mubr.f32.mxu0 %v4692
      %v4694 = vand.u32 %v3152, 4294901760
      %v4695 = vsub.f32 %v3152, %v4694
      %v4696 = vand.u32 %v4695, 4294901760
      %4697 = vmatmul.mubr.f32.gmra.mrb[0].mxu0 %v4696
      %v4698 = vpop.f32.mrb[0].mxu0
      %v4699 = vadd.f32 %v4594, %v4698
      %v4700 = vpop.f32.mrb[0].mxu0
      %4701 = vdwg.mxu0
      %4702 = vmatprep.subr.mxu0 0.0
      %v4703 = vand.u32 %v3156, 4294901760
      %v4704 = vsub.f32 %v3156, %v4703
      %v4705 = vand.u32 %v4704, 4294901760
      %4706 = vmatpush1.msra.mxu0 %v4705
      %4707 = vmatprep.subr.mxu0 0.0
      %v4708 = vand.u32 %v3159, 4294901760
      %v4709 = vsub.f32 %v3159, %v4708
      %v4710 = vand.u32 %v4709, 4294901760
      %4711 = vmatpush1.msra.mxu0 %v4710
      %4712 = vmatprep.subr.mxu0 0.0
      %v4713 = vand.u32 %v3162, 4294901760
      %v4714 = vsub.f32 %v3162, %v4713
      %v4715 = vand.u32 %v4714, 4294901760
      %4716 = vmatpush1.msra.mxu0 %v4715
      %4717 = vmatprep.subr.mxu0 0.0
      %v4718 = vand.u32 %v3165, 4294901760
      %v4719 = vsub.f32 %v3165, %v4718
      %v4720 = vand.u32 %v4719, 4294901760
      %4721 = vmatpush1.msra.mxu0 %v4720
      %4722 = vmatprep.subr.mxu0 0.0
      %v4723 = vand.u32 %v3168, 4294901760
      %v4724 = vsub.f32 %v3168, %v4723
      %v4725 = vand.u32 %v4724, 4294901760
      %4726 = vmatpush1.msra.mxu0 %v4725
      %4727 = vmatprep.subr.mxu0 0.0
      %v4728 = vand.u32 %v3171, 4294901760
      %v4729 = vsub.f32 %v3171, %v4728
      %v4730 = vand.u32 %v4729, 4294901760
      %4731 = vmatpush1.msra.mxu0 %v4730
      %4732 = vmatprep.subr.mxu0 0.0
      %v4733 = vand.u32 %v3174, 4294901760
      %v4734 = vsub.f32 %v3174, %v4733
      %v4735 = vand.u32 %v4734, 4294901760
      %4736 = vmatpush1.msra.mxu0 %v4735
      %4737 = vmatprep.subr.mxu0 0.0
      %v4738 = vand.u32 %v3177, 4294901760
      %v4739 = vsub.f32 %v3177, %v4738
      %v4740 = vand.u32 %v4739, 4294901760
      %4741 = vmatpush1.msra.mxu0 %v4740
      %4742 = vmatprep.subr.mxu0 0.0
      %v4743 = vand.u32 %v3180, 4294901760
      %v4744 = vsub.f32 %v3180, %v4743
      %v4745 = vand.u32 %v4744, 4294901760
      %4746 = vmatpush1.msra.mxu0 %v4745
      %4747 = vmatprep.subr.mxu0 0.0
      %v4748 = vand.u32 %v3183, 4294901760
      %v4749 = vsub.f32 %v3183, %v4748
      %v4750 = vand.u32 %v4749, 4294901760
      %4751 = vmatpush1.msra.mxu0 %v4750
      %4752 = vmatprep.subr.mxu0 0.0
      %v4753 = vand.u32 %v3186, 4294901760
      %v4754 = vsub.f32 %v3186, %v4753
      %v4755 = vand.u32 %v4754, 4294901760
      %4756 = vmatpush1.msra.mxu0 %v4755
      %4757 = vmatprep.subr.mxu0 0.0
      %v4758 = vand.u32 %v3189, 4294901760
      %v4759 = vsub.f32 %v3189, %v4758
      %v4760 = vand.u32 %v4759, 4294901760
      %4761 = vmatpush1.msra.mxu0 %v4760
      %4762 = vmatprep.subr.mxu0 0.0
      %v4763 = vand.u32 %v3192, 4294901760
      %v4764 = vsub.f32 %v3192, %v4763
      %v4765 = vand.u32 %v4764, 4294901760
      %4766 = vmatpush1.msra.mxu0 %v4765
      %4767 = vmatprep.subr.mxu0 0.0
      %v4768 = vand.u32 %v3195, 4294901760
      %v4769 = vsub.f32 %v3195, %v4768
      %v4770 = vand.u32 %v4769, 4294901760
      %4771 = vmatpush1.msra.mxu0 %v4770
      %4772 = vmatprep.subr.mxu0 0.0
      %v4773 = vand.u32 %v3198, 4294901760
      %v4774 = vsub.f32 %v3198, %v4773
      %v4775 = vand.u32 %v4774, 4294901760
      %4776 = vmatpush1.msra.mxu0 %v4775
      %4777 = vmatprep.subr.mxu0 0.0
      %v4778 = vand.u32 %v3201, 4294901760
      %v4779 = vsub.f32 %v3201, %v4778
      %v4780 = vand.u32 %v4779, 4294901760
      %4781 = vmatpush1.msra.mxu0 %v4780
      %4782 = vmatprep.subr.mxu0 0.0
      %v4783 = vand.u32 %v3204, 4294901760
      %v4784 = vsub.f32 %v3204, %v4783
      %v4785 = vand.u32 %v4784, 4294901760
      %4786 = vmatpush1.msra.mxu0 %v4785
      %4787 = vmatprep.subr.mxu0 0.0
      %v4788 = vand.u32 %v3207, 4294901760
      %v4789 = vsub.f32 %v3207, %v4788
      %v4790 = vand.u32 %v4789, 4294901760
      %4791 = vmatpush1.msra.mxu0 %v4790
      %4792 = vmatprep.subr.mxu0 0.0
      %4793 = vmatpush1.msra.mxu0 0.0
      %4794 = vmatprep.subr.mxu0 0.0
      %4795 = vmatpush1.msra.mxu0 0.0
      %4796 = vmatprep.subr.mxu0 0.0
      %4797 = vmatpush1.msra.mxu0 0.0
      %4798 = vmatprep.subr.mxu0 0.0
      %4799 = vmatpush1.msra.mxu0 0.0
      %4800 = vmatprep.subr.mxu0 0.0
      %4801 = vmatpush1.msra.mxu0 0.0
      %4802 = vmatprep.subr.mxu0 0.0
      %4803 = vmatpush1.msra.mxu0 0.0
      %4804 = vmatprep.subr.mxu0 0.0
      %4805 = vmatpush1.msra.mxu0 0.0
      %4806 = vmatprep.subr.mxu0 0.0
      %4807 = vmatpush1.msra.mxu0 0.0
      %4808 = vmatprep.subr.mxu0 0.0
      %4809 = vmatpush1.msra.mxu0 0.0
      %4810 = vmatprep.subr.mxu0 0.0
      %4811 = vmatpush1.msra.mxu0 0.0
      %4812 = vmatprep.subr.mxu0 0.0
      %4813 = vmatpush1.msra.mxu0 0.0
      %4814 = vmatprep.subr.mxu0 0.0
      %4815 = vmatpush1.msra.mxu0 0.0
      %4816 = vmatprep.subr.mxu0 0.0
      %4817 = vmatpush1.msra.mxu0 0.0
      %4818 = vmatprep.subr.mxu0 0.0
      %4819 = vmatpush1.msra.mxu0 0.0
      %v4820 = vand.u32 %v3209, 4294901760
      %4821 = vmatprep.mubr.f32.mxu0 %v4820
      %v4822 = vand.u32 %v3150, 4294901760
      %4823 = vmatmul.mubr.f32.gmra.mrb[0].mxu0 %v4822
      %v4824 = vpop.f32.mrb[0].mxu0
      %v4825 = vadd.f32 %v4688, %v4824
      %v4826 = vpop.f32.mrb[0].mxu0
      %v4827 = vand.u32 %v3212, 4294901760
      %4828 = vmatprep.mubr.f32.mxu0 %v4827
      %v4829 = vand.u32 %v3152, 4294901760
      %4830 = vmatmul.mubr.f32.gmra.mrb[0].mxu0 %v4829
      %v4831 = vpop.f32.mrb[0].mxu0
      %v4832 = vadd.f32 %v4699, %v4831
      %v4833 = vpop.f32.mrb[0].mxu0
      %4834 = vdwg.mxu0
      %4835 = vmatprep.subr.mxu0 0.0
      %v4836 = vand.u32 %v3156, 4294901760
      %4837 = vmatpush1.msra.mxu0 %v4836
      %4838 = vmatprep.subr.mxu0 0.0
      %v4839 = vand.u32 %v3159, 4294901760
      %4840 = vmatpush1.msra.mxu0 %v4839
      %4841 = vmatprep.subr.mxu0 0.0
      %v4842 = vand.u32 %v3162, 4294901760
      %4843 = vmatpush1.msra.mxu0 %v4842
      %4844 = vmatprep.subr.mxu0 0.0
      %v4845 = vand.u32 %v3165, 4294901760
      %4846 = vmatpush1.msra.mxu0 %v4845
      %4847 = vmatprep.subr.mxu0 0.0
      %v4848 = vand.u32 %v3168, 4294901760
      %4849 = vmatpush1.msra.mxu0 %v4848
      %4850 = vmatprep.subr.mxu0 0.0
      %v4851 = vand.u32 %v3171, 4294901760
      %4852 = vmatpush1.msra.mxu0 %v4851
      %4853 = vmatprep.subr.mxu0 0.0
      %v4854 = vand.u32 %v3174, 4294901760
      %4855 = vmatpush1.msra.mxu0 %v4854
      %4856 = vmatprep.subr.mxu0 0.0
      %v4857 = vand.u32 %v3177, 4294901760
      %4858 = vmatpush1.msra.mxu0 %v4857
      %4859 = vmatprep.subr.mxu0 0.0
      %v4860 = vand.u32 %v3180, 4294901760
      %4861 = vmatpush1.msra.mxu0 %v4860
      %4862 = vmatprep.subr.mxu0 0.0
      %v4863 = vand.u32 %v3183, 4294901760
      %4864 = vmatpush1.msra.mxu0 %v4863
      %4865 = vmatprep.subr.mxu0 0.0
      %v4866 = vand.u32 %v3186, 4294901760
      %4867 = vmatpush1.msra.mxu0 %v4866
      %4868 = vmatprep.subr.mxu0 0.0
      %v4869 = vand.u32 %v3189, 4294901760
      %4870 = vmatpush1.msra.mxu0 %v4869
      %4871 = vmatprep.subr.mxu0 0.0
      %v4872 = vand.u32 %v3192, 4294901760
      %4873 = vmatpush1.msra.mxu0 %v4872
      %4874 = vmatprep.subr.mxu0 0.0
      %v4875 = vand.u32 %v3195, 4294901760
      %4876 = vmatpush1.msra.mxu0 %v4875
      %4877 = vmatprep.subr.mxu0 0.0
      %v4878 = vand.u32 %v3198, 4294901760
      %4879 = vmatpush1.msra.mxu0 %v4878
      %4880 = vmatprep.subr.mxu0 0.0
      %v4881 = vand.u32 %v3201, 4294901760
      %4882 = vmatpush1.msra.mxu0 %v4881
      %4883 = vmatprep.subr.mxu0 0.0
      %v4884 = vand.u32 %v3204, 4294901760
      %4885 = vmatpush1.msra.mxu0 %v4884
      %4886 = vmatprep.subr.mxu0 0.0
      %v4887 = vand.u32 %v3207, 4294901760
      %4888 = vmatpush1.msra.mxu0 %v4887
      %4889 = vmatprep.subr.mxu0 0.0
      %4890 = vmatpush1.msra.mxu0 0.0
      %4891 = vmatprep.subr.mxu0 0.0
      %4892 = vmatpush1.msra.mxu0 0.0
      %4893 = vmatprep.subr.mxu0 0.0
      %4894 = vmatpush1.msra.mxu0 0.0
      %4895 = vmatprep.subr.mxu0 0.0
      %4896 = vmatpush1.msra.mxu0 0.0
      %4897 = vmatprep.subr.mxu0 0.0
      %4898 = vmatpush1.msra.mxu0 0.0
      %4899 = vmatprep.subr.mxu0 0.0
      %4900 = vmatpush1.msra.mxu0 0.0
      %4901 = vmatprep.subr.mxu0 0.0
      %4902 = vmatpush1.msra.mxu0 0.0
      %4903 = vmatprep.subr.mxu0 0.0
      %4904 = vmatpush1.msra.mxu0 0.0
      %4905 = vmatprep.subr.mxu0 0.0
      %4906 = vmatpush1.msra.mxu0 0.0
      %4907 = vmatprep.subr.mxu0 0.0
      %4908 = vmatpush1.msra.mxu0 0.0
      %4909 = vmatprep.subr.mxu0 0.0
      %4910 = vmatpush1.msra.mxu0 0.0
      %4911 = vmatprep.subr.mxu0 0.0
      %4912 = vmatpush1.msra.mxu0 0.0
      %4913 = vmatprep.subr.mxu0 0.0
      %4914 = vmatpush1.msra.mxu0 0.0
      %4915 = vmatprep.subr.mxu0 0.0
      %4916 = vmatpush1.msra.mxu0 0.0
      %v4917 = vand.u32 %v3209, 4294901760
      %4918 = vmatprep.mubr.f32.mxu0 %v4917
      %v4919 = vand.u32 %v3150, 4294901760
      %4920 = vmatmul.mubr.f32.gmra.mrb[0].mxu0 %v4919
      %v4921 = vpop.f32.mrb[0].mxu0
      %v4922 = vadd.f32 %v4825, %v4921
      %v4923 = vpop.f32.mrb[0].mxu0
      %v4924 = vand.u32 %v3212, 4294901760
      %4925 = vmatprep.mubr.f32.mxu0 %v4924
      %v4926 = vand.u32 %v3152, 4294901760
      %4927 = vmatmul.mubr.f32.gmra.mrb[0].mxu0 %v4926
      %v4928 = vpop.f32.mrb[0].mxu0
      %v4929 = vadd.f32 %v4832, %v4928
      %v4930 = vpop.f32.mrb[0].mxu0
      %4931 = vdwg.mxu0
      %v4932 = vld [vmem:[#allocation4] sm:$0xff]
      %v4933 = vld [vmem:[#allocation4 + $0x8] sm:$0xff]
      %v4934 = vld [vmem:[%s5] sm:$0x7]
      %v4936 = vlaneseq
      %v4937 = vshrl.u32 %v4936, 7
      %v4938 = vsub.s32 0, %v4937
      %v4939 = vrot.slane %v4934, %v4938
      %v4940 = vlaneseq
      %v4941 = vshrl.u32 %v4940, 7
      %v4942 = vsub.s32 1, %v4941
      %v4943 = vrot.slane %v4934, %v4942
      %v4944 = vlaneseq
      %v4945 = vshrl.u32 %v4944, 7
      %v4946 = vsub.s32 2, %v4945
      %v4947 = vrot.slane %v4934, %v4946
      %v4951 = vmul.f32 %v4184, %v4939
      %v4952 = vmul.f32 %v4186, %v4943
      %v4953 = vmul.f32 %v4922, %v4947
      %v4954 = vmul.f32 %v4192, %v4939
      %v4955 = vmul.f32 %v4194, %v4943
      %v4956 = vmul.f32 %v4929, %v4947
      %v4957 = vadd.f32 %v4951, %v4952
      %v4958 = vadd.f32 %v4957, %v4953
      %4959 = vadd.xlane.f32.xlu0 %v4958
      %v4960 = vpop.xlane.xlu0 %4959
      %v4961 = vadd.f32 %v4954, %v4955
      %v4962 = vadd.f32 %v4961, %v4956
      %4963 = vadd.xlane.f32.xlu0 %v4962
      %v4964 = vpop.xlane.xlu0 %4963
      %v4965 = vadd.f32 %v4932, %v4960
      %v4966 = vadd.f32 %v4933, %v4964
      %4967 = vst.msk [vmem:[#allocation4] sm:$0xff] %vm659, %v4965
      %4968 = vst.msk [vmem:[#allocation4 + $0x8] sm:$0xff] %vm659, %v4966
      %v4969 = vld [vmem:[%s4] sm:$0xff]
      %v4970 = vld [vmem:[%s4 + $0x8] sm:$0xff]
      %4972 = vset.pattern.permute.xlu0 0
      %4973 = vperm.xlu0 %4972, %v4969
      %v4974 = vpop.permute.xlu0 %4973
      %4977 = vset.pattern.permute.xlu0 0
      %4978 = vperm.xlu0 %4977, %v4970
      %v4979 = vpop.permute.xlu0 %4978
      %v4981 = vadd.f32 %v4184, %v4974
      %v4982 = vadd.f32 %v4186, %v4974
      %v4983 = vadd.f32 %v4922, %v4974
      %v4984 = vadd.f32 %v4192, %v4979
      %v4985 = vadd.f32 %v4194, %v4979
      %v4986 = vadd.f32 %v4929, %v4979
      %4987 = vst [vmem:[%s469] sm:$0xff] %v4981
      %4988 = vst [vmem:[%s469 + $0x8] sm:$0xff] %v4982
      %4989 = vst [vmem:[%s469 + $0x10] sm:$0xff] %v4983
      %4990 = vst [vmem:[%s469 + $0x18] sm:$0xff] %v4984
      %4991 = vst [vmem:[%s469 + $0x20] sm:$0xff] %v4985
      %4992 = vst [vmem:[%s469 + $0x28] sm:$0xff] %v4986
      %v4993 = vld [vmem:[#allocation4] sm:$0xff]
      %v4994 = vld [vmem:[#allocation4 + $0x8] sm:$0xff]
      %v4995 = vld [vmem:[%s4] sm:$0xff]
      %v4996 = vld [vmem:[%s4 + $0x8] sm:$0xff]
      %v4997 = vmul.f32 %v4995, 256.0
      %v4998 = vmul.f32 %v4996, 256.0
      %v4999 = vadd.f32 %v4993, %v4997
      %v5000 = vadd.f32 %v4994, %v4998
      %v5001 = vmul.f32 %v4999, 0.00390625
      %v5002 = vmul.f32 %v5000, 0.00390625
      %5004 = vset.pattern.permute.xlu0 0
      %5005 = vperm.xlu0 %5004, %v5001
      %v5006 = vpop.permute.xlu0 %5005
      %5009 = vset.pattern.permute.xlu0 0
      %5010 = vperm.xlu0 %5009, %v5002
      %v5011 = vpop.permute.xlu0 %5010
      %v5013 = vld [vmem:[%s6] sm:$0x3]
      %v5014 = vld [vmem:[%s7] sm:$0x3]
      %5016 = vset.pattern.permute.xlu0 0
      %5017 = vperm.xlu0 %5016, %v5014
      %v5018 = vpop.permute.xlu0 %5017
      %v5021 = vsel %vm964, %v5013, 0
      %5023 = vmatprep.subr.mxu0 0.0
      %v5024 = vand.u32 %v5006, 4294901760
      %5025 = vmatpush1.msra.mxu0 %v5024
      %5026 = vmatprep.subr.mxu0 0.0
      %v5027 = vand.u32 %v5011, 4294901760
      %5028 = vmatpush1.msra.mxu0 %v5027
      %5029 = vmatprep.subr.mxu0 0.0
      %5030 = vmatpush1.msra.mxu0 0.0
      %5031 = vmatprep.subr.mxu0 0.0
      %5032 = vmatpush1.msra.mxu0 0.0
      %5033 = vmatprep.subr.mxu0 0.0
      %5034 = vmatpush1.msra.mxu0 0.0
      %5035 = vmatprep.subr.mxu0 0.0
      %5036 = vmatpush1.msra.mxu0 0.0
      %5037 = vmatprep.subr.mxu0 0.0
      %5038 = vmatpush1.msra.mxu0 0.0
      %5039 = vmatprep.subr.mxu0 0.0
      %5040 = vmatpush1.msra.mxu0 0.0
      %5041 = vmatprep.subr.mxu0 0.0
      %5042 = vmatpush1.msra.mxu0 0.0
      %5043 = vmatprep.subr.mxu0 0.0
      %5044 = vmatpush1.msra.mxu0 0.0
      %5045 = vmatprep.subr.mxu0 0.0
      %5046 = vmatpush1.msra.mxu0 0.0
      %5047 = vmatprep.subr.mxu0 0.0
      %5048 = vmatpush1.msra.mxu0 0.0
      %5049 = vmatprep.subr.mxu0 0.0
      %5050 = vmatpush1.msra.mxu0 0.0
      %5051 = vmatprep.subr.mxu0 0.0
      %5052 = vmatpush1.msra.mxu0 0.0
      %5053 = vmatprep.subr.mxu0 0.0
      %5054 = vmatpush1.msra.mxu0 0.0
      %5055 = vmatprep.subr.mxu0 0.0
      %5056 = vmatpush1.msra.mxu0 0.0
      %5057 = vmatprep.subr.mxu0 0.0
      %5058 = vmatpush1.msra.mxu0 0.0
      %5059 = vmatprep.subr.mxu0 0.0
      %5060 = vmatpush1.msra.mxu0 0.0
      %5061 = vmatprep.subr.mxu0 0.0
      %5062 = vmatpush1.msra.mxu0 0.0
      %5063 = vmatprep.subr.mxu0 0.0
      %5064 = vmatpush1.msra.mxu0 0.0
      %5065 = vmatprep.subr.mxu0 0.0
      %5066 = vmatpush1.msra.mxu0 0.0
      %5067 = vmatprep.subr.mxu0 0.0
      %5068 = vmatpush1.msra.mxu0 0.0
      %5069 = vmatprep.subr.mxu0 0.0
      %5070 = vmatpush1.msra.mxu0 0.0
      %5071 = vmatprep.subr.mxu0 0.0
      %5072 = vmatpush1.msra.mxu0 0.0
      %5073 = vmatprep.subr.mxu0 0.0
      %5074 = vmatpush1.msra.mxu0 0.0
      %5075 = vmatprep.subr.mxu0 0.0
      %5076 = vmatpush1.msra.mxu0 0.0
      %5077 = vmatprep.subr.mxu0 0.0
      %5078 = vmatpush1.msra.mxu0 0.0
      %5079 = vmatprep.subr.mxu0 0.0
      %5080 = vmatpush1.msra.mxu0 0.0
      %5081 = vmatprep.subr.mxu0 0.0
      %5082 = vmatpush1.msra.mxu0 0.0
      %5083 = vmatprep.subr.mxu0 0.0
      %5084 = vmatpush1.msra.mxu0 0.0
      %5085 = vmatprep.subr.mxu0 0.0
      %5086 = vmatpush1.msra.mxu0 0.0
      %5087 = vmatprep.subr.mxu0 0.0
      %5088 = vmatpush1.msra.mxu0 0.0
      %5089 = vmatprep.mubr.f32.mxu0 0.0
      %v5090 = vand.u32 %v5021, 4294901760
      %v5091 = vsub.f32 %v5021, %v5090
      %v5092 = vand.u32 %v5091, 4294901760
      %v5093 = vsub.f32 %v5091, %v5092
      %v5094 = vand.u32 %v5093, 4294901760
      %5095 = vmatmul.mubr.f32.gmra.mrb[0].mxu0 %v5094
      %v5096 = vpop.f32.mrb[0].mxu0
      %v5097 = vadd.f32 %v5018, %v5096
      %v5098 = vpop.f32.mrb[0].mxu0
      %5099 = vdwg.mxu0
      %5100 = vmatprep.subr.mxu0 0.0
      %v5101 = vand.u32 %v5006, 4294901760
      %v5102 = vsub.f32 %v5006, %v5101
      %v5103 = vand.u32 %v5102, 4294901760
      %v5104 = vsub.f32 %v5102, %v5103
      %v5105 = vand.u32 %v5104, 4294901760
      %5106 = vmatpush1.msra.mxu0 %v5105
      %5107 = vmatprep.subr.mxu0 0.0
      %v5108 = vand.u32 %v5011, 4294901760
      %v5109 = vsub.f32 %v5011, %v5108
      %v5110 = vand.u32 %v5109, 4294901760
      %v5111 = vsub.f32 %v5109, %v5110
      %v5112 = vand.u32 %v5111, 4294901760
      %5113 = vmatpush1.msra.mxu0 %v5112
      %5114 = vmatprep.subr.mxu0 0.0
      %5115 = vmatpush1.msra.mxu0 0.0
      %5116 = vmatprep.subr.mxu0 0.0
      %5117 = vmatpush1.msra.mxu0 0.0
      %5118 = vmatprep.subr.mxu0 0.0
      %5119 = vmatpush1.msra.mxu0 0.0
      %5120 = vmatprep.subr.mxu0 0.0
      %5121 = vmatpush1.msra.mxu0 0.0
      %5122 = vmatprep.subr.mxu0 0.0
      %5123 = vmatpush1.msra.mxu0 0.0
      %5124 = vmatprep.subr.mxu0 0.0
      %5125 = vmatpush1.msra.mxu0 0.0
      %5126 = vmatprep.subr.mxu0 0.0
      %5127 = vmatpush1.msra.mxu0 0.0
      %5128 = vmatprep.subr.mxu0 0.0
      %5129 = vmatpush1.msra.mxu0 0.0
      %5130 = vmatprep.subr.mxu0 0.0
      %5131 = vmatpush1.msra.mxu0 0.0
      %5132 = vmatprep.subr.mxu0 0.0
      %5133 = vmatpush1.msra.mxu0 0.0
      %5134 = vmatprep.subr.mxu0 0.0
      %5135 = vmatpush1.msra.mxu0 0.0
      %5136 = vmatprep.subr.mxu0 0.0
      %5137 = vmatpush1.msra.mxu0 0.0
      %5138 = vmatprep.subr.mxu0 0.0
      %5139 = vmatpush1.msra.mxu0 0.0
      %5140 = vmatprep.subr.mxu0 0.0
      %5141 = vmatpush1.msra.mxu0 0.0
      %5142 = vmatprep.subr.mxu0 0.0
      %5143 = vmatpush1.msra.mxu0 0.0
      %5144 = vmatprep.subr.mxu0 0.0
      %5145 = vmatpush1.msra.mxu0 0.0
      %5146 = vmatprep.subr.mxu0 0.0
      %5147 = vmatpush1.msra.mxu0 0.0
      %5148 = vmatprep.subr.mxu0 0.0
      %5149 = vmatpush1.msra.mxu0 0.0
      %5150 = vmatprep.subr.mxu0 0.0
      %5151 = vmatpush1.msra.mxu0 0.0
      %5152 = vmatprep.subr.mxu0 0.0
      %5153 = vmatpush1.msra.mxu0 0.0
      %5154 = vmatprep.subr.mxu0 0.0
      %5155 = vmatpush1.msra.mxu0 0.0
      %5156 = vmatprep.subr.mxu0 0.0
      %5157 = vmatpush1.msra.mxu0 0.0
      %5158 = vmatprep.subr.mxu0 0.0
      %5159 = vmatpush1.msra.mxu0 0.0
      %5160 = vmatprep.subr.mxu0 0.0
      %5161 = vmatpush1.msra.mxu0 0.0
      %5162 = vmatprep.subr.mxu0 0.0
      %5163 = vmatpush1.msra.mxu0 0.0
      %5164 = vmatprep.subr.mxu0 0.0
      %5165 = vmatpush1.msra.mxu0 0.0
      %5166 = vmatprep.subr.mxu0 0.0
      %5167 = vmatpush1.msra.mxu0 0.0
      %5168 = vmatprep.subr.mxu0 0.0
      %5169 = vmatpush1.msra.mxu0 0.0
      %5170 = vmatprep.subr.mxu0 0.0
      %5171 = vmatpush1.msra.mxu0 0.0
      %5172 = vmatprep.subr.mxu0 0.0
      %5173 = vmatpush1.msra.mxu0 0.0
      %5174 = vmatprep.mubr.f32.mxu0 0.0
      %v5175 = vand.u32 %v5021, 4294901760
      %5176 = vmatmul.mubr.f32.gmra.mrb[0].mxu0 %v5175
      %v5177 = vpop.f32.mrb[0].mxu0
      %v5178 = vadd.f32 %v5097, %v5177
      %v5179 = vpop.f32.mrb[0].mxu0
      %5180 = vdwg.mxu0
      %5181 = vmatprep.subr.mxu0 0.0
      %v5182 = vand.u32 %v5006, 4294901760
      %v5183 = vsub.f32 %v5006, %v5182
      %5184 = vmatpush1.msra.mxu0 %v5183
      %5185 = vmatprep.subr.mxu0 0.0
      %v5186 = vand.u32 %v5011, 4294901760
      %v5187 = vsub.f32 %v5011, %v5186
      %5188 = vmatpush1.msra.mxu0 %v5187
      %5189 = vmatprep.subr.mxu0 0.0
      %5190 = vmatpush1.msra.mxu0 0.0
      %5191 = vmatprep.subr.mxu0 0.0
      %5192 = vmatpush1.msra.mxu0 0.0
      %5193 = vmatprep.subr.mxu0 0.0
      %5194 = vmatpush1.msra.mxu0 0.0
      %5195 = vmatprep.subr.mxu0 0.0
      %5196 = vmatpush1.msra.mxu0 0.0
      %5197 = vmatprep.subr.mxu0 0.0
      %5198 = vmatpush1.msra.mxu0 0.0
      %5199 = vmatprep.subr.mxu0 0.0
      %5200 = vmatpush1.msra.mxu0 0.0
      %5201 = vmatprep.subr.mxu0 0.0
      %5202 = vmatpush1.msra.mxu0 0.0
      %5203 = vmatprep.subr.mxu0 0.0
      %5204 = vmatpush1.msra.mxu0 0.0
      %5205 = vmatprep.subr.mxu0 0.0
      %5206 = vmatpush1.msra.mxu0 0.0
      %5207 = vmatprep.subr.mxu0 0.0
      %5208 = vmatpush1.msra.mxu0 0.0
      %5209 = vmatprep.subr.mxu0 0.0
      %5210 = vmatpush1.msra.mxu0 0.0
      %5211 = vmatprep.subr.mxu0 0.0
      %5212 = vmatpush1.msra.mxu0 0.0
      %5213 = vmatprep.subr.mxu0 0.0
      %5214 = vmatpush1.msra.mxu0 0.0
      %5215 = vmatprep.subr.mxu0 0.0
      %5216 = vmatpush1.msra.mxu0 0.0
      %5217 = vmatprep.subr.mxu0 0.0
      %5218 = vmatpush1.msra.mxu0 0.0
      %5219 = vmatprep.subr.mxu0 0.0
      %5220 = vmatpush1.msra.mxu0 0.0
      %5221 = vmatprep.subr.mxu0 0.0
      %5222 = vmatpush1.msra.mxu0 0.0
      %5223 = vmatprep.subr.mxu0 0.0
      %5224 = vmatpush1.msra.mxu0 0.0
      %5225 = vmatprep.subr.mxu0 0.0
      %5226 = vmatpush1.msra.mxu0 0.0
      %5227 = vmatprep.subr.mxu0 0.0
      %5228 = vmatpush1.msra.mxu0 0.0
      %5229 = vmatprep.subr.mxu0 0.0
      %5230 = vmatpush1.msra.mxu0 0.0
      %5231 = vmatprep.subr.mxu0 0.0
      %5232 = vmatpush1.msra.mxu0 0.0
      %5233 = vmatprep.subr.mxu0 0.0
      %5234 = vmatpush1.msra.mxu0 0.0
      %5235 = vmatprep.subr.mxu0 0.0
      %5236 = vmatpush1.msra.mxu0 0.0
      %5237 = vmatprep.subr.mxu0 0.0
      %5238 = vmatpush1.msra.mxu0 0.0
      %5239 = vmatprep.subr.mxu0 0.0
      %5240 = vmatpush1.msra.mxu0 0.0
      %5241 = vmatprep.subr.mxu0 0.0
      %5242 = vmatpush1.msra.mxu0 0.0
      %5243 = vmatprep.subr.mxu0 0.0
      %5244 = vmatpush1.msra.mxu0 0.0
      %5245 = vmatprep.subr.mxu0 0.0
      %5246 = vmatpush1.msra.mxu0 0.0
      %5247 = vmatprep.subr.mxu0 0.0
      %5248 = vmatpush1.msra.mxu0 0.0
      %5249 = vmatprep.mubr.f32.mxu0 0.0
      %v5250 = vand.u32 %v5021, 4294901760
      %v5251 = vsub.f32 %v5021, %v5250
      %5252 = vmatmul.mubr.f32.gmra.mrb[0].mxu0 %v5251
      %v5253 = vpop.f32.mrb[0].mxu0
      %v5254 = vadd.f32 %v5178, %v5253
      %v5255 = vpop.f32.mrb[0].mxu0
      %5256 = vdwg.mxu0
      %5257 = vmatprep.subr.mxu0 0.0
      %v5258 = vand.u32 %v5006, 4294901760
      %5259 = vmatpush1.msra.mxu0 %v5258
      %5260 = vmatprep.subr.mxu0 0.0
      %v5261 = vand.u32 %v5011, 4294901760
      %5262 = vmatpush1.msra.mxu0 %v5261
      %5263 = vmatprep.subr.mxu0 0.0
      %5264 = vmatpush1.msra.mxu0 0.0
      %5265 = vmatprep.subr.mxu0 0.0
      %5266 = vmatpush1.msra.mxu0 0.0
      %5267 = vmatprep.subr.mxu0 0.0
      %5268 = vmatpush1.msra.mxu0 0.0
      %5269 = vmatprep.subr.mxu0 0.0
      %5270 = vmatpush1.msra.mxu0 0.0
      %5271 = vmatprep.subr.mxu0 0.0
      %5272 = vmatpush1.msra.mxu0 0.0
      %5273 = vmatprep.subr.mxu0 0.0
      %5274 = vmatpush1.msra.mxu0 0.0
      %5275 = vmatprep.subr.mxu0 0.0
      %5276 = vmatpush1.msra.mxu0 0.0
      %5277 = vmatprep.subr.mxu0 0.0
      %5278 = vmatpush1.msra.mxu0 0.0
      %5279 = vmatprep.subr.mxu0 0.0
      %5280 = vmatpush1.msra.mxu0 0.0
      %5281 = vmatprep.subr.mxu0 0.0
      %5282 = vmatpush1.msra.mxu0 0.0
      %5283 = vmatprep.subr.mxu0 0.0
      %5284 = vmatpush1.msra.mxu0 0.0
      %5285 = vmatprep.subr.mxu0 0.0
      %5286 = vmatpush1.msra.mxu0 0.0
      %5287 = vmatprep.subr.mxu0 0.0
      %5288 = vmatpush1.msra.mxu0 0.0
      %5289 = vmatprep.subr.mxu0 0.0
      %5290 = vmatpush1.msra.mxu0 0.0
      %5291 = vmatprep.subr.mxu0 0.0
      %5292 = vmatpush1.msra.mxu0 0.0
      %5293 = vmatprep.subr.mxu0 0.0
      %5294 = vmatpush1.msra.mxu0 0.0
      %5295 = vmatprep.subr.mxu0 0.0
      %5296 = vmatpush1.msra.mxu0 0.0
      %5297 = vmatprep.subr.mxu0 0.0
      %5298 = vmatpush1.msra.mxu0 0.0
      %5299 = vmatprep.subr.mxu0 0.0
      %5300 = vmatpush1.msra.mxu0 0.0
      %5301 = vmatprep.subr.mxu0 0.0
      %5302 = vmatpush1.msra.mxu0 0.0
      %5303 = vmatprep.subr.mxu0 0.0
      %5304 = vmatpush1.msra.mxu0 0.0
      %5305 = vmatprep.subr.mxu0 0.0
      %5306 = vmatpush1.msra.mxu0 0.0
      %5307 = vmatprep.subr.mxu0 0.0
      %5308 = vmatpush1.msra.mxu0 0.0
      %5309 = vmatprep.subr.mxu0 0.0
      %5310 = vmatpush1.msra.mxu0 0.0
      %5311 = vmatprep.subr.mxu0 0.0
      %5312 = vmatpush1.msra.mxu0 0.0
      %5313 = vmatprep.subr.mxu0 0.0
      %5314 = vmatpush1.msra.mxu0 0.0
      %5315 = vmatprep.subr.mxu0 0.0
      %5316 = vmatpush1.msra.mxu0 0.0
      %5317 = vmatprep.subr.mxu0 0.0
      %5318 = vmatpush1.msra.mxu0 0.0
      %5319 = vmatprep.subr.mxu0 0.0
      %5320 = vmatpush1.msra.mxu0 0.0
      %5321 = vmatprep.subr.mxu0 0.0
      %5322 = vmatpush1.msra.mxu0 0.0
      %5323 = vmatprep.mubr.f32.mxu0 0.0
      %v5324 = vand.u32 %v5021, 4294901760
      %v5325 = vsub.f32 %v5021, %v5324
      %v5326 = vand.u32 %v5325, 4294901760
      %5327 = vmatmul.mubr.f32.gmra.mrb[0].mxu0 %v5326
      %v5328 = vpop.f32.mrb[0].mxu0
      %v5329 = vadd.f32 %v5254, %v5328
      %v5330 = vpop.f32.mrb[0].mxu0
      %5331 = vdwg.mxu0
      %5332 = vmatprep.subr.mxu0 0.0
      %v5333 = vand.u32 %v5006, 4294901760
      %v5334 = vsub.f32 %v5006, %v5333
      %v5335 = vand.u32 %v5334, 4294901760
      %5336 = vmatpush1.msra.mxu0 %v5335
      %5337 = vmatprep.subr.mxu0 0.0
      %v5338 = vand.u32 %v5011, 4294901760
      %v5339 = vsub.f32 %v5011, %v5338
      %v5340 = vand.u32 %v5339, 4294901760
      %5341 = vmatpush1.msra.mxu0 %v5340
      %5342 = vmatprep.subr.mxu0 0.0
      %5343 = vmatpush1.msra.mxu0 0.0
      %5344 = vmatprep.subr.mxu0 0.0
      %5345 = vmatpush1.msra.mxu0 0.0
      %5346 = vmatprep.subr.mxu0 0.0
      %5347 = vmatpush1.msra.mxu0 0.0
      %5348 = vmatprep.subr.mxu0 0.0
      %5349 = vmatpush1.msra.mxu0 0.0
      %5350 = vmatprep.subr.mxu0 0.0
      %5351 = vmatpush1.msra.mxu0 0.0
      %5352 = vmatprep.subr.mxu0 0.0
      %5353 = vmatpush1.msra.mxu0 0.0
      %5354 = vmatprep.subr.mxu0 0.0
      %5355 = vmatpush1.msra.mxu0 0.0
      %5356 = vmatprep.subr.mxu0 0.0
      %5357 = vmatpush1.msra.mxu0 0.0
      %5358 = vmatprep.subr.mxu0 0.0
      %5359 = vmatpush1.msra.mxu0 0.0
      %5360 = vmatprep.subr.mxu0 0.0
      %5361 = vmatpush1.msra.mxu0 0.0
      %5362 = vmatprep.subr.mxu0 0.0
      %5363 = vmatpush1.msra.mxu0 0.0
      %5364 = vmatprep.subr.mxu0 0.0
      %5365 = vmatpush1.msra.mxu0 0.0
      %5366 = vmatprep.subr.mxu0 0.0
      %5367 = vmatpush1.msra.mxu0 0.0
      %5368 = vmatprep.subr.mxu0 0.0
      %5369 = vmatpush1.msra.mxu0 0.0
      %5370 = vmatprep.subr.mxu0 0.0
      %5371 = vmatpush1.msra.mxu0 0.0
      %5372 = vmatprep.subr.mxu0 0.0
      %5373 = vmatpush1.msra.mxu0 0.0
      %5374 = vmatprep.subr.mxu0 0.0
      %5375 = vmatpush1.msra.mxu0 0.0
      %5376 = vmatprep.subr.mxu0 0.0
      %5377 = vmatpush1.msra.mxu0 0.0
      %5378 = vmatprep.subr.mxu0 0.0
      %5379 = vmatpush1.msra.mxu0 0.0
      %5380 = vmatprep.subr.mxu0 0.0
      %5381 = vmatpush1.msra.mxu0 0.0
      %5382 = vmatprep.subr.mxu0 0.0
      %5383 = vmatpush1.msra.mxu0 0.0
      %5384 = vmatprep.subr.mxu0 0.0
      %5385 = vmatpush1.msra.mxu0 0.0
      %5386 = vmatprep.subr.mxu0 0.0
      %5387 = vmatpush1.msra.mxu0 0.0
      %5388 = vmatprep.subr.mxu0 0.0
      %5389 = vmatpush1.msra.mxu0 0.0
      %5390 = vmatprep.subr.mxu0 0.0
      %5391 = vmatpush1.msra.mxu0 0.0
      %5392 = vmatprep.subr.mxu0 0.0
      %5393 = vmatpush1.msra.mxu0 0.0
      %5394 = vmatprep.subr.mxu0 0.0
      %5395 = vmatpush1.msra.mxu0 0.0
      %5396 = vmatprep.subr.mxu0 0.0
      %5397 = vmatpush1.msra.mxu0 0.0
      %5398 = vmatprep.subr.mxu0 0.0
      %5399 = vmatpush1.msra.mxu0 0.0
      %5400 = vmatprep.subr.mxu0 0.0
      %5401 = vmatpush1.msra.mxu0 0.0
      %5402 = vmatprep.mubr.f32.mxu0 0.0
      %v5403 = vand.u32 %v5021, 4294901760
      %5404 = vmatmul.mubr.f32.gmra.mrb[0].mxu0 %v5403
      %v5405 = vpop.f32.mrb[0].mxu0
      %v5406 = vadd.f32 %v5329, %v5405
      %v5407 = vpop.f32.mrb[0].mxu0
      %5408 = vdwg.mxu0
      %5409 = vmatprep.subr.mxu0 0.0
      %v5410 = vand.u32 %v5006, 4294901760
      %5411 = vmatpush1.msra.mxu0 %v5410
      %5412 = vmatprep.subr.mxu0 0.0
      %v5413 = vand.u32 %v5011, 4294901760
      %5414 = vmatpush1.msra.mxu0 %v5413
      %5415 = vmatprep.subr.mxu0 0.0
      %5416 = vmatpush1.msra.mxu0 0.0
      %5417 = vmatprep.subr.mxu0 0.0
      %5418 = vmatpush1.msra.mxu0 0.0
      %5419 = vmatprep.subr.mxu0 0.0
      %5420 = vmatpush1.msra.mxu0 0.0
      %5421 = vmatprep.subr.mxu0 0.0
      %5422 = vmatpush1.msra.mxu0 0.0
      %5423 = vmatprep.subr.mxu0 0.0
      %5424 = vmatpush1.msra.mxu0 0.0
      %5425 = vmatprep.subr.mxu0 0.0
      %5426 = vmatpush1.msra.mxu0 0.0
      %5427 = vmatprep.subr.mxu0 0.0
      %5428 = vmatpush1.msra.mxu0 0.0
      %5429 = vmatprep.subr.mxu0 0.0
      %5430 = vmatpush1.msra.mxu0 0.0
      %5431 = vmatprep.subr.mxu0 0.0
      %5432 = vmatpush1.msra.mxu0 0.0
      %5433 = vmatprep.subr.mxu0 0.0
      %5434 = vmatpush1.msra.mxu0 0.0
      %5435 = vmatprep.subr.mxu0 0.0
      %5436 = vmatpush1.msra.mxu0 0.0
      %5437 = vmatprep.subr.mxu0 0.0
      %5438 = vmatpush1.msra.mxu0 0.0
      %5439 = vmatprep.subr.mxu0 0.0
      %5440 = vmatpush1.msra.mxu0 0.0
      %5441 = vmatprep.subr.mxu0 0.0
      %5442 = vmatpush1.msra.mxu0 0.0
      %5443 = vmatprep.subr.mxu0 0.0
      %5444 = vmatpush1.msra.mxu0 0.0
      %5445 = vmatprep.subr.mxu0 0.0
      %5446 = vmatpush1.msra.mxu0 0.0
      %5447 = vmatprep.subr.mxu0 0.0
      %5448 = vmatpush1.msra.mxu0 0.0
      %5449 = vmatprep.subr.mxu0 0.0
      %5450 = vmatpush1.msra.mxu0 0.0
      %5451 = vmatprep.subr.mxu0 0.0
      %5452 = vmatpush1.msra.mxu0 0.0
      %5453 = vmatprep.subr.mxu0 0.0
      %5454 = vmatpush1.msra.mxu0 0.0
      %5455 = vmatprep.subr.mxu0 0.0
      %5456 = vmatpush1.msra.mxu0 0.0
      %5457 = vmatprep.subr.mxu0 0.0
      %5458 = vmatpush1.msra.mxu0 0.0
      %5459 = vmatprep.subr.mxu0 0.0
      %5460 = vmatpush1.msra.mxu0 0.0
      %5461 = vmatprep.subr.mxu0 0.0
      %5462 = vmatpush1.msra.mxu0 0.0
      %5463 = vmatprep.subr.mxu0 0.0
      %5464 = vmatpush1.msra.mxu0 0.0
      %5465 = vmatprep.subr.mxu0 0.0
      %5466 = vmatpush1.msra.mxu0 0.0
      %5467 = vmatprep.subr.mxu0 0.0
      %5468 = vmatpush1.msra.mxu0 0.0
      %5469 = vmatprep.subr.mxu0 0.0
      %5470 = vmatpush1.msra.mxu0 0.0
      %5471 = vmatprep.subr.mxu0 0.0
      %5472 = vmatpush1.msra.mxu0 0.0
      %5473 = vmatprep.subr.mxu0 0.0
      %5474 = vmatpush1.msra.mxu0 0.0
      %5475 = vmatprep.mubr.f32.mxu0 0.0
      %v5476 = vand.u32 %v5021, 4294901760
      %5477 = vmatmul.mubr.f32.gmra.mrb[0].mxu0 %v5476
      %v5478 = vpop.f32.mrb[0].mxu0
      %v5479 = vadd.f32 %v5406, %v5478
      %v5480 = vpop.f32.mrb[0].mxu0
      %5481 = vdwg.mxu0
      %v5482 = vmax.f32 %v5479, 0.0
      %v5483 = vld [vmem:[%s8] sm:$0xff]
      %v5484 = vld [vmem:[%s8 + $0x8] sm:$0xff]
      %v5485 = vld [vmem:[%s9] sm:$0xff]
      %v5486 = vld [vmem:[%s9 + $0x8] sm:$0xff]
      %5488 = vset.pattern.permute.xlu0 0
      %5489 = vperm.xlu0 %5488, %v5485
      %v5490 = vpop.permute.xlu0 %5489
      %5493 = vset.pattern.permute.xlu0 0
      %5494 = vperm.xlu0 %5493, %v5486
      %v5495 = vpop.permute.xlu0 %5494
      %vm5497 = vcmask 15360
      %v5499 = vsel %vm5497, %v5483, 0
      %v5502 = vsel %vm5497, %v5484, 0
      %vm5504 = vcmask 1041408
      %v5506 = vsel %vm5504, %v5482, 0
      %5508 = vmatprep.subr.mxu0 0.0
      %v5509 = vand.u32 %v5506, 4294901760
      %5510 = vmatpush1.msra.mxu0 %v5509
      %5511 = vmatprep.subr.mxu0 0.0
      %5512 = vmatpush1.msra.mxu0 0.0
      %5513 = vmatprep.subr.mxu0 0.0
      %5514 = vmatpush1.msra.mxu0 0.0
      %5515 = vmatprep.subr.mxu0 0.0
      %5516 = vmatpush1.msra.mxu0 0.0
      %5517 = vmatprep.subr.mxu0 0.0
      %5518 = vmatpush1.msra.mxu0 0.0
      %5519 = vmatprep.subr.mxu0 0.0
      %5520 = vmatpush1.msra.mxu0 0.0
      %5521 = vmatprep.subr.mxu0 0.0
      %5522 = vmatpush1.msra.mxu0 0.0
      %5523 = vmatprep.subr.mxu0 0.0
      %5524 = vmatpush1.msra.mxu0 0.0
      %5525 = vmatprep.subr.mxu0 0.0
      %5526 = vmatpush1.msra.mxu0 0.0
      %5527 = vmatprep.subr.mxu0 0.0
      %5528 = vmatpush1.msra.mxu0 0.0
      %5529 = vmatprep.subr.mxu0 0.0
      %5530 = vmatpush1.msra.mxu0 0.0
      %5531 = vmatprep.subr.mxu0 0.0
      %5532 = vmatpush1.msra.mxu0 0.0
      %5533 = vmatprep.subr.mxu0 0.0
      %5534 = vmatpush1.msra.mxu0 0.0
      %5535 = vmatprep.subr.mxu0 0.0
      %5536 = vmatpush1.msra.mxu0 0.0
      %5537 = vmatprep.subr.mxu0 0.0
      %5538 = vmatpush1.msra.mxu0 0.0
      %5539 = vmatprep.subr.mxu0 0.0
      %5540 = vmatpush1.msra.mxu0 0.0
      %5541 = vmatprep.subr.mxu0 0.0
      %5542 = vmatpush1.msra.mxu0 0.0
      %5543 = vmatprep.subr.mxu0 0.0
      %5544 = vmatpush1.msra.mxu0 0.0
      %5545 = vmatprep.subr.mxu0 0.0
      %5546 = vmatpush1.msra.mxu0 0.0
      %5547 = vmatprep.subr.mxu0 0.0
      %5548 = vmatpush1.msra.mxu0 0.0
      %5549 = vmatprep.subr.mxu0 0.0
      %5550 = vmatpush1.msra.mxu0 0.0
      %5551 = vmatprep.subr.mxu0 0.0
      %5552 = vmatpush1.msra.mxu0 0.0
      %5553 = vmatprep.subr.mxu0 0.0
      %5554 = vmatpush1.msra.mxu0 0.0
      %5555 = vmatprep.subr.mxu0 0.0
      %5556 = vmatpush1.msra.mxu0 0.0
      %5557 = vmatprep.subr.mxu0 0.0
      %5558 = vmatpush1.msra.mxu0 0.0
      %5559 = vmatprep.subr.mxu0 0.0
      %5560 = vmatpush1.msra.mxu0 0.0
      %5561 = vmatprep.subr.mxu0 0.0
      %5562 = vmatpush1.msra.mxu0 0.0
      %5563 = vmatprep.subr.mxu0 0.0
      %5564 = vmatpush1.msra.mxu0 0.0
      %5565 = vmatprep.subr.mxu0 0.0
      %5566 = vmatpush1.msra.mxu0 0.0
      %5567 = vmatprep.subr.mxu0 0.0
      %5568 = vmatpush1.msra.mxu0 0.0
      %5569 = vmatprep.subr.mxu0 0.0
      %5570 = vmatpush1.msra.mxu0 0.0
      %5571 = vmatprep.subr.mxu0 0.0
      %5572 = vmatpush1.msra.mxu0 0.0
      %5573 = vmatprep.mubr.f32.mxu0 0.0
      %v5574 = vand.u32 %v5499, 4294901760
      %v5575 = vsub.f32 %v5499, %v5574
      %v5576 = vand.u32 %v5575, 4294901760
      %v5577 = vsub.f32 %v5575, %v5576
      %v5578 = vand.u32 %v5577, 4294901760
      %5579 = vmatmul.mubr.f32.gmra.mrb[0].mxu0 %v5578
      %v5580 = vpop.f32.mrb[0].mxu0
      %v5581 = vadd.f32 %v5490, %v5580
      %v5582 = vpop.f32.mrb[0].mxu0
      %5583 = vmatprep.mubr.f32.mxu0 0.0
      %v5584 = vand.u32 %v5502, 4294901760
      %v5585 = vsub.f32 %v5502, %v5584
      %v5586 = vand.u32 %v5585, 4294901760
      %v5587 = vsub.f32 %v5585, %v5586
      %v5588 = vand.u32 %v5587, 4294901760
      %5589 = vmatmul.mubr.f32.gmra.mrb[0].mxu0 %v5588
      %v5590 = vpop.f32.mrb[0].mxu0
      %v5591 = vadd.f32 %v5495, %v5590
      %v5592 = vpop.f32.mrb[0].mxu0
      %5593 = vdwg.mxu0
      %5594 = vmatprep.subr.mxu0 0.0
      %v5595 = vand.u32 %v5506, 4294901760
      %v5596 = vsub.f32 %v5506, %v5595
      %v5597 = vand.u32 %v5596, 4294901760
      %v5598 = vsub.f32 %v5596, %v5597
      %v5599 = vand.u32 %v5598, 4294901760
      %5600 = vmatpush1.msra.mxu0 %v5599
      %5601 = vmatprep.subr.mxu0 0.0
      %5602 = vmatpush1.msra.mxu0 0.0
      %5603 = vmatprep.subr.mxu0 0.0
      %5604 = vmatpush1.msra.mxu0 0.0
      %5605 = vmatprep.subr.mxu0 0.0
      %5606 = vmatpush1.msra.mxu0 0.0
      %5607 = vmatprep.subr.mxu0 0.0
      %5608 = vmatpush1.msra.mxu0 0.0
      %5609 = vmatprep.subr.mxu0 0.0
      %5610 = vmatpush1.msra.mxu0 0.0
      %5611 = vmatprep.subr.mxu0 0.0
      %5612 = vmatpush1.msra.mxu0 0.0
      %5613 = vmatprep.subr.mxu0 0.0
      %5614 = vmatpush1.msra.mxu0 0.0
      %5615 = vmatprep.subr.mxu0 0.0
      %5616 = vmatpush1.msra.mxu0 0.0
      %5617 = vmatprep.subr.mxu0 0.0
      %5618 = vmatpush1.msra.mxu0 0.0
      %5619 = vmatprep.subr.mxu0 0.0
      %5620 = vmatpush1.msra.mxu0 0.0
      %5621 = vmatprep.subr.mxu0 0.0
      %5622 = vmatpush1.msra.mxu0 0.0
      %5623 = vmatprep.subr.mxu0 0.0
      %5624 = vmatpush1.msra.mxu0 0.0
      %5625 = vmatprep.subr.mxu0 0.0
      %5626 = vmatpush1.msra.mxu0 0.0
      %5627 = vmatprep.subr.mxu0 0.0
      %5628 = vmatpush1.msra.mxu0 0.0
      %5629 = vmatprep.subr.mxu0 0.0
      %5630 = vmatpush1.msra.mxu0 0.0
      %5631 = vmatprep.subr.mxu0 0.0
      %5632 = vmatpush1.msra.mxu0 0.0
      %5633 = vmatprep.subr.mxu0 0.0
      %5634 = vmatpush1.msra.mxu0 0.0
      %5635 = vmatprep.subr.mxu0 0.0
      %5636 = vmatpush1.msra.mxu0 0.0
      %5637 = vmatprep.subr.mxu0 0.0
      %5638 = vmatpush1.msra.mxu0 0.0
      %5639 = vmatprep.subr.mxu0 0.0
      %5640 = vmatpush1.msra.mxu0 0.0
      %5641 = vmatprep.subr.mxu0 0.0
      %5642 = vmatpush1.msra.mxu0 0.0
      %5643 = vmatprep.subr.mxu0 0.0
      %5644 = vmatpush1.msra.mxu0 0.0
      %5645 = vmatprep.subr.mxu0 0.0
      %5646 = vmatpush1.msra.mxu0 0.0
      %5647 = vmatprep.subr.mxu0 0.0
      %5648 = vmatpush1.msra.mxu0 0.0
      %5649 = vmatprep.subr.mxu0 0.0
      %5650 = vmatpush1.msra.mxu0 0.0
      %5651 = vmatprep.subr.mxu0 0.0
      %5652 = vmatpush1.msra.mxu0 0.0
      %5653 = vmatprep.subr.mxu0 0.0
      %5654 = vmatpush1.msra.mxu0 0.0
      %5655 = vmatprep.subr.mxu0 0.0
      %5656 = vmatpush1.msra.mxu0 0.0
      %5657 = vmatprep.subr.mxu0 0.0
      %5658 = vmatpush1.msra.mxu0 0.0
      %5659 = vmatprep.subr.mxu0 0.0
      %5660 = vmatpush1.msra.mxu0 0.0
      %5661 = vmatprep.subr.mxu0 0.0
      %5662 = vmatpush1.msra.mxu0 0.0
      %5663 = vmatprep.mubr.f32.mxu0 0.0
      %v5664 = vand.u32 %v5499, 4294901760
      %5665 = vmatmul.mubr.f32.gmra.mrb[0].mxu0 %v5664
      %v5666 = vpop.f32.mrb[0].mxu0
      %v5667 = vadd.f32 %v5581, %v5666
      %v5668 = vpop.f32.mrb[0].mxu0
      %5669 = vmatprep.mubr.f32.mxu0 0.0
      %v5670 = vand.u32 %v5502, 4294901760
      %5671 = vmatmul.mubr.f32.gmra.mrb[0].mxu0 %v5670
      %v5672 = vpop.f32.mrb[0].mxu0
      %v5673 = vadd.f32 %v5591, %v5672
      %v5674 = vpop.f32.mrb[0].mxu0
      %5675 = vdwg.mxu0
      %5676 = vmatprep.subr.mxu0 0.0
      %v5677 = vand.u32 %v5506, 4294901760
      %v5678 = vsub.f32 %v5506, %v5677
      %5679 = vmatpush1.msra.mxu0 %v5678
      %5680 = vmatprep.subr.mxu0 0.0
      %5681 = vmatpush1.msra.mxu0 0.0
      %5682 = vmatprep.subr.mxu0 0.0
      %5683 = vmatpush1.msra.mxu0 0.0
      %5684 = vmatprep.subr.mxu0 0.0
      %5685 = vmatpush1.msra.mxu0 0.0
      %5686 = vmatprep.subr.mxu0 0.0
      %5687 = vmatpush1.msra.mxu0 0.0
      %5688 = vmatprep.subr.mxu0 0.0
      %5689 = vmatpush1.msra.mxu0 0.0
      %5690 = vmatprep.subr.mxu0 0.0
      %5691 = vmatpush1.msra.mxu0 0.0
      %5692 = vmatprep.subr.mxu0 0.0
      %5693 = vmatpush1.msra.mxu0 0.0
      %5694 = vmatprep.subr.mxu0 0.0
      %5695 = vmatpush1.msra.mxu0 0.0
      %5696 = vmatprep.subr.mxu0 0.0
      %5697 = vmatpush1.msra.mxu0 0.0
      %5698 = vmatprep.subr.mxu0 0.0
      %5699 = vmatpush1.msra.mxu0 0.0
      %5700 = vmatprep.subr.mxu0 0.0
      %5701 = vmatpush1.msra.mxu0 0.0
      %5702 = vmatprep.subr.mxu0 0.0
      %5703 = vmatpush1.msra.mxu0 0.0
      %5704 = vmatprep.subr.mxu0 0.0
      %5705 = vmatpush1.msra.mxu0 0.0
      %5706 = vmatprep.subr.mxu0 0.0
      %5707 = vmatpush1.msra.mxu0 0.0
      %5708 = vmatprep.subr.mxu0 0.0
      %5709 = vmatpush1.msra.mxu0 0.0
      %5710 = vmatprep.subr.mxu0 0.0
      %5711 = vmatpush1.msra.mxu0 0.0
      %5712 = vmatprep.subr.mxu0 0.0
      %5713 = vmatpush1.msra.mxu0 0.0
      %5714 = vmatprep.subr.mxu0 0.0
      %5715 = vmatpush1.msra.mxu0 0.0
      %5716 = vmatprep.subr.mxu0 0.0
      %5717 = vmatpush1.msra.mxu0 0.0
      %5718 = vmatprep.subr.mxu0 0.0
      %5719 = vmatpush1.msra.mxu0 0.0
      %5720 = vmatprep.subr.mxu0 0.0
      %5721 = vmatpush1.msra.mxu0 0.0
      %5722 = vmatprep.subr.mxu0 0.0
      %5723 = vmatpush1.msra.mxu0 0.0
      %5724 = vmatprep.subr.mxu0 0.0
      %5725 = vmatpush1.msra.mxu0 0.0
      %5726 = vmatprep.subr.mxu0 0.0
      %5727 = vmatpush1.msra.mxu0 0.0
      %5728 = vmatprep.subr.mxu0 0.0
      %5729 = vmatpush1.msra.mxu0 0.0
      %5730 = vmatprep.subr.mxu0 0.0
      %5731 = vmatpush1.msra.mxu0 0.0
      %5732 = vmatprep.subr.mxu0 0.0
      %5733 = vmatpush1.msra.mxu0 0.0
      %5734 = vmatprep.subr.mxu0 0.0
      %5735 = vmatpush1.msra.mxu0 0.0
      %5736 = vmatprep.subr.mxu0 0.0
      %5737 = vmatpush1.msra.mxu0 0.0
      %5738 = vmatprep.subr.mxu0 0.0
      %5739 = vmatpush1.msra.mxu0 0.0
      %5740 = vmatprep.subr.mxu0 0.0
      %5741 = vmatpush1.msra.mxu0 0.0
      %5742 = vmatprep.mubr.f32.mxu0 0.0
      %v5743 = vand.u32 %v5499, 4294901760
      %v5744 = vsub.f32 %v5499, %v5743
      %5745 = vmatmul.mubr.f32.gmra.mrb[0].mxu0 %v5744
      %v5746 = vpop.f32.mrb[0].mxu0
      %v5747 = vadd.f32 %v5667, %v5746
      %v5748 = vpop.f32.mrb[0].mxu0
      %5749 = vmatprep.mubr.f32.mxu0 0.0
      %v5750 = vand.u32 %v5502, 4294901760
      %v5751 = vsub.f32 %v5502, %v5750
      %5752 = vmatmul.mubr.f32.gmra.mrb[0].mxu0 %v5751
      %v5753 = vpop.f32.mrb[0].mxu0
      %v5754 = vadd.f32 %v5673, %v5753
      %v5755 = vpop.f32.mrb[0].mxu0
      %5756 = vdwg.mxu0
      %5757 = vmatprep.subr.mxu0 0.0
      %v5758 = vand.u32 %v5506, 4294901760
      %5759 = vmatpush1.msra.mxu0 %v5758
      %5760 = vmatprep.subr.mxu0 0.0
      %5761 = vmatpush1.msra.mxu0 0.0
      %5762 = vmatprep.subr.mxu0 0.0
      %5763 = vmatpush1.msra.mxu0 0.0
      %5764 = vmatprep.subr.mxu0 0.0
      %5765 = vmatpush1.msra.mxu0 0.0
      %5766 = vmatprep.subr.mxu0 0.0
      %5767 = vmatpush1.msra.mxu0 0.0
      %5768 = vmatprep.subr.mxu0 0.0
      %5769 = vmatpush1.msra.mxu0 0.0
      %5770 = vmatprep.subr.mxu0 0.0
      %5771 = vmatpush1.msra.mxu0 0.0
      %5772 = vmatprep.subr.mxu0 0.0
      %5773 = vmatpush1.msra.mxu0 0.0
      %5774 = vmatprep.subr.mxu0 0.0
      %5775 = vmatpush1.msra.mxu0 0.0
      %5776 = vmatprep.subr.mxu0 0.0
      %5777 = vmatpush1.msra.mxu0 0.0
      %5778 = vmatprep.subr.mxu0 0.0
      %5779 = vmatpush1.msra.mxu0 0.0
      %5780 = vmatprep.subr.mxu0 0.0
      %5781 = vmatpush1.msra.mxu0 0.0
      %5782 = vmatprep.subr.mxu0 0.0
      %5783 = vmatpush1.msra.mxu0 0.0
      %5784 = vmatprep.subr.mxu0 0.0
      %5785 = vmatpush1.msra.mxu0 0.0
      %5786 = vmatprep.subr.mxu0 0.0
      %5787 = vmatpush1.msra.mxu0 0.0
      %5788 = vmatprep.subr.mxu0 0.0
      %5789 = vmatpush1.msra.mxu0 0.0
      %5790 = vmatprep.subr.mxu0 0.0
      %5791 = vmatpush1.msra.mxu0 0.0
      %5792 = vmatprep.subr.mxu0 0.0
      %5793 = vmatpush1.msra.mxu0 0.0
      %5794 = vmatprep.subr.mxu0 0.0
      %5795 = vmatpush1.msra.mxu0 0.0
      %5796 = vmatprep.subr.mxu0 0.0
      %5797 = vmatpush1.msra.mxu0 0.0
      %5798 = vmatprep.subr.mxu0 0.0
      %5799 = vmatpush1.msra.mxu0 0.0
      %5800 = vmatprep.subr.mxu0 0.0
      %5801 = vmatpush1.msra.mxu0 0.0
      %5802 = vmatprep.subr.mxu0 0.0
      %5803 = vmatpush1.msra.mxu0 0.0
      %5804 = vmatprep.subr.mxu0 0.0
      %5805 = vmatpush1.msra.mxu0 0.0
      %5806 = vmatprep.subr.mxu0 0.0
      %5807 = vmatpush1.msra.mxu0 0.0
      %5808 = vmatprep.subr.mxu0 0.0
      %5809 = vmatpush1.msra.mxu0 0.0
      %5810 = vmatprep.subr.mxu0 0.0
      %5811 = vmatpush1.msra.mxu0 0.0
      %5812 = vmatprep.subr.mxu0 0.0
      %5813 = vmatpush1.msra.mxu0 0.0
      %5814 = vmatprep.subr.mxu0 0.0
      %5815 = vmatpush1.msra.mxu0 0.0
      %5816 = vmatprep.subr.mxu0 0.0
      %5817 = vmatpush1.msra.mxu0 0.0
      %5818 = vmatprep.subr.mxu0 0.0
      %5819 = vmatpush1.msra.mxu0 0.0
      %5820 = vmatprep.subr.mxu0 0.0
      %5821 = vmatpush1.msra.mxu0 0.0
      %5822 = vmatprep.mubr.f32.mxu0 0.0
      %v5823 = vand.u32 %v5499, 4294901760
      %v5824 = vsub.f32 %v5499, %v5823
      %v5825 = vand.u32 %v5824, 4294901760
      %5826 = vmatmul.mubr.f32.gmra.mrb[0].mxu0 %v5825
      %v5827 = vpop.f32.mrb[0].mxu0
      %v5828 = vadd.f32 %v5747, %v5827
      %v5829 = vpop.f32.mrb[0].mxu0
      %5830 = vmatprep.mubr.f32.mxu0 0.0
      %v5831 = vand.u32 %v5502, 4294901760
      %v5832 = vsub.f32 %v5502, %v5831
      %v5833 = vand.u32 %v5832, 4294901760
      %5834 = vmatmul.mubr.f32.gmra.mrb[0].mxu0 %v5833
      %v5835 = vpop.f32.mrb[0].mxu0
      %v5836 = vadd.f32 %v5754, %v5835
      %v5837 = vpop.f32.mrb[0].mxu0
      %5838 = vdwg.mxu0
      %5839 = vmatprep.subr.mxu0 0.0
      %v5840 = vand.u32 %v5506, 4294901760
      %v5841 = vsub.f32 %v5506, %v5840
      %v5842 = vand.u32 %v5841, 4294901760
      %5843 = vmatpush1.msra.mxu0 %v5842
      %5844 = vmatprep.subr.mxu0 0.0
      %5845 = vmatpush1.msra.mxu0 0.0
      %5846 = vmatprep.subr.mxu0 0.0
      %5847 = vmatpush1.msra.mxu0 0.0
      %5848 = vmatprep.subr.mxu0 0.0
      %5849 = vmatpush1.msra.mxu0 0.0
      %5850 = vmatprep.subr.mxu0 0.0
      %5851 = vmatpush1.msra.mxu0 0.0
      %5852 = vmatprep.subr.mxu0 0.0
      %5853 = vmatpush1.msra.mxu0 0.0
      %5854 = vmatprep.subr.mxu0 0.0
      %5855 = vmatpush1.msra.mxu0 0.0
      %5856 = vmatprep.subr.mxu0 0.0
      %5857 = vmatpush1.msra.mxu0 0.0
      %5858 = vmatprep.subr.mxu0 0.0
      %5859 = vmatpush1.msra.mxu0 0.0
      %5860 = vmatprep.subr.mxu0 0.0
      %5861 = vmatpush1.msra.mxu0 0.0
      %5862 = vmatprep.subr.mxu0 0.0
      %5863 = vmatpush1.msra.mxu0 0.0
      %5864 = vmatprep.subr.mxu0 0.0
      %5865 = vmatpush1.msra.mxu0 0.0
      %5866 = vmatprep.subr.mxu0 0.0
      %5867 = vmatpush1.msra.mxu0 0.0
      %5868 = vmatprep.subr.mxu0 0.0
      %5869 = vmatpush1.msra.mxu0 0.0
      %5870 = vmatprep.subr.mxu0 0.0
      %5871 = vmatpush1.msra.mxu0 0.0
      %5872 = vmatprep.subr.mxu0 0.0
      %5873 = vmatpush1.msra.mxu0 0.0
      %5874 = vmatprep.subr.mxu0 0.0
      %5875 = vmatpush1.msra.mxu0 0.0
      %5876 = vmatprep.subr.mxu0 0.0
      %5877 = vmatpush1.msra.mxu0 0.0
      %5878 = vmatprep.subr.mxu0 0.0
      %5879 = vmatpush1.msra.mxu0 0.0
      %5880 = vmatprep.subr.mxu0 0.0
      %5881 = vmatpush1.msra.mxu0 0.0
      %5882 = vmatprep.subr.mxu0 0.0
      %5883 = vmatpush1.msra.mxu0 0.0
      %5884 = vmatprep.subr.mxu0 0.0
      %5885 = vmatpush1.msra.mxu0 0.0
      %5886 = vmatprep.subr.mxu0 0.0
      %5887 = vmatpush1.msra.mxu0 0.0
      %5888 = vmatprep.subr.mxu0 0.0
      %5889 = vmatpush1.msra.mxu0 0.0
      %5890 = vmatprep.subr.mxu0 0.0
      %5891 = vmatpush1.msra.mxu0 0.0
      %5892 = vmatprep.subr.mxu0 0.0
      %5893 = vmatpush1.msra.mxu0 0.0
      %5894 = vmatprep.subr.mxu0 0.0
      %5895 = vmatpush1.msra.mxu0 0.0
      %5896 = vmatprep.subr.mxu0 0.0
      %5897 = vmatpush1.msra.mxu0 0.0
      %5898 = vmatprep.subr.mxu0 0.0
      %5899 = vmatpush1.msra.mxu0 0.0
      %5900 = vmatprep.subr.mxu0 0.0
      %5901 = vmatpush1.msra.mxu0 0.0
      %5902 = vmatprep.subr.mxu0 0.0
      %5903 = vmatpush1.msra.mxu0 0.0
      %5904 = vmatprep.subr.mxu0 0.0
      %5905 = vmatpush1.msra.mxu0 0.0
      %5906 = vmatprep.mubr.f32.mxu0 0.0
      %v5907 = vand.u32 %v5499, 4294901760
      %5908 = vmatmul.mubr.f32.gmra.mrb[0].mxu0 %v5907
      %v5909 = vpop.f32.mrb[0].mxu0
      %v5910 = vadd.f32 %v5828, %v5909
      %v5911 = vpop.f32.mrb[0].mxu0
      %5912 = vmatprep.mubr.f32.mxu0 0.0
      %v5913 = vand.u32 %v5502, 4294901760
      %5914 = vmatmul.mubr.f32.gmra.mrb[0].mxu0 %v5913
      %v5915 = vpop.f32.mrb[0].mxu0
      %v5916 = vadd.f32 %v5836, %v5915
      %v5917 = vpop.f32.mrb[0].mxu0
      %5918 = vdwg.mxu0
      %5919 = vmatprep.subr.mxu0 0.0
      %v5920 = vand.u32 %v5506, 4294901760
      %5921 = vmatpush1.msra.mxu0 %v5920
      %5922 = vmatprep.subr.mxu0 0.0
      %5923 = vmatpush1.msra.mxu0 0.0
      %5924 = vmatprep.subr.mxu0 0.0
      %5925 = vmatpush1.msra.mxu0 0.0
      %5926 = vmatprep.subr.mxu0 0.0
      %5927 = vmatpush1.msra.mxu0 0.0
      %5928 = vmatprep.subr.mxu0 0.0
      %5929 = vmatpush1.msra.mxu0 0.0
      %5930 = vmatprep.subr.mxu0 0.0
      %5931 = vmatpush1.msra.mxu0 0.0
      %5932 = vmatprep.subr.mxu0 0.0
      %5933 = vmatpush1.msra.mxu0 0.0
      %5934 = vmatprep.subr.mxu0 0.0
      %5935 = vmatpush1.msra.mxu0 0.0
      %5936 = vmatprep.subr.mxu0 0.0
      %5937 = vmatpush1.msra.mxu0 0.0
      %5938 = vmatprep.subr.mxu0 0.0
      %5939 = vmatpush1.msra.mxu0 0.0
      %5940 = vmatprep.subr.mxu0 0.0
      %5941 = vmatpush1.msra.mxu0 0.0
      %5942 = vmatprep.subr.mxu0 0.0
      %5943 = vmatpush1.msra.mxu0 0.0
      %5944 = vmatprep.subr.mxu0 0.0
      %5945 = vmatpush1.msra.mxu0 0.0
      %5946 = vmatprep.subr.mxu0 0.0
      %5947 = vmatpush1.msra.mxu0 0.0
      %5948 = vmatprep.subr.mxu0 0.0
      %5949 = vmatpush1.msra.mxu0 0.0
      %5950 = vmatprep.subr.mxu0 0.0
      %5951 = vmatpush1.msra.mxu0 0.0
      %5952 = vmatprep.subr.mxu0 0.0
      %5953 = vmatpush1.msra.mxu0 0.0
      %5954 = vmatprep.subr.mxu0 0.0
      %5955 = vmatpush1.msra.mxu0 0.0
      %5956 = vmatprep.subr.mxu0 0.0
      %5957 = vmatpush1.msra.mxu0 0.0
      %5958 = vmatprep.subr.mxu0 0.0
      %5959 = vmatpush1.msra.mxu0 0.0
      %5960 = vmatprep.subr.mxu0 0.0
      %5961 = vmatpush1.msra.mxu0 0.0
      %5962 = vmatprep.subr.mxu0 0.0
      %5963 = vmatpush1.msra.mxu0 0.0
      %5964 = vmatprep.subr.mxu0 0.0
      %5965 = vmatpush1.msra.mxu0 0.0
      %5966 = vmatprep.subr.mxu0 0.0
      %5967 = vmatpush1.msra.mxu0 0.0
      %5968 = vmatprep.subr.mxu0 0.0
      %5969 = vmatpush1.msra.mxu0 0.0
      %5970 = vmatprep.subr.mxu0 0.0
      %5971 = vmatpush1.msra.mxu0 0.0
      %5972 = vmatprep.subr.mxu0 0.0
      %5973 = vmatpush1.msra.mxu0 0.0
      %5974 = vmatprep.subr.mxu0 0.0
      %5975 = vmatpush1.msra.mxu0 0.0
      %5976 = vmatprep.subr.mxu0 0.0
      %5977 = vmatpush1.msra.mxu0 0.0
      %5978 = vmatprep.subr.mxu0 0.0
      %5979 = vmatpush1.msra.mxu0 0.0
      %5980 = vmatprep.subr.mxu0 0.0
      %5981 = vmatpush1.msra.mxu0 0.0
      %5982 = vmatprep.subr.mxu0 0.0
      %5983 = vmatpush1.msra.mxu0 0.0
      %5984 = vmatprep.mubr.f32.mxu0 0.0
      %v5985 = vand.u32 %v5499, 4294901760
      %5986 = vmatmul.mubr.f32.gmra.mrb[0].mxu0 %v5985
      %v5987 = vpop.f32.mrb[0].mxu0
      %v5988 = vadd.f32 %v5910, %v5987
      %v5989 = vpop.f32.mrb[0].mxu0
      %5990 = vmatprep.mubr.f32.mxu0 0.0
      %v5991 = vand.u32 %v5502, 4294901760
      %5992 = vmatmul.mubr.f32.gmra.mrb[0].mxu0 %v5991
      %v5993 = vpop.f32.mrb[0].mxu0
      %v5994 = vadd.f32 %v5916, %v5993
      %v5995 = vpop.f32.mrb[0].mxu0
      %5996 = vdwg.mxu0
      %v5997 = vxor.u32 %v5988, 2147483648
      %v5998 = vxor.u32 %v5994, 2147483648
      %v5999 = vmul.f32 %v5997, 1.442695
      %v6000 = vpow.pop %v5999
      %v6001 = vmul.f32 %v5998, 1.442695
      %v6002 = vpow.pop %v6001
      %v6003 = vadd.f32 %v6000, 1.0
      %v6004 = vadd.f32 %v6002, 1.0
      %v6005 = vrcp.pop %v6003
      %v6006 = vmul.f32 1.0, %v6005
      %v6007 = vrcp.pop %v6004
      %v6008 = vmul.f32 1.0, %v6007
      %v6009 = vld [vmem:[%s469] sm:$0xff]
      %v6010 = vld [vmem:[%s469 + $0x8] sm:$0xff]
      %v6011 = vld [vmem:[%s469 + $0x10] sm:$0xff]
      %v6012 = vld [vmem:[%s469 + $0x18] sm:$0xff]
      %v6013 = vld [vmem:[%s469 + $0x20] sm:$0xff]
      %v6014 = vld [vmem:[%s469 + $0x28] sm:$0xff]
      %6016 = vset.pattern.permute.xlu0 0
      %6017 = vperm.xlu0 %6016, %v6006
      %v6018 = vpop.permute.xlu0 %6017
      %6021 = vset.pattern.permute.xlu0 0
      %6022 = vperm.xlu0 %6021, %v6008
      %v6023 = vpop.permute.xlu0 %6022
      %v6025 = vmul.f32 %v6009, %v6018
      %v6026 = vmul.f32 %v6010, %v6018
      %v6027 = vmul.f32 %v6011, %v6018
      %v6028 = vmul.f32 %v6012, %v6023
      %v6029 = vmul.f32 %v6013, %v6023
      %v6030 = vmul.f32 %v6014, %v6023
      %v6031 = vld [vmem:[%s10] sm:$0x3]
      %v6032 = vld [vmem:[%s11] sm:$0x3]
      %6034 = vset.pattern.permute.xlu0 0
      %6035 = vperm.xlu0 %6034, %v6032
      %v6036 = vpop.permute.xlu0 %6035
      %v6039 = vsel %vm964, %v6031, 0
      %v6041 = vand.u32 %v6026, 4294901760
      %6042 = vmatprep.subr.mxu0 %v6041
      %v6043 = vand.u32 %v6025, 4294901760
      %6044 = vmatpush1.msra.mxu0 %v6043
      %v6045 = vand.u32 %v6029, 4294901760
      %6046 = vmatprep.subr.mxu0 %v6045
      %v6047 = vand.u32 %v6028, 4294901760
      %6048 = vmatpush1.msra.mxu0 %v6047
      %6049 = vmatprep.subr.mxu0 0.0
      %6050 = vmatpush1.msra.mxu0 0.0
      %6051 = vmatprep.subr.mxu0 0.0
      %6052 = vmatpush1.msra.mxu0 0.0
      %6053 = vmatprep.subr.mxu0 0.0
      %6054 = vmatpush1.msra.mxu0 0.0
      %6055 = vmatprep.subr.mxu0 0.0
      %6056 = vmatpush1.msra.mxu0 0.0
      %6057 = vmatprep.subr.mxu0 0.0
      %6058 = vmatpush1.msra.mxu0 0.0
      %6059 = vmatprep.subr.mxu0 0.0
      %6060 = vmatpush1.msra.mxu0 0.0
      %6061 = vmatprep.subr.mxu0 0.0
      %6062 = vmatpush1.msra.mxu0 0.0
      %6063 = vmatprep.subr.mxu0 0.0
      %6064 = vmatpush1.msra.mxu0 0.0
      %6065 = vmatprep.subr.mxu0 0.0
      %6066 = vmatpush1.msra.mxu0 0.0
      %6067 = vmatprep.subr.mxu0 0.0
      %6068 = vmatpush1.msra.mxu0 0.0
      %6069 = vmatprep.subr.mxu0 0.0
      %6070 = vmatpush1.msra.mxu0 0.0
      %6071 = vmatprep.subr.mxu0 0.0
      %6072 = vmatpush1.msra.mxu0 0.0
      %6073 = vmatprep.subr.mxu0 0.0
      %6074 = vmatpush1.msra.mxu0 0.0
      %6075 = vmatprep.subr.mxu0 0.0
      %6076 = vmatpush1.msra.mxu0 0.0
      %6077 = vmatprep.subr.mxu0 0.0
      %6078 = vmatpush1.msra.mxu0 0.0
      %6079 = vmatprep.subr.mxu0 0.0
      %6080 = vmatpush1.msra.mxu0 0.0
      %6081 = vmatprep.subr.mxu0 0.0
      %6082 = vmatpush1.msra.mxu0 0.0
      %6083 = vmatprep.subr.mxu0 0.0
      %6084 = vmatpush1.msra.mxu0 0.0
      %6085 = vmatprep.subr.mxu0 0.0
      %6086 = vmatpush1.msra.mxu0 0.0
      %6087 = vmatprep.subr.mxu0 0.0
      %6088 = vmatpush1.msra.mxu0 0.0
      %6089 = vmatprep.subr.mxu0 0.0
      %6090 = vmatpush1.msra.mxu0 0.0
      %6091 = vmatprep.subr.mxu0 0.0
      %6092 = vmatpush1.msra.mxu0 0.0
      %6093 = vmatprep.subr.mxu0 0.0
      %6094 = vmatpush1.msra.mxu0 0.0
      %6095 = vmatprep.subr.mxu0 0.0
      %6096 = vmatpush1.msra.mxu0 0.0
      %6097 = vmatprep.subr.mxu0 0.0
      %6098 = vmatpush1.msra.mxu0 0.0
      %6099 = vmatprep.subr.mxu0 0.0
      %6100 = vmatpush1.msra.mxu0 0.0
      %6101 = vmatprep.subr.mxu0 0.0
      %6102 = vmatpush1.msra.mxu0 0.0
      %6103 = vmatprep.subr.mxu0 0.0
      %6104 = vmatpush1.msra.mxu0 0.0
      %6105 = vmatprep.subr.mxu0 0.0
      %6106 = vmatpush1.msra.mxu0 0.0
      %6107 = vmatprep.subr.mxu0 0.0
      %6108 = vmatpush1.msra.mxu0 0.0
      %6109 = vmatprep.mubr.f32.mxu0 0.0
      %v6110 = vand.u32 %v6039, 4294901760
      %v6111 = vsub.f32 %v6039, %v6110
      %v6112 = vand.u32 %v6111, 4294901760
      %v6113 = vsub.f32 %v6111, %v6112
      %v6114 = vand.u32 %v6113, 4294901760
      %6115 = vmatmul.mubr.f32.gmra.mrb[0].mxu0 %v6114
      %v6116 = vpop.f32.mrb[0].mxu0
      %v6117 = vadd.f32 %v6036, %v6116
      %v6118 = vpop.f32.mrb[0].mxu0
      %v6119 = vadd.f32 %v6036, %v6118
      %6120 = vdwg.mxu0
      %v6121 = vand.u32 %v6026, 4294901760
      %v6122 = vsub.f32 %v6026, %v6121
      %v6123 = vand.u32 %v6122, 4294901760
      %v6124 = vsub.f32 %v6122, %v6123
      %v6125 = vand.u32 %v6124, 4294901760
      %6126 = vmatprep.subr.mxu0 %v6125
      %v6127 = vand.u32 %v6025, 4294901760
      %v6128 = vsub.f32 %v6025, %v6127
      %v6129 = vand.u32 %v6128, 4294901760
      %v6130 = vsub.f32 %v6128, %v6129
      %v6131 = vand.u32 %v6130, 4294901760
      %6132 = vmatpush1.msra.mxu0 %v6131
      %v6133 = vand.u32 %v6029, 4294901760
      %v6134 = vsub.f32 %v6029, %v6133
      %v6135 = vand.u32 %v6134, 4294901760
      %v6136 = vsub.f32 %v6134, %v6135
      %v6137 = vand.u32 %v6136, 4294901760
      %6138 = vmatprep.subr.mxu0 %v6137
      %v6139 = vand.u32 %v6028, 4294901760
      %v6140 = vsub.f32 %v6028, %v6139
      %v6141 = vand.u32 %v6140, 4294901760
      %v6142 = vsub.f32 %v6140, %v6141
      %v6143 = vand.u32 %v6142, 4294901760
      %6144 = vmatpush1.msra.mxu0 %v6143
      %6145 = vmatprep.subr.mxu0 0.0
      %6146 = vmatpush1.msra.mxu0 0.0
      %6147 = vmatprep.subr.mxu0 0.0
      %6148 = vmatpush1.msra.mxu0 0.0
      %6149 = vmatprep.subr.mxu0 0.0
      %6150 = vmatpush1.msra.mxu0 0.0
      %6151 = vmatprep.subr.mxu0 0.0
      %6152 = vmatpush1.msra.mxu0 0.0
      %6153 = vmatprep.subr.mxu0 0.0
      %6154 = vmatpush1.msra.mxu0 0.0
      %6155 = vmatprep.subr.mxu0 0.0
      %6156 = vmatpush1.msra.mxu0 0.0
      %6157 = vmatprep.subr.mxu0 0.0
      %6158 = vmatpush1.msra.mxu0 0.0
      %6159 = vmatprep.subr.mxu0 0.0
      %6160 = vmatpush1.msra.mxu0 0.0
      %6161 = vmatprep.subr.mxu0 0.0
      %6162 = vmatpush1.msra.mxu0 0.0
      %6163 = vmatprep.subr.mxu0 0.0
      %6164 = vmatpush1.msra.mxu0 0.0
      %6165 = vmatprep.subr.mxu0 0.0
      %6166 = vmatpush1.msra.mxu0 0.0
      %6167 = vmatprep.subr.mxu0 0.0
      %6168 = vmatpush1.msra.mxu0 0.0
      %6169 = vmatprep.subr.mxu0 0.0
      %6170 = vmatpush1.msra.mxu0 0.0
      %6171 = vmatprep.subr.mxu0 0.0
      %6172 = vmatpush1.msra.mxu0 0.0
      %6173 = vmatprep.subr.mxu0 0.0
      %6174 = vmatpush1.msra.mxu0 0.0
      %6175 = vmatprep.subr.mxu0 0.0
      %6176 = vmatpush1.msra.mxu0 0.0
      %6177 = vmatprep.subr.mxu0 0.0
      %6178 = vmatpush1.msra.mxu0 0.0
      %6179 = vmatprep.subr.mxu0 0.0
      %6180 = vmatpush1.msra.mxu0 0.0
      %6181 = vmatprep.subr.mxu0 0.0
      %6182 = vmatpush1.msra.mxu0 0.0
      %6183 = vmatprep.subr.mxu0 0.0
      %6184 = vmatpush1.msra.mxu0 0.0
      %6185 = vmatprep.subr.mxu0 0.0
      %6186 = vmatpush1.msra.mxu0 0.0
      %6187 = vmatprep.subr.mxu0 0.0
      %6188 = vmatpush1.msra.mxu0 0.0
      %6189 = vmatprep.subr.mxu0 0.0
      %6190 = vmatpush1.msra.mxu0 0.0
      %6191 = vmatprep.subr.mxu0 0.0
      %6192 = vmatpush1.msra.mxu0 0.0
      %6193 = vmatprep.subr.mxu0 0.0
      %6194 = vmatpush1.msra.mxu0 0.0
      %6195 = vmatprep.subr.mxu0 0.0
      %6196 = vmatpush1.msra.mxu0 0.0
      %6197 = vmatprep.subr.mxu0 0.0
      %6198 = vmatpush1.msra.mxu0 0.0
      %6199 = vmatprep.subr.mxu0 0.0
      %6200 = vmatpush1.msra.mxu0 0.0
      %6201 = vmatprep.subr.mxu0 0.0
      %6202 = vmatpush1.msra.mxu0 0.0
      %6203 = vmatprep.subr.mxu0 0.0
      %6204 = vmatpush1.msra.mxu0 0.0
      %6205 = vmatprep.mubr.f32.mxu0 0.0
      %v6206 = vand.u32 %v6039, 4294901760
      %6207 = vmatmul.mubr.f32.gmra.mrb[0].mxu0 %v6206
      %v6208 = vpop.f32.mrb[0].mxu0
      %v6209 = vadd.f32 %v6117, %v6208
      %v6210 = vpop.f32.mrb[0].mxu0
      %v6211 = vadd.f32 %v6119, %v6210
      %6212 = vdwg.mxu0
      %v6213 = vand.u32 %v6026, 4294901760
      %v6214 = vsub.f32 %v6026, %v6213
      %6215 = vmatprep.subr.mxu0 %v6214
      %v6216 = vand.u32 %v6025, 4294901760
      %v6217 = vsub.f32 %v6025, %v6216
      %6218 = vmatpush1.msra.mxu0 %v6217
      %v6219 = vand.u32 %v6029, 4294901760
      %v6220 = vsub.f32 %v6029, %v6219
      %6221 = vmatprep.subr.mxu0 %v6220
      %v6222 = vand.u32 %v6028, 4294901760
      %v6223 = vsub.f32 %v6028, %v6222
      %6224 = vmatpush1.msra.mxu0 %v6223
      %6225 = vmatprep.subr.mxu0 0.0
      %6226 = vmatpush1.msra.mxu0 0.0
      %6227 = vmatprep.subr.mxu0 0.0
      %6228 = vmatpush1.msra.mxu0 0.0
      %6229 = vmatprep.subr.mxu0 0.0
      %6230 = vmatpush1.msra.mxu0 0.0
      %6231 = vmatprep.subr.mxu0 0.0
      %6232 = vmatpush1.msra.mxu0 0.0
      %6233 = vmatprep.subr.mxu0 0.0
      %6234 = vmatpush1.msra.mxu0 0.0
      %6235 = vmatprep.subr.mxu0 0.0
      %6236 = vmatpush1.msra.mxu0 0.0
      %6237 = vmatprep.subr.mxu0 0.0
      %6238 = vmatpush1.msra.mxu0 0.0
      %6239 = vmatprep.subr.mxu0 0.0
      %6240 = vmatpush1.msra.mxu0 0.0
      %6241 = vmatprep.subr.mxu0 0.0
      %6242 = vmatpush1.msra.mxu0 0.0
      %6243 = vmatprep.subr.mxu0 0.0
      %6244 = vmatpush1.msra.mxu0 0.0
      %6245 = vmatprep.subr.mxu0 0.0
      %6246 = vmatpush1.msra.mxu0 0.0
      %6247 = vmatprep.subr.mxu0 0.0
      %6248 = vmatpush1.msra.mxu0 0.0
      %6249 = vmatprep.subr.mxu0 0.0
      %6250 = vmatpush1.msra.mxu0 0.0
      %6251 = vmatprep.subr.mxu0 0.0
      %6252 = vmatpush1.msra.mxu0 0.0
      %6253 = vmatprep.subr.mxu0 0.0
      %6254 = vmatpush1.msra.mxu0 0.0
      %6255 = vmatprep.subr.mxu0 0.0
      %6256 = vmatpush1.msra.mxu0 0.0
      %6257 = vmatprep.subr.mxu0 0.0
      %6258 = vmatpush1.msra.mxu0 0.0
      %6259 = vmatprep.subr.mxu0 0.0
      %6260 = vmatpush1.msra.mxu0 0.0
      %6261 = vmatprep.subr.mxu0 0.0
      %6262 = vmatpush1.msra.mxu0 0.0
      %6263 = vmatprep.subr.mxu0 0.0
      %6264 = vmatpush1.msra.mxu0 0.0
      %6265 = vmatprep.subr.mxu0 0.0
      %6266 = vmatpush1.msra.mxu0 0.0
      %6267 = vmatprep.subr.mxu0 0.0
      %6268 = vmatpush1.msra.mxu0 0.0
      %6269 = vmatprep.subr.mxu0 0.0
      %6270 = vmatpush1.msra.mxu0 0.0
      %6271 = vmatprep.subr.mxu0 0.0
      %6272 = vmatpush1.msra.mxu0 0.0
      %6273 = vmatprep.subr.mxu0 0.0
      %6274 = vmatpush1.msra.mxu0 0.0
      %6275 = vmatprep.subr.mxu0 0.0
      %6276 = vmatpush1.msra.mxu0 0.0
      %6277 = vmatprep.subr.mxu0 0.0
      %6278 = vmatpush1.msra.mxu0 0.0
      %6279 = vmatprep.subr.mxu0 0.0
      %6280 = vmatpush1.msra.mxu0 0.0
      %6281 = vmatprep.subr.mxu0 0.0
      %6282 = vmatpush1.msra.mxu0 0.0
      %6283 = vmatprep.subr.mxu0 0.0
      %6284 = vmatpush1.msra.mxu0 0.0
      %6285 = vmatprep.mubr.f32.mxu0 0.0
      %v6286 = vand.u32 %v6039, 4294901760
      %v6287 = vsub.f32 %v6039, %v6286
      %6288 = vmatmul.mubr.f32.gmra.mrb[0].mxu0 %v6287
      %v6289 = vpop.f32.mrb[0].mxu0
      %v6290 = vadd.f32 %v6209, %v6289
      %v6291 = vpop.f32.mrb[0].mxu0
      %v6292 = vadd.f32 %v6211, %v6291
      %6293 = vdwg.mxu0
      %v6294 = vand.u32 %v6026, 4294901760
      %6295 = vmatprep.subr.mxu0 %v6294
      %v6296 = vand.u32 %v6025, 4294901760
      %6297 = vmatpush1.msra.mxu0 %v6296
      %v6298 = vand.u32 %v6029, 4294901760
      %6299 = vmatprep.subr.mxu0 %v6298
      %v6300 = vand.u32 %v6028, 4294901760
      %6301 = vmatpush1.msra.mxu0 %v6300
      %6302 = vmatprep.subr.mxu0 0.0
      %6303 = vmatpush1.msra.mxu0 0.0
      %6304 = vmatprep.subr.mxu0 0.0
      %6305 = vmatpush1.msra.mxu0 0.0
      %6306 = vmatprep.subr.mxu0 0.0
      %6307 = vmatpush1.msra.mxu0 0.0
      %6308 = vmatprep.subr.mxu0 0.0
      %6309 = vmatpush1.msra.mxu0 0.0
      %6310 = vmatprep.subr.mxu0 0.0
      %6311 = vmatpush1.msra.mxu0 0.0
      %6312 = vmatprep.subr.mxu0 0.0
      %6313 = vmatpush1.msra.mxu0 0.0
      %6314 = vmatprep.subr.mxu0 0.0
      %6315 = vmatpush1.msra.mxu0 0.0
      %6316 = vmatprep.subr.mxu0 0.0
      %6317 = vmatpush1.msra.mxu0 0.0
      %6318 = vmatprep.subr.mxu0 0.0
      %6319 = vmatpush1.msra.mxu0 0.0
      %6320 = vmatprep.subr.mxu0 0.0
      %6321 = vmatpush1.msra.mxu0 0.0
      %6322 = vmatprep.subr.mxu0 0.0
      %6323 = vmatpush1.msra.mxu0 0.0
      %6324 = vmatprep.subr.mxu0 0.0
      %6325 = vmatpush1.msra.mxu0 0.0
      %6326 = vmatprep.subr.mxu0 0.0
      %6327 = vmatpush1.msra.mxu0 0.0
      %6328 = vmatprep.subr.mxu0 0.0
      %6329 = vmatpush1.msra.mxu0 0.0
      %6330 = vmatprep.subr.mxu0 0.0
      %6331 = vmatpush1.msra.mxu0 0.0
      %6332 = vmatprep.subr.mxu0 0.0
      %6333 = vmatpush1.msra.mxu0 0.0
      %6334 = vmatprep.subr.mxu0 0.0
      %6335 = vmatpush1.msra.mxu0 0.0
      %6336 = vmatprep.subr.mxu0 0.0
      %6337 = vmatpush1.msra.mxu0 0.0
      %6338 = vmatprep.subr.mxu0 0.0
      %6339 = vmatpush1.msra.mxu0 0.0
      %6340 = vmatprep.subr.mxu0 0.0
      %6341 = vmatpush1.msra.mxu0 0.0
      %6342 = vmatprep.subr.mxu0 0.0
      %6343 = vmatpush1.msra.mxu0 0.0
      %6344 = vmatprep.subr.mxu0 0.0
      %6345 = vmatpush1.msra.mxu0 0.0
      %6346 = vmatprep.subr.mxu0 0.0
      %6347 = vmatpush1.msra.mxu0 0.0
      %6348 = vmatprep.subr.mxu0 0.0
      %6349 = vmatpush1.msra.mxu0 0.0
      %6350 = vmatprep.subr.mxu0 0.0
      %6351 = vmatpush1.msra.mxu0 0.0
      %6352 = vmatprep.subr.mxu0 0.0
      %6353 = vmatpush1.msra.mxu0 0.0
      %6354 = vmatprep.subr.mxu0 0.0
      %6355 = vmatpush1.msra.mxu0 0.0
      %6356 = vmatprep.subr.mxu0 0.0
      %6357 = vmatpush1.msra.mxu0 0.0
      %6358 = vmatprep.subr.mxu0 0.0
      %6359 = vmatpush1.msra.mxu0 0.0
      %6360 = vmatprep.subr.mxu0 0.0
      %6361 = vmatpush1.msra.mxu0 0.0
      %6362 = vmatprep.mubr.f32.mxu0 0.0
      %v6363 = vand.u32 %v6039, 4294901760
      %v6364 = vsub.f32 %v6039, %v6363
      %v6365 = vand.u32 %v6364, 4294901760
      %6366 = vmatmul.mubr.f32.gmra.mrb[0].mxu0 %v6365
      %v6367 = vpop.f32.mrb[0].mxu0
      %v6368 = vadd.f32 %v6290, %v6367
      %v6369 = vpop.f32.mrb[0].mxu0
      %v6370 = vadd.f32 %v6292, %v6369
      %6371 = vdwg.mxu0
      %v6372 = vand.u32 %v6026, 4294901760
      %v6373 = vsub.f32 %v6026, %v6372
      %v6374 = vand.u32 %v6373, 4294901760
      %6375 = vmatprep.subr.mxu0 %v6374
      %v6376 = vand.u32 %v6025, 4294901760
      %v6377 = vsub.f32 %v6025, %v6376
      %v6378 = vand.u32 %v6377, 4294901760
      %6379 = vmatpush1.msra.mxu0 %v6378
      %v6380 = vand.u32 %v6029, 4294901760
      %v6381 = vsub.f32 %v6029, %v6380
      %v6382 = vand.u32 %v6381, 4294901760
      %6383 = vmatprep.subr.mxu0 %v6382
      %v6384 = vand.u32 %v6028, 4294901760
      %v6385 = vsub.f32 %v6028, %v6384
      %v6386 = vand.u32 %v6385, 4294901760
      %6387 = vmatpush1.msra.mxu0 %v6386
      %6388 = vmatprep.subr.mxu0 0.0
      %6389 = vmatpush1.msra.mxu0 0.0
      %6390 = vmatprep.subr.mxu0 0.0
      %6391 = vmatpush1.msra.mxu0 0.0
      %6392 = vmatprep.subr.mxu0 0.0
      %6393 = vmatpush1.msra.mxu0 0.0
      %6394 = vmatprep.subr.mxu0 0.0
      %6395 = vmatpush1.msra.mxu0 0.0
      %6396 = vmatprep.subr.mxu0 0.0
      %6397 = vmatpush1.msra.mxu0 0.0
      %6398 = vmatprep.subr.mxu0 0.0
      %6399 = vmatpush1.msra.mxu0 0.0
      %6400 = vmatprep.subr.mxu0 0.0
      %6401 = vmatpush1.msra.mxu0 0.0
      %6402 = vmatprep.subr.mxu0 0.0
      %6403 = vmatpush1.msra.mxu0 0.0
      %6404 = vmatprep.subr.mxu0 0.0
      %6405 = vmatpush1.msra.mxu0 0.0
      %6406 = vmatprep.subr.mxu0 0.0
      %6407 = vmatpush1.msra.mxu0 0.0
      %6408 = vmatprep.subr.mxu0 0.0
      %6409 = vmatpush1.msra.mxu0 0.0
      %6410 = vmatprep.subr.mxu0 0.0
      %6411 = vmatpush1.msra.mxu0 0.0
      %6412 = vmatprep.subr.mxu0 0.0
      %6413 = vmatpush1.msra.mxu0 0.0
      %6414 = vmatprep.subr.mxu0 0.0
      %6415 = vmatpush1.msra.mxu0 0.0
      %6416 = vmatprep.subr.mxu0 0.0
      %6417 = vmatpush1.msra.mxu0 0.0
      %6418 = vmatprep.subr.mxu0 0.0
      %6419 = vmatpush1.msra.mxu0 0.0
      %6420 = vmatprep.subr.mxu0 0.0
      %6421 = vmatpush1.msra.mxu0 0.0
      %6422 = vmatprep.subr.mxu0 0.0
      %6423 = vmatpush1.msra.mxu0 0.0
      %6424 = vmatprep.subr.mxu0 0.0
      %6425 = vmatpush1.msra.mxu0 0.0
      %6426 = vmatprep.subr.mxu0 0.0
      %6427 = vmatpush1.msra.mxu0 0.0
      %6428 = vmatprep.subr.mxu0 0.0
      %6429 = vmatpush1.msra.mxu0 0.0
      %6430 = vmatprep.subr.mxu0 0.0
      %6431 = vmatpush1.msra.mxu0 0.0
      %6432 = vmatprep.subr.mxu0 0.0
      %6433 = vmatpush1.msra.mxu0 0.0
      %6434 = vmatprep.subr.mxu0 0.0
      %6435 = vmatpush1.msra.mxu0 0.0
      %6436 = vmatprep.subr.mxu0 0.0
      %6437 = vmatpush1.msra.mxu0 0.0
      %6438 = vmatprep.subr.mxu0 0.0
      %6439 = vmatpush1.msra.mxu0 0.0
      %6440 = vmatprep.subr.mxu0 0.0
      %6441 = vmatpush1.msra.mxu0 0.0
      %6442 = vmatprep.subr.mxu0 0.0
      %6443 = vmatpush1.msra.mxu0 0.0
      %6444 = vmatprep.subr.mxu0 0.0
      %6445 = vmatpush1.msra.mxu0 0.0
      %6446 = vmatprep.subr.mxu0 0.0
      %6447 = vmatpush1.msra.mxu0 0.0
      %6448 = vmatprep.mubr.f32.mxu0 0.0
      %v6449 = vand.u32 %v6039, 4294901760
      %6450 = vmatmul.mubr.f32.gmra.mrb[0].mxu0 %v6449
      %v6451 = vpop.f32.mrb[0].mxu0
      %v6452 = vadd.f32 %v6368, %v6451
      %v6453 = vpop.f32.mrb[0].mxu0
      %v6454 = vadd.f32 %v6370, %v6453
      %6455 = vdwg.mxu0
      %v6456 = vand.u32 %v6026, 4294901760
      %6457 = vmatprep.subr.mxu0 %v6456
      %v6458 = vand.u32 %v6025, 4294901760
      %6459 = vmatpush1.msra.mxu0 %v6458
      %v6460 = vand.u32 %v6029, 4294901760
      %6461 = vmatprep.subr.mxu0 %v6460
      %v6462 = vand.u32 %v6028, 4294901760
      %6463 = vmatpush1.msra.mxu0 %v6462
      %6464 = vmatprep.subr.mxu0 0.0
      %6465 = vmatpush1.msra.mxu0 0.0
      %6466 = vmatprep.subr.mxu0 0.0
      %6467 = vmatpush1.msra.mxu0 0.0
      %6468 = vmatprep.subr.mxu0 0.0
      %6469 = vmatpush1.msra.mxu0 0.0
      %6470 = vmatprep.subr.mxu0 0.0
      %6471 = vmatpush1.msra.mxu0 0.0
      %6472 = vmatprep.subr.mxu0 0.0
      %6473 = vmatpush1.msra.mxu0 0.0
      %6474 = vmatprep.subr.mxu0 0.0
      %6475 = vmatpush1.msra.mxu0 0.0
      %6476 = vmatprep.subr.mxu0 0.0
      %6477 = vmatpush1.msra.mxu0 0.0
      %6478 = vmatprep.subr.mxu0 0.0
      %6479 = vmatpush1.msra.mxu0 0.0
      %6480 = vmatprep.subr.mxu0 0.0
      %6481 = vmatpush1.msra.mxu0 0.0
      %6482 = vmatprep.subr.mxu0 0.0
      %6483 = vmatpush1.msra.mxu0 0.0
      %6484 = vmatprep.subr.mxu0 0.0
      %6485 = vmatpush1.msra.mxu0 0.0
      %6486 = vmatprep.subr.mxu0 0.0
      %6487 = vmatpush1.msra.mxu0 0.0
      %6488 = vmatprep.subr.mxu0 0.0
      %6489 = vmatpush1.msra.mxu0 0.0
      %6490 = vmatprep.subr.mxu0 0.0
      %6491 = vmatpush1.msra.mxu0 0.0
      %6492 = vmatprep.subr.mxu0 0.0
      %6493 = vmatpush1.msra.mxu0 0.0
      %6494 = vmatprep.subr.mxu0 0.0
      %6495 = vmatpush1.msra.mxu0 0.0
      %6496 = vmatprep.subr.mxu0 0.0
      %6497 = vmatpush1.msra.mxu0 0.0
      %6498 = vmatprep.subr.mxu0 0.0
      %6499 = vmatpush1.msra.mxu0 0.0
      %6500 = vmatprep.subr.mxu0 0.0
      %6501 = vmatpush1.msra.mxu0 0.0
      %6502 = vmatprep.subr.mxu0 0.0
      %6503 = vmatpush1.msra.mxu0 0.0
      %6504 = vmatprep.subr.mxu0 0.0
      %6505 = vmatpush1.msra.mxu0 0.0
      %6506 = vmatprep.subr.mxu0 0.0
      %6507 = vmatpush1.msra.mxu0 0.0
      %6508 = vmatprep.subr.mxu0 0.0
      %6509 = vmatpush1.msra.mxu0 0.0
      %6510 = vmatprep.subr.mxu0 0.0
      %6511 = vmatpush1.msra.mxu0 0.0
      %6512 = vmatprep.subr.mxu0 0.0
      %6513 = vmatpush1.msra.mxu0 0.0
      %6514 = vmatprep.subr.mxu0 0.0
      %6515 = vmatpush1.msra.mxu0 0.0
      %6516 = vmatprep.subr.mxu0 0.0
      %6517 = vmatpush1.msra.mxu0 0.0
      %6518 = vmatprep.subr.mxu0 0.0
      %6519 = vmatpush1.msra.mxu0 0.0
      %6520 = vmatprep.subr.mxu0 0.0
      %6521 = vmatpush1.msra.mxu0 0.0
      %6522 = vmatprep.subr.mxu0 0.0
      %6523 = vmatpush1.msra.mxu0 0.0
      %6524 = vmatprep.mubr.f32.mxu0 0.0
      %v6525 = vand.u32 %v6039, 4294901760
      %6526 = vmatmul.mubr.f32.gmra.mrb[0].mxu0 %v6525
      %v6527 = vpop.f32.mrb[0].mxu0
      %v6528 = vadd.f32 %v6452, %v6527
      %v6529 = vpop.f32.mrb[0].mxu0
      %v6530 = vadd.f32 %v6454, %v6529
      %6531 = vdwg.mxu0
      %6532 = vmatprep.subr.mxu0 0.0
      %v6533 = vand.u32 %v6027, 4294901760
      %6534 = vmatpush1.msra.mxu0 %v6533
      %6535 = vmatprep.subr.mxu0 0.0
      %v6536 = vand.u32 %v6030, 4294901760
      %6537 = vmatpush1.msra.mxu0 %v6536
      %6538 = vmatprep.subr.mxu0 0.0
      %6539 = vmatpush1.msra.mxu0 0.0
      %6540 = vmatprep.subr.mxu0 0.0
      %6541 = vmatpush1.msra.mxu0 0.0
      %6542 = vmatprep.subr.mxu0 0.0
      %6543 = vmatpush1.msra.mxu0 0.0
      %6544 = vmatprep.subr.mxu0 0.0
      %6545 = vmatpush1.msra.mxu0 0.0
      %6546 = vmatprep.subr.mxu0 0.0
      %6547 = vmatpush1.msra.mxu0 0.0
      %6548 = vmatprep.subr.mxu0 0.0
      %6549 = vmatpush1.msra.mxu0 0.0
      %6550 = vmatprep.subr.mxu0 0.0
      %6551 = vmatpush1.msra.mxu0 0.0
      %6552 = vmatprep.subr.mxu0 0.0
      %6553 = vmatpush1.msra.mxu0 0.0
      %6554 = vmatprep.subr.mxu0 0.0
      %6555 = vmatpush1.msra.mxu0 0.0
      %6556 = vmatprep.subr.mxu0 0.0
      %6557 = vmatpush1.msra.mxu0 0.0
      %6558 = vmatprep.subr.mxu0 0.0
      %6559 = vmatpush1.msra.mxu0 0.0
      %6560 = vmatprep.subr.mxu0 0.0
      %6561 = vmatpush1.msra.mxu0 0.0
      %6562 = vmatprep.subr.mxu0 0.0
      %6563 = vmatpush1.msra.mxu0 0.0
      %6564 = vmatprep.subr.mxu0 0.0
      %6565 = vmatpush1.msra.mxu0 0.0
      %6566 = vmatprep.subr.mxu0 0.0
      %6567 = vmatpush1.msra.mxu0 0.0
      %6568 = vmatprep.subr.mxu0 0.0
      %6569 = vmatpush1.msra.mxu0 0.0
      %6570 = vmatprep.subr.mxu0 0.0
      %6571 = vmatpush1.msra.mxu0 0.0
      %6572 = vmatprep.subr.mxu0 0.0
      %6573 = vmatpush1.msra.mxu0 0.0
      %6574 = vmatprep.subr.mxu0 0.0
      %6575 = vmatpush1.msra.mxu0 0.0
      %6576 = vmatprep.subr.mxu0 0.0
      %6577 = vmatpush1.msra.mxu0 0.0
      %6578 = vmatprep.subr.mxu0 0.0
      %6579 = vmatpush1.msra.mxu0 0.0
      %6580 = vmatprep.subr.mxu0 0.0
      %6581 = vmatpush1.msra.mxu0 0.0
      %6582 = vmatprep.subr.mxu0 0.0
      %6583 = vmatpush1.msra.mxu0 0.0
      %6584 = vmatprep.subr.mxu0 0.0
      %6585 = vmatpush1.msra.mxu0 0.0
      %6586 = vmatprep.subr.mxu0 0.0
      %6587 = vmatpush1.msra.mxu0 0.0
      %6588 = vmatprep.subr.mxu0 0.0
      %6589 = vmatpush1.msra.mxu0 0.0
      %6590 = vmatprep.subr.mxu0 0.0
      %6591 = vmatpush1.msra.mxu0 0.0
      %6592 = vmatprep.subr.mxu0 0.0
      %6593 = vmatpush1.msra.mxu0 0.0
      %6594 = vmatprep.subr.mxu0 0.0
      %6595 = vmatpush1.msra.mxu0 0.0
      %6596 = vmatprep.subr.mxu0 0.0
      %6597 = vmatpush1.msra.mxu0 0.0
      %6598 = vmatprep.mubr.f32.mxu0 0.0
      %v6599 = vand.u32 %v6039, 4294901760
      %v6600 = vsub.f32 %v6039, %v6599
      %v6601 = vand.u32 %v6600, 4294901760
      %v6602 = vsub.f32 %v6600, %v6601
      %v6603 = vand.u32 %v6602, 4294901760
      %6604 = vmatmul.mubr.f32.gmra.mrb[0].mxu0 %v6603
      %v6605 = vpop.f32.mrb[0].mxu0
      %v6606 = vadd.f32 %v6036, %v6605
      %v6607 = vpop.f32.mrb[0].mxu0
      %6608 = vdwg.mxu0
      %6609 = vmatprep.subr.mxu0 0.0
      %v6610 = vand.u32 %v6027, 4294901760
      %v6611 = vsub.f32 %v6027, %v6610
      %v6612 = vand.u32 %v6611, 4294901760
      %v6613 = vsub.f32 %v6611, %v6612
      %v6614 = vand.u32 %v6613, 4294901760
      %6615 = vmatpush1.msra.mxu0 %v6614
      %6616 = vmatprep.subr.mxu0 0.0
      %v6617 = vand.u32 %v6030, 4294901760
      %v6618 = vsub.f32 %v6030, %v6617
      %v6619 = vand.u32 %v6618, 4294901760
      %v6620 = vsub.f32 %v6618, %v6619
      %v6621 = vand.u32 %v6620, 4294901760
      %6622 = vmatpush1.msra.mxu0 %v6621
      %6623 = vmatprep.subr.mxu0 0.0
      %6624 = vmatpush1.msra.mxu0 0.0
      %6625 = vmatprep.subr.mxu0 0.0
      %6626 = vmatpush1.msra.mxu0 0.0
      %6627 = vmatprep.subr.mxu0 0.0
      %6628 = vmatpush1.msra.mxu0 0.0
      %6629 = vmatprep.subr.mxu0 0.0
      %6630 = vmatpush1.msra.mxu0 0.0
      %6631 = vmatprep.subr.mxu0 0.0
      %6632 = vmatpush1.msra.mxu0 0.0
      %6633 = vmatprep.subr.mxu0 0.0
      %6634 = vmatpush1.msra.mxu0 0.0
      %6635 = vmatprep.subr.mxu0 0.0
      %6636 = vmatpush1.msra.mxu0 0.0
      %6637 = vmatprep.subr.mxu0 0.0
      %6638 = vmatpush1.msra.mxu0 0.0
      %6639 = vmatprep.subr.mxu0 0.0
      %6640 = vmatpush1.msra.mxu0 0.0
      %6641 = vmatprep.subr.mxu0 0.0
      %6642 = vmatpush1.msra.mxu0 0.0
      %6643 = vmatprep.subr.mxu0 0.0
      %6644 = vmatpush1.msra.mxu0 0.0
      %6645 = vmatprep.subr.mxu0 0.0
      %6646 = vmatpush1.msra.mxu0 0.0
      %6647 = vmatprep.subr.mxu0 0.0
      %6648 = vmatpush1.msra.mxu0 0.0
      %6649 = vmatprep.subr.mxu0 0.0
      %6650 = vmatpush1.msra.mxu0 0.0
      %6651 = vmatprep.subr.mxu0 0.0
      %6652 = vmatpush1.msra.mxu0 0.0
      %6653 = vmatprep.subr.mxu0 0.0
      %6654 = vmatpush1.msra.mxu0 0.0
      %6655 = vmatprep.subr.mxu0 0.0
      %6656 = vmatpush1.msra.mxu0 0.0
      %6657 = vmatprep.subr.mxu0 0.0
      %6658 = vmatpush1.msra.mxu0 0.0
      %6659 = vmatprep.subr.mxu0 0.0
      %6660 = vmatpush1.msra.mxu0 0.0
      %6661 = vmatprep.subr.mxu0 0.0
      %6662 = vmatpush1.msra.mxu0 0.0
      %6663 = vmatprep.subr.mxu0 0.0
      %6664 = vmatpush1.msra.mxu0 0.0
      %6665 = vmatprep.subr.mxu0 0.0
      %6666 = vmatpush1.msra.mxu0 0.0
      %6667 = vmatprep.subr.mxu0 0.0
      %6668 = vmatpush1.msra.mxu0 0.0
      %6669 = vmatprep.subr.mxu0 0.0
      %6670 = vmatpush1.msra.mxu0 0.0
      %6671 = vmatprep.subr.mxu0 0.0
      %6672 = vmatpush1.msra.mxu0 0.0
      %6673 = vmatprep.subr.mxu0 0.0
      %6674 = vmatpush1.msra.mxu0 0.0
      %6675 = vmatprep.subr.mxu0 0.0
      %6676 = vmatpush1.msra.mxu0 0.0
      %6677 = vmatprep.subr.mxu0 0.0
      %6678 = vmatpush1.msra.mxu0 0.0
      %6679 = vmatprep.subr.mxu0 0.0
      %6680 = vmatpush1.msra.mxu0 0.0
      %6681 = vmatprep.subr.mxu0 0.0
      %6682 = vmatpush1.msra.mxu0 0.0
      %6683 = vmatprep.mubr.f32.mxu0 0.0
      %v6684 = vand.u32 %v6039, 4294901760
      %6685 = vmatmul.mubr.f32.gmra.mrb[0].mxu0 %v6684
      %v6686 = vpop.f32.mrb[0].mxu0
      %v6687 = vadd.f32 %v6606, %v6686
      %v6688 = vpop.f32.mrb[0].mxu0
      %6689 = vdwg.mxu0
      %6690 = vmatprep.subr.mxu0 0.0
      %v6691 = vand.u32 %v6027, 4294901760
      %v6692 = vsub.f32 %v6027, %v6691
      %6693 = vmatpush1.msra.mxu0 %v6692
      %6694 = vmatprep.subr.mxu0 0.0
      %v6695 = vand.u32 %v6030, 4294901760
      %v6696 = vsub.f32 %v6030, %v6695
      %6697 = vmatpush1.msra.mxu0 %v6696
      %6698 = vmatprep.subr.mxu0 0.0
      %6699 = vmatpush1.msra.mxu0 0.0
      %6700 = vmatprep.subr.mxu0 0.0
      %6701 = vmatpush1.msra.mxu0 0.0
      %6702 = vmatprep.subr.mxu0 0.0
      %6703 = vmatpush1.msra.mxu0 0.0
      %6704 = vmatprep.subr.mxu0 0.0
      %6705 = vmatpush1.msra.mxu0 0.0
      %6706 = vmatprep.subr.mxu0 0.0
      %6707 = vmatpush1.msra.mxu0 0.0
      %6708 = vmatprep.subr.mxu0 0.0
      %6709 = vmatpush1.msra.mxu0 0.0
      %6710 = vmatprep.subr.mxu0 0.0
      %6711 = vmatpush1.msra.mxu0 0.0
      %6712 = vmatprep.subr.mxu0 0.0
      %6713 = vmatpush1.msra.mxu0 0.0
      %6714 = vmatprep.subr.mxu0 0.0
      %6715 = vmatpush1.msra.mxu0 0.0
      %6716 = vmatprep.subr.mxu0 0.0
      %6717 = vmatpush1.msra.mxu0 0.0
      %6718 = vmatprep.subr.mxu0 0.0
      %6719 = vmatpush1.msra.mxu0 0.0
      %6720 = vmatprep.subr.mxu0 0.0
      %6721 = vmatpush1.msra.mxu0 0.0
      %6722 = vmatprep.subr.mxu0 0.0
      %6723 = vmatpush1.msra.mxu0 0.0
      %6724 = vmatprep.subr.mxu0 0.0
      %6725 = vmatpush1.msra.mxu0 0.0
      %6726 = vmatprep.subr.mxu0 0.0
      %6727 = vmatpush1.msra.mxu0 0.0
      %6728 = vmatprep.subr.mxu0 0.0
      %6729 = vmatpush1.msra.mxu0 0.0
      %6730 = vmatprep.subr.mxu0 0.0
      %6731 = vmatpush1.msra.mxu0 0.0
      %6732 = vmatprep.subr.mxu0 0.0
      %6733 = vmatpush1.msra.mxu0 0.0
      %6734 = vmatprep.subr.mxu0 0.0
      %6735 = vmatpush1.msra.mxu0 0.0
      %6736 = vmatprep.subr.mxu0 0.0
      %6737 = vmatpush1.msra.mxu0 0.0
      %6738 = vmatprep.subr.mxu0 0.0
      %6739 = vmatpush1.msra.mxu0 0.0
      %6740 = vmatprep.subr.mxu0 0.0
      %6741 = vmatpush1.msra.mxu0 0.0
      %6742 = vmatprep.subr.mxu0 0.0
      %6743 = vmatpush1.msra.mxu0 0.0
      %6744 = vmatprep.subr.mxu0 0.0
      %6745 = vmatpush1.msra.mxu0 0.0
      %6746 = vmatprep.subr.mxu0 0.0
      %6747 = vmatpush1.msra.mxu0 0.0
      %6748 = vmatprep.subr.mxu0 0.0
      %6749 = vmatpush1.msra.mxu0 0.0
      %6750 = vmatprep.subr.mxu0 0.0
      %6751 = vmatpush1.msra.mxu0 0.0
      %6752 = vmatprep.subr.mxu0 0.0
      %6753 = vmatpush1.msra.mxu0 0.0
      %6754 = vmatprep.subr.mxu0 0.0
      %6755 = vmatpush1.msra.mxu0 0.0
      %6756 = vmatprep.subr.mxu0 0.0
      %6757 = vmatpush1.msra.mxu0 0.0
      %6758 = vmatprep.mubr.f32.mxu0 0.0
      %v6759 = vand.u32 %v6039, 4294901760
      %v6760 = vsub.f32 %v6039, %v6759
      %6761 = vmatmul.mubr.f32.gmra.mrb[0].mxu0 %v6760
      %v6762 = vpop.f32.mrb[0].mxu0
      %v6763 = vadd.f32 %v6687, %v6762
      %v6764 = vpop.f32.mrb[0].mxu0
      %6765 = vdwg.mxu0
      %6766 = vmatprep.subr.mxu0 0.0
      %v6767 = vand.u32 %v6027, 4294901760
      %6768 = vmatpush1.msra.mxu0 %v6767
      %6769 = vmatprep.subr.mxu0 0.0
      %v6770 = vand.u32 %v6030, 4294901760
      %6771 = vmatpush1.msra.mxu0 %v6770
      %6772 = vmatprep.subr.mxu0 0.0
      %6773 = vmatpush1.msra.mxu0 0.0
      %6774 = vmatprep.subr.mxu0 0.0
      %6775 = vmatpush1.msra.mxu0 0.0
      %6776 = vmatprep.subr.mxu0 0.0
      %6777 = vmatpush1.msra.mxu0 0.0
      %6778 = vmatprep.subr.mxu0 0.0
      %6779 = vmatpush1.msra.mxu0 0.0
      %6780 = vmatprep.subr.mxu0 0.0
      %6781 = vmatpush1.msra.mxu0 0.0
      %6782 = vmatprep.subr.mxu0 0.0
      %6783 = vmatpush1.msra.mxu0 0.0
      %6784 = vmatprep.subr.mxu0 0.0
      %6785 = vmatpush1.msra.mxu0 0.0
      %6786 = vmatprep.subr.mxu0 0.0
      %6787 = vmatpush1.msra.mxu0 0.0
      %6788 = vmatprep.subr.mxu0 0.0
      %6789 = vmatpush1.msra.mxu0 0.0
      %6790 = vmatprep.subr.mxu0 0.0
      %6791 = vmatpush1.msra.mxu0 0.0
      %6792 = vmatprep.subr.mxu0 0.0
      %6793 = vmatpush1.msra.mxu0 0.0
      %6794 = vmatprep.subr.mxu0 0.0
      %6795 = vmatpush1.msra.mxu0 0.0
      %6796 = vmatprep.subr.mxu0 0.0
      %6797 = vmatpush1.msra.mxu0 0.0
      %6798 = vmatprep.subr.mxu0 0.0
      %6799 = vmatpush1.msra.mxu0 0.0
      %6800 = vmatprep.subr.mxu0 0.0
      %6801 = vmatpush1.msra.mxu0 0.0
      %6802 = vmatprep.subr.mxu0 0.0
      %6803 = vmatpush1.msra.mxu0 0.0
      %6804 = vmatprep.subr.mxu0 0.0
      %6805 = vmatpush1.msra.mxu0 0.0
      %6806 = vmatprep.subr.mxu0 0.0
      %6807 = vmatpush1.msra.mxu0 0.0
      %6808 = vmatprep.subr.mxu0 0.0
      %6809 = vmatpush1.msra.mxu0 0.0
      %6810 = vmatprep.subr.mxu0 0.0
      %6811 = vmatpush1.msra.mxu0 0.0
      %6812 = vmatprep.subr.mxu0 0.0
      %6813 = vmatpush1.msra.mxu0 0.0
      %6814 = vmatprep.subr.mxu0 0.0
      %6815 = vmatpush1.msra.mxu0 0.0
      %6816 = vmatprep.subr.mxu0 0.0
      %6817 = vmatpush1.msra.mxu0 0.0
      %6818 = vmatprep.subr.mxu0 0.0
      %6819 = vmatpush1.msra.mxu0 0.0
      %6820 = vmatprep.subr.mxu0 0.0
      %6821 = vmatpush1.msra.mxu0 0.0
      %6822 = vmatprep.subr.mxu0 0.0
      %6823 = vmatpush1.msra.mxu0 0.0
      %6824 = vmatprep.subr.mxu0 0.0
      %6825 = vmatpush1.msra.mxu0 0.0
      %6826 = vmatprep.subr.mxu0 0.0
      %6827 = vmatpush1.msra.mxu0 0.0
      %6828 = vmatprep.subr.mxu0 0.0
      %6829 = vmatpush1.msra.mxu0 0.0
      %6830 = vmatprep.subr.mxu0 0.0
      %6831 = vmatpush1.msra.mxu0 0.0
      %6832 = vmatprep.mubr.f32.mxu0 0.0
      %v6833 = vand.u32 %v6039, 4294901760
      %v6834 = vsub.f32 %v6039, %v6833
      %v6835 = vand.u32 %v6834, 4294901760
      %6836 = vmatmul.mubr.f32.gmra.mrb[0].mxu0 %v6835
      %v6837 = vpop.f32.mrb[0].mxu0
      %v6838 = vadd.f32 %v6763, %v6837
      %v6839 = vpop.f32.mrb[0].mxu0
      %6840 = vdwg.mxu0
      %6841 = vmatprep.subr.mxu0 0.0
      %v6842 = vand.u32 %v6027, 4294901760
      %v6843 = vsub.f32 %v6027, %v6842
      %v6844 = vand.u32 %v6843, 4294901760
      %6845 = vmatpush1.msra.mxu0 %v6844
      %6846 = vmatprep.subr.mxu0 0.0
      %v6847 = vand.u32 %v6030, 4294901760
      %v6848 = vsub.f32 %v6030, %v6847
      %v6849 = vand.u32 %v6848, 4294901760
      %6850 = vmatpush1.msra.mxu0 %v6849
      %6851 = vmatprep.subr.mxu0 0.0
      %6852 = vmatpush1.msra.mxu0 0.0
      %6853 = vmatprep.subr.mxu0 0.0
      %6854 = vmatpush1.msra.mxu0 0.0
      %6855 = vmatprep.subr.mxu0 0.0
      %6856 = vmatpush1.msra.mxu0 0.0
      %6857 = vmatprep.subr.mxu0 0.0
      %6858 = vmatpush1.msra.mxu0 0.0
      %6859 = vmatprep.subr.mxu0 0.0
      %6860 = vmatpush1.msra.mxu0 0.0
      %6861 = vmatprep.subr.mxu0 0.0
      %6862 = vmatpush1.msra.mxu0 0.0
      %6863 = vmatprep.subr.mxu0 0.0
      %6864 = vmatpush1.msra.mxu0 0.0
      %6865 = vmatprep.subr.mxu0 0.0
      %6866 = vmatpush1.msra.mxu0 0.0
      %6867 = vmatprep.subr.mxu0 0.0
      %6868 = vmatpush1.msra.mxu0 0.0
      %6869 = vmatprep.subr.mxu0 0.0
      %6870 = vmatpush1.msra.mxu0 0.0
      %6871 = vmatprep.subr.mxu0 0.0
      %6872 = vmatpush1.msra.mxu0 0.0
      %6873 = vmatprep.subr.mxu0 0.0
      %6874 = vmatpush1.msra.mxu0 0.0
      %6875 = vmatprep.subr.mxu0 0.0
      %6876 = vmatpush1.msra.mxu0 0.0
      %6877 = vmatprep.subr.mxu0 0.0
      %6878 = vmatpush1.msra.mxu0 0.0
      %6879 = vmatprep.subr.mxu0 0.0
      %6880 = vmatpush1.msra.mxu0 0.0
      %6881 = vmatprep.subr.mxu0 0.0
      %6882 = vmatpush1.msra.mxu0 0.0
      %6883 = vmatprep.subr.mxu0 0.0
      %6884 = vmatpush1.msra.mxu0 0.0
      %6885 = vmatprep.subr.mxu0 0.0
      %6886 = vmatpush1.msra.mxu0 0.0
      %6887 = vmatprep.subr.mxu0 0.0
      %6888 = vmatpush1.msra.mxu0 0.0
      %6889 = vmatprep.subr.mxu0 0.0
      %6890 = vmatpush1.msra.mxu0 0.0
      %6891 = vmatprep.subr.mxu0 0.0
      %6892 = vmatpush1.msra.mxu0 0.0
      %6893 = vmatprep.subr.mxu0 0.0
      %6894 = vmatpush1.msra.mxu0 0.0
      %6895 = vmatprep.subr.mxu0 0.0
      %6896 = vmatpush1.msra.mxu0 0.0
      %6897 = vmatprep.subr.mxu0 0.0
      %6898 = vmatpush1.msra.mxu0 0.0
      %6899 = vmatprep.subr.mxu0 0.0
      %6900 = vmatpush1.msra.mxu0 0.0
      %6901 = vmatprep.subr.mxu0 0.0
      %6902 = vmatpush1.msra.mxu0 0.0
      %6903 = vmatprep.subr.mxu0 0.0
      %6904 = vmatpush1.msra.mxu0 0.0
      %6905 = vmatprep.subr.mxu0 0.0
      %6906 = vmatpush1.msra.mxu0 0.0
      %6907 = vmatprep.subr.mxu0 0.0
      %6908 = vmatpush1.msra.mxu0 0.0
      %6909 = vmatprep.subr.mxu0 0.0
      %6910 = vmatpush1.msra.mxu0 0.0
      %6911 = vmatprep.mubr.f32.mxu0 0.0
      %v6912 = vand.u32 %v6039, 4294901760
      %6913 = vmatmul.mubr.f32.gmra.mrb[0].mxu0 %v6912
      %v6914 = vpop.f32.mrb[0].mxu0
      %v6915 = vadd.f32 %v6838, %v6914
      %v6916 = vpop.f32.mrb[0].mxu0
      %6917 = vdwg.mxu0
      %6918 = vmatprep.subr.mxu0 0.0
      %v6919 = vand.u32 %v6027, 4294901760
      %6920 = vmatpush1.msra.mxu0 %v6919
      %6921 = vmatprep.subr.mxu0 0.0
      %v6922 = vand.u32 %v6030, 4294901760
      %6923 = vmatpush1.msra.mxu0 %v6922
      %6924 = vmatprep.subr.mxu0 0.0
      %6925 = vmatpush1.msra.mxu0 0.0
      %6926 = vmatprep.subr.mxu0 0.0
      %6927 = vmatpush1.msra.mxu0 0.0
      %6928 = vmatprep.subr.mxu0 0.0
      %6929 = vmatpush1.msra.mxu0 0.0
      %6930 = vmatprep.subr.mxu0 0.0
      %6931 = vmatpush1.msra.mxu0 0.0
      %6932 = vmatprep.subr.mxu0 0.0
      %6933 = vmatpush1.msra.mxu0 0.0
      %6934 = vmatprep.subr.mxu0 0.0
      %6935 = vmatpush1.msra.mxu0 0.0
      %6936 = vmatprep.subr.mxu0 0.0
      %6937 = vmatpush1.msra.mxu0 0.0
      %6938 = vmatprep.subr.mxu0 0.0
      %6939 = vmatpush1.msra.mxu0 0.0
      %6940 = vmatprep.subr.mxu0 0.0
      %6941 = vmatpush1.msra.mxu0 0.0
      %6942 = vmatprep.subr.mxu0 0.0
      %6943 = vmatpush1.msra.mxu0 0.0
      %6944 = vmatprep.subr.mxu0 0.0
      %6945 = vmatpush1.msra.mxu0 0.0
      %6946 = vmatprep.subr.mxu0 0.0
      %6947 = vmatpush1.msra.mxu0 0.0
      %6948 = vmatprep.subr.mxu0 0.0
      %6949 = vmatpush1.msra.mxu0 0.0
      %6950 = vmatprep.subr.mxu0 0.0
      %6951 = vmatpush1.msra.mxu0 0.0
      %6952 = vmatprep.subr.mxu0 0.0
      %6953 = vmatpush1.msra.mxu0 0.0
      %6954 = vmatprep.subr.mxu0 0.0
      %6955 = vmatpush1.msra.mxu0 0.0
      %6956 = vmatprep.subr.mxu0 0.0
      %6957 = vmatpush1.msra.mxu0 0.0
      %6958 = vmatprep.subr.mxu0 0.0
      %6959 = vmatpush1.msra.mxu0 0.0
      %6960 = vmatprep.subr.mxu0 0.0
      %6961 = vmatpush1.msra.mxu0 0.0
      %6962 = vmatprep.subr.mxu0 0.0
      %6963 = vmatpush1.msra.mxu0 0.0
      %6964 = vmatprep.subr.mxu0 0.0
      %6965 = vmatpush1.msra.mxu0 0.0
      %6966 = vmatprep.subr.mxu0 0.0
      %6967 = vmatpush1.msra.mxu0 0.0
      %6968 = vmatprep.subr.mxu0 0.0
      %6969 = vmatpush1.msra.mxu0 0.0
      %6970 = vmatprep.subr.mxu0 0.0
      %6971 = vmatpush1.msra.mxu0 0.0
      %6972 = vmatprep.subr.mxu0 0.0
      %6973 = vmatpush1.msra.mxu0 0.0
      %6974 = vmatprep.subr.mxu0 0.0
      %6975 = vmatpush1.msra.mxu0 0.0
      %6976 = vmatprep.subr.mxu0 0.0
      %6977 = vmatpush1.msra.mxu0 0.0
      %6978 = vmatprep.subr.mxu0 0.0
      %6979 = vmatpush1.msra.mxu0 0.0
      %6980 = vmatprep.subr.mxu0 0.0
      %6981 = vmatpush1.msra.mxu0 0.0
      %6982 = vmatprep.subr.mxu0 0.0
      %6983 = vmatpush1.msra.mxu0 0.0
      %6984 = vmatprep.mubr.f32.mxu0 0.0
      %v6985 = vand.u32 %v6039, 4294901760
      %6986 = vmatmul.mubr.f32.gmra.mrb[0].mxu0 %v6985
      %v6987 = vpop.f32.mrb[0].mxu0
      %v6988 = vadd.f32 %v6915, %v6987
      %v6989 = vpop.f32.mrb[0].mxu0
      %6990 = vdwg.mxu0
      %v6991 = vmax.f32 %v6528, 0.0
      %v6992 = vmax.f32 %v6530, 0.0
      %v6993 = vmax.f32 %v6988, 0.0
      %v6994 = vld [vmem:[%s12] sm:$0x1]
      %v6995 = vld [vmem:[#allocation5] sm:$0x1]
      %6997 = vset.pattern.permute.xlu0 0
      %6998 = vperm.xlu0 %6997, %v6995
      %v6999 = vpop.permute.xlu0 %6998
      %v7001 = vlaneseq
      %v7002 = vshrl.u32 %v7001, 7
      %v7003 = vsub.s32 0, %v7002
      %v7004 = vrot.slane %v6999, %v7003
      %v7006 = vsel %vm5497, %v6994, 0
      %v7009 = vsel %vm5504, %v6991, 0
      %v7012 = vsel %vm5504, %v6992, 0
      %v7015 = vsel %vm5504, %v6993, 0
      %v7017 = vand.u32 %v7012, 4294901760
      %7018 = vmatprep.subr.mxu0 %v7017
      %v7019 = vand.u32 %v7009, 4294901760
      %7020 = vmatpush1.msra.mxu0 %v7019
      %7021 = vmatprep.subr.mxu0 0.0
      %7022 = vmatpush1.msra.mxu0 0.0
      %7023 = vmatprep.subr.mxu0 0.0
      %7024 = vmatpush1.msra.mxu0 0.0
      %7025 = vmatprep.subr.mxu0 0.0
      %7026 = vmatpush1.msra.mxu0 0.0
      %7027 = vmatprep.subr.mxu0 0.0
      %7028 = vmatpush1.msra.mxu0 0.0
      %7029 = vmatprep.subr.mxu0 0.0
      %7030 = vmatpush1.msra.mxu0 0.0
      %7031 = vmatprep.subr.mxu0 0.0
      %7032 = vmatpush1.msra.mxu0 0.0
      %7033 = vmatprep.subr.mxu0 0.0
      %7034 = vmatpush1.msra.mxu0 0.0
      %7035 = vmatprep.subr.mxu0 0.0
      %7036 = vmatpush1.msra.mxu0 0.0
      %7037 = vmatprep.subr.mxu0 0.0
      %7038 = vmatpush1.msra.mxu0 0.0
      %7039 = vmatprep.subr.mxu0 0.0
      %7040 = vmatpush1.msra.mxu0 0.0
      %7041 = vmatprep.subr.mxu0 0.0
      %7042 = vmatpush1.msra.mxu0 0.0
      %7043 = vmatprep.subr.mxu0 0.0
      %7044 = vmatpush1.msra.mxu0 0.0
      %7045 = vmatprep.subr.mxu0 0.0
      %7046 = vmatpush1.msra.mxu0 0.0
      %7047 = vmatprep.subr.mxu0 0.0
      %7048 = vmatpush1.msra.mxu0 0.0
      %7049 = vmatprep.subr.mxu0 0.0
      %7050 = vmatpush1.msra.mxu0 0.0
      %7051 = vmatprep.subr.mxu0 0.0
      %7052 = vmatpush1.msra.mxu0 0.0
      %7053 = vmatprep.subr.mxu0 0.0
      %7054 = vmatpush1.msra.mxu0 0.0
      %7055 = vmatprep.subr.mxu0 0.0
      %7056 = vmatpush1.msra.mxu0 0.0
      %7057 = vmatprep.subr.mxu0 0.0
      %7058 = vmatpush1.msra.mxu0 0.0
      %7059 = vmatprep.subr.mxu0 0.0
      %7060 = vmatpush1.msra.mxu0 0.0
      %7061 = vmatprep.subr.mxu0 0.0
      %7062 = vmatpush1.msra.mxu0 0.0
      %7063 = vmatprep.subr.mxu0 0.0
      %7064 = vmatpush1.msra.mxu0 0.0
      %7065 = vmatprep.subr.mxu0 0.0
      %7066 = vmatpush1.msra.mxu0 0.0
      %7067 = vmatprep.subr.mxu0 0.0
      %7068 = vmatpush1.msra.mxu0 0.0
      %7069 = vmatprep.subr.mxu0 0.0
      %7070 = vmatpush1.msra.mxu0 0.0
      %7071 = vmatprep.subr.mxu0 0.0
      %7072 = vmatpush1.msra.mxu0 0.0
      %7073 = vmatprep.subr.mxu0 0.0
      %7074 = vmatpush1.msra.mxu0 0.0
      %7075 = vmatprep.subr.mxu0 0.0
      %7076 = vmatpush1.msra.mxu0 0.0
      %7077 = vmatprep.subr.mxu0 0.0
      %7078 = vmatpush1.msra.mxu0 0.0
      %7079 = vmatprep.subr.mxu0 0.0
      %7080 = vmatpush1.msra.mxu0 0.0
      %7081 = vmatprep.subr.mxu0 0.0
      %7082 = vmatpush1.msra.mxu0 0.0
      %7083 = vmatprep.mubr.f32.mxu0 0.0
      %v7084 = vand.u32 %v7006, 4294901760
      %v7085 = vsub.f32 %v7006, %v7084
      %v7086 = vand.u32 %v7085, 4294901760
      %v7087 = vsub.f32 %v7085, %v7086
      %v7088 = vand.u32 %v7087, 4294901760
      %7089 = vmatmul.mubr.f32.gmra.mrb[0].mxu0 %v7088
      %v7090 = vpop.f32.mrb[0].mxu0
      %v7091 = vadd.f32 %v7004, %v7090
      %v7092 = vpop.f32.mrb[0].mxu0
      %v7093 = vadd.f32 %v7004, %v7092
      %7094 = vdwg.mxu0
      %v7095 = vand.u32 %v7012, 4294901760
      %v7096 = vsub.f32 %v7012, %v7095
      %v7097 = vand.u32 %v7096, 4294901760
      %v7098 = vsub.f32 %v7096, %v7097
      %v7099 = vand.u32 %v7098, 4294901760
      %7100 = vmatprep.subr.mxu0 %v7099
      %v7101 = vand.u32 %v7009, 4294901760
      %v7102 = vsub.f32 %v7009, %v7101
      %v7103 = vand.u32 %v7102, 4294901760
      %v7104 = vsub.f32 %v7102, %v7103
      %v7105 = vand.u32 %v7104, 4294901760
      %7106 = vmatpush1.msra.mxu0 %v7105
      %7107 = vmatprep.subr.mxu0 0.0
      %7108 = vmatpush1.msra.mxu0 0.0
      %7109 = vmatprep.subr.mxu0 0.0
      %7110 = vmatpush1.msra.mxu0 0.0
      %7111 = vmatprep.subr.mxu0 0.0
      %7112 = vmatpush1.msra.mxu0 0.0
      %7113 = vmatprep.subr.mxu0 0.0
      %7114 = vmatpush1.msra.mxu0 0.0
      %7115 = vmatprep.subr.mxu0 0.0
      %7116 = vmatpush1.msra.mxu0 0.0
      %7117 = vmatprep.subr.mxu0 0.0
      %7118 = vmatpush1.msra.mxu0 0.0
      %7119 = vmatprep.subr.mxu0 0.0
      %7120 = vmatpush1.msra.mxu0 0.0
      %7121 = vmatprep.subr.mxu0 0.0
      %7122 = vmatpush1.msra.mxu0 0.0
      %7123 = vmatprep.subr.mxu0 0.0
      %7124 = vmatpush1.msra.mxu0 0.0
      %7125 = vmatprep.subr.mxu0 0.0
      %7126 = vmatpush1.msra.mxu0 0.0
      %7127 = vmatprep.subr.mxu0 0.0
      %7128 = vmatpush1.msra.mxu0 0.0
      %7129 = vmatprep.subr.mxu0 0.0
      %7130 = vmatpush1.msra.mxu0 0.0
      %7131 = vmatprep.subr.mxu0 0.0
      %7132 = vmatpush1.msra.mxu0 0.0
      %7133 = vmatprep.subr.mxu0 0.0
      %7134 = vmatpush1.msra.mxu0 0.0
      %7135 = vmatprep.subr.mxu0 0.0
      %7136 = vmatpush1.msra.mxu0 0.0
      %7137 = vmatprep.subr.mxu0 0.0
      %7138 = vmatpush1.msra.mxu0 0.0
      %7139 = vmatprep.subr.mxu0 0.0
      %7140 = vmatpush1.msra.mxu0 0.0
      %7141 = vmatprep.subr.mxu0 0.0
      %7142 = vmatpush1.msra.mxu0 0.0
      %7143 = vmatprep.subr.mxu0 0.0
      %7144 = vmatpush1.msra.mxu0 0.0
      %7145 = vmatprep.subr.mxu0 0.0
      %7146 = vmatpush1.msra.mxu0 0.0
      %7147 = vmatprep.subr.mxu0 0.0
      %7148 = vmatpush1.msra.mxu0 0.0
      %7149 = vmatprep.subr.mxu0 0.0
      %7150 = vmatpush1.msra.mxu0 0.0
      %7151 = vmatprep.subr.mxu0 0.0
      %7152 = vmatpush1.msra.mxu0 0.0
      %7153 = vmatprep.subr.mxu0 0.0
      %7154 = vmatpush1.msra.mxu0 0.0
      %7155 = vmatprep.subr.mxu0 0.0
      %7156 = vmatpush1.msra.mxu0 0.0
      %7157 = vmatprep.subr.mxu0 0.0
      %7158 = vmatpush1.msra.mxu0 0.0
      %7159 = vmatprep.subr.mxu0 0.0
      %7160 = vmatpush1.msra.mxu0 0.0
      %7161 = vmatprep.subr.mxu0 0.0
      %7162 = vmatpush1.msra.mxu0 0.0
      %7163 = vmatprep.subr.mxu0 0.0
      %7164 = vmatpush1.msra.mxu0 0.0
      %7165 = vmatprep.subr.mxu0 0.0
      %7166 = vmatpush1.msra.mxu0 0.0
      %7167 = vmatprep.subr.mxu0 0.0
      %7168 = vmatpush1.msra.mxu0 0.0
      %7169 = vmatprep.mubr.f32.mxu0 0.0
      %v7170 = vand.u32 %v7006, 4294901760
      %7171 = vmatmul.mubr.f32.gmra.mrb[0].mxu0 %v7170
      %v7172 = vpop.f32.mrb[0].mxu0
      %v7173 = vadd.f32 %v7091, %v7172
      %v7174 = vpop.f32.mrb[0].mxu0
      %v7175 = vadd.f32 %v7093, %v7174
      %7176 = vdwg.mxu0
      %v7177 = vand.u32 %v7012, 4294901760
      %v7178 = vsub.f32 %v7012, %v7177
      %7179 = vmatprep.subr.mxu0 %v7178
      %v7180 = vand.u32 %v7009, 4294901760
      %v7181 = vsub.f32 %v7009, %v7180
      %7182 = vmatpush1.msra.mxu0 %v7181
      %7183 = vmatprep.subr.mxu0 0.0
      %7184 = vmatpush1.msra.mxu0 0.0
      %7185 = vmatprep.subr.mxu0 0.0
      %7186 = vmatpush1.msra.mxu0 0.0
      %7187 = vmatprep.subr.mxu0 0.0
      %7188 = vmatpush1.msra.mxu0 0.0
      %7189 = vmatprep.subr.mxu0 0.0
      %7190 = vmatpush1.msra.mxu0 0.0
      %7191 = vmatprep.subr.mxu0 0.0
      %7192 = vmatpush1.msra.mxu0 0.0
      %7193 = vmatprep.subr.mxu0 0.0
      %7194 = vmatpush1.msra.mxu0 0.0
      %7195 = vmatprep.subr.mxu0 0.0
      %7196 = vmatpush1.msra.mxu0 0.0
      %7197 = vmatprep.subr.mxu0 0.0
      %7198 = vmatpush1.msra.mxu0 0.0
      %7199 = vmatprep.subr.mxu0 0.0
      %7200 = vmatpush1.msra.mxu0 0.0
      %7201 = vmatprep.subr.mxu0 0.0
      %7202 = vmatpush1.msra.mxu0 0.0
      %7203 = vmatprep.subr.mxu0 0.0
      %7204 = vmatpush1.msra.mxu0 0.0
      %7205 = vmatprep.subr.mxu0 0.0
      %7206 = vmatpush1.msra.mxu0 0.0
      %7207 = vmatprep.subr.mxu0 0.0
      %7208 = vmatpush1.msra.mxu0 0.0
      %7209 = vmatprep.subr.mxu0 0.0
      %7210 = vmatpush1.msra.mxu0 0.0
      %7211 = vmatprep.subr.mxu0 0.0
      %7212 = vmatpush1.msra.mxu0 0.0
      %7213 = vmatprep.subr.mxu0 0.0
      %7214 = vmatpush1.msra.mxu0 0.0
      %7215 = vmatprep.subr.mxu0 0.0
      %7216 = vmatpush1.msra.mxu0 0.0
      %7217 = vmatprep.subr.mxu0 0.0
      %7218 = vmatpush1.msra.mxu0 0.0
      %7219 = vmatprep.subr.mxu0 0.0
      %7220 = vmatpush1.msra.mxu0 0.0
      %7221 = vmatprep.subr.mxu0 0.0
      %7222 = vmatpush1.msra.mxu0 0.0
      %7223 = vmatprep.subr.mxu0 0.0
      %7224 = vmatpush1.msra.mxu0 0.0
      %7225 = vmatprep.subr.mxu0 0.0
      %7226 = vmatpush1.msra.mxu0 0.0
      %7227 = vmatprep.subr.mxu0 0.0
      %7228 = vmatpush1.msra.mxu0 0.0
      %7229 = vmatprep.subr.mxu0 0.0
      %7230 = vmatpush1.msra.mxu0 0.0
      %7231 = vmatprep.subr.mxu0 0.0
      %7232 = vmatpush1.msra.mxu0 0.0
      %7233 = vmatprep.subr.mxu0 0.0
      %7234 = vmatpush1.msra.mxu0 0.0
      %7235 = vmatprep.subr.mxu0 0.0
      %7236 = vmatpush1.msra.mxu0 0.0
      %7237 = vmatprep.subr.mxu0 0.0
      %7238 = vmatpush1.msra.mxu0 0.0
      %7239 = vmatprep.subr.mxu0 0.0
      %7240 = vmatpush1.msra.mxu0 0.0
      %7241 = vmatprep.subr.mxu0 0.0
      %7242 = vmatpush1.msra.mxu0 0.0
      %7243 = vmatprep.subr.mxu0 0.0
      %7244 = vmatpush1.msra.mxu0 0.0
      %7245 = vmatprep.mubr.f32.mxu0 0.0
      %v7246 = vand.u32 %v7006, 4294901760
      %v7247 = vsub.f32 %v7006, %v7246
      %7248 = vmatmul.mubr.f32.gmra.mrb[0].mxu0 %v7247
      %v7249 = vpop.f32.mrb[0].mxu0
      %v7250 = vadd.f32 %v7173, %v7249
      %v7251 = vpop.f32.mrb[0].mxu0
      %v7252 = vadd.f32 %v7175, %v7251
      %7253 = vdwg.mxu0
      %v7254 = vand.u32 %v7012, 4294901760
      %7255 = vmatprep.subr.mxu0 %v7254
      %v7256 = vand.u32 %v7009, 4294901760
      %7257 = vmatpush1.msra.mxu0 %v7256
      %7258 = vmatprep.subr.mxu0 0.0
      %7259 = vmatpush1.msra.mxu0 0.0
      %7260 = vmatprep.subr.mxu0 0.0
      %7261 = vmatpush1.msra.mxu0 0.0
      %7262 = vmatprep.subr.mxu0 0.0
      %7263 = vmatpush1.msra.mxu0 0.0
      %7264 = vmatprep.subr.mxu0 0.0
      %7265 = vmatpush1.msra.mxu0 0.0
      %7266 = vmatprep.subr.mxu0 0.0
      %7267 = vmatpush1.msra.mxu0 0.0
      %7268 = vmatprep.subr.mxu0 0.0
      %7269 = vmatpush1.msra.mxu0 0.0
      %7270 = vmatprep.subr.mxu0 0.0
      %7271 = vmatpush1.msra.mxu0 0.0
      %7272 = vmatprep.subr.mxu0 0.0
      %7273 = vmatpush1.msra.mxu0 0.0
      %7274 = vmatprep.subr.mxu0 0.0
      %7275 = vmatpush1.msra.mxu0 0.0
      %7276 = vmatprep.subr.mxu0 0.0
      %7277 = vmatpush1.msra.mxu0 0.0
      %7278 = vmatprep.subr.mxu0 0.0
      %7279 = vmatpush1.msra.mxu0 0.0
      %7280 = vmatprep.subr.mxu0 0.0
      %7281 = vmatpush1.msra.mxu0 0.0
      %7282 = vmatprep.subr.mxu0 0.0
      %7283 = vmatpush1.msra.mxu0 0.0
      %7284 = vmatprep.subr.mxu0 0.0
      %7285 = vmatpush1.msra.mxu0 0.0
      %7286 = vmatprep.subr.mxu0 0.0
      %7287 = vmatpush1.msra.mxu0 0.0
      %7288 = vmatprep.subr.mxu0 0.0
      %7289 = vmatpush1.msra.mxu0 0.0
      %7290 = vmatprep.subr.mxu0 0.0
      %7291 = vmatpush1.msra.mxu0 0.0
      %7292 = vmatprep.subr.mxu0 0.0
      %7293 = vmatpush1.msra.mxu0 0.0
      %7294 = vmatprep.subr.mxu0 0.0
      %7295 = vmatpush1.msra.mxu0 0.0
      %7296 = vmatprep.subr.mxu0 0.0
      %7297 = vmatpush1.msra.mxu0 0.0
      %7298 = vmatprep.subr.mxu0 0.0
      %7299 = vmatpush1.msra.mxu0 0.0
      %7300 = vmatprep.subr.mxu0 0.0
      %7301 = vmatpush1.msra.mxu0 0.0
      %7302 = vmatprep.subr.mxu0 0.0
      %7303 = vmatpush1.msra.mxu0 0.0
      %7304 = vmatprep.subr.mxu0 0.0
      %7305 = vmatpush1.msra.mxu0 0.0
      %7306 = vmatprep.subr.mxu0 0.0
      %7307 = vmatpush1.msra.mxu0 0.0
      %7308 = vmatprep.subr.mxu0 0.0
      %7309 = vmatpush1.msra.mxu0 0.0
      %7310 = vmatprep.subr.mxu0 0.0
      %7311 = vmatpush1.msra.mxu0 0.0
      %7312 = vmatprep.subr.mxu0 0.0
      %7313 = vmatpush1.msra.mxu0 0.0
      %7314 = vmatprep.subr.mxu0 0.0
      %7315 = vmatpush1.msra.mxu0 0.0
      %7316 = vmatprep.subr.mxu0 0.0
      %7317 = vmatpush1.msra.mxu0 0.0
      %7318 = vmatprep.subr.mxu0 0.0
      %7319 = vmatpush1.msra.mxu0 0.0
      %7320 = vmatprep.mubr.f32.mxu0 0.0
      %v7321 = vand.u32 %v7006, 4294901760
      %v7322 = vsub.f32 %v7006, %v7321
      %v7323 = vand.u32 %v7322, 4294901760
      %7324 = vmatmul.mubr.f32.gmra.mrb[0].mxu0 %v7323
      %v7325 = vpop.f32.mrb[0].mxu0
      %v7326 = vadd.f32 %v7250, %v7325
      %v7327 = vpop.f32.mrb[0].mxu0
      %v7328 = vadd.f32 %v7252, %v7327
      %7329 = vdwg.mxu0
      %v7330 = vand.u32 %v7012, 4294901760
      %v7331 = vsub.f32 %v7012, %v7330
      %v7332 = vand.u32 %v7331, 4294901760
      %7333 = vmatprep.subr.mxu0 %v7332
      %v7334 = vand.u32 %v7009, 4294901760
      %v7335 = vsub.f32 %v7009, %v7334
      %v7336 = vand.u32 %v7335, 4294901760
      %7337 = vmatpush1.msra.mxu0 %v7336
      %7338 = vmatprep.subr.mxu0 0.0
      %7339 = vmatpush1.msra.mxu0 0.0
      %7340 = vmatprep.subr.mxu0 0.0
      %7341 = vmatpush1.msra.mxu0 0.0
      %7342 = vmatprep.subr.mxu0 0.0
      %7343 = vmatpush1.msra.mxu0 0.0
      %7344 = vmatprep.subr.mxu0 0.0
      %7345 = vmatpush1.msra.mxu0 0.0
      %7346 = vmatprep.subr.mxu0 0.0
      %7347 = vmatpush1.msra.mxu0 0.0
      %7348 = vmatprep.subr.mxu0 0.0
      %7349 = vmatpush1.msra.mxu0 0.0
      %7350 = vmatprep.subr.mxu0 0.0
      %7351 = vmatpush1.msra.mxu0 0.0
      %7352 = vmatprep.subr.mxu0 0.0
      %7353 = vmatpush1.msra.mxu0 0.0
      %7354 = vmatprep.subr.mxu0 0.0
      %7355 = vmatpush1.msra.mxu0 0.0
      %7356 = vmatprep.subr.mxu0 0.0
      %7357 = vmatpush1.msra.mxu0 0.0
      %7358 = vmatprep.subr.mxu0 0.0
      %7359 = vmatpush1.msra.mxu0 0.0
      %7360 = vmatprep.subr.mxu0 0.0
      %7361 = vmatpush1.msra.mxu0 0.0
      %7362 = vmatprep.subr.mxu0 0.0
      %7363 = vmatpush1.msra.mxu0 0.0
      %7364 = vmatprep.subr.mxu0 0.0
      %7365 = vmatpush1.msra.mxu0 0.0
      %7366 = vmatprep.subr.mxu0 0.0
      %7367 = vmatpush1.msra.mxu0 0.0
      %7368 = vmatprep.subr.mxu0 0.0
      %7369 = vmatpush1.msra.mxu0 0.0
      %7370 = vmatprep.subr.mxu0 0.0
      %7371 = vmatpush1.msra.mxu0 0.0
      %7372 = vmatprep.subr.mxu0 0.0
      %7373 = vmatpush1.msra.mxu0 0.0
      %7374 = vmatprep.subr.mxu0 0.0
      %7375 = vmatpush1.msra.mxu0 0.0
      %7376 = vmatprep.subr.mxu0 0.0
      %7377 = vmatpush1.msra.mxu0 0.0
      %7378 = vmatprep.subr.mxu0 0.0
      %7379 = vmatpush1.msra.mxu0 0.0
      %7380 = vmatprep.subr.mxu0 0.0
      %7381 = vmatpush1.msra.mxu0 0.0
      %7382 = vmatprep.subr.mxu0 0.0
      %7383 = vmatpush1.msra.mxu0 0.0
      %7384 = vmatprep.subr.mxu0 0.0
      %7385 = vmatpush1.msra.mxu0 0.0
      %7386 = vmatprep.subr.mxu0 0.0
      %7387 = vmatpush1.msra.mxu0 0.0
      %7388 = vmatprep.subr.mxu0 0.0
      %7389 = vmatpush1.msra.mxu0 0.0
      %7390 = vmatprep.subr.mxu0 0.0
      %7391 = vmatpush1.msra.mxu0 0.0
      %7392 = vmatprep.subr.mxu0 0.0
      %7393 = vmatpush1.msra.mxu0 0.0
      %7394 = vmatprep.subr.mxu0 0.0
      %7395 = vmatpush1.msra.mxu0 0.0
      %7396 = vmatprep.subr.mxu0 0.0
      %7397 = vmatpush1.msra.mxu0 0.0
      %7398 = vmatprep.subr.mxu0 0.0
      %7399 = vmatpush1.msra.mxu0 0.0
      %7400 = vmatprep.mubr.f32.mxu0 0.0
      %v7401 = vand.u32 %v7006, 4294901760
      %7402 = vmatmul.mubr.f32.gmra.mrb[0].mxu0 %v7401
      %v7403 = vpop.f32.mrb[0].mxu0
      %v7404 = vadd.f32 %v7326, %v7403
      %v7405 = vpop.f32.mrb[0].mxu0
      %v7406 = vadd.f32 %v7328, %v7405
      %7407 = vdwg.mxu0
      %v7408 = vand.u32 %v7012, 4294901760
      %7409 = vmatprep.subr.mxu0 %v7408
      %v7410 = vand.u32 %v7009, 4294901760
      %7411 = vmatpush1.msra.mxu0 %v7410
      %7412 = vmatprep.subr.mxu0 0.0
      %7413 = vmatpush1.msra.mxu0 0.0
      %7414 = vmatprep.subr.mxu0 0.0
      %7415 = vmatpush1.msra.mxu0 0.0
      %7416 = vmatprep.subr.mxu0 0.0
      %7417 = vmatpush1.msra.mxu0 0.0
      %7418 = vmatprep.subr.mxu0 0.0
      %7419 = vmatpush1.msra.mxu0 0.0
      %7420 = vmatprep.subr.mxu0 0.0
      %7421 = vmatpush1.msra.mxu0 0.0
      %7422 = vmatprep.subr.mxu0 0.0
      %7423 = vmatpush1.msra.mxu0 0.0
      %7424 = vmatprep.subr.mxu0 0.0
      %7425 = vmatpush1.msra.mxu0 0.0
      %7426 = vmatprep.subr.mxu0 0.0
      %7427 = vmatpush1.msra.mxu0 0.0
      %7428 = vmatprep.subr.mxu0 0.0
      %7429 = vmatpush1.msra.mxu0 0.0
      %7430 = vmatprep.subr.mxu0 0.0
      %7431 = vmatpush1.msra.mxu0 0.0
      %7432 = vmatprep.subr.mxu0 0.0
      %7433 = vmatpush1.msra.mxu0 0.0
      %7434 = vmatprep.subr.mxu0 0.0
      %7435 = vmatpush1.msra.mxu0 0.0
      %7436 = vmatprep.subr.mxu0 0.0
      %7437 = vmatpush1.msra.mxu0 0.0
      %7438 = vmatprep.subr.mxu0 0.0
      %7439 = vmatpush1.msra.mxu0 0.0
      %7440 = vmatprep.subr.mxu0 0.0
      %7441 = vmatpush1.msra.mxu0 0.0
      %7442 = vmatprep.subr.mxu0 0.0
      %7443 = vmatpush1.msra.mxu0 0.0
      %7444 = vmatprep.subr.mxu0 0.0
      %7445 = vmatpush1.msra.mxu0 0.0
      %7446 = vmatprep.subr.mxu0 0.0
      %7447 = vmatpush1.msra.mxu0 0.0
      %7448 = vmatprep.subr.mxu0 0.0
      %7449 = vmatpush1.msra.mxu0 0.0
      %7450 = vmatprep.subr.mxu0 0.0
      %7451 = vmatpush1.msra.mxu0 0.0
      %7452 = vmatprep.subr.mxu0 0.0
      %7453 = vmatpush1.msra.mxu0 0.0
      %7454 = vmatprep.subr.mxu0 0.0
      %7455 = vmatpush1.msra.mxu0 0.0
      %7456 = vmatprep.subr.mxu0 0.0
      %7457 = vmatpush1.msra.mxu0 0.0
      %7458 = vmatprep.subr.mxu0 0.0
      %7459 = vmatpush1.msra.mxu0 0.0
      %7460 = vmatprep.subr.mxu0 0.0
      %7461 = vmatpush1.msra.mxu0 0.0
      %7462 = vmatprep.subr.mxu0 0.0
      %7463 = vmatpush1.msra.mxu0 0.0
      %7464 = vmatprep.subr.mxu0 0.0
      %7465 = vmatpush1.msra.mxu0 0.0
      %7466 = vmatprep.subr.mxu0 0.0
      %7467 = vmatpush1.msra.mxu0 0.0
      %7468 = vmatprep.subr.mxu0 0.0
      %7469 = vmatpush1.msra.mxu0 0.0
      %7470 = vmatprep.subr.mxu0 0.0
      %7471 = vmatpush1.msra.mxu0 0.0
      %7472 = vmatprep.subr.mxu0 0.0
      %7473 = vmatpush1.msra.mxu0 0.0
      %7474 = vmatprep.mubr.f32.mxu0 0.0
      %v7475 = vand.u32 %v7006, 4294901760
      %7476 = vmatmul.mubr.f32.gmra.mrb[0].mxu0 %v7475
      %v7477 = vpop.f32.mrb[0].mxu0
      %v7478 = vadd.f32 %v7404, %v7477
      %v7479 = vpop.f32.mrb[0].mxu0
      %v7480 = vadd.f32 %v7406, %v7479
      %7481 = vdwg.mxu0
      %7482 = vmatprep.subr.mxu0 0.0
      %v7483 = vand.u32 %v7015, 4294901760
      %7484 = vmatpush1.msra.mxu0 %v7483
      %7485 = vmatprep.subr.mxu0 0.0
      %7486 = vmatpush1.msra.mxu0 0.0
      %7487 = vmatprep.subr.mxu0 0.0
      %7488 = vmatpush1.msra.mxu0 0.0
      %7489 = vmatprep.subr.mxu0 0.0
      %7490 = vmatpush1.msra.mxu0 0.0
      %7491 = vmatprep.subr.mxu0 0.0
      %7492 = vmatpush1.msra.mxu0 0.0
      %7493 = vmatprep.subr.mxu0 0.0
      %7494 = vmatpush1.msra.mxu0 0.0
      %7495 = vmatprep.subr.mxu0 0.0
      %7496 = vmatpush1.msra.mxu0 0.0
      %7497 = vmatprep.subr.mxu0 0.0
      %7498 = vmatpush1.msra.mxu0 0.0
      %7499 = vmatprep.subr.mxu0 0.0
      %7500 = vmatpush1.msra.mxu0 0.0
      %7501 = vmatprep.subr.mxu0 0.0
      %7502 = vmatpush1.msra.mxu0 0.0
      %7503 = vmatprep.subr.mxu0 0.0
      %7504 = vmatpush1.msra.mxu0 0.0
      %7505 = vmatprep.subr.mxu0 0.0
      %7506 = vmatpush1.msra.mxu0 0.0
      %7507 = vmatprep.subr.mxu0 0.0
      %7508 = vmatpush1.msra.mxu0 0.0
      %7509 = vmatprep.subr.mxu0 0.0
      %7510 = vmatpush1.msra.mxu0 0.0
      %7511 = vmatprep.subr.mxu0 0.0
      %7512 = vmatpush1.msra.mxu0 0.0
      %7513 = vmatprep.subr.mxu0 0.0
      %7514 = vmatpush1.msra.mxu0 0.0
      %7515 = vmatprep.subr.mxu0 0.0
      %7516 = vmatpush1.msra.mxu0 0.0
      %7517 = vmatprep.subr.mxu0 0.0
      %7518 = vmatpush1.msra.mxu0 0.0
      %7519 = vmatprep.subr.mxu0 0.0
      %7520 = vmatpush1.msra.mxu0 0.0
      %7521 = vmatprep.subr.mxu0 0.0
      %7522 = vmatpush1.msra.mxu0 0.0
      %7523 = vmatprep.subr.mxu0 0.0
      %7524 = vmatpush1.msra.mxu0 0.0
      %7525 = vmatprep.subr.mxu0 0.0
      %7526 = vmatpush1.msra.mxu0 0.0
      %7527 = vmatprep.subr.mxu0 0.0
      %7528 = vmatpush1.msra.mxu0 0.0
      %7529 = vmatprep.subr.mxu0 0.0
      %7530 = vmatpush1.msra.mxu0 0.0
      %7531 = vmatprep.subr.mxu0 0.0
      %7532 = vmatpush1.msra.mxu0 0.0
      %7533 = vmatprep.subr.mxu0 0.0
      %7534 = vmatpush1.msra.mxu0 0.0
      %7535 = vmatprep.subr.mxu0 0.0
      %7536 = vmatpush1.msra.mxu0 0.0
      %7537 = vmatprep.subr.mxu0 0.0
      %7538 = vmatpush1.msra.mxu0 0.0
      %7539 = vmatprep.subr.mxu0 0.0
      %7540 = vmatpush1.msra.mxu0 0.0
      %7541 = vmatprep.subr.mxu0 0.0
      %7542 = vmatpush1.msra.mxu0 0.0
      %7543 = vmatprep.subr.mxu0 0.0
      %7544 = vmatpush1.msra.mxu0 0.0
      %7545 = vmatprep.subr.mxu0 0.0
      %7546 = vmatpush1.msra.mxu0 0.0
      %7547 = vmatprep.mubr.f32.mxu0 0.0
      %v7548 = vand.u32 %v7006, 4294901760
      %v7549 = vsub.f32 %v7006, %v7548
      %v7550 = vand.u32 %v7549, 4294901760
      %v7551 = vsub.f32 %v7549, %v7550
      %v7552 = vand.u32 %v7551, 4294901760
      %7553 = vmatmul.mubr.f32.gmra.mrb[0].mxu0 %v7552
      %v7554 = vpop.f32.mrb[0].mxu0
      %v7555 = vadd.f32 %v7004, %v7554
      %v7556 = vpop.f32.mrb[0].mxu0
      %7557 = vdwg.mxu0
      %7558 = vmatprep.subr.mxu0 0.0
      %v7559 = vand.u32 %v7015, 4294901760
      %v7560 = vsub.f32 %v7015, %v7559
      %v7561 = vand.u32 %v7560, 4294901760
      %v7562 = vsub.f32 %v7560, %v7561
      %v7563 = vand.u32 %v7562, 4294901760
      %7564 = vmatpush1.msra.mxu0 %v7563
      %7565 = vmatprep.subr.mxu0 0.0
      %7566 = vmatpush1.msra.mxu0 0.0
      %7567 = vmatprep.subr.mxu0 0.0
      %7568 = vmatpush1.msra.mxu0 0.0
      %7569 = vmatprep.subr.mxu0 0.0
      %7570 = vmatpush1.msra.mxu0 0.0
      %7571 = vmatprep.subr.mxu0 0.0
      %7572 = vmatpush1.msra.mxu0 0.0
      %7573 = vmatprep.subr.mxu0 0.0
      %7574 = vmatpush1.msra.mxu0 0.0
      %7575 = vmatprep.subr.mxu0 0.0
      %7576 = vmatpush1.msra.mxu0 0.0
      %7577 = vmatprep.subr.mxu0 0.0
      %7578 = vmatpush1.msra.mxu0 0.0
      %7579 = vmatprep.subr.mxu0 0.0
      %7580 = vmatpush1.msra.mxu0 0.0
      %7581 = vmatprep.subr.mxu0 0.0
      %7582 = vmatpush1.msra.mxu0 0.0
      %7583 = vmatprep.subr.mxu0 0.0
      %7584 = vmatpush1.msra.mxu0 0.0
      %7585 = vmatprep.subr.mxu0 0.0
      %7586 = vmatpush1.msra.mxu0 0.0
      %7587 = vmatprep.subr.mxu0 0.0
      %7588 = vmatpush1.msra.mxu0 0.0
      %7589 = vmatprep.subr.mxu0 0.0
      %7590 = vmatpush1.msra.mxu0 0.0
      %7591 = vmatprep.subr.mxu0 0.0
      %7592 = vmatpush1.msra.mxu0 0.0
      %7593 = vmatprep.subr.mxu0 0.0
      %7594 = vmatpush1.msra.mxu0 0.0
      %7595 = vmatprep.subr.mxu0 0.0
      %7596 = vmatpush1.msra.mxu0 0.0
      %7597 = vmatprep.subr.mxu0 0.0
      %7598 = vmatpush1.msra.mxu0 0.0
      %7599 = vmatprep.subr.mxu0 0.0
      %7600 = vmatpush1.msra.mxu0 0.0
      %7601 = vmatprep.subr.mxu0 0.0
      %7602 = vmatpush1.msra.mxu0 0.0
      %7603 = vmatprep.subr.mxu0 0.0
      %7604 = vmatpush1.msra.mxu0 0.0
      %7605 = vmatprep.subr.mxu0 0.0
      %7606 = vmatpush1.msra.mxu0 0.0
      %7607 = vmatprep.subr.mxu0 0.0
      %7608 = vmatpush1.msra.mxu0 0.0
      %7609 = vmatprep.subr.mxu0 0.0
      %7610 = vmatpush1.msra.mxu0 0.0
      %7611 = vmatprep.subr.mxu0 0.0
      %7612 = vmatpush1.msra.mxu0 0.0
      %7613 = vmatprep.subr.mxu0 0.0
      %7614 = vmatpush1.msra.mxu0 0.0
      %7615 = vmatprep.subr.mxu0 0.0
      %7616 = vmatpush1.msra.mxu0 0.0
      %7617 = vmatprep.subr.mxu0 0.0
      %7618 = vmatpush1.msra.mxu0 0.0
      %7619 = vmatprep.subr.mxu0 0.0
      %7620 = vmatpush1.msra.mxu0 0.0
      %7621 = vmatprep.subr.mxu0 0.0
      %7622 = vmatpush1.msra.mxu0 0.0
      %7623 = vmatprep.subr.mxu0 0.0
      %7624 = vmatpush1.msra.mxu0 0.0
      %7625 = vmatprep.subr.mxu0 0.0
      %7626 = vmatpush1.msra.mxu0 0.0
      %7627 = vmatprep.mubr.f32.mxu0 0.0
      %v7628 = vand.u32 %v7006, 4294901760
      %7629 = vmatmul.mubr.f32.gmra.mrb[0].mxu0 %v7628
      %v7630 = vpop.f32.mrb[0].mxu0
      %v7631 = vadd.f32 %v7555, %v7630
      %v7632 = vpop.f32.mrb[0].mxu0
      %7633 = vdwg.mxu0
      %7634 = vmatprep.subr.mxu0 0.0
      %v7635 = vand.u32 %v7015, 4294901760
      %v7636 = vsub.f32 %v7015, %v7635
      %7637 = vmatpush1.msra.mxu0 %v7636
      %7638 = vmatprep.subr.mxu0 0.0
      %7639 = vmatpush1.msra.mxu0 0.0
      %7640 = vmatprep.subr.mxu0 0.0
      %7641 = vmatpush1.msra.mxu0 0.0
      %7642 = vmatprep.subr.mxu0 0.0
      %7643 = vmatpush1.msra.mxu0 0.0
      %7644 = vmatprep.subr.mxu0 0.0
      %7645 = vmatpush1.msra.mxu0 0.0
      %7646 = vmatprep.subr.mxu0 0.0
      %7647 = vmatpush1.msra.mxu0 0.0
      %7648 = vmatprep.subr.mxu0 0.0
      %7649 = vmatpush1.msra.mxu0 0.0
      %7650 = vmatprep.subr.mxu0 0.0
      %7651 = vmatpush1.msra.mxu0 0.0
      %7652 = vmatprep.subr.mxu0 0.0
      %7653 = vmatpush1.msra.mxu0 0.0
      %7654 = vmatprep.subr.mxu0 0.0
      %7655 = vmatpush1.msra.mxu0 0.0
      %7656 = vmatprep.subr.mxu0 0.0
      %7657 = vmatpush1.msra.mxu0 0.0
      %7658 = vmatprep.subr.mxu0 0.0
      %7659 = vmatpush1.msra.mxu0 0.0
      %7660 = vmatprep.subr.mxu0 0.0
      %7661 = vmatpush1.msra.mxu0 0.0
      %7662 = vmatprep.subr.mxu0 0.0
      %7663 = vmatpush1.msra.mxu0 0.0
      %7664 = vmatprep.subr.mxu0 0.0
      %7665 = vmatpush1.msra.mxu0 0.0
      %7666 = vmatprep.subr.mxu0 0.0
      %7667 = vmatpush1.msra.mxu0 0.0
      %7668 = vmatprep.subr.mxu0 0.0
      %7669 = vmatpush1.msra.mxu0 0.0
      %7670 = vmatprep.subr.mxu0 0.0
      %7671 = vmatpush1.msra.mxu0 0.0
      %7672 = vmatprep.subr.mxu0 0.0
      %7673 = vmatpush1.msra.mxu0 0.0
      %7674 = vmatprep.subr.mxu0 0.0
      %7675 = vmatpush1.msra.mxu0 0.0
      %7676 = vmatprep.subr.mxu0 0.0
      %7677 = vmatpush1.msra.mxu0 0.0
      %7678 = vmatprep.subr.mxu0 0.0
      %7679 = vmatpush1.msra.mxu0 0.0
      %7680 = vmatprep.subr.mxu0 0.0
      %7681 = vmatpush1.msra.mxu0 0.0
      %7682 = vmatprep.subr.mxu0 0.0
      %7683 = vmatpush1.msra.mxu0 0.0
      %7684 = vmatprep.subr.mxu0 0.0
      %7685 = vmatpush1.msra.mxu0 0.0
      %7686 = vmatprep.subr.mxu0 0.0
      %7687 = vmatpush1.msra.mxu0 0.0
      %7688 = vmatprep.subr.mxu0 0.0
      %7689 = vmatpush1.msra.mxu0 0.0
      %7690 = vmatprep.subr.mxu0 0.0
      %7691 = vmatpush1.msra.mxu0 0.0
      %7692 = vmatprep.subr.mxu0 0.0
      %7693 = vmatpush1.msra.mxu0 0.0
      %7694 = vmatprep.subr.mxu0 0.0
      %7695 = vmatpush1.msra.mxu0 0.0
      %7696 = vmatprep.subr.mxu0 0.0
      %7697 = vmatpush1.msra.mxu0 0.0
      %7698 = vmatprep.subr.mxu0 0.0
      %7699 = vmatpush1.msra.mxu0 0.0
      %7700 = vmatprep.mubr.f32.mxu0 0.0
      %v7701 = vand.u32 %v7006, 4294901760
      %v7702 = vsub.f32 %v7006, %v7701
      %7703 = vmatmul.mubr.f32.gmra.mrb[0].mxu0 %v7702
      %v7704 = vpop.f32.mrb[0].mxu0
      %v7705 = vadd.f32 %v7631, %v7704
      %v7706 = vpop.f32.mrb[0].mxu0
      %7707 = vdwg.mxu0
      %7708 = vmatprep.subr.mxu0 0.0
      %v7709 = vand.u32 %v7015, 4294901760
      %7710 = vmatpush1.msra.mxu0 %v7709
      %7711 = vmatprep.subr.mxu0 0.0
      %7712 = vmatpush1.msra.mxu0 0.0
      %7713 = vmatprep.subr.mxu0 0.0
      %7714 = vmatpush1.msra.mxu0 0.0
      %7715 = vmatprep.subr.mxu0 0.0
      %7716 = vmatpush1.msra.mxu0 0.0
      %7717 = vmatprep.subr.mxu0 0.0
      %7718 = vmatpush1.msra.mxu0 0.0
      %7719 = vmatprep.subr.mxu0 0.0
      %7720 = vmatpush1.msra.mxu0 0.0
      %7721 = vmatprep.subr.mxu0 0.0
      %7722 = vmatpush1.msra.mxu0 0.0
      %7723 = vmatprep.subr.mxu0 0.0
      %7724 = vmatpush1.msra.mxu0 0.0
      %7725 = vmatprep.subr.mxu0 0.0
      %7726 = vmatpush1.msra.mxu0 0.0
      %7727 = vmatprep.subr.mxu0 0.0
      %7728 = vmatpush1.msra.mxu0 0.0
      %7729 = vmatprep.subr.mxu0 0.0
      %7730 = vmatpush1.msra.mxu0 0.0
      %7731 = vmatprep.subr.mxu0 0.0
      %7732 = vmatpush1.msra.mxu0 0.0
      %7733 = vmatprep.subr.mxu0 0.0
      %7734 = vmatpush1.msra.mxu0 0.0
      %7735 = vmatprep.subr.mxu0 0.0
      %7736 = vmatpush1.msra.mxu0 0.0
      %7737 = vmatprep.subr.mxu0 0.0
      %7738 = vmatpush1.msra.mxu0 0.0
      %7739 = vmatprep.subr.mxu0 0.0
      %7740 = vmatpush1.msra.mxu0 0.0
      %7741 = vmatprep.subr.mxu0 0.0
      %7742 = vmatpush1.msra.mxu0 0.0
      %7743 = vmatprep.subr.mxu0 0.0
      %7744 = vmatpush1.msra.mxu0 0.0
      %7745 = vmatprep.subr.mxu0 0.0
      %7746 = vmatpush1.msra.mxu0 0.0
      %7747 = vmatprep.subr.mxu0 0.0
      %7748 = vmatpush1.msra.mxu0 0.0
      %7749 = vmatprep.subr.mxu0 0.0
      %7750 = vmatpush1.msra.mxu0 0.0
      %7751 = vmatprep.subr.mxu0 0.0
      %7752 = vmatpush1.msra.mxu0 0.0
      %7753 = vmatprep.subr.mxu0 0.0
      %7754 = vmatpush1.msra.mxu0 0.0
      %7755 = vmatprep.subr.mxu0 0.0
      %7756 = vmatpush1.msra.mxu0 0.0
      %7757 = vmatprep.subr.mxu0 0.0
      %7758 = vmatpush1.msra.mxu0 0.0
      %7759 = vmatprep.subr.mxu0 0.0
      %7760 = vmatpush1.msra.mxu0 0.0
      %7761 = vmatprep.subr.mxu0 0.0
      %7762 = vmatpush1.msra.mxu0 0.0
      %7763 = vmatprep.subr.mxu0 0.0
      %7764 = vmatpush1.msra.mxu0 0.0
      %7765 = vmatprep.subr.mxu0 0.0
      %7766 = vmatpush1.msra.mxu0 0.0
      %7767 = vmatprep.subr.mxu0 0.0
      %7768 = vmatpush1.msra.mxu0 0.0
      %7769 = vmatprep.subr.mxu0 0.0
      %7770 = vmatpush1.msra.mxu0 0.0
      %7771 = vmatprep.subr.mxu0 0.0
      %7772 = vmatpush1.msra.mxu0 0.0
      %7773 = vmatprep.mubr.f32.mxu0 0.0
      %v7774 = vand.u32 %v7006, 4294901760
      %v7775 = vsub.f32 %v7006, %v7774
      %v7776 = vand.u32 %v7775, 4294901760
      %7777 = vmatmul.mubr.f32.gmra.mrb[0].mxu0 %v7776
      %v7778 = vpop.f32.mrb[0].mxu0
      %v7779 = vadd.f32 %v7705, %v7778
      %v7780 = vpop.f32.mrb[0].mxu0
      %7781 = vdwg.mxu0
      %7782 = vmatprep.subr.mxu0 0.0
      %v7783 = vand.u32 %v7015, 4294901760
      %v7784 = vsub.f32 %v7015, %v7783
      %v7785 = vand.u32 %v7784, 4294901760
      %7786 = vmatpush1.msra.mxu0 %v7785
      %7787 = vmatprep.subr.mxu0 0.0
      %7788 = vmatpush1.msra.mxu0 0.0
      %7789 = vmatprep.subr.mxu0 0.0
      %7790 = vmatpush1.msra.mxu0 0.0
      %7791 = vmatprep.subr.mxu0 0.0
      %7792 = vmatpush1.msra.mxu0 0.0
      %7793 = vmatprep.subr.mxu0 0.0
      %7794 = vmatpush1.msra.mxu0 0.0
      %7795 = vmatprep.subr.mxu0 0.0
      %7796 = vmatpush1.msra.mxu0 0.0
      %7797 = vmatprep.subr.mxu0 0.0
      %7798 = vmatpush1.msra.mxu0 0.0
      %7799 = vmatprep.subr.mxu0 0.0
      %7800 = vmatpush1.msra.mxu0 0.0
      %7801 = vmatprep.subr.mxu0 0.0
      %7802 = vmatpush1.msra.mxu0 0.0
      %7803 = vmatprep.subr.mxu0 0.0
      %7804 = vmatpush1.msra.mxu0 0.0
      %7805 = vmatprep.subr.mxu0 0.0
      %7806 = vmatpush1.msra.mxu0 0.0
      %7807 = vmatprep.subr.mxu0 0.0
      %7808 = vmatpush1.msra.mxu0 0.0
      %7809 = vmatprep.subr.mxu0 0.0
      %7810 = vmatpush1.msra.mxu0 0.0
      %7811 = vmatprep.subr.mxu0 0.0
      %7812 = vmatpush1.msra.mxu0 0.0
      %7813 = vmatprep.subr.mxu0 0.0
      %7814 = vmatpush1.msra.mxu0 0.0
      %7815 = vmatprep.subr.mxu0 0.0
      %7816 = vmatpush1.msra.mxu0 0.0
      %7817 = vmatprep.subr.mxu0 0.0
      %7818 = vmatpush1.msra.mxu0 0.0
      %7819 = vmatprep.subr.mxu0 0.0
      %7820 = vmatpush1.msra.mxu0 0.0
      %7821 = vmatprep.subr.mxu0 0.0
      %7822 = vmatpush1.msra.mxu0 0.0
      %7823 = vmatprep.subr.mxu0 0.0
      %7824 = vmatpush1.msra.mxu0 0.0
      %7825 = vmatprep.subr.mxu0 0.0
      %7826 = vmatpush1.msra.mxu0 0.0
      %7827 = vmatprep.subr.mxu0 0.0
      %7828 = vmatpush1.msra.mxu0 0.0
      %7829 = vmatprep.subr.mxu0 0.0
      %7830 = vmatpush1.msra.mxu0 0.0
      %7831 = vmatprep.subr.mxu0 0.0
      %7832 = vmatpush1.msra.mxu0 0.0
      %7833 = vmatprep.subr.mxu0 0.0
      %7834 = vmatpush1.msra.mxu0 0.0
      %7835 = vmatprep.subr.mxu0 0.0
      %7836 = vmatpush1.msra.mxu0 0.0
      %7837 = vmatprep.subr.mxu0 0.0
      %7838 = vmatpush1.msra.mxu0 0.0
      %7839 = vmatprep.subr.mxu0 0.0
      %7840 = vmatpush1.msra.mxu0 0.0
      %7841 = vmatprep.subr.mxu0 0.0
      %7842 = vmatpush1.msra.mxu0 0.0
      %7843 = vmatprep.subr.mxu0 0.0
      %7844 = vmatpush1.msra.mxu0 0.0
      %7845 = vmatprep.subr.mxu0 0.0
      %7846 = vmatpush1.msra.mxu0 0.0
      %7847 = vmatprep.subr.mxu0 0.0
      %7848 = vmatpush1.msra.mxu0 0.0
      %7849 = vmatprep.mubr.f32.mxu0 0.0
      %v7850 = vand.u32 %v7006, 4294901760
      %7851 = vmatmul.mubr.f32.gmra.mrb[0].mxu0 %v7850
      %v7852 = vpop.f32.mrb[0].mxu0
      %v7853 = vadd.f32 %v7779, %v7852
      %v7854 = vpop.f32.mrb[0].mxu0
      %7855 = vdwg.mxu0
      %7856 = vmatprep.subr.mxu0 0.0
      %v7857 = vand.u32 %v7015, 4294901760
      %7858 = vmatpush1.msra.mxu0 %v7857
      %7859 = vmatprep.subr.mxu0 0.0
      %7860 = vmatpush1.msra.mxu0 0.0
      %7861 = vmatprep.subr.mxu0 0.0
      %7862 = vmatpush1.msra.mxu0 0.0
      %7863 = vmatprep.subr.mxu0 0.0
      %7864 = vmatpush1.msra.mxu0 0.0
      %7865 = vmatprep.subr.mxu0 0.0
      %7866 = vmatpush1.msra.mxu0 0.0
      %7867 = vmatprep.subr.mxu0 0.0
      %7868 = vmatpush1.msra.mxu0 0.0
      %7869 = vmatprep.subr.mxu0 0.0
      %7870 = vmatpush1.msra.mxu0 0.0
      %7871 = vmatprep.subr.mxu0 0.0
      %7872 = vmatpush1.msra.mxu0 0.0
      %7873 = vmatprep.subr.mxu0 0.0
      %7874 = vmatpush1.msra.mxu0 0.0
      %7875 = vmatprep.subr.mxu0 0.0
      %7876 = vmatpush1.msra.mxu0 0.0
      %7877 = vmatprep.subr.mxu0 0.0
      %7878 = vmatpush1.msra.mxu0 0.0
      %7879 = vmatprep.subr.mxu0 0.0
      %7880 = vmatpush1.msra.mxu0 0.0
      %7881 = vmatprep.subr.mxu0 0.0
      %7882 = vmatpush1.msra.mxu0 0.0
      %7883 = vmatprep.subr.mxu0 0.0
      %7884 = vmatpush1.msra.mxu0 0.0
      %7885 = vmatprep.subr.mxu0 0.0
      %7886 = vmatpush1.msra.mxu0 0.0
      %7887 = vmatprep.subr.mxu0 0.0
      %7888 = vmatpush1.msra.mxu0 0.0
      %7889 = vmatprep.subr.mxu0 0.0
      %7890 = vmatpush1.msra.mxu0 0.0
      %7891 = vmatprep.subr.mxu0 0.0
      %7892 = vmatpush1.msra.mxu0 0.0
      %7893 = vmatprep.subr.mxu0 0.0
      %7894 = vmatpush1.msra.mxu0 0.0
      %7895 = vmatprep.subr.mxu0 0.0
      %7896 = vmatpush1.msra.mxu0 0.0
      %7897 = vmatprep.subr.mxu0 0.0
      %7898 = vmatpush1.msra.mxu0 0.0
      %7899 = vmatprep.subr.mxu0 0.0
      %7900 = vmatpush1.msra.mxu0 0.0
      %7901 = vmatprep.subr.mxu0 0.0
      %7902 = vmatpush1.msra.mxu0 0.0
      %7903 = vmatprep.subr.mxu0 0.0
      %7904 = vmatpush1.msra.mxu0 0.0
      %7905 = vmatprep.subr.mxu0 0.0
      %7906 = vmatpush1.msra.mxu0 0.0
      %7907 = vmatprep.subr.mxu0 0.0
      %7908 = vmatpush1.msra.mxu0 0.0
      %7909 = vmatprep.subr.mxu0 0.0
      %7910 = vmatpush1.msra.mxu0 0.0
      %7911 = vmatprep.subr.mxu0 0.0
      %7912 = vmatpush1.msra.mxu0 0.0
      %7913 = vmatprep.subr.mxu0 0.0
      %7914 = vmatpush1.msra.mxu0 0.0
      %7915 = vmatprep.subr.mxu0 0.0
      %7916 = vmatpush1.msra.mxu0 0.0
      %7917 = vmatprep.subr.mxu0 0.0
      %7918 = vmatpush1.msra.mxu0 0.0
      %7919 = vmatprep.subr.mxu0 0.0
      %7920 = vmatpush1.msra.mxu0 0.0
      %7921 = vmatprep.mubr.f32.mxu0 0.0
      %v7922 = vand.u32 %v7006, 4294901760
      %7923 = vmatmul.mubr.f32.gmra.mrb[0].mxu0 %v7922
      %v7924 = vpop.f32.mrb[0].mxu0
      %v7925 = vadd.f32 %v7853, %v7924
      %v7926 = vpop.f32.mrb[0].mxu0
      %7927 = vdwg.mxu0
      %v7928 = vxor.u32 %v7478, 2147483648
      %v7929 = vxor.u32 %v7480, 2147483648
      %v7930 = vxor.u32 %v7925, 2147483648
      %v7931 = vmul.f32 %v7928, 1.442695
      %v7932 = vpow.pop %v7931
      %v7933 = vmul.f32 %v7929, 1.442695
      %v7934 = vpow.pop %v7933
      %v7935 = vmul.f32 %v7930, 1.442695
      %v7936 = vpow.pop %v7935
      %v7937 = vadd.f32 %v7932, 1.0
      %v7938 = vadd.f32 %v7934, 1.0
      %v7939 = vadd.f32 %v7936, 1.0
      %v7940 = vrcp.pop %v7937
      %v7941 = vmul.f32 1.0, %v7940
      %v7942 = vrcp.pop %v7938
      %v7943 = vmul.f32 1.0, %v7942
      %v7944 = vrcp.pop %v7939
      %v7945 = vmul.f32 1.0, %v7944
      %v7946 = vlaneseq
      %v7947 = vshrl.u32 %v7946, 7
      %v7948 = vsub.s32 0, %v7947
      %v7949 = vrot.slane %v7941, %v7948
      %v7950 = vlaneseq
      %v7951 = vshrl.u32 %v7950, 7
      %v7952 = vsub.s32 0, %v7951
      %v7953 = vrot.slane %v7943, %v7952
      %v7954 = vlaneseq
      %v7955 = vshrl.u32 %v7954, 7
      %v7956 = vsub.s32 0, %v7955
      %v7957 = vrot.slane %v7945, %v7956
      %v7958 = vmul.f32 %v6025, %v7949
      %v7959 = vmul.f32 %v6026, %v7953
      %v7960 = vmul.f32 %v6027, %v7957
      %v7961 = vmul.f32 %v6028, %v7949
      %v7962 = vmul.f32 %v6029, %v7953
      %v7963 = vmul.f32 %v6030, %v7957
      %v7964 = vld [vmem:[%s464 + $0x8] sm:$0xff]
      %v7965 = vld [vmem:[%s464 + $0x10] sm:$0xff]
      %v7966 = vld [vmem:[%s464 + $0x18] sm:$0xff]
      %v7967 = vld [vmem:[%s464 + $0x30] sm:$0xff]
      %v7968 = vld [vmem:[%s464 + $0x38] sm:$0xff]
      %v7969 = vld [vmem:[%s464 + $0x40] sm:$0xff]
      %v7970 = vadd.f32 %v7958, %v7964
      %v7971 = vadd.f32 %v7959, %v7965
      %v7972 = vadd.f32 %v7960, %v7966
      %v7973 = vadd.f32 %v7961, %v7967
      %v7974 = vadd.f32 %v7962, %v7968
      %v7975 = vadd.f32 %v7963, %v7969
      %7976 = vst [vmem:[%s469] sm:$0xff] %v7970
      %7977 = vst [vmem:[%s469 + $0x8] sm:$0xff] %v7971
      %7978 = vst [vmem:[%s469 + $0x10] sm:$0xff] %v7972
      %7979 = vst [vmem:[%s469 + $0x18] sm:$0xff] %v7973
      %7980 = vst [vmem:[%s469 + $0x20] sm:$0xff] %v7974
      %7981 = vst [vmem:[%s469 + $0x28] sm:$0xff] %v7975
      %p7982 = scmp.lt.s32.totalorder %s27, 1
      %s7983 = scalar_select %p7982, %s27, 1
      %s7984 = smul.addr %s7983, 6
      %s7985 = smul.addr %s7984, 8
      %s7986 = scalar_lea.vmem %s14, %s7985
      // Predicated region
      $region77: #{dehaze_block.1} parent=75 // pred_check
        %p7987 = pneg %p344
      $region78: #{dehaze_block.1} parent=75 // pred_check_branch
        %7989 = sbr.rel (%p7987) target = $region80
      $region79: #{dehaze_block.1} parent=75 // pred_region
        _
      $region80: #{dehaze_block.1} parent=75 // pred_fallthru
        _
    $region76: #{dehaze_block.1} parent=5 // pred_fallthru
      _
    %p7990 = scmp.le.s32.totalorder 2, %s22
    // Predicated region
    $region81: #{dehaze_block.1} parent=5 // pred_check
      %p7991 = pneg %p7990
    $region82: #{dehaze_block.1} parent=5 // pred_check_branch
      %7993 = sbr.rel (%p7991) target = $region84
    $region83: #{dehaze_block.1} parent=5 // pred_region
      %s7994 = ssub.s32 %s22, 2
      // Predicated region
      $region85: #{dehaze_block.1} parent=83 // pred_check
        %p7995 = pneg %p350
      $region86: #{dehaze_block.1} parent=83 // pred_check_branch
        %7997 = sbr.rel (%p7995) target = $region88
      $region87: #{dehaze_block.1} parent=83 // pred_region
        %p7998 = scmp.lt.s32.totalorder %s28, 1
        %s7999 = scalar_select %p7998, %s28, 1
        %s8000 = smul.addr %s7999, 6
        %s8001 = smul.addr %s8000, 8
        %s8002 = scalar_lea.vmem %s14, %s8001
      $region88: #{dehaze_block.1} parent=83 // pred_fallthru
        _
    $region84: #{dehaze_block.1} parent=5 // pred_fallthru
      _
  $region6: #{dehaze_block.1} parent=0 // loop_footer
    %s26 = sadd.s32 1, %s22
  $region7: #{dehaze_block.1} parent=0 // loop_footer_branch
    %21 = sbr.rel target = $region3
  $region8: #{dehaze_block.1} parent=0 // loop_exit
    _

</llo_original>
